<compile_context>
chip_gen: v7x
topology: tpu7x:2x2x1
jax: 0.10.0
libtpu: 0.0.40
codegen_flags: <defaults>
</compile_context>

<pallas_src>
import functools

import jax
import jax.numpy as jnp
from jax.experimental import pallas as pl
from jax.experimental.pallas import tpu as pltpu


_VMEM_LIMIT = 32 * 1024 * 1024   # explicit scoped-VMEM budget (> v5e 16 MiB default)
_NEG_BIG = -1e30                 # safe "minus infinity" for masking


def _pick_tile(n, preferred=(128, 256, 512)):
    for t in preferred:
        if n % t == 0:
            return t
    return n


# ---------------------------------------------------------------------------
# Kernel 1: fused multi-head projection   feat = x @ W,  el = x @ WAl,  er = x @ WAr
# ---------------------------------------------------------------------------
def _project_kernel(x_ref, w_ref, wal_ref, war_ref, feat_ref, el_ref, er_ref):
    x = x_ref[...].astype(jnp.float32)                      # (TN, Din)
    xb = x.astype(jnp.bfloat16)
    wb = w_ref[...].astype(jnp.bfloat16)                    # (Din, H*D)
    feat = jnp.dot(xb, wb, preferred_element_type=jnp.float32)
    feat_ref[...] = feat.astype(feat_ref.dtype)             # bf16 message values
    # Per-node attention terms (tiny matmuls, kept f32 for the softmax path).
    el_ref[...] = jnp.dot(x, wal_ref[...], preferred_element_type=jnp.float32)
    er_ref[...] = jnp.dot(x, war_ref[...], preferred_element_type=jnp.float32)


def _project(x, w, wal, war, *, tile_n):
    N, Din = x.shape
    HD = w.shape[1]
    H = wal.shape[1]
    return pl.pallas_call(
        _project_kernel,
        out_shape=(
            jax.ShapeDtypeStruct((N, HD), jnp.bfloat16),    # feat
            jax.ShapeDtypeStruct((N, H), jnp.float32),      # el (source term)
            jax.ShapeDtypeStruct((N, H), jnp.float32),      # er (destination term)
        ),
        grid=(N // tile_n,),
        in_specs=[
            pl.BlockSpec((tile_n, Din), lambda i: (i, 0)),
            pl.BlockSpec((Din, HD), lambda i: (0, 0)),
            pl.BlockSpec((Din, H), lambda i: (0, 0)),
            pl.BlockSpec((Din, H), lambda i: (0, 0)),
        ],
        out_specs=(
            pl.BlockSpec((tile_n, HD), lambda i: (i, 0)),
            pl.BlockSpec((tile_n, H), lambda i: (i, 0)),
            pl.BlockSpec((tile_n, H), lambda i: (i, 0)),
        ),
        compiler_params=pltpu.CompilerParams(
            dimension_semantics=("parallel",),
            vmem_limit_bytes=_VMEM_LIMIT),
    )(x, w, wal, war)


# ---------------------------------------------------------------------------
# Kernel 2: flash-style masked attention + aggregation, all heads per dst tile
# ---------------------------------------------------------------------------
def _attention_kernel(adj_ref, feat_ref, er_ref, elt_ref, bias_ref, out_ref,
                      m_ref, l_ref, acc_ref, *,
                      num_heads, head_dim, negative_slope, apply_act):
    j = pl.program_id(1)

    @pl.when(j == 0)
    def _init():
        m_ref[...] = jnp.full_like(m_ref, _NEG_BIG)
        l_ref[...] = jnp.zeros_like(l_ref)
        acc_ref[...] = jnp.zeros_like(acc_ref)

    edge = adj_ref[...] > 0                                  # (TI, TJ)
    er = er_ref[...]                                         # (TI, H) f32
    elt = elt_ref[...]                                       # (H, TJ) f32
    feat = feat_ref[...]                                     # (TJ, H*D) bf16

    for h in range(num_heads):
        hs = slice(h * head_dim, (h + 1) * head_dim)
        # GAT v1 score from per-node terms only (no D-wide pairwise work).
        s = er[:, h:h + 1] + elt[h:h + 1, :]                 # (TI, TJ)
        s = jnp.where(s > 0, s, negative_slope * s)          # LeakyReLU
        s = jnp.where(edge, s, _NEG_BIG)                     # mask non-edges
        # Online softmax update over source tiles.
        m_prev = m_ref[:, h:h + 1]
        m_new = jnp.maximum(m_prev, jnp.max(s, axis=1, keepdims=True))
        scale = jnp.exp(m_prev - m_new)
        p = jnp.where(edge, jnp.exp(s - m_new), 0.0)         # (TI, TJ)
        l_ref[:, h:h + 1] = scale * l_ref[:, h:h + 1] + jnp.sum(
            p, axis=1, keepdims=True)
        acc_ref[:, hs] = scale * acc_ref[:, hs] + jnp.dot(
            p.astype(jnp.bfloat16), feat[:, hs],
            preferred_element_type=jnp.float32)
        m_ref[:, h:h + 1] = m_new

    @pl.when(j == pl.num_programs(1) - 1)
    def _finalize():
        # Guard against zero in-degree rows (no NaN even without self-loops).
        inv = pl.reciprocal(jnp.maximum(l_ref[...], 1e-20), approx=True)  # (TI, H)
        bias = bias_ref[...]                                              # (1, H*D)
        for h in range(num_heads):
            hs = slice(h * head_dim, (h + 1) * head_dim)
            y = acc_ref[:, hs] * inv[:, h:h + 1] + bias[:, hs]
            if apply_act:
                y = jnp.where(y > 0, y, jnp.exp(y) - 1.0)                 # ELU
            out_ref[:, hs] = y.astype(out_ref.dtype)


def _attention(adj, feat, er, el_t, bias, *, tile_i, tile_j,
               negative_slope, apply_act, out_dtype):
    N = adj.shape[0]
    HD = feat.shape[1]
    H = er.shape[1]
    D = HD // H
    kernel = functools.partial(
        _attention_kernel, num_heads=H, head_dim=D,
        negative_slope=negative_slope, apply_act=apply_act)
    return pl.pallas_call(
        kernel,
        out_shape=jax.ShapeDtypeStruct((N, HD), out_dtype),
        grid=(N // tile_i, N // tile_j),
        in_specs=[
            pl.BlockSpec((tile_i, tile_j), lambda i, j: (i, j)),   # adj (bf16)
            pl.BlockSpec((tile_j, HD), lambda i, j: (j, 0)),       # src feat
            pl.BlockSpec((tile_i, H), lambda i, j: (i, 0)),        # er (dst)
            pl.BlockSpec((H, tile_j), lambda i, j: (0, j)),        # el^T (src)
            pl.BlockSpec((1, HD), lambda i, j: (0, 0)),            # bias
        ],
        out_specs=pl.BlockSpec((tile_i, HD), lambda i, j: (i, 0)),
        scratch_shapes=[
            pltpu.VMEM((tile_i, H), jnp.float32),      # running max
            pltpu.VMEM((tile_i, H), jnp.float32),      # running sum
            pltpu.VMEM((tile_i, HD), jnp.float32),     # output accumulator
        ],
        compiler_params=pltpu.CompilerParams(
            dimension_semantics=("parallel", "arbitrary"),
            vmem_limit_bytes=_VMEM_LIMIT),
    )(adj, feat, er, el_t, bias)


# ---------------------------------------------------------------------------
# Layer / model wrappers
# ---------------------------------------------------------------------------
def gat_layer(x, adj, w, attn_l, attn_r, bias, *,
              negative_slope, apply_act, out_dtype):
    N, Din = x.shape
    H, D = attn_l.shape
    # Fold the attention vectors into the projection:  el = x @ (W @ Al).
    w3 = w.reshape(Din, H, D)
    wal = jnp.einsum('ihd,hd->ih', w3, attn_l)     # (Din, H)
    war = jnp.einsum('ihd,hd->ih', w3, attn_r)     # (Din, H)

    tile = _pick_tile(N)
    feat, el, er = _project(x, w, wal, war, tile_n=tile)
    el_t = jnp.transpose(el)                       # (H, N) — tiny, lane-dense rows
    return _attention(adj, feat, er, el_t, bias,
                      tile_i=tile, tile_j=tile,
                      negative_slope=negative_slope,
                      apply_act=apply_act, out_dtype=out_dtype)


def gat_forward(x, adj, params, *, negative_slope=0.2):
    # Dense adjacency mask adj[dst, src]; bf16 halves its DMA/VMEM footprint.
    adj = adj.astype(jnp.bfloat16)
    h = x
    n_layers = len(params)
    for idx, (w, al, ar, b) in enumerate(params):
        last = idx == n_layers - 1
        out = gat_layer(h, adj, w, al, ar, b,
                        negative_slope=negative_slope,
                        apply_act=not last,
                        out_dtype=jnp.float32 if last else jnp.bfloat16)
        if last:
            H, D = al.shape
            out = out.reshape(out.shape[0], H, D).mean(axis=1)   # mean over heads
        # hidden layers: output is already the head-major flatten(1) layout.
        h = out
    return h


def init_params(key, in_size, hid_size, out_size, heads):
    """Synthetic GATConv params per layer: W (Din, H*D), attn_l/attn_r (H, D), bias (1, H*D)."""
    dims_in = [in_size, hid_size * heads[0], hid_size * heads[1]]
    dims_out = [hid_size, hid_size, out_size]
    params = []
    for l in range(3):
        key, kw, kl, kr, kb = jax.random.split(key, 5)
        H, Din, Dout = heads[l], dims_in[l], dims_out[l]
        scale = 1.0 / jnp.sqrt(jnp.float32(Din))
        w = jax.random.normal(kw, (Din, H * Dout), jnp.float32) * scale
        al = jax.random.normal(kl, (H, Dout), jnp.float32) * scale
        ar = jax.random.normal(kr, (H, Dout), jnp.float32) * scale
        b = jax.random.normal(kb, (1, H * Dout), jnp.float32) * 0.1
        params.append((w, al, ar, b))
    return params


if __name__ == "__main__":
    # Small, module-consistent config: 3 GATConv layers.
    in_size, hid_size, out_size = 16, 32, 8
    heads = [4, 4, 1]            # hidden layers have H*D = 128 (lane-aligned)
    negative_slope = 0.2
    N = 256                      # number of graph nodes

    key = jax.random.PRNGKey(0)
    key, kx, kadj = jax.random.split(key, 3)

    # Node features.
    x = jax.random.normal(kx, (N, in_size), jnp.float32)

    # Random sparse directed graph as dense mask adj[dst, src], plus self-loops.
    adj = (jax.random.uniform(kadj, (N, N)) < 0.05).astype(jnp.float32)
    adj = jnp.maximum(adj, jnp.eye(N, dtype=jnp.float32))

    params = init_params(key, in_size, hid_size, out_size, heads)

    fwd = jax.jit(functools.partial(gat_forward, negative_slope=negative_slope))
    logits = fwd(x, adj, params)
    logits = jax.block_until_ready(logits)

    assert logits.shape == (N, out_size), logits.shape
    assert bool(jnp.all(jnp.isfinite(logits)))
    print("KERNEL_OK")
</pallas_src>

<mosaic_0001>
module attributes {stable_mosaic.version = 11 : i64} {
  func.func @_project_kernel(%arg0: i32, %arg1: memref<128x16xf32, #tpu.memory_space<vmem>>, %arg2: memref<16x128xf32, #tpu.memory_space<vmem>>, %arg3: memref<16x4xf32, #tpu.memory_space<vmem>>, %arg4: memref<16x4xf32, #tpu.memory_space<vmem>>, %arg5: memref<128x128xbf16, #tpu.memory_space<vmem>>, %arg6: memref<128x4xf32, #tpu.memory_space<vmem>>, %arg7: memref<128x4xf32, #tpu.memory_space<vmem>>) attributes {dimension_semantics = [#tpu.dimension_semantics<parallel>], iteration_bounds = array<i64: 2>, scalar_prefetch = 0 : i64, scratch_operands = 0 : i64, tpu.core_type = #tpu.core_type<tc>, window_params = [{transform_indices = @transform_0, window_bounds = array<i64: 128, 16>}, {pipeline_mode = #tpu.pipeline_mode<synchronous>, transform_indices = @transform_1, window_bounds = array<i64: 16, 128>}, {pipeline_mode = #tpu.pipeline_mode<synchronous>, transform_indices = @transform_2, window_bounds = array<i64: 16, 4>}, {pipeline_mode = #tpu.pipeline_mode<synchronous>, transform_indices = @transform_3, window_bounds = array<i64: 16, 4>}, {transform_indices = @transform_4, window_bounds = array<i64: 128, 128>}, {transform_indices = @transform_5, window_bounds = array<i64: 128, 4>}, {transform_indices = @transform_6, window_bounds = array<i64: 128, 4>}]} {
    %c0 = arith.constant 0 : index
    %c0_0 = arith.constant 0 : index
    %0 = vector.load %arg1[%c0, %c0_0] : memref<128x16xf32, #tpu.memory_space<vmem>>, vector<128x16xf32>
    %1 = arith.truncf %0 : vector<128x16xf32> to vector<128x16xbf16>
    %c0_1 = arith.constant 0 : index
    %c0_2 = arith.constant 0 : index
    %2 = vector.load %arg2[%c0_1, %c0_2] : memref<16x128xf32, #tpu.memory_space<vmem>>, vector<16x128xf32>
    %3 = arith.truncf %2 : vector<16x128xf32> to vector<16x128xbf16>
    %cst = arith.constant dense<0.000000e+00> : vector<128x128xf32>
    %4 = tpu.matmul %1, %3, %cst {dimension_numbers = #tpu.dot_dimension_numbers<[1], [0], [0], [1], [0, 0, 1, 1], [], []>} : vector<128x16xbf16>, vector<16x128xbf16>, vector<128x128xf32> -> vector<128x128xf32>
    %5 = arith.truncf %4 : vector<128x128xf32> to vector<128x128xbf16>
    %c0_3 = arith.constant 0 : index
    %c0_4 = arith.constant 0 : index
    %6 = vector.load %arg5[%c0_3, %c0_4] : memref<128x128xbf16, #tpu.memory_space<vmem>>, vector<128x128xbf16>
    tpu.vector_store %arg5[%c0_3, %c0_4], %5 {strides = array<i32>} : memref<128x128xbf16, #tpu.memory_space<vmem>>, vector<128x128xbf16>,
    %c0_5 = arith.constant 0 : index
    %c0_6 = arith.constant 0 : index
    %7 = vector.load %arg3[%c0_5, %c0_6] : memref<16x4xf32, #tpu.memory_space<vmem>>, vector<16x4xf32>
    %cst_7 = arith.constant dense<0.000000e+00> : vector<128x4xf32>
    %8 = tpu.matmul %0, %7, %cst_7 {dimension_numbers = #tpu.dot_dimension_numbers<[1], [0], [0], [1], [0, 0, 1, 1], [], []>} : vector<128x16xf32>, vector<16x4xf32>, vector<128x4xf32> -> vector<128x4xf32>
    %c0_8 = arith.constant 0 : index
    %c0_9 = arith.constant 0 : index
    %9 = vector.load %arg6[%c0_8, %c0_9] : memref<128x4xf32, #tpu.memory_space<vmem>>, vector<128x4xf32>
    tpu.vector_store %arg6[%c0_8, %c0_9], %8 {strides = array<i32>} : memref<128x4xf32, #tpu.memory_space<vmem>>, vector<128x4xf32>,
    %c0_10 = arith.constant 0 : index
    %c0_11 = arith.constant 0 : index
    %10 = vector.load %arg4[%c0_10, %c0_11] : memref<16x4xf32, #tpu.memory_space<vmem>>, vector<16x4xf32>
    %cst_12 = arith.constant dense<0.000000e+00> : vector<128x4xf32>
    %11 = tpu.matmul %0, %10, %cst_12 {dimension_numbers = #tpu.dot_dimension_numbers<[1], [0], [0], [1], [0, 0, 1, 1], [], []>} : vector<128x16xf32>, vector<16x4xf32>, vector<128x4xf32> -> vector<128x4xf32>
    %c0_13 = arith.constant 0 : index
    %c0_14 = arith.constant 0 : index
    %12 = vector.load %arg7[%c0_13, %c0_14] : memref<128x4xf32, #tpu.memory_space<vmem>>, vector<128x4xf32>
    tpu.vector_store %arg7[%c0_13, %c0_14], %11 {strides = array<i32>} : memref<128x4xf32, #tpu.memory_space<vmem>>, vector<128x4xf32>,
    return
  }
  func.func @transform_0(%arg0: i32) -> (i32, i32) {
    %c0_i32 = arith.constant 0 : i32
    %c0_i32_0 = arith.constant 0 : i32
    return %arg0, %c0_i32 : i32, i32
  }
  func.func @transform_1(%arg0: i32) -> (i32, i32) {
    %c0_i32 = arith.constant 0 : i32
    %c0_i32_0 = arith.constant 0 : i32
    %c0_i32_1 = arith.constant 0 : i32
    return %c0_i32, %c0_i32_0 : i32, i32
  }
  func.func @transform_2(%arg0: i32) -> (i32, i32) {
    %c0_i32 = arith.constant 0 : i32
    %c0_i32_0 = arith.constant 0 : i32
    %c0_i32_1 = arith.constant 0 : i32
    return %c0_i32, %c0_i32_0 : i32, i32
  }
  func.func @transform_3(%arg0: i32) -> (i32, i32) {
    %c0_i32 = arith.constant 0 : i32
    %c0_i32_0 = arith.constant 0 : i32
    %c0_i32_1 = arith.constant 0 : i32
    return %c0_i32, %c0_i32_0 : i32, i32
  }
  func.func @transform_4(%arg0: i32) -> (i32, i32) {
    %c0_i32 = arith.constant 0 : i32
    %c0_i32_0 = arith.constant 0 : i32
    return %arg0, %c0_i32 : i32, i32
  }
  func.func @transform_5(%arg0: i32) -> (i32, i32) {
    %c0_i32 = arith.constant 0 : i32
    %c0_i32_0 = arith.constant 0 : i32
    return %arg0, %c0_i32 : i32, i32
  }
  func.func @transform_6(%arg0: i32) -> (i32, i32) {
    %c0_i32 = arith.constant 0 : i32
    %c0_i32_0 = arith.constant 0 : i32
    return %arg0, %c0_i32 : i32, i32
  }
}

module attributes {stable_mosaic.version = 11 : i64} {
  func.func @_attention_kernel(%arg0: i32, %arg1: i32, %arg2: memref<128x128xbf16, #tpu.memory_space<vmem>>, %arg3: memref<128x128xbf16, #tpu.memory_space<vmem>>, %arg4: memref<128x4xf32, #tpu.memory_space<vmem>>, %arg5: memref<4x128xf32, #tpu.memory_space<vmem>>, %arg6: memref<1x128xf32, #tpu.memory_space<vmem>>, %arg7: memref<128x128xbf16, #tpu.memory_space<vmem>>, %arg8: memref<128x4xf32, #tpu.memory_space<vmem>>, %arg9: memref<128x4xf32, #tpu.memory_space<vmem>>, %arg10: memref<128x128xf32, #tpu.memory_space<vmem>>) attributes {dimension_semantics = [#tpu.dimension_semantics<parallel>, #tpu.dimension_semantics<arbitrary>], iteration_bounds = array<i64: 2, 2>, scalar_prefetch = 0 : i64, scratch_operands = 3 : i64, tpu.core_type = #tpu.core_type<tc>, window_params = [{transform_indices = @transform_0, window_bounds = array<i64: 128, 128>}, {transform_indices = @transform_1, window_bounds = array<i64: 128, 128>}, {transform_indices = @transform_2, window_bounds = array<i64: 128, 4>}, {transform_indices = @transform_3, window_bounds = array<i64: 4, 128>}, {pipeline_mode = #tpu.pipeline_mode<synchronous>, transform_indices = @transform_4, window_bounds = array<i64: 1, 128>}, {transform_indices = @transform_5, window_bounds = array<i64: 128, 128>}]} {
    %c0_i32 = arith.constant 0 : i32
    %0 = arith.cmpi eq, %arg1, %c0_i32 : i32
    %1 = arith.extui %0 : i1 to i32
    %c0_i32_0 = arith.constant 0 : i32
    %2 = arith.cmpi ne, %1, %c0_i32_0 : i32
    scf.if %2 {
      %cst_79 = arith.constant -1.000000e+30 : f32
      %164 = vector.broadcast %cst_79 : f32 to vector<128x4xf32>
      %c0_80 = arith.constant 0 : index
      %c0_81 = arith.constant 0 : index
      %165 = vector.load %arg8[%c0_80, %c0_81] : memref<128x4xf32, #tpu.memory_space<vmem>>, vector<128x4xf32>
      tpu.vector_store %arg8[%c0_80, %c0_81], %164 {strides = array<i32>} : memref<128x4xf32, #tpu.memory_space<vmem>>, vector<128x4xf32>,
      %cst_82 = arith.constant 0.000000e+00 : f32
      %166 = vector.broadcast %cst_82 : f32 to vector<128x4xf32>
      %c0_83 = arith.constant 0 : index
      %c0_84 = arith.constant 0 : index
      %167 = vector.load %arg9[%c0_83, %c0_84] : memref<128x4xf32, #tpu.memory_space<vmem>>, vector<128x4xf32>
      tpu.vector_store %arg9[%c0_83, %c0_84], %166 {strides = array<i32>} : memref<128x4xf32, #tpu.memory_space<vmem>>, vector<128x4xf32>,
      %cst_85 = arith.constant 0.000000e+00 : f32
      %168 = vector.broadcast %cst_85 : f32 to vector<128x128xf32>
      %c0_86 = arith.constant 0 : index
      %c0_87 = arith.constant 0 : index
      %169 = vector.load %arg10[%c0_86, %c0_87] : memref<128x128xf32, #tpu.memory_space<vmem>>, vector<128x128xf32>
      tpu.vector_store %arg10[%c0_86, %c0_87], %168 {strides = array<i32>} : memref<128x128xf32, #tpu.memory_space<vmem>>, vector<128x128xf32>,
    } else {
    }
    %c0 = arith.constant 0 : index
    %c0_1 = arith.constant 0 : index
    %3 = vector.load %arg2[%c0, %c0_1] : memref<128x128xbf16, #tpu.memory_space<vmem>>, vector<128x128xbf16>
    %cst = arith.constant 0.000000e+00 : bf16
    %4 = vector.broadcast %cst : bf16 to vector<128x128xbf16>
    %5 = arith.cmpf ogt, %3, %4 : vector<128x128xbf16>
    %c0_2 = arith.constant 0 : index
    %c0_3 = arith.constant 0 : index
    %6 = vector.load %arg4[%c0_2, %c0_3] : memref<128x4xf32, #tpu.memory_space<vmem>>, vector<128x4xf32>
    %c0_4 = arith.constant 0 : index
    %c0_5 = arith.constant 0 : index
    %7 = vector.load %arg5[%c0_4, %c0_5] : memref<4x128xf32, #tpu.memory_space<vmem>>, vector<4x128xf32>
    %c0_6 = arith.constant 0 : index
    %c0_7 = arith.constant 0 : index
    %8 = vector.load %arg3[%c0_6, %c0_7] : memref<128x128xbf16, #tpu.memory_space<vmem>>, vector<128x128xbf16>
    %9 = vector.extract_strided_slice %6 {offsets = [0, 0], sizes = [128, 1], strides = [1, 1]} : vector<128x4xf32> to vector<128x1xf32>
    %10 = vector.extract_strided_slice %7 {offsets = [0, 0], sizes = [1, 128], strides = [1, 1]} : vector<4x128xf32> to vector<1x128xf32>
    %11 = vector.broadcast %9 : vector<128x1xf32> to vector<128x128xf32>
    %12 = vector.broadcast %10 : vector<1x128xf32> to vector<128x128xf32>
    %13 = arith.addf %11, %12 : vector<128x128xf32>
    %cst_8 = arith.constant 0.000000e+00 : f32
    %14 = vector.broadcast %cst_8 : f32 to vector<128x128xf32>
    %15 = arith.cmpf ogt, %13, %14 : vector<128x128xf32>
    %cst_9 = arith.constant 2.000000e-01 : f32
    %16 = vector.broadcast %cst_9 : f32 to vector<128x128xf32>
    %17 = arith.mulf %16, %13 : vector<128x128xf32>
    %18 = arith.select %15, %13, %17 : vector<128x128xi1>, vector<128x128xf32>
    %cst_10 = arith.constant -1.000000e+30 : f32
    %19 = vector.broadcast %cst_10 : f32 to vector<128x128xf32>
    %20 = arith.select %5, %18, %19 : vector<128x128xi1>, vector<128x128xf32>
    %c0_11 = arith.constant 0 : index
    %c0_12 = arith.constant 0 : index
    %21 = vector.load %arg8[%c0_11, %c0_12] : memref<128x4xf32, #tpu.memory_space<vmem>>, vector<128x1xf32>
    %cst_13 = arith.constant dense<0xFF800000> : vector<128xf32>
    %22 = vector.multi_reduction <maximumf>, %20, %cst_13 [1] : vector<128x128xf32> to vector<128xf32>
    %23 = vector.shape_cast %22 : vector<128xf32> to vector<128x1xf32>
    %24 = arith.maximumf %21, %23 : vector<128x1xf32>
    %25 = arith.subf %21, %24 : vector<128x1xf32>
    %26 = math.exp %25 : vector<128x1xf32>
    %27 = vector.broadcast %24 : vector<128x1xf32> to vector<128x128xf32>
    %28 = arith.subf %20, %27 : vector<128x128xf32>
    %29 = math.exp %28 : vector<128x128xf32>
    %cst_14 = arith.constant 0.000000e+00 : f32
    %30 = vector.broadcast %cst_14 : f32 to vector<128x128xf32>
    %31 = arith.select %5, %29, %30 : vector<128x128xi1>, vector<128x128xf32>
    %c0_15 = arith.constant 0 : index
    %c0_16 = arith.constant 0 : index
    %32 = vector.load %arg9[%c0_15, %c0_16] : memref<128x4xf32, #tpu.memory_space<vmem>>, vector<128x1xf32>
    %33 = arith.mulf %26, %32 : vector<128x1xf32>
    %cst_17 = arith.constant dense<0.000000e+00> : vector<128xf32>
    %34 = vector.multi_reduction <add>, %31, %cst_17 [1] : vector<128x128xf32> to vector<128xf32>
    %35 = vector.shape_cast %34 : vector<128xf32> to vector<128x1xf32>
    %36 = arith.addf %33, %35 : vector<128x1xf32>
    %c0_18 = arith.constant 0 : index
    %c0_19 = arith.constant 0 : index
    %37 = vector.load %arg9[%c0_18, %c0_19] : memref<128x4xf32, #tpu.memory_space<vmem>>, vector<128x1xf32>
    tpu.vector_store %arg9[%c0_18, %c0_19], %36 {strides = array<i32>} : memref<128x4xf32, #tpu.memory_space<vmem>>, vector<128x1xf32>,
    %c0_20 = arith.constant 0 : index
    %c0_21 = arith.constant 0 : index
    %38 = vector.load %arg10[%c0_20, %c0_21] : memref<128x128xf32, #tpu.memory_space<vmem>>, vector<128x32xf32>
    %39 = vector.broadcast %26 : vector<128x1xf32> to vector<128x32xf32>
    %40 = arith.mulf %39, %38 : vector<128x32xf32>
    %41 = arith.truncf %31 : vector<128x128xf32> to vector<128x128xbf16>
    %42 = vector.extract_strided_slice %8 {offsets = [0, 0], sizes = [128, 32], strides = [1, 1]} : vector<128x128xbf16> to vector<128x32xbf16>
    %cst_22 = arith.constant dense<0.000000e+00> : vector<128x32xf32>
    %43 = tpu.matmul %41, %42, %cst_22 {dimension_numbers = #tpu.dot_dimension_numbers<[1], [0], [0], [1], [0, 0, 1, 1], [], []>} : vector<128x128xbf16>, vector<128x32xbf16>, vector<128x32xf32> -> vector<128x32xf32>
    %44 = arith.addf %40, %43 : vector<128x32xf32>
    %c0_23 = arith.constant 0 : index
    %c0_24 = arith.constant 0 : index
    %45 = vector.load %arg10[%c0_23, %c0_24] : memref<128x128xf32, #tpu.memory_space<vmem>>, vector<128x32xf32>
    tpu.vector_store %arg10[%c0_23, %c0_24], %44 {strides = array<i32>} : memref<128x128xf32, #tpu.memory_space<vmem>>, vector<128x32xf32>,
    %c0_25 = arith.constant 0 : index
    %c0_26 = arith.constant 0 : index
    %46 = vector.load %arg8[%c0_25, %c0_26] : memref<128x4xf32, #tpu.memory_space<vmem>>, vector<128x1xf32>
    tpu.vector_store %arg8[%c0_25, %c0_26], %24 {strides = array<i32>} : memref<128x4xf32, #tpu.memory_space<vmem>>, vector<128x1xf32>,
    %47 = vector.extract_strided_slice %6 {offsets = [0, 1], sizes = [128, 1], strides = [1, 1]} : vector<128x4xf32> to vector<128x1xf32>
    %48 = vector.extract_strided_slice %7 {offsets = [1, 0], sizes = [1, 128], strides = [1, 1]} : vector<4x128xf32> to vector<1x128xf32>
    %49 = vector.broadcast %47 : vector<128x1xf32> to vector<128x128xf32>
    %50 = vector.broadcast %48 : vector<1x128xf32> to vector<128x128xf32>
    %51 = arith.addf %49, %50 : vector<128x128xf32>
    %cst_27 = arith.constant 0.000000e+00 : f32
    %52 = vector.broadcast %cst_27 : f32 to vector<128x128xf32>
    %53 = arith.cmpf ogt, %51, %52 : vector<128x128xf32>
    %cst_28 = arith.constant 2.000000e-01 : f32
    %54 = vector.broadcast %cst_28 : f32 to vector<128x128xf32>
    %55 = arith.mulf %54, %51 : vector<128x128xf32>
    %56 = arith.select %53, %51, %55 : vector<128x128xi1>, vector<128x128xf32>
    %cst_29 = arith.constant -1.000000e+30 : f32
    %57 = vector.broadcast %cst_29 : f32 to vector<128x128xf32>
    %58 = arith.select %5, %56, %57 : vector<128x128xi1>, vector<128x128xf32>
    %c0_30 = arith.constant 0 : index
    %c1 = arith.constant 1 : index
    %59 = vector.load %arg8[%c0_30, %c1] : memref<128x4xf32, #tpu.memory_space<vmem>>, vector<128x1xf32>
    %cst_31 = arith.constant dense<0xFF800000> : vector<128xf32>
    %60 = vector.multi_reduction <maximumf>, %58, %cst_31 [1] : vector<128x128xf32> to vector<128xf32>
    %61 = vector.shape_cast %60 : vector<128xf32> to vector<128x1xf32>
    %62 = arith.maximumf %59, %61 : vector<128x1xf32>
    %63 = arith.subf %59, %62 : vector<128x1xf32>
    %64 = math.exp %63 : vector<128x1xf32>
    %65 = vector.broadcast %62 : vector<128x1xf32> to vector<128x128xf32>
    %66 = arith.subf %58, %65 : vector<128x128xf32>
    %67 = math.exp %66 : vector<128x128xf32>
    %cst_32 = arith.constant 0.000000e+00 : f32
    %68 = vector.broadcast %cst_32 : f32 to vector<128x128xf32>
    %69 = arith.select %5, %67, %68 : vector<128x128xi1>, vector<128x128xf32>
    %c0_33 = arith.constant 0 : index
    %c1_34 = arith.constant 1 : index
    %70 = vector.load %arg9[%c0_33, %c1_34] : memref<128x4xf32, #tpu.memory_space<vmem>>, vector<128x1xf32>
    %71 = arith.mulf %64, %70 : vector<128x1xf32>
    %cst_35 = arith.constant dense<0.000000e+00> : vector<128xf32>
    %72 = vector.multi_reduction <add>, %69, %cst_35 [1] : vector<128x128xf32> to vector<128xf32>
    %73 = vector.shape_cast %72 : vector<128xf32> to vector<128x1xf32>
    %74 = arith.addf %71, %73 : vector<128x1xf32>
    %c0_36 = arith.constant 0 : index
    %c1_37 = arith.constant 1 : index
    %75 = vector.load %arg9[%c0_36, %c1_37] : memref<128x4xf32, #tpu.memory_space<vmem>>, vector<128x1xf32>
    tpu.vector_store %arg9[%c0_36, %c1_37], %74 {strides = array<i32>} : memref<128x4xf32, #tpu.memory_space<vmem>>, vector<128x1xf32>,
    %c0_38 = arith.constant 0 : index
    %c32 = arith.constant 32 : index
    %76 = vector.load %arg10[%c0_38, %c32] : memref<128x128xf32, #tpu.memory_space<vmem>>, vector<128x32xf32>
    %77 = vector.broadcast %64 : vector<128x1xf32> to vector<128x32xf32>
    %78 = arith.mulf %77, %76 : vector<128x32xf32>
    %79 = arith.truncf %69 : vector<128x128xf32> to vector<128x128xbf16>
    %80 = vector.extract_strided_slice %8 {offsets = [0, 32], sizes = [128, 32], strides = [1, 1]} : vector<128x128xbf16> to vector<128x32xbf16>
    %cst_39 = arith.constant dense<0.000000e+00> : vector<128x32xf32>
    %81 = tpu.matmul %79, %80, %cst_39 {dimension_numbers = #tpu.dot_dimension_numbers<[1], [0], [0], [1], [0, 0, 1, 1], [], []>} : vector<128x128xbf16>, vector<128x32xbf16>, vector<128x32xf32> -> vector<128x32xf32>
    %82 = arith.addf %78, %81 : vector<128x32xf32>
    %c0_40 = arith.constant 0 : index
    %c32_41 = arith.constant 32 : index
    %83 = vector.load %arg10[%c0_40, %c32_41] : memref<128x128xf32, #tpu.memory_space<vmem>>, vector<128x32xf32>
    tpu.vector_store %arg10[%c0_40, %c32_41], %82 {strides = array<i32>} : memref<128x128xf32, #tpu.memory_space<vmem>>, vector<128x32xf32>,
    %c0_42 = arith.constant 0 : index
    %c1_43 = arith.constant 1 : index
    %84 = vector.load %arg8[%c0_42, %c1_43] : memref<128x4xf32, #tpu.memory_space<vmem>>, vector<128x1xf32>
    tpu.vector_store %arg8[%c0_42, %c1_43], %62 {strides = array<i32>} : memref<128x4xf32, #tpu.memory_space<vmem>>, vector<128x1xf32>,
    %85 = vector.extract_strided_slice %6 {offsets = [0, 2], sizes = [128, 1], strides = [1, 1]} : vector<128x4xf32> to vector<128x1xf32>
    %86 = vector.extract_strided_slice %7 {offsets = [2, 0], sizes = [1, 128], strides = [1, 1]} : vector<4x128xf32> to vector<1x128xf32>
    %87 = vector.broadcast %85 : vector<128x1xf32> to vector<128x128xf32>
    %88 = vector.broadcast %86 : vector<1x128xf32> to vector<128x128xf32>
    %89 = arith.addf %87, %88 : vector<128x128xf32>
    %cst_44 = arith.constant 0.000000e+00 : f32
    %90 = vector.broadcast %cst_44 : f32 to vector<128x128xf32>
    %91 = arith.cmpf ogt, %89, %90 : vector<128x128xf32>
    %cst_45 = arith.constant 2.000000e-01 : f32
    %92 = vector.broadcast %cst_45 : f32 to vector<128x128xf32>
    %93 = arith.mulf %92, %89 : vector<128x128xf32>
    %94 = arith.select %91, %89, %93 : vector<128x128xi1>, vector<128x128xf32>
    %cst_46 = arith.constant -1.000000e+30 : f32
    %95 = vector.broadcast %cst_46 : f32 to vector<128x128xf32>
    %96 = arith.select %5, %94, %95 : vector<128x128xi1>, vector<128x128xf32>
    %c0_47 = arith.constant 0 : index
    %c2 = arith.constant 2 : index
    %97 = vector.load %arg8[%c0_47, %c2] : memref<128x4xf32, #tpu.memory_space<vmem>>, vector<128x1xf32>
    %cst_48 = arith.constant dense<0xFF800000> : vector<128xf32>
    %98 = vector.multi_reduction <maximumf>, %96, %cst_48 [1] : vector<128x128xf32> to vector<128xf32>
    %99 = vector.shape_cast %98 : vector<128xf32> to vector<128x1xf32>
    %100 = arith.maximumf %97, %99 : vector<128x1xf32>
    %101 = arith.subf %97, %100 : vector<128x1xf32>
    %102 = math.exp %101 : vector<128x1xf32>
    %103 = vector.broadcast %100 : vector<128x1xf32> to vector<128x128xf32>
    %104 = arith.subf %96, %103 : vector<128x128xf32>
    %105 = math.exp %104 : vector<128x128xf32>
    %cst_49 = arith.constant 0.000000e+00 : f32
    %106 = vector.broadcast %cst_49 : f32 to vector<128x128xf32>
    %107 = arith.select %5, %105, %106 : vector<128x128xi1>, vector<128x128xf32>
    %c0_50 = arith.constant 0 : index
    %c2_51 = arith.constant 2 : index
    %108 = vector.load %arg9[%c0_50, %c2_51] : memref<128x4xf32, #tpu.memory_space<vmem>>, vector<128x1xf32>
    %109 = arith.mulf %102, %108 : vector<128x1xf32>
    %cst_52 = arith.constant dense<0.000000e+00> : vector<128xf32>
    %110 = vector.multi_reduction <add>, %107, %cst_52 [1] : vector<128x128xf32> to vector<128xf32>
    %111 = vector.shape_cast %110 : vector<128xf32> to vector<128x1xf32>
    %112 = arith.addf %109, %111 : vector<128x1xf32>
    %c0_53 = arith.constant 0 : index
    %c2_54 = arith.constant 2 : index
    %113 = vector.load %arg9[%c0_53, %c2_54] : memref<128x4xf32, #tpu.memory_space<vmem>>, vector<128x1xf32>
    tpu.vector_store %arg9[%c0_53, %c2_54], %112 {strides = array<i32>} : memref<128x4xf32, #tpu.memory_space<vmem>>, vector<128x1xf32>,
    %c0_55 = arith.constant 0 : index
    %c64 = arith.constant 64 : index
    %114 = vector.load %arg10[%c0_55, %c64] : memref<128x128xf32, #tpu.memory_space<vmem>>, vector<128x32xf32>
    %115 = vector.broadcast %102 : vector<128x1xf32> to vector<128x32xf32>
    %116 = arith.mulf %115, %114 : vector<128x32xf32>
    %117 = arith.truncf %107 : vector<128x128xf32> to vector<128x128xbf16>
    %118 = vector.extract_strided_slice %8 {offsets = [0, 64], sizes = [128, 32], strides = [1, 1]} : vector<128x128xbf16> to vector<128x32xbf16>
    %cst_56 = arith.constant dense<0.000000e+00> : vector<128x32xf32>
    %119 = tpu.matmul %117, %118, %cst_56 {dimension_numbers = #tpu.dot_dimension_numbers<[1], [0], [0], [1], [0, 0, 1, 1], [], []>} : vector<128x128xbf16>, vector<128x32xbf16>, vector<128x32xf32> -> vector<128x32xf32>
    %120 = arith.addf %116, %119 : vector<128x32xf32>
    %c0_57 = arith.constant 0 : index
    %c64_58 = arith.constant 64 : index
    %121 = vector.load %arg10[%c0_57, %c64_58] : memref<128x128xf32, #tpu.memory_space<vmem>>, vector<128x32xf32>
    tpu.vector_store %arg10[%c0_57, %c64_58], %120 {strides = array<i32>} : memref<128x128xf32, #tpu.memory_space<vmem>>, vector<128x32xf32>,
    %c0_59 = arith.constant 0 : index
    %c2_60 = arith.constant 2 : index
    %122 = vector.load %arg8[%c0_59, %c2_60] : memref<128x4xf32, #tpu.memory_space<vmem>>, vector<128x1xf32>
    tpu.vector_store %arg8[%c0_59, %c2_60], %100 {strides = array<i32>} : memref<128x4xf32, #tpu.memory_space<vmem>>, vector<128x1xf32>,
    %123 = vector.extract_strided_slice %6 {offsets = [0, 3], sizes = [128, 1], strides = [1, 1]} : vector<128x4xf32> to vector<128x1xf32>
    %124 = vector.extract_strided_slice %7 {offsets = [3, 0], sizes = [1, 128], strides = [1, 1]} : vector<4x128xf32> to vector<1x128xf32>
    %125 = vector.broadcast %123 : vector<128x1xf32> to vector<128x128xf32>
    %126 = vector.broadcast %124 : vector<1x128xf32> to vector<128x128xf32>
    %127 = arith.addf %125, %126 : vector<128x128xf32>
    %cst_61 = arith.constant 0.000000e+00 : f32
    %128 = vector.broadcast %cst_61 : f32 to vector<128x128xf32>
    %129 = arith.cmpf ogt, %127, %128 : vector<128x128xf32>
    %cst_62 = arith.constant 2.000000e-01 : f32
    %130 = vector.broadcast %cst_62 : f32 to vector<128x128xf32>
    %131 = arith.mulf %130, %127 : vector<128x128xf32>
    %132 = arith.select %129, %127, %131 : vector<128x128xi1>, vector<128x128xf32>
    %cst_63 = arith.constant -1.000000e+30 : f32
    %133 = vector.broadcast %cst_63 : f32 to vector<128x128xf32>
    %134 = arith.select %5, %132, %133 : vector<128x128xi1>, vector<128x128xf32>
    %c0_64 = arith.constant 0 : index
    %c3 = arith.constant 3 : index
    %135 = vector.load %arg8[%c0_64, %c3] : memref<128x4xf32, #tpu.memory_space<vmem>>, vector<128x1xf32>
    %cst_65 = arith.constant dense<0xFF800000> : vector<128xf32>
    %136 = vector.multi_reduction <maximumf>, %134, %cst_65 [1] : vector<128x128xf32> to vector<128xf32>
    %137 = vector.shape_cast %136 : vector<128xf32> to vector<128x1xf32>
    %138 = arith.maximumf %135, %137 : vector<128x1xf32>
    %139 = arith.subf %135, %138 : vector<128x1xf32>
    %140 = math.exp %139 : vector<128x1xf32>
    %141 = vector.broadcast %138 : vector<128x1xf32> to vector<128x128xf32>
    %142 = arith.subf %134, %141 : vector<128x128xf32>
    %143 = math.exp %142 : vector<128x128xf32>
    %cst_66 = arith.constant 0.000000e+00 : f32
    %144 = vector.broadcast %cst_66 : f32 to vector<128x128xf32>
    %145 = arith.select %5, %143, %144 : vector<128x128xi1>, vector<128x128xf32>
    %c0_67 = arith.constant 0 : index
    %c3_68 = arith.constant 3 : index
    %146 = vector.load %arg9[%c0_67, %c3_68] : memref<128x4xf32, #tpu.memory_space<vmem>>, vector<128x1xf32>
    %147 = arith.mulf %140, %146 : vector<128x1xf32>
    %cst_69 = arith.constant dense<0.000000e+00> : vector<128xf32>
    %148 = vector.multi_reduction <add>, %145, %cst_69 [1] : vector<128x128xf32> to vector<128xf32>
    %149 = vector.shape_cast %148 : vector<128xf32> to vector<128x1xf32>
    %150 = arith.addf %147, %149 : vector<128x1xf32>
    %c0_70 = arith.constant 0 : index
    %c3_71 = arith.constant 3 : index
    %151 = vector.load %arg9[%c0_70, %c3_71] : memref<128x4xf32, #tpu.memory_space<vmem>>, vector<128x1xf32>
    tpu.vector_store %arg9[%c0_70, %c3_71], %150 {strides = array<i32>} : memref<128x4xf32, #tpu.memory_space<vmem>>, vector<128x1xf32>,
    %c0_72 = arith.constant 0 : index
    %c96 = arith.constant 96 : index
    %152 = vector.load %arg10[%c0_72, %c96] : memref<128x128xf32, #tpu.memory_space<vmem>>, vector<128x32xf32>
    %153 = vector.broadcast %140 : vector<128x1xf32> to vector<128x32xf32>
    %154 = arith.mulf %153, %152 : vector<128x32xf32>
    %155 = arith.truncf %145 : vector<128x128xf32> to vector<128x128xbf16>
    %156 = vector.extract_strided_slice %8 {offsets = [0, 96], sizes = [128, 32], strides = [1, 1]} : vector<128x128xbf16> to vector<128x32xbf16>
    %cst_73 = arith.constant dense<0.000000e+00> : vector<128x32xf32>
    %157 = tpu.matmul %155, %156, %cst_73 {dimension_numbers = #tpu.dot_dimension_numbers<[1], [0], [0], [1], [0, 0, 1, 1], [], []>} : vector<128x128xbf16>, vector<128x32xbf16>, vector<128x32xf32> -> vector<128x32xf32>
    %158 = arith.addf %154, %157 : vector<128x32xf32>
    %c0_74 = arith.constant 0 : index
    %c96_75 = arith.constant 96 : index
    %159 = vector.load %arg10[%c0_74, %c96_75] : memref<128x128xf32, #tpu.memory_space<vmem>>, vector<128x32xf32>
    tpu.vector_store %arg10[%c0_74, %c96_75], %158 {strides = array<i32>} : memref<128x128xf32, #tpu.memory_space<vmem>>, vector<128x32xf32>,
    %c0_76 = arith.constant 0 : index
    %c3_77 = arith.constant 3 : index
    %160 = vector.load %arg8[%c0_76, %c3_77] : memref<128x4xf32, #tpu.memory_space<vmem>>, vector<128x1xf32>
    tpu.vector_store %arg8[%c0_76, %c3_77], %138 {strides = array<i32>} : memref<128x4xf32, #tpu.memory_space<vmem>>, vector<128x1xf32>,
    %c1_i32 = arith.constant 1 : i32
    %161 = arith.cmpi eq, %arg1, %c1_i32 : i32
    %162 = arith.extui %161 : i1 to i32
    %c0_i32_78 = arith.constant 0 : i32
    %163 = arith.cmpi ne, %162, %c0_i32_78 : i32
    scf.if %163 {
      %c0_79 = arith.constant 0 : index
      %c0_80 = arith.constant 0 : index
      %164 = vector.load %arg9[%c0_79, %c0_80] : memref<128x4xf32, #tpu.memory_space<vmem>>, vector<128x4xf32>
      %cst_81 = arith.constant 9.99999968E-21 : f32
      %165 = vector.broadcast %cst_81 : f32 to vector<128x4xf32>
      %166 = arith.maximumf %164, %165 : vector<128x4xf32>
      %167 = tpu.reciprocal %166 {approx = true} : vector<128x4xf32> -> vector<128x4xf32>
      %c0_82 = arith.constant 0 : index
      %c0_83 = arith.constant 0 : index
      %168 = vector.load %arg6[%c0_82, %c0_83] : memref<1x128xf32, #tpu.memory_space<vmem>>, vector<1x128xf32>
      %c0_84 = arith.constant 0 : index
      %c0_85 = arith.constant 0 : index
      %169 = vector.load %arg10[%c0_84, %c0_85] : memref<128x128xf32, #tpu.memory_space<vmem>>, vector<128x32xf32>
      %170 = vector.extract_strided_slice %167 {offsets = [0, 0], sizes = [128, 1], strides = [1, 1]} : vector<128x4xf32> to vector<128x1xf32>
      %171 = vector.broadcast %170 : vector<128x1xf32> to vector<128x32xf32>
      %172 = arith.mulf %169, %171 : vector<128x32xf32>
      %173 = vector.extract_strided_slice %168 {offsets = [0, 0], sizes = [1, 32], strides = [1, 1]} : vector<1x128xf32> to vector<1x32xf32>
      %174 = vector.broadcast %173 : vector<1x32xf32> to vector<128x32xf32>
      %175 = arith.addf %172, %174 : vector<128x32xf32>
      %cst_86 = arith.constant 0.000000e+00 : f32
      %176 = vector.broadcast %cst_86 : f32 to vector<128x32xf32>
      %177 = arith.cmpf ogt, %175, %176 : vector<128x32xf32>
      %178 = math.exp %175 : vector<128x32xf32>
      %cst_87 = arith.constant 1.000000e+00 : f32
      %179 = vector.broadcast %cst_87 : f32 to vector<128x32xf32>
      %180 = arith.subf %178, %179 : vector<128x32xf32>
      %181 = arith.select %177, %175, %180 : vector<128x32xi1>, vector<128x32xf32>
      %182 = arith.truncf %181 : vector<128x32xf32> to vector<128x32xbf16>
      %c0_88 = arith.constant 0 : index
      %c0_89 = arith.constant 0 : index
      %183 = vector.load %arg7[%c0_88, %c0_89] : memref<128x128xbf16, #tpu.memory_space<vmem>>, vector<128x32xbf16>
      tpu.vector_store %arg7[%c0_88, %c0_89], %182 {strides = array<i32>} : memref<128x128xbf16, #tpu.memory_space<vmem>>, vector<128x32xbf16>,
      %c0_90 = arith.constant 0 : index
      %c32_91 = arith.constant 32 : index
      %184 = vector.load %arg10[%c0_90, %c32_91] : memref<128x128xf32, #tpu.memory_space<vmem>>, vector<128x32xf32>
      %185 = vector.extract_strided_slice %167 {offsets = [0, 1], sizes = [128, 1], strides = [1, 1]} : vector<128x4xf32> to vector<128x1xf32>
      %186 = vector.broadcast %185 : vector<128x1xf32> to vector<128x32xf32>
      %187 = arith.mulf %184, %186 : vector<128x32xf32>
      %188 = vector.extract_strided_slice %168 {offsets = [0, 32], sizes = [1, 32], strides = [1, 1]} : vector<1x128xf32> to vector<1x32xf32>
      %189 = vector.broadcast %188 : vector<1x32xf32> to vector<128x32xf32>
      %190 = arith.addf %187, %189 : vector<128x32xf32>
      %cst_92 = arith.constant 0.000000e+00 : f32
      %191 = vector.broadcast %cst_92 : f32 to vector<128x32xf32>
      %192 = arith.cmpf ogt, %190, %191 : vector<128x32xf32>
      %193 = math.exp %190 : vector<128x32xf32>
      %cst_93 = arith.constant 1.000000e+00 : f32
      %194 = vector.broadcast %cst_93 : f32 to vector<128x32xf32>
      %195 = arith.subf %193, %194 : vector<128x32xf32>
      %196 = arith.select %192, %190, %195 : vector<128x32xi1>, vector<128x32xf32>
      %197 = arith.truncf %196 : vector<128x32xf32> to vector<128x32xbf16>
      %c0_94 = arith.constant 0 : index
      %c32_95 = arith.constant 32 : index
      %198 = vector.load %arg7[%c0_94, %c32_95] : memref<128x128xbf16, #tpu.memory_space<vmem>>, vector<128x32xbf16>
      tpu.vector_store %arg7[%c0_94, %c32_95], %197 {strides = array<i32>} : memref<128x128xbf16, #tpu.memory_space<vmem>>, vector<128x32xbf16>,
      %c0_96 = arith.constant 0 : index
      %c64_97 = arith.constant 64 : index
      %199 = vector.load %arg10[%c0_96, %c64_97] : memref<128x128xf32, #tpu.memory_space<vmem>>, vector<128x32xf32>
      %200 = vector.extract_strided_slice %167 {offsets = [0, 2], sizes = [128, 1], strides = [1, 1]} : vector<128x4xf32> to vector<128x1xf32>
      %201 = vector.broadcast %200 : vector<128x1xf32> to vector<128x32xf32>
      %202 = arith.mulf %199, %201 : vector<128x32xf32>
      %203 = vector.extract_strided_slice %168 {offsets = [0, 64], sizes = [1, 32], strides = [1, 1]} : vector<1x128xf32> to vector<1x32xf32>
      %204 = vector.broadcast %203 : vector<1x32xf32> to vector<128x32xf32>
      %205 = arith.addf %202, %204 : vector<128x32xf32>
      %cst_98 = arith.constant 0.000000e+00 : f32
      %206 = vector.broadcast %cst_98 : f32 to vector<128x32xf32>
      %207 = arith.cmpf ogt, %205, %206 : vector<128x32xf32>
      %208 = math.exp %205 : vector<128x32xf32>
      %cst_99 = arith.constant 1.000000e+00 : f32
      %209 = vector.broadcast %cst_99 : f32 to vector<128x32xf32>
      %210 = arith.subf %208, %209 : vector<128x32xf32>
      %211 = arith.select %207, %205, %210 : vector<128x32xi1>, vector<128x32xf32>
      %212 = arith.truncf %211 : vector<128x32xf32> to vector<128x32xbf16>
      %c0_100 = arith.constant 0 : index
      %c64_101 = arith.constant 64 : index
      %213 = vector.load %arg7[%c0_100, %c64_101] : memref<128x128xbf16, #tpu.memory_space<vmem>>, vector<128x32xbf16>
      tpu.vector_store %arg7[%c0_100, %c64_101], %212 {strides = array<i32>} : memref<128x128xbf16, #tpu.memory_space<vmem>>, vector<128x32xbf16>,
      %c0_102 = arith.constant 0 : index
      %c96_103 = arith.constant 96 : index
      %214 = vector.load %arg10[%c0_102, %c96_103] : memref<128x128xf32, #tpu.memory_space<vmem>>, vector<128x32xf32>
      %215 = vector.extract_strided_slice %167 {offsets = [0, 3], sizes = [128, 1], strides = [1, 1]} : vector<128x4xf32> to vector<128x1xf32>
      %216 = vector.broadcast %215 : vector<128x1xf32> to vector<128x32xf32>
      %217 = arith.mulf %214, %216 : vector<128x32xf32>
      %218 = vector.extract_strided_slice %168 {offsets = [0, 96], sizes = [1, 32], strides = [1, 1]} : vector<1x128xf32> to vector<1x32xf32>
      %219 = vector.broadcast %218 : vector<1x32xf32> to vector<128x32xf32>
      %220 = arith.addf %217, %219 : vector<128x32xf32>
      %cst_104 = arith.constant 0.000000e+00 : f32
      %221 = vector.broadcast %cst_104 : f32 to vector<128x32xf32>
      %222 = arith.cmpf ogt, %220, %221 : vector<128x32xf32>
      %223 = math.exp %220 : vector<128x32xf32>
      %cst_105 = arith.constant 1.000000e+00 : f32
      %224 = vector.broadcast %cst_105 : f32 to vector<128x32xf32>
      %225 = arith.subf %223, %224 : vector<128x32xf32>
      %226 = arith.select %222, %220, %225 : vector<128x32xi1>, vector<128x32xf32>
      %227 = arith.truncf %226 : vector<128x32xf32> to vector<128x32xbf16>
      %c0_106 = arith.constant 0 : index
      %c96_107 = arith.constant 96 : index
      %228 = vector.load %arg7[%c0_106, %c96_107] : memref<128x128xbf16, #tpu.memory_space<vmem>>, vector<128x32xbf16>
      tpu.vector_store %arg7[%c0_106, %c96_107], %227 {strides = array<i32>} : memref<128x128xbf16, #tpu.memory_space<vmem>>, vector<128x32xbf16>,
    } else {
    }
    return
  }
  func.func @transform_0(%arg0: i32, %arg1: i32) -> (i32, i32) {
    %c0_i32 = arith.constant 0 : i32
    return %arg0, %arg1 : i32, i32
  }
  func.func @transform_1(%arg0: i32, %arg1: i32) -> (i32, i32) {
    %c0_i32 = arith.constant 0 : i32
    %c0_i32_0 = arith.constant 0 : i32
    return %arg1, %c0_i32 : i32, i32
  }
  func.func @transform_2(%arg0: i32, %arg1: i32) -> (i32, i32) {
    %c0_i32 = arith.constant 0 : i32
    %c0_i32_0 = arith.constant 0 : i32
    return %arg0, %c0_i32 : i32, i32
  }
  func.func @transform_3(%arg0: i32, %arg1: i32) -> (i32, i32) {
    %c0_i32 = arith.constant 0 : i32
    %c0_i32_0 = arith.constant 0 : i32
    return %c0_i32, %arg1 : i32, i32
  }
  func.func @transform_4(%arg0: i32, %arg1: i32) -> (i32, i32) {
    %c0_i32 = arith.constant 0 : i32
    %c0_i32_0 = arith.constant 0 : i32
    %c0_i32_1 = arith.constant 0 : i32
    return %c0_i32, %c0_i32_0 : i32, i32
  }
  func.func @transform_5(%arg0: i32, %arg1: i32) -> (i32, i32) {
    %c0_i32 = arith.constant 0 : i32
    %c0_i32_0 = arith.constant 0 : i32
    return %arg0, %c0_i32 : i32, i32
  }
}

module attributes {stable_mosaic.version = 11 : i64} {
  func.func @_project_kernel(%arg0: i32, %arg1: memref<128x128xbf16, #tpu.memory_space<vmem>>, %arg2: memref<128x128xf32, #tpu.memory_space<vmem>>, %arg3: memref<128x4xf32, #tpu.memory_space<vmem>>, %arg4: memref<128x4xf32, #tpu.memory_space<vmem>>, %arg5: memref<128x128xbf16, #tpu.memory_space<vmem>>, %arg6: memref<128x4xf32, #tpu.memory_space<vmem>>, %arg7: memref<128x4xf32, #tpu.memory_space<vmem>>) attributes {dimension_semantics = [#tpu.dimension_semantics<parallel>], iteration_bounds = array<i64: 2>, scalar_prefetch = 0 : i64, scratch_operands = 0 : i64, tpu.core_type = #tpu.core_type<tc>, window_params = [{transform_indices = @transform_0, window_bounds = array<i64: 128, 128>}, {pipeline_mode = #tpu.pipeline_mode<synchronous>, transform_indices = @transform_1, window_bounds = array<i64: 128, 128>}, {pipeline_mode = #tpu.pipeline_mode<synchronous>, transform_indices = @transform_2, window_bounds = array<i64: 128, 4>}, {pipeline_mode = #tpu.pipeline_mode<synchronous>, transform_indices = @transform_3, window_bounds = array<i64: 128, 4>}, {transform_indices = @transform_4, window_bounds = array<i64: 128, 128>}, {transform_indices = @transform_5, window_bounds = array<i64: 128, 4>}, {transform_indices = @transform_6, window_bounds = array<i64: 128, 4>}]} {
    %c0 = arith.constant 0 : index
    %c0_0 = arith.constant 0 : index
    %0 = vector.load %arg1[%c0, %c0_0] : memref<128x128xbf16, #tpu.memory_space<vmem>>, vector<128x128xbf16>
    %1 = arith.extf %0 : vector<128x128xbf16> to vector<128x128xf32>
    %2 = arith.truncf %1 : vector<128x128xf32> to vector<128x128xbf16>
    %c0_1 = arith.constant 0 : index
    %c0_2 = arith.constant 0 : index
    %3 = vector.load %arg2[%c0_1, %c0_2] : memref<128x128xf32, #tpu.memory_space<vmem>>, vector<128x128xf32>
    %4 = arith.truncf %3 : vector<128x128xf32> to vector<128x128xbf16>
    %cst = arith.constant dense<0.000000e+00> : vector<128x128xf32>
    %5 = tpu.matmul %2, %4, %cst {dimension_numbers = #tpu.dot_dimension_numbers<[1], [0], [0], [1], [0, 0, 1, 1], [], []>} : vector<128x128xbf16>, vector<128x128xbf16>, vector<128x128xf32> -> vector<128x128xf32>
    %6 = arith.truncf %5 : vector<128x128xf32> to vector<128x128xbf16>
    %c0_3 = arith.constant 0 : index
    %c0_4 = arith.constant 0 : index
    %7 = vector.load %arg5[%c0_3, %c0_4] : memref<128x128xbf16, #tpu.memory_space<vmem>>, vector<128x128xbf16>
    tpu.vector_store %arg5[%c0_3, %c0_4], %6 {strides = array<i32>} : memref<128x128xbf16, #tpu.memory_space<vmem>>, vector<128x128xbf16>,
    %c0_5 = arith.constant 0 : index
    %c0_6 = arith.constant 0 : index
    %8 = vector.load %arg3[%c0_5, %c0_6] : memref<128x4xf32, #tpu.memory_space<vmem>>, vector<128x4xf32>
    %cst_7 = arith.constant dense<0.000000e+00> : vector<128x4xf32>
    %9 = tpu.matmul %1, %8, %cst_7 {dimension_numbers = #tpu.dot_dimension_numbers<[1], [0], [0], [1], [0, 0, 1, 1], [], []>} : vector<128x128xf32>, vector<128x4xf32>, vector<128x4xf32> -> vector<128x4xf32>
    %c0_8 = arith.constant 0 : index
    %c0_9 = arith.constant 0 : index
    %10 = vector.load %arg6[%c0_8, %c0_9] : memref<128x4xf32, #tpu.memory_space<vmem>>, vector<128x4xf32>
    tpu.vector_store %arg6[%c0_8, %c0_9], %9 {strides = array<i32>} : memref<128x4xf32, #tpu.memory_space<vmem>>, vector<128x4xf32>,
    %c0_10 = arith.constant 0 : index
    %c0_11 = arith.constant 0 : index
    %11 = vector.load %arg4[%c0_10, %c0_11] : memref<128x4xf32, #tpu.memory_space<vmem>>, vector<128x4xf32>
    %cst_12 = arith.constant dense<0.000000e+00> : vector<128x4xf32>
    %12 = tpu.matmul %1, %11, %cst_12 {dimension_numbers = #tpu.dot_dimension_numbers<[1], [0], [0], [1], [0, 0, 1, 1], [], []>} : vector<128x128xf32>, vector<128x4xf32>, vector<128x4xf32> -> vector<128x4xf32>
    %c0_13 = arith.constant 0 : index
    %c0_14 = arith.constant 0 : index
    %13 = vector.load %arg7[%c0_13, %c0_14] : memref<128x4xf32, #tpu.memory_space<vmem>>, vector<128x4xf32>
    tpu.vector_store %arg7[%c0_13, %c0_14], %12 {strides = array<i32>} : memref<128x4xf32, #tpu.memory_space<vmem>>, vector<128x4xf32>,
    return
  }
  func.func @transform_0(%arg0: i32) -> (i32, i32) {
    %c0_i32 = arith.constant 0 : i32
    %c0_i32_0 = arith.constant 0 : i32
    return %arg0, %c0_i32 : i32, i32
  }
  func.func @transform_1(%arg0: i32) -> (i32, i32) {
    %c0_i32 = arith.constant 0 : i32
    %c0_i32_0 = arith.constant 0 : i32
    %c0_i32_1 = arith.constant 0 : i32
    return %c0_i32, %c0_i32_0 : i32, i32
  }
  func.func @transform_2(%arg0: i32) -> (i32, i32) {
    %c0_i32 = arith.constant 0 : i32
    %c0_i32_0 = arith.constant 0 : i32
    %c0_i32_1 = arith.constant 0 : i32
    return %c0_i32, %c0_i32_0 : i32, i32
  }
  func.func @transform_3(%arg0: i32) -> (i32, i32) {
    %c0_i32 = arith.constant 0 : i32
    %c0_i32_0 = arith.constant 0 : i32
    %c0_i32_1 = arith.constant 0 : i32
    return %c0_i32, %c0_i32_0 : i32, i32
  }
  func.func @transform_4(%arg0: i32) -> (i32, i32) {
    %c0_i32 = arith.constant 0 : i32
    %c0_i32_0 = arith.constant 0 : i32
    return %arg0, %c0_i32 : i32, i32
  }
  func.func @transform_5(%arg0: i32) -> (i32, i32) {
    %c0_i32 = arith.constant 0 : i32
    %c0_i32_0 = arith.constant 0 : i32
    return %arg0, %c0_i32 : i32, i32
  }
  func.func @transform_6(%arg0: i32) -> (i32, i32) {
    %c0_i32 = arith.constant 0 : i32
    %c0_i32_0 = arith.constant 0 : i32
    return %arg0, %c0_i32 : i32, i32
  }
}

module attributes {stable_mosaic.version = 11 : i64} {
  func.func @_project_kernel(%arg0: i32, %arg1: memref<128x128xbf16, #tpu.memory_space<vmem>>, %arg2: memref<128x8xf32, #tpu.memory_space<vmem>>, %arg3: memref<128x1xf32, #tpu.memory_space<vmem>>, %arg4: memref<128x1xf32, #tpu.memory_space<vmem>>, %arg5: memref<128x8xbf16, #tpu.memory_space<vmem>>, %arg6: memref<128x1xf32, #tpu.memory_space<vmem>>, %arg7: memref<128x1xf32, #tpu.memory_space<vmem>>) attributes {dimension_semantics = [#tpu.dimension_semantics<parallel>], iteration_bounds = array<i64: 2>, scalar_prefetch = 0 : i64, scratch_operands = 0 : i64, tpu.core_type = #tpu.core_type<tc>, window_params = [{transform_indices = @transform_0, window_bounds = array<i64: 128, 128>}, {pipeline_mode = #tpu.pipeline_mode<synchronous>, transform_indices = @transform_1, window_bounds = array<i64: 128, 8>}, {pipeline_mode = #tpu.pipeline_mode<synchronous>, transform_indices = @transform_2, window_bounds = array<i64: 128, 1>}, {pipeline_mode = #tpu.pipeline_mode<synchronous>, transform_indices = @transform_3, window_bounds = array<i64: 128, 1>}, {transform_indices = @transform_4, window_bounds = array<i64: 128, 8>}, {transform_indices = @transform_5, window_bounds = array<i64: 128, 1>}, {transform_indices = @transform_6, window_bounds = array<i64: 128, 1>}]} {
    %c0 = arith.constant 0 : index
    %c0_0 = arith.constant 0 : index
    %0 = vector.load %arg1[%c0, %c0_0] : memref<128x128xbf16, #tpu.memory_space<vmem>>, vector<128x128xbf16>
    %1 = arith.extf %0 : vector<128x128xbf16> to vector<128x128xf32>
    %2 = arith.truncf %1 : vector<128x128xf32> to vector<128x128xbf16>
    %c0_1 = arith.constant 0 : index
    %c0_2 = arith.constant 0 : index
    %3 = vector.load %arg2[%c0_1, %c0_2] : memref<128x8xf32, #tpu.memory_space<vmem>>, vector<128x8xf32>
    %4 = arith.truncf %3 : vector<128x8xf32> to vector<128x8xbf16>
    %cst = arith.constant dense<0.000000e+00> : vector<128x8xf32>
    %5 = tpu.matmul %2, %4, %cst {dimension_numbers = #tpu.dot_dimension_numbers<[1], [0], [0], [1], [0, 0, 1, 1], [], []>} : vector<128x128xbf16>, vector<128x8xbf16>, vector<128x8xf32> -> vector<128x8xf32>
    %6 = arith.truncf %5 : vector<128x8xf32> to vector<128x8xbf16>
    %c0_3 = arith.constant 0 : index
    %c0_4 = arith.constant 0 : index
    %7 = vector.load %arg5[%c0_3, %c0_4] : memref<128x8xbf16, #tpu.memory_space<vmem>>, vector<128x8xbf16>
    tpu.vector_store %arg5[%c0_3, %c0_4], %6 {strides = array<i32>} : memref<128x8xbf16, #tpu.memory_space<vmem>>, vector<128x8xbf16>,
    %c0_5 = arith.constant 0 : index
    %c0_6 = arith.constant 0 : index
    %8 = vector.load %arg3[%c0_5, %c0_6] : memref<128x1xf32, #tpu.memory_space<vmem>>, vector<128x1xf32>
    %cst_7 = arith.constant dense<0.000000e+00> : vector<128x1xf32>
    %9 = tpu.matmul %1, %8, %cst_7 {dimension_numbers = #tpu.dot_dimension_numbers<[1], [0], [0], [1], [0, 0, 1, 1], [], []>} : vector<128x128xf32>, vector<128x1xf32>, vector<128x1xf32> -> vector<128x1xf32>
    %c0_8 = arith.constant 0 : index
    %c0_9 = arith.constant 0 : index
    %10 = vector.load %arg6[%c0_8, %c0_9] : memref<128x1xf32, #tpu.memory_space<vmem>>, vector<128x1xf32>
    tpu.vector_store %arg6[%c0_8, %c0_9], %9 {strides = array<i32>} : memref<128x1xf32, #tpu.memory_space<vmem>>, vector<128x1xf32>,
    %c0_10 = arith.constant 0 : index
    %c0_11 = arith.constant 0 : index
    %11 = vector.load %arg4[%c0_10, %c0_11] : memref<128x1xf32, #tpu.memory_space<vmem>>, vector<128x1xf32>
    %cst_12 = arith.constant dense<0.000000e+00> : vector<128x1xf32>
    %12 = tpu.matmul %1, %11, %cst_12 {dimension_numbers = #tpu.dot_dimension_numbers<[1], [0], [0], [1], [0, 0, 1, 1], [], []>} : vector<128x128xf32>, vector<128x1xf32>, vector<128x1xf32> -> vector<128x1xf32>
    %c0_13 = arith.constant 0 : index
    %c0_14 = arith.constant 0 : index
    %13 = vector.load %arg7[%c0_13, %c0_14] : memref<128x1xf32, #tpu.memory_space<vmem>>, vector<128x1xf32>
    tpu.vector_store %arg7[%c0_13, %c0_14], %12 {strides = array<i32>} : memref<128x1xf32, #tpu.memory_space<vmem>>, vector<128x1xf32>,
    return
  }
  func.func @transform_0(%arg0: i32) -> (i32, i32) {
    %c0_i32 = arith.constant 0 : i32
    %c0_i32_0 = arith.constant 0 : i32
    return %arg0, %c0_i32 : i32, i32
  }
  func.func @transform_1(%arg0: i32) -> (i32, i32) {
    %c0_i32 = arith.constant 0 : i32
    %c0_i32_0 = arith.constant 0 : i32
    %c0_i32_1 = arith.constant 0 : i32
    return %c0_i32, %c0_i32_0 : i32, i32
  }
  func.func @transform_2(%arg0: i32) -> (i32, i32) {
    %c0_i32 = arith.constant 0 : i32
    %c0_i32_0 = arith.constant 0 : i32
    %c0_i32_1 = arith.constant 0 : i32
    return %c0_i32, %c0_i32_0 : i32, i32
  }
  func.func @transform_3(%arg0: i32) -> (i32, i32) {
    %c0_i32 = arith.constant 0 : i32
    %c0_i32_0 = arith.constant 0 : i32
    %c0_i32_1 = arith.constant 0 : i32
    return %c0_i32, %c0_i32_0 : i32, i32
  }
  func.func @transform_4(%arg0: i32) -> (i32, i32) {
    %c0_i32 = arith.constant 0 : i32
    %c0_i32_0 = arith.constant 0 : i32
    return %arg0, %c0_i32 : i32, i32
  }
  func.func @transform_5(%arg0: i32) -> (i32, i32) {
    %c0_i32 = arith.constant 0 : i32
    %c0_i32_0 = arith.constant 0 : i32
    return %arg0, %c0_i32 : i32, i32
  }
  func.func @transform_6(%arg0: i32) -> (i32, i32) {
    %c0_i32 = arith.constant 0 : i32
    %c0_i32_0 = arith.constant 0 : i32
    return %arg0, %c0_i32 : i32, i32
  }
}

module attributes {stable_mosaic.version = 11 : i64} {
  func.func @_attention_kernel(%arg0: i32, %arg1: i32, %arg2: memref<128x128xbf16, #tpu.memory_space<vmem>>, %arg3: memref<128x8xbf16, #tpu.memory_space<vmem>>, %arg4: memref<128x1xf32, #tpu.memory_space<vmem>>, %arg5: memref<1x128xf32, #tpu.memory_space<vmem>>, %arg6: memref<1x8xf32, #tpu.memory_space<vmem>>, %arg7: memref<128x8xf32, #tpu.memory_space<vmem>>, %arg8: memref<128x1xf32, #tpu.memory_space<vmem>>, %arg9: memref<128x1xf32, #tpu.memory_space<vmem>>, %arg10: memref<128x8xf32, #tpu.memory_space<vmem>>) attributes {dimension_semantics = [#tpu.dimension_semantics<parallel>, #tpu.dimension_semantics<arbitrary>], iteration_bounds = array<i64: 2, 2>, scalar_prefetch = 0 : i64, scratch_operands = 3 : i64, tpu.core_type = #tpu.core_type<tc>, window_params = [{transform_indices = @transform_0, window_bounds = array<i64: 128, 128>}, {transform_indices = @transform_1, window_bounds = array<i64: 128, 8>}, {transform_indices = @transform_2, window_bounds = array<i64: 128, 1>}, {transform_indices = @transform_3, window_bounds = array<i64: 1, 128>}, {pipeline_mode = #tpu.pipeline_mode<synchronous>, transform_indices = @transform_4, window_bounds = array<i64: 1, 8>}, {transform_indices = @transform_5, window_bounds = array<i64: 128, 8>}]} {
    %c0_i32 = arith.constant 0 : i32
    %0 = arith.cmpi eq, %arg1, %c0_i32 : i32
    %1 = arith.extui %0 : i1 to i32
    %c0_i32_0 = arith.constant 0 : i32
    %2 = arith.cmpi ne, %1, %c0_i32_0 : i32
    scf.if %2 {
      %cst_28 = arith.constant -1.000000e+30 : f32
      %47 = vector.broadcast %cst_28 : f32 to vector<128x1xf32>
      %c0_29 = arith.constant 0 : index
      %c0_30 = arith.constant 0 : index
      %48 = vector.load %arg8[%c0_29, %c0_30] : memref<128x1xf32, #tpu.memory_space<vmem>>, vector<128x1xf32>
      tpu.vector_store %arg8[%c0_29, %c0_30], %47 {strides = array<i32>} : memref<128x1xf32, #tpu.memory_space<vmem>>, vector<128x1xf32>,
      %cst_31 = arith.constant 0.000000e+00 : f32
      %49 = vector.broadcast %cst_31 : f32 to vector<128x1xf32>
      %c0_32 = arith.constant 0 : index
      %c0_33 = arith.constant 0 : index
      %50 = vector.load %arg9[%c0_32, %c0_33] : memref<128x1xf32, #tpu.memory_space<vmem>>, vector<128x1xf32>
      tpu.vector_store %arg9[%c0_32, %c0_33], %49 {strides = array<i32>} : memref<128x1xf32, #tpu.memory_space<vmem>>, vector<128x1xf32>,
      %cst_34 = arith.constant 0.000000e+00 : f32
      %51 = vector.broadcast %cst_34 : f32 to vector<128x8xf32>
      %c0_35 = arith.constant 0 : index
      %c0_36 = arith.constant 0 : index
      %52 = vector.load %arg10[%c0_35, %c0_36] : memref<128x8xf32, #tpu.memory_space<vmem>>, vector<128x8xf32>
      tpu.vector_store %arg10[%c0_35, %c0_36], %51 {strides = array<i32>} : memref<128x8xf32, #tpu.memory_space<vmem>>, vector<128x8xf32>,
    } else {
    }
    %c0 = arith.constant 0 : index
    %c0_1 = arith.constant 0 : index
    %3 = vector.load %arg2[%c0, %c0_1] : memref<128x128xbf16, #tpu.memory_space<vmem>>, vector<128x128xbf16>
    %cst = arith.constant 0.000000e+00 : bf16
    %4 = vector.broadcast %cst : bf16 to vector<128x128xbf16>
    %5 = arith.cmpf ogt, %3, %4 : vector<128x128xbf16>
    %c0_2 = arith.constant 0 : index
    %c0_3 = arith.constant 0 : index
    %6 = vector.load %arg4[%c0_2, %c0_3] : memref<128x1xf32, #tpu.memory_space<vmem>>, vector<128x1xf32>
    %c0_4 = arith.constant 0 : index
    %c0_5 = arith.constant 0 : index
    %7 = vector.load %arg5[%c0_4, %c0_5] : memref<1x128xf32, #tpu.memory_space<vmem>>, vector<1x128xf32>
    %c0_6 = arith.constant 0 : index
    %c0_7 = arith.constant 0 : index
    %8 = vector.load %arg3[%c0_6, %c0_7] : memref<128x8xbf16, #tpu.memory_space<vmem>>, vector<128x8xbf16>
    %9 = vector.broadcast %6 : vector<128x1xf32> to vector<128x128xf32>
    %10 = vector.broadcast %7 : vector<1x128xf32> to vector<128x128xf32>
    %11 = arith.addf %9, %10 : vector<128x128xf32>
    %cst_8 = arith.constant 0.000000e+00 : f32
    %12 = vector.broadcast %cst_8 : f32 to vector<128x128xf32>
    %13 = arith.cmpf ogt, %11, %12 : vector<128x128xf32>
    %cst_9 = arith.constant 2.000000e-01 : f32
    %14 = vector.broadcast %cst_9 : f32 to vector<128x128xf32>
    %15 = arith.mulf %14, %11 : vector<128x128xf32>
    %16 = arith.select %13, %11, %15 : vector<128x128xi1>, vector<128x128xf32>
    %cst_10 = arith.constant -1.000000e+30 : f32
    %17 = vector.broadcast %cst_10 : f32 to vector<128x128xf32>
    %18 = arith.select %5, %16, %17 : vector<128x128xi1>, vector<128x128xf32>
    %c0_11 = arith.constant 0 : index
    %c0_12 = arith.constant 0 : index
    %19 = vector.load %arg8[%c0_11, %c0_12] : memref<128x1xf32, #tpu.memory_space<vmem>>, vector<128x1xf32>
    %cst_13 = arith.constant dense<0xFF800000> : vector<128xf32>
    %20 = vector.multi_reduction <maximumf>, %18, %cst_13 [1] : vector<128x128xf32> to vector<128xf32>
    %21 = vector.shape_cast %20 : vector<128xf32> to vector<128x1xf32>
    %22 = arith.maximumf %19, %21 : vector<128x1xf32>
    %23 = arith.subf %19, %22 : vector<128x1xf32>
    %24 = math.exp %23 : vector<128x1xf32>
    %25 = vector.broadcast %22 : vector<128x1xf32> to vector<128x128xf32>
    %26 = arith.subf %18, %25 : vector<128x128xf32>
    %27 = math.exp %26 : vector<128x128xf32>
    %cst_14 = arith.constant 0.000000e+00 : f32
    %28 = vector.broadcast %cst_14 : f32 to vector<128x128xf32>
    %29 = arith.select %5, %27, %28 : vector<128x128xi1>, vector<128x128xf32>
    %c0_15 = arith.constant 0 : index
    %c0_16 = arith.constant 0 : index
    %30 = vector.load %arg9[%c0_15, %c0_16] : memref<128x1xf32, #tpu.memory_space<vmem>>, vector<128x1xf32>
    %31 = arith.mulf %24, %30 : vector<128x1xf32>
    %cst_17 = arith.constant dense<0.000000e+00> : vector<128xf32>
    %32 = vector.multi_reduction <add>, %29, %cst_17 [1] : vector<128x128xf32> to vector<128xf32>
    %33 = vector.shape_cast %32 : vector<128xf32> to vector<128x1xf32>
    %34 = arith.addf %31, %33 : vector<128x1xf32>
    %c0_18 = arith.constant 0 : index
    %c0_19 = arith.constant 0 : index
    %35 = vector.load %arg9[%c0_18, %c0_19] : memref<128x1xf32, #tpu.memory_space<vmem>>, vector<128x1xf32>
    tpu.vector_store %arg9[%c0_18, %c0_19], %34 {strides = array<i32>} : memref<128x1xf32, #tpu.memory_space<vmem>>, vector<128x1xf32>,
    %c0_20 = arith.constant 0 : index
    %c0_21 = arith.constant 0 : index
    %36 = vector.load %arg10[%c0_20, %c0_21] : memref<128x8xf32, #tpu.memory_space<vmem>>, vector<128x8xf32>
    %37 = vector.broadcast %24 : vector<128x1xf32> to vector<128x8xf32>
    %38 = arith.mulf %37, %36 : vector<128x8xf32>
    %39 = arith.truncf %29 : vector<128x128xf32> to vector<128x128xbf16>
    %cst_22 = arith.constant dense<0.000000e+00> : vector<128x8xf32>
    %40 = tpu.matmul %39, %8, %cst_22 {dimension_numbers = #tpu.dot_dimension_numbers<[1], [0], [0], [1], [0, 0, 1, 1], [], []>} : vector<128x128xbf16>, vector<128x8xbf16>, vector<128x8xf32> -> vector<128x8xf32>
    %41 = arith.addf %38, %40 : vector<128x8xf32>
    %c0_23 = arith.constant 0 : index
    %c0_24 = arith.constant 0 : index
    %42 = vector.load %arg10[%c0_23, %c0_24] : memref<128x8xf32, #tpu.memory_space<vmem>>, vector<128x8xf32>
    tpu.vector_store %arg10[%c0_23, %c0_24], %41 {strides = array<i32>} : memref<128x8xf32, #tpu.memory_space<vmem>>, vector<128x8xf32>,
    %c0_25 = arith.constant 0 : index
    %c0_26 = arith.constant 0 : index
    %43 = vector.load %arg8[%c0_25, %c0_26] : memref<128x1xf32, #tpu.memory_space<vmem>>, vector<128x1xf32>
    tpu.vector_store %arg8[%c0_25, %c0_26], %22 {strides = array<i32>} : memref<128x1xf32, #tpu.memory_space<vmem>>, vector<128x1xf32>,
    %c1_i32 = arith.constant 1 : i32
    %44 = arith.cmpi eq, %arg1, %c1_i32 : i32
    %45 = arith.extui %44 : i1 to i32
    %c0_i32_27 = arith.constant 0 : i32
    %46 = arith.cmpi ne, %45, %c0_i32_27 : i32
    scf.if %46 {
      %c0_28 = arith.constant 0 : index
      %c0_29 = arith.constant 0 : index
      %47 = vector.load %arg9[%c0_28, %c0_29] : memref<128x1xf32, #tpu.memory_space<vmem>>, vector<128x1xf32>
      %cst_30 = arith.constant 9.99999968E-21 : f32
      %48 = vector.broadcast %cst_30 : f32 to vector<128x1xf32>
      %49 = arith.maximumf %47, %48 : vector<128x1xf32>
      %50 = tpu.reciprocal %49 {approx = true} : vector<128x1xf32> -> vector<128x1xf32>
      %c0_31 = arith.constant 0 : index
      %c0_32 = arith.constant 0 : index
      %51 = vector.load %arg6[%c0_31, %c0_32] : memref<1x8xf32, #tpu.memory_space<vmem>>, vector<1x8xf32>
      %c0_33 = arith.constant 0 : index
      %c0_34 = arith.constant 0 : index
      %52 = vector.load %arg10[%c0_33, %c0_34] : memref<128x8xf32, #tpu.memory_space<vmem>>, vector<128x8xf32>
      %53 = vector.broadcast %50 : vector<128x1xf32> to vector<128x8xf32>
      %54 = arith.mulf %52, %53 : vector<128x8xf32>
      %55 = vector.broadcast %51 : vector<1x8xf32> to vector<128x8xf32>
      %56 = arith.addf %54, %55 : vector<128x8xf32>
      %c0_35 = arith.constant 0 : index
      %c0_36 = arith.constant 0 : index
      %57 = vector.load %arg7[%c0_35, %c0_36] : memref<128x8xf32, #tpu.memory_space<vmem>>, vector<128x8xf32>
      tpu.vector_store %arg7[%c0_35, %c0_36], %56 {strides = array<i32>} : memref<128x8xf32, #tpu.memory_space<vmem>>, vector<128x8xf32>,
    } else {
    }
    return
  }
  func.func @transform_0(%arg0: i32, %arg1: i32) -> (i32, i32) {
    %c0_i32 = arith.constant 0 : i32
    return %arg0, %arg1 : i32, i32
  }
  func.func @transform_1(%arg0: i32, %arg1: i32) -> (i32, i32) {
    %c0_i32 = arith.constant 0 : i32
    %c0_i32_0 = arith.constant 0 : i32
    return %arg1, %c0_i32 : i32, i32
  }
  func.func @transform_2(%arg0: i32, %arg1: i32) -> (i32, i32) {
    %c0_i32 = arith.constant 0 : i32
    %c0_i32_0 = arith.constant 0 : i32
    return %arg0, %c0_i32 : i32, i32
  }
  func.func @transform_3(%arg0: i32, %arg1: i32) -> (i32, i32) {
    %c0_i32 = arith.constant 0 : i32
    %c0_i32_0 = arith.constant 0 : i32
    return %c0_i32, %arg1 : i32, i32
  }
  func.func @transform_4(%arg0: i32, %arg1: i32) -> (i32, i32) {
    %c0_i32 = arith.constant 0 : i32
    %c0_i32_0 = arith.constant 0 : i32
    %c0_i32_1 = arith.constant 0 : i32
    return %c0_i32, %c0_i32_0 : i32, i32
  }
  func.func @transform_5(%arg0: i32, %arg1: i32) -> (i32, i32) {
    %c0_i32 = arith.constant 0 : i32
    %c0_i32_0 = arith.constant 0 : i32
    return %arg0, %c0_i32 : i32, i32
  }
}

</mosaic_0001>

<llo_original>
// kernel: gat_forward.6
$region0: #{gat_forward.6}
  #allocation0 [shape = 'u32[]', space=smem, size = 0x4, offset = 0x4, fixed_abs, tag = 'smem constant byte address 0x4 - core index']
  #allocation1 [shape = 'u32[144,128]{1,0:T(1,128)}', space=vmem, size = 0x12000, scoped, tag = 'internal scratch']
  %s0 = inlined_call_operand.vmem [shape: f32[256,16], index: 0, kind: input, shape index: {}]
  %s1 = inlined_call_operand.vmem [shape: f32[16,128], index: 1, kind: input, shape index: {}]
  %s2 = inlined_call_operand.vmem [shape: f32[16,4], index: 2, kind: input, shape index: {}]
  %s3 = inlined_call_operand.vmem [shape: f32[16,4], index: 3, kind: input, shape index: {}]
  %s4 = inlined_call_operand.vmem [shape: bf16[256,128], index: 4, kind: output, shape index: {0}]
  %s5 = inlined_call_operand.vmem [shape: f32[256,4], index: 5, kind: output, shape index: {1}]
  %s6 = inlined_call_operand.vmem [shape: f32[256,4], index: 6, kind: output, shape index: {2}]
  %7 = xla_tuple %s4, %s5, %s6
  %s8 = sld [smem:[#allocation0]]
  $region65: #{gat_forward.6} parent=0
    _
  %s10 = ssub.s32 1, %s8
  %s11 = scalar_select 0, %s10, %s8
  loop: start=0, step=1, limit=4
  $region2: #{gat_forward.6} parent=0 // loop_pre_header
    _
  $region3: #{gat_forward.6} parent=0 // loop_header
    %s13 = sphi 0, %s17
    %p14 = scmp.ge.s32.totalorder %s13, 4
    %s23 = sphi 0, %s25
    %s26 = sphi 0, %s23
    %s27 = sphi 0, %s26
    %s43 = sphi 0, %s27
    %s47 = sphi 0, %s47
    %s49 = sphi 0, %s47
    %s50 = sphi 0, %s49
    %s64 = sphi 0, %s50
    %s68 = sphi 0, %s68
    %s70 = sphi 0, %s68
    %s71 = sphi 0, %s70
    %s85 = sphi 0, %s71
    %s89 = sphi 0, %s89
    %s91 = sphi 0, %s89
    %s92 = sphi 0, %s91
    %s106 = sphi 0, %s92
    %s112 = sphi 0, %s114
    %s115 = sphi 0, %s112
    %s116 = sphi 0, %s115
    %s132 = sphi 0, %s116
    %s138 = sphi 0, %s140
    %s141 = sphi 0, %s138
    %s142 = sphi 0, %s141
    %s158 = sphi 0, %s142
    %s164 = sphi 0, %s166
    %s167 = sphi 0, %s164
    %s168 = sphi 0, %s167
    %s184 = sphi 0, %s168
  $region4: #{gat_forward.6} parent=0 // loop_header_branch
    %16 = sbr.rel (%p14) target = $region8
  $region5: #{gat_forward.6} parent=0 // loop_body
    %s18 = ssub.s32 %s13, 1
    %s19 = ssub.s32 %s13, 2
    %s20 = sadd.s32 %s13, 1
    %s21 = ssub.s32 %s13, %s20
    %p22 = scmp.eq.s32.totalorder %s21, 0
    %s24 = sadd.s32 %s23, 1
    %s25 = scalar_select %p22, %s23, %s24
    %p28 = pneg %p22
    %p29 = scmp.eq.s32.totalorder %s13, 1
    %p30 = por %p28, %p29
    %p31 = scmp.ne.s32.totalorder %s23, %s26
    %p32 = scmp.eq.s32.totalorder %s13, 0
    %p33 = por %p31, %p32
    %p34 = scmp.ne.s32.totalorder %s23, %s26
    %p35 = scmp.eq.s32.totalorder %s18, 1
    %p36 = por %p34, %p35
    %p37 = scmp.ne.s32.totalorder %s26, %s27
    %p38 = scmp.eq.s32.totalorder %s18, 0
    %p39 = por %p37, %p38
    %p40 = scmp.ne.s32.totalorder %s26, %s27
    %p41 = scmp.eq.s32.totalorder %s19, 1
    %p42 = por %p40, %p41
    %p44 = scmp.ne.s32.totalorder %s27, %s43
    %p45 = scmp.eq.s32.totalorder %s19, 0
    %p46 = por %p44, %p45
    %s48 = sadd.s32 %s47, 1
    %p51 = scmp.eq.s32.totalorder %s13, 1
    %p52 = scmp.ne.s32.totalorder %s47, %s49
    %p53 = scmp.eq.s32.totalorder %s13, 0
    %p54 = por %p52, %p53
    %p55 = scmp.ne.s32.totalorder %s47, %s49
    %p56 = scmp.eq.s32.totalorder %s18, 1
    %p57 = por %p55, %p56
    %p58 = scmp.ne.s32.totalorder %s49, %s50
    %p59 = scmp.eq.s32.totalorder %s18, 0
    %p60 = por %p58, %p59
    %p61 = scmp.ne.s32.totalorder %s49, %s50
    %p62 = scmp.eq.s32.totalorder %s19, 1
    %p63 = por %p61, %p62
    %p65 = scmp.ne.s32.totalorder %s50, %s64
    %p66 = scmp.eq.s32.totalorder %s19, 0
    %p67 = por %p65, %p66
    %s69 = sadd.s32 %s68, 1
    %p72 = scmp.eq.s32.totalorder %s13, 1
    %p73 = scmp.ne.s32.totalorder %s68, %s70
    %p74 = scmp.eq.s32.totalorder %s13, 0
    %p75 = por %p73, %p74
    %p76 = scmp.ne.s32.totalorder %s68, %s70
    %p77 = scmp.eq.s32.totalorder %s18, 1
    %p78 = por %p76, %p77
    %p79 = scmp.ne.s32.totalorder %s70, %s71
    %p80 = scmp.eq.s32.totalorder %s18, 0
    %p81 = por %p79, %p80
    %p82 = scmp.ne.s32.totalorder %s70, %s71
    %p83 = scmp.eq.s32.totalorder %s19, 1
    %p84 = por %p82, %p83
    %p86 = scmp.ne.s32.totalorder %s71, %s85
    %p87 = scmp.eq.s32.totalorder %s19, 0
    %p88 = por %p86, %p87
    %s90 = sadd.s32 %s89, 1
    %p93 = scmp.eq.s32.totalorder %s13, 1
    %p94 = scmp.ne.s32.totalorder %s89, %s91
    %p95 = scmp.eq.s32.totalorder %s13, 0
    %p96 = por %p94, %p95
    %p97 = scmp.ne.s32.totalorder %s89, %s91
    %p98 = scmp.eq.s32.totalorder %s18, 1
    %p99 = por %p97, %p98
    %p100 = scmp.ne.s32.totalorder %s91, %s92
    %p101 = scmp.eq.s32.totalorder %s18, 0
    %p102 = por %p100, %p101
    %p103 = scmp.ne.s32.totalorder %s91, %s92
    %p104 = scmp.eq.s32.totalorder %s19, 1
    %p105 = por %p103, %p104
    %p107 = scmp.ne.s32.totalorder %s92, %s106
    %p108 = scmp.eq.s32.totalorder %s19, 0
    %p109 = por %p107, %p108
    %s110 = ssub.s32 %s13, %s20
    %p111 = scmp.eq.s32.totalorder %s110, 0
    %s113 = sadd.s32 %s112, 1
    %s114 = scalar_select %p111, %s112, %s113
    %p117 = pneg %p111
    %p118 = scmp.eq.s32.totalorder %s13, 1
    %p119 = por %p117, %p118
    %p120 = scmp.ne.s32.totalorder %s112, %s115
    %p121 = scmp.eq.s32.totalorder %s13, 0
    %p122 = por %p120, %p121
    %p123 = scmp.ne.s32.totalorder %s112, %s115
    %p124 = scmp.eq.s32.totalorder %s18, 1
    %p125 = por %p123, %p124
    %p126 = scmp.ne.s32.totalorder %s115, %s116
    %p127 = scmp.eq.s32.totalorder %s18, 0
    %p128 = por %p126, %p127
    %p129 = scmp.ne.s32.totalorder %s115, %s116
    %p130 = scmp.eq.s32.totalorder %s19, 1
    %p131 = por %p129, %p130
    %p133 = scmp.ne.s32.totalorder %s116, %s132
    %p134 = scmp.eq.s32.totalorder %s19, 0
    %p135 = por %p133, %p134
    %s136 = ssub.s32 %s13, %s20
    %p137 = scmp.eq.s32.totalorder %s136, 0
    %s139 = sadd.s32 %s138, 1
    %s140 = scalar_select %p137, %s138, %s139
    %p143 = pneg %p137
    %p144 = scmp.eq.s32.totalorder %s13, 1
    %p145 = por %p143, %p144
    %p146 = scmp.ne.s32.totalorder %s138, %s141
    %p147 = scmp.eq.s32.totalorder %s13, 0
    %p148 = por %p146, %p147
    %p149 = scmp.ne.s32.totalorder %s138, %s141
    %p150 = scmp.eq.s32.totalorder %s18, 1
    %p151 = por %p149, %p150
    %p152 = scmp.ne.s32.totalorder %s141, %s142
    %p153 = scmp.eq.s32.totalorder %s18, 0
    %p154 = por %p152, %p153
    %p155 = scmp.ne.s32.totalorder %s141, %s142
    %p156 = scmp.eq.s32.totalorder %s19, 1
    %p157 = por %p155, %p156
    %p159 = scmp.ne.s32.totalorder %s142, %s158
    %p160 = scmp.eq.s32.totalorder %s19, 0
    %p161 = por %p159, %p160
    %s162 = ssub.s32 %s13, %s20
    %p163 = scmp.eq.s32.totalorder %s162, 0
    %s165 = sadd.s32 %s164, 1
    %s166 = scalar_select %p163, %s164, %s165
    %p169 = pneg %p163
    %p170 = scmp.eq.s32.totalorder %s13, 1
    %p171 = por %p169, %p170
    %p172 = scmp.ne.s32.totalorder %s164, %s167
    %p173 = scmp.eq.s32.totalorder %s13, 0
    %p174 = por %p172, %p173
    %p175 = scmp.ne.s32.totalorder %s164, %s167
    %p176 = scmp.eq.s32.totalorder %s18, 1
    %p177 = por %p175, %p176
    %p178 = scmp.ne.s32.totalorder %s167, %s168
    %p179 = scmp.eq.s32.totalorder %s18, 0
    %p180 = por %p178, %p179
    %p181 = scmp.ne.s32.totalorder %s167, %s168
    %p182 = scmp.eq.s32.totalorder %s19, 1
    %p183 = por %p181, %p182
    %p185 = scmp.ne.s32.totalorder %s168, %s184
    %p186 = scmp.eq.s32.totalorder %s19, 0
    %p187 = por %p185, %p186
    %p188 = scmp.le.s32.totalorder 1, %s13
    %p189 = scmp.lt.s32.totalorder %s13, 3
    %p190 = pnand %p188, %p189
    %p191 = pneg %p190
    // Predicated region
    $region9: #{gat_forward.6} parent=5 // pred_check
      _
    $region10: #{gat_forward.6} parent=5 // pred_check_branch
      %193 = sbr.rel (%p190) target = $region12
    $region11: #{gat_forward.6} parent=5 // pred_region
      %s194 = ssub.s32 %s13, 1
      // Predicated region
      $region13: #{gat_forward.6} parent=11 // pred_check
        %p195 = pneg %p60
      $region14: #{gat_forward.6} parent=11 // pred_check_branch
        %197 = sbr.rel (%p195) target = $region16
      $region15: #{gat_forward.6} parent=11 // pred_region
        _
      $region16: #{gat_forward.6} parent=11 // pred_fallthru
        _
      // Predicated region
      $region17: #{gat_forward.6} parent=11 // pred_check
        %p198 = pneg %p81
      $region18: #{gat_forward.6} parent=11 // pred_check_branch
        %200 = sbr.rel (%p198) target = $region20
      $region19: #{gat_forward.6} parent=11 // pred_region
        _
      $region20: #{gat_forward.6} parent=11 // pred_fallthru
        _
      // Predicated region
      $region21: #{gat_forward.6} parent=11 // pred_check
        %p201 = pneg %p102
      $region22: #{gat_forward.6} parent=11 // pred_check_branch
        %203 = sbr.rel (%p201) target = $region24
      $region23: #{gat_forward.6} parent=11 // pred_region
        _
      $region24: #{gat_forward.6} parent=11 // pred_fallthru
        _
    $region12: #{gat_forward.6} parent=5 // pred_fallthru
      _
    %p204 = scmp.lt.s32.totalorder %s13, 2
    // Predicated region
    $region25: #{gat_forward.6} parent=5 // pred_check
      %p205 = pneg %p204
    $region26: #{gat_forward.6} parent=5 // pred_check_branch
      %207 = sbr.rel (%p205) target = $region28
    $region27: #{gat_forward.6} parent=5 // pred_region
      // Predicated region
      $region29: #{gat_forward.6} parent=27 // pred_check
        %p208 = pneg %p33
      $region30: #{gat_forward.6} parent=27 // pred_check_branch
        %210 = sbr.rel (%p208) target = $region32
      $region31: #{gat_forward.6} parent=27 // pred_region
        %s211 = smul.u32 16, %s13
        %p212 = scmp.lt.s32.totalorder %s211, 31
        %s213 = scalar_select %p212, %s211, 31
        %s214 = smul.addr %s213, 8
        %s215 = scalar_lea.vmem %s0, %s214
        %s216 = smul.u32 16, %s13
      $region32: #{gat_forward.6} parent=27 // pred_fallthru
        _
    $region28: #{gat_forward.6} parent=5 // pred_fallthru
      _
    %p217 = scmp.le.s32.totalorder 1, %s13
    %p218 = scmp.lt.s32.totalorder %s13, 3
    %p219 = pnand %p217, %p218
    %p220 = pneg %p219
    // Predicated region
    $region33: #{gat_forward.6} parent=5 // pred_check
      _
    $region34: #{gat_forward.6} parent=5 // pred_check_branch
      %222 = sbr.rel (%p219) target = $region36
    $region35: #{gat_forward.6} parent=5 // pred_region
      %s223 = ssub.s32 %s13, 1
      %s224 = smul.u32 16, %s18
      %p225 = scmp.lt.s32.totalorder %s224, 31
      %s226 = scalar_select %p225, %s224, 31
      %s227 = smul.addr %s226, 8
      %s228 = scalar_lea.vmem %s0, %s227
      %p229 = pneg %p39
      %p230 = pneg %p36
      %p231 = pneg %p60
      %p232 = pneg %p57
      %p233 = pneg %p81
      %p234 = pneg %p78
      %p235 = pneg %p102
      %p236 = pneg %p99
      %p237 = pneg %p128
      %p238 = pneg %p125
      %s239 = smul.u32 16, %s18
      %p240 = scmp.lt.s32.totalorder %s239, 31
      %s241 = scalar_select %p240, %s239, 31
      %s242 = smul.addr %s241, 4
      %s243 = scalar_lea.vmem %s4, %s242
      %p244 = pneg %p154
      %p245 = pneg %p151
      %s246 = smul.u32 16, %s18
      %p247 = scmp.lt.s32.totalorder %s246, 31
      %s248 = scalar_select %p247, %s246, 31
      %s249 = smul.addr %s248, 8
      %s250 = scalar_lea.vmem %s5, %s249
      %p251 = pneg %p180
      %p252 = pneg %p177
      %s253 = smul.u32 16, %s18
      %p254 = scmp.lt.s32.totalorder %s253, 31
      %s255 = scalar_select %p254, %s253, 31
      %s256 = smul.addr %s255, 8
      %s257 = scalar_lea.vmem %s6, %s256
      %s258 = smul.u32 16, %s18
      %p259 = scmp.lt.s32.totalorder %s258, 31
      %s260 = scalar_select %p259, %s258, 31
      %s261 = smul.addr %s260, 8
      %s262 = scalar_lea.vmem %s0, %s261
      %s263 = smul.u32 16, %s18
      %s264 = smul.u32 16, %s18
      %p265 = scmp.lt.s32.totalorder %s264, 31
      %s266 = scalar_select %p265, %s264, 31
      %s267 = smul.addr %s266, 4
      %s268 = scalar_lea.vmem %s4, %s267
      %s269 = smul.u32 16, %s18
      %s270 = smul.u32 16, %s18
      %p271 = scmp.lt.s32.totalorder %s270, 31
      %s272 = scalar_select %p271, %s270, 31
      %s273 = smul.addr %s272, 8
      %s274 = scalar_lea.vmem %s5, %s273
      %s275 = smul.u32 16, %s18
      %s276 = smul.u32 16, %s18
      %p277 = scmp.lt.s32.totalorder %s276, 31
      %s278 = scalar_select %p277, %s276, 31
      %s279 = smul.addr %s278, 8
      %s280 = scalar_lea.vmem %s6, %s279
      %s281 = smul.u32 16, %s18
      %v283 = vld [vmem:[%s262] sm:$0xff]
      %v284 = vld [vmem:[%s262 + $0x8] sm:$0xff]
      %v285 = vld [vmem:[%s262 + $0x10] sm:$0xff]
      %v286 = vld [vmem:[%s262 + $0x18] sm:$0xff]
      %v287 = vld [vmem:[%s262 + $0x20] sm:$0xff]
      %v288 = vld [vmem:[%s262 + $0x28] sm:$0xff]
      %v289 = vld [vmem:[%s262 + $0x30] sm:$0xff]
      %v290 = vld [vmem:[%s262 + $0x38] sm:$0xff]
      %v291 = vld [vmem:[%s262 + $0x40] sm:$0xff]
      %v292 = vld [vmem:[%s262 + $0x48] sm:$0xff]
      %v293 = vld [vmem:[%s262 + $0x50] sm:$0xff]
      %v294 = vld [vmem:[%s262 + $0x58] sm:$0xff]
      %v295 = vld [vmem:[%s262 + $0x60] sm:$0xff]
      %v296 = vld [vmem:[%s262 + $0x68] sm:$0xff]
      %v297 = vld [vmem:[%s262 + $0x70] sm:$0xff]
      %v298 = vld [vmem:[%s262 + $0x78] sm:$0xff]
      %v299 = vpack.c.bf16 %v284, %v283
      %v300 = vpack.c.bf16 %v286, %v285
      %v301 = vpack.c.bf16 %v288, %v287
      %v302 = vpack.c.bf16 %v290, %v289
      %v303 = vpack.c.bf16 %v292, %v291
      %v304 = vpack.c.bf16 %v294, %v293
      %v305 = vpack.c.bf16 %v296, %v295
      %v306 = vpack.c.bf16 %v298, %v297
      %v307 = vld [vmem:[%s1] sm:$0xff]
      %v308 = vld [vmem:[%s1 + $0x8] sm:$0xff]
      %v309 = vpack.c.bf16 %v308, %v307
      %vm310 = vcmask 130048
      %v312 = vsel %vm310, %v299, 0
      %v315 = vsel %vm310, %v300, 0
      %v318 = vsel %vm310, %v301, 0
      %v321 = vsel %vm310, %v302, 0
      %v324 = vsel %vm310, %v303, 0
      %v327 = vsel %vm310, %v304, 0
      %v330 = vsel %vm310, %v305, 0
      %v333 = vsel %vm310, %v306, 0
      %335 = vmatprep.subr.bf16.mxu0 0
      %336 = vmatpush1.bf16.msra.mxu0 %v309
      %337 = vmatprep.subr.bf16.mxu0 0
      %338 = vmatpush1.bf16.msra.mxu0 0
      %339 = vmatprep.subr.bf16.mxu0 0
      %340 = vmatpush1.bf16.msra.mxu0 0
      %341 = vmatprep.subr.bf16.mxu0 0
      %342 = vmatpush1.bf16.msra.mxu0 0
      %343 = vmatprep.subr.bf16.mxu0 0
      %344 = vmatpush1.bf16.msra.mxu0 0
      %345 = vmatprep.subr.bf16.mxu0 0
      %346 = vmatpush1.bf16.msra.mxu0 0
      %347 = vmatprep.subr.bf16.mxu0 0
      %348 = vmatpush1.bf16.msra.mxu0 0
      %349 = vmatprep.subr.bf16.mxu0 0
      %350 = vmatpush1.bf16.msra.mxu0 0
      %351 = vmatprep.subr.bf16.mxu0 0
      %352 = vmatpush1.bf16.msra.mxu0 0
      %353 = vmatprep.subr.bf16.mxu0 0
      %354 = vmatpush1.bf16.msra.mxu0 0
      %355 = vmatprep.subr.bf16.mxu0 0
      %356 = vmatpush1.bf16.msra.mxu0 0
      %357 = vmatprep.subr.bf16.mxu0 0
      %358 = vmatpush1.bf16.msra.mxu0 0
      %359 = vmatprep.subr.bf16.mxu0 0
      %360 = vmatpush1.bf16.msra.mxu0 0
      %361 = vmatprep.subr.bf16.mxu0 0
      %362 = vmatpush1.bf16.msra.mxu0 0
      %363 = vmatprep.subr.bf16.mxu0 0
      %364 = vmatpush1.bf16.msra.mxu0 0
      %365 = vmatprep.subr.bf16.mxu0 0
      %366 = vmatpush1.bf16.msra.mxu0 0
      %367 = vmatprep.mubr.bf16.mxu0 0
      %368 = vmatmul.mubr.bf16.gmra.mrb[0].mxu0 %v312
      %v369 = vpop.f32.mrb[0].mxu0
      %v370 = vadd.f32 0.0, %v369
      %v371 = vpop.f32.mrb[0].mxu0
      %v372 = vpop.f32.mrb[0].mxu0
      %v373 = vadd.f32 0.0, %v372
      %v374 = vpop.f32.mrb[0].mxu0
      %375 = vmatprep.mubr.bf16.mxu0 0
      %376 = vmatmul.mubr.bf16.gmra.mrb[0].mxu0 %v315
      %v377 = vpop.f32.mrb[0].mxu0
      %v378 = vadd.f32 0.0, %v377
      %v379 = vpop.f32.mrb[0].mxu0
      %v380 = vpop.f32.mrb[0].mxu0
      %v381 = vadd.f32 0.0, %v380
      %v382 = vpop.f32.mrb[0].mxu0
      %383 = vmatprep.mubr.bf16.mxu0 0
      %384 = vmatmul.mubr.bf16.gmra.mrb[0].mxu0 %v318
      %v385 = vpop.f32.mrb[0].mxu0
      %v386 = vadd.f32 0.0, %v385
      %v387 = vpop.f32.mrb[0].mxu0
      %v388 = vpop.f32.mrb[0].mxu0
      %v389 = vadd.f32 0.0, %v388
      %v390 = vpop.f32.mrb[0].mxu0
      %391 = vmatprep.mubr.bf16.mxu0 0
      %392 = vmatmul.mubr.bf16.gmra.mrb[0].mxu0 %v321
      %v393 = vpop.f32.mrb[0].mxu0
      %v394 = vadd.f32 0.0, %v393
      %v395 = vpop.f32.mrb[0].mxu0
      %v396 = vpop.f32.mrb[0].mxu0
      %v397 = vadd.f32 0.0, %v396
      %v398 = vpop.f32.mrb[0].mxu0
      %399 = vmatprep.mubr.bf16.mxu0 0
      %400 = vmatmul.mubr.bf16.gmra.mrb[0].mxu0 %v324
      %v401 = vpop.f32.mrb[0].mxu0
      %v402 = vadd.f32 0.0, %v401
      %v403 = vpop.f32.mrb[0].mxu0
      %v404 = vpop.f32.mrb[0].mxu0
      %v405 = vadd.f32 0.0, %v404
      %v406 = vpop.f32.mrb[0].mxu0
      %407 = vmatprep.mubr.bf16.mxu0 0
      %408 = vmatmul.mubr.bf16.gmra.mrb[0].mxu0 %v327
      %v409 = vpop.f32.mrb[0].mxu0
      %v410 = vadd.f32 0.0, %v409
      %v411 = vpop.f32.mrb[0].mxu0
      %v412 = vpop.f32.mrb[0].mxu0
      %v413 = vadd.f32 0.0, %v412
      %v414 = vpop.f32.mrb[0].mxu0
      %415 = vmatprep.mubr.bf16.mxu0 0
      %416 = vmatmul.mubr.bf16.gmra.mrb[0].mxu0 %v330
      %v417 = vpop.f32.mrb[0].mxu0
      %v418 = vadd.f32 0.0, %v417
      %v419 = vpop.f32.mrb[0].mxu0
      %v420 = vpop.f32.mrb[0].mxu0
      %v421 = vadd.f32 0.0, %v420
      %v422 = vpop.f32.mrb[0].mxu0
      %423 = vmatprep.mubr.bf16.mxu0 0
      %424 = vmatmul.mubr.bf16.gmra.mrb[0].mxu0 %v333
      %v425 = vpop.f32.mrb[0].mxu0
      %v426 = vadd.f32 0.0, %v425
      %v427 = vpop.f32.mrb[0].mxu0
      %v428 = vpop.f32.mrb[0].mxu0
      %v429 = vadd.f32 0.0, %v428
      %v430 = vpop.f32.mrb[0].mxu0
      %431 = vdwg.mxu0
      %v432 = vpack.c.bf16 %v373, %v370
      %v433 = vpack.c.bf16 %v381, %v378
      %v434 = vpack.c.bf16 %v389, %v386
      %v435 = vpack.c.bf16 %v397, %v394
      %v436 = vpack.c.bf16 %v405, %v402
      %v437 = vpack.c.bf16 %v413, %v410
      %v438 = vpack.c.bf16 %v421, %v418
      %v439 = vpack.c.bf16 %v429, %v426
      %v448 = vunpack.c.l.b16 %v432
      %v449 = vunpack.c.h.b16 %v432
      %v450 = vunpack.c.l.b16 %v433
      %v451 = vunpack.c.h.b16 %v433
      %v452 = vunpack.c.l.b16 %v434
      %v453 = vunpack.c.h.b16 %v434
      %v454 = vunpack.c.l.b16 %v435
      %v455 = vunpack.c.h.b16 %v435
      %v456 = vunpack.c.l.b16 %v436
      %v457 = vunpack.c.h.b16 %v436
      %v458 = vunpack.c.l.b16 %v437
      %v459 = vunpack.c.h.b16 %v437
      %v460 = vunpack.c.l.b16 %v438
      %v461 = vunpack.c.h.b16 %v438
      %v462 = vunpack.c.l.b16 %v439
      %v463 = vunpack.c.h.b16 %v439
      %v464 = vpack.c.b16 %v448, %v448
      %v465 = vpack.c.b16 %v449, %v449
      %v466 = vpack.c.b16 %v450, %v450
      %v467 = vpack.c.b16 %v451, %v451
      %v468 = vpack.c.b16 %v452, %v452
      %v469 = vpack.c.b16 %v453, %v453
      %v470 = vpack.c.b16 %v454, %v454
      %v471 = vpack.c.b16 %v455, %v455
      %v472 = vpack.c.b16 %v456, %v456
      %v473 = vpack.c.b16 %v457, %v457
      %v474 = vpack.c.b16 %v458, %v458
      %v475 = vpack.c.b16 %v459, %v459
      %v476 = vpack.c.b16 %v460, %v460
      %v477 = vpack.c.b16 %v461, %v461
      %v478 = vpack.c.b16 %v462, %v462
      %v479 = vpack.c.b16 %v463, %v463
      %496 = vst [vmem:[%s268] sm:$0xf] %v464
      %497 = vst [vmem:[%s268 + $0x4] sm:$0xf] %v465
      %498 = vst [vmem:[%s268 + $0x8] sm:$0xf] %v466
      %499 = vst [vmem:[%s268 + $0xc] sm:$0xf] %v467
      %500 = vst [vmem:[%s268 + $0x10] sm:$0xf] %v468
      %501 = vst [vmem:[%s268 + $0x14] sm:$0xf] %v469
      %502 = vst [vmem:[%s268 + $0x18] sm:$0xf] %v470
      %503 = vst [vmem:[%s268 + $0x1c] sm:$0xf] %v471
      %504 = vst [vmem:[%s268 + $0x20] sm:$0xf] %v472
      %505 = vst [vmem:[%s268 + $0x24] sm:$0xf] %v473
      %506 = vst [vmem:[%s268 + $0x28] sm:$0xf] %v474
      %507 = vst [vmem:[%s268 + $0x2c] sm:$0xf] %v475
      %508 = vst [vmem:[%s268 + $0x30] sm:$0xf] %v476
      %509 = vst [vmem:[%s268 + $0x34] sm:$0xf] %v477
      %510 = vst [vmem:[%s268 + $0x38] sm:$0xf] %v478
      %511 = vst [vmem:[%s268 + $0x3c] sm:$0xf] %v479
      %v512 = vld [vmem:[%s2] sm:$0xff]
      %v513 = vld [vmem:[%s2 + $0x8] sm:$0xff]
      %v515 = vsel %vm310, %v283, 0
      %v518 = vsel %vm310, %v284, 0
      %v521 = vsel %vm310, %v285, 0
      %v524 = vsel %vm310, %v286, 0
      %v527 = vsel %vm310, %v287, 0
      %v530 = vsel %vm310, %v288, 0
      %v533 = vsel %vm310, %v289, 0
      %v536 = vsel %vm310, %v290, 0
      %v539 = vsel %vm310, %v291, 0
      %v542 = vsel %vm310, %v292, 0
      %v545 = vsel %vm310, %v293, 0
      %v548 = vsel %vm310, %v294, 0
      %v551 = vsel %vm310, %v295, 0
      %v554 = vsel %vm310, %v296, 0
      %v557 = vsel %vm310, %v297, 0
      %v560 = vsel %vm310, %v298, 0
      %562 = vmatprep.subr.mxu0 0.0
      %563 = vmatpush1.msra.mxu0 %v512
      %564 = vmatprep.subr.mxu0 0.0
      %565 = vmatpush1.msra.mxu0 %v513
      %566 = vmatprep.subr.mxu0 0.0
      %567 = vmatpush1.msra.mxu0 0.0
      %568 = vmatprep.subr.mxu0 0.0
      %569 = vmatpush1.msra.mxu0 0.0
      %570 = vmatprep.subr.mxu0 0.0
      %571 = vmatpush1.msra.mxu0 0.0
      %572 = vmatprep.subr.mxu0 0.0
      %573 = vmatpush1.msra.mxu0 0.0
      %574 = vmatprep.subr.mxu0 0.0
      %575 = vmatpush1.msra.mxu0 0.0
      %576 = vmatprep.subr.mxu0 0.0
      %577 = vmatpush1.msra.mxu0 0.0
      %578 = vmatprep.subr.mxu0 0.0
      %579 = vmatpush1.msra.mxu0 0.0
      %580 = vmatprep.subr.mxu0 0.0
      %581 = vmatpush1.msra.mxu0 0.0
      %582 = vmatprep.subr.mxu0 0.0
      %583 = vmatpush1.msra.mxu0 0.0
      %584 = vmatprep.subr.mxu0 0.0
      %585 = vmatpush1.msra.mxu0 0.0
      %586 = vmatprep.subr.mxu0 0.0
      %587 = vmatpush1.msra.mxu0 0.0
      %588 = vmatprep.subr.mxu0 0.0
      %589 = vmatpush1.msra.mxu0 0.0
      %590 = vmatprep.subr.mxu0 0.0
      %591 = vmatpush1.msra.mxu0 0.0
      %592 = vmatprep.subr.mxu0 0.0
      %593 = vmatpush1.msra.mxu0 0.0
      %594 = vmatprep.subr.mxu0 0.0
      %595 = vmatpush1.msra.mxu0 0.0
      %596 = vmatprep.subr.mxu0 0.0
      %597 = vmatpush1.msra.mxu0 0.0
      %598 = vmatprep.subr.mxu0 0.0
      %599 = vmatpush1.msra.mxu0 0.0
      %600 = vmatprep.subr.mxu0 0.0
      %601 = vmatpush1.msra.mxu0 0.0
      %602 = vmatprep.subr.mxu0 0.0
      %603 = vmatpush1.msra.mxu0 0.0
      %604 = vmatprep.subr.mxu0 0.0
      %605 = vmatpush1.msra.mxu0 0.0
      %606 = vmatprep.subr.mxu0 0.0
      %607 = vmatpush1.msra.mxu0 0.0
      %608 = vmatprep.subr.mxu0 0.0
      %609 = vmatpush1.msra.mxu0 0.0
      %610 = vmatprep.subr.mxu0 0.0
      %611 = vmatpush1.msra.mxu0 0.0
      %612 = vmatprep.subr.mxu0 0.0
      %613 = vmatpush1.msra.mxu0 0.0
      %614 = vmatprep.subr.mxu0 0.0
      %615 = vmatpush1.msra.mxu0 0.0
      %616 = vmatprep.subr.mxu0 0.0
      %617 = vmatpush1.msra.mxu0 0.0
      %618 = vmatprep.subr.mxu0 0.0
      %619 = vmatpush1.msra.mxu0 0.0
      %620 = vmatprep.subr.mxu0 0.0
      %621 = vmatpush1.msra.mxu0 0.0
      %622 = vmatprep.subr.mxu0 0.0
      %623 = vmatpush1.msra.mxu0 0.0
      %624 = vmatprep.subr.mxu0 0.0
      %625 = vmatpush1.msra.mxu0 0.0
      %626 = vmatprep.mubr.f32.mxu0 0.0
      %627 = vmatmul.mubr.f32.gmra.mrb[0].mxu0 %v515
      %v628 = vpop.f32.mrb[0].mxu0
      %v629 = vadd.f32 0.0, %v628
      %v630 = vpop.f32.mrb[0].mxu0
      %631 = vmatprep.mubr.f32.mxu0 0.0
      %632 = vmatmul.mubr.f32.gmra.mrb[0].mxu0 %v518
      %v633 = vpop.f32.mrb[0].mxu0
      %v634 = vadd.f32 0.0, %v633
      %v635 = vpop.f32.mrb[0].mxu0
      %636 = vmatprep.mubr.f32.mxu0 0.0
      %637 = vmatmul.mubr.f32.gmra.mrb[0].mxu0 %v521
      %v638 = vpop.f32.mrb[0].mxu0
      %v639 = vadd.f32 0.0, %v638
      %v640 = vpop.f32.mrb[0].mxu0
      %641 = vmatprep.mubr.f32.mxu0 0.0
      %642 = vmatmul.mubr.f32.gmra.mrb[0].mxu0 %v524
      %v643 = vpop.f32.mrb[0].mxu0
      %v644 = vadd.f32 0.0, %v643
      %v645 = vpop.f32.mrb[0].mxu0
      %646 = vmatprep.mubr.f32.mxu0 0.0
      %647 = vmatmul.mubr.f32.gmra.mrb[0].mxu0 %v527
      %v648 = vpop.f32.mrb[0].mxu0
      %v649 = vadd.f32 0.0, %v648
      %v650 = vpop.f32.mrb[0].mxu0
      %651 = vmatprep.mubr.f32.mxu0 0.0
      %652 = vmatmul.mubr.f32.gmra.mrb[0].mxu0 %v530
      %v653 = vpop.f32.mrb[0].mxu0
      %v654 = vadd.f32 0.0, %v653
      %v655 = vpop.f32.mrb[0].mxu0
      %656 = vmatprep.mubr.f32.mxu0 0.0
      %657 = vmatmul.mubr.f32.gmra.mrb[0].mxu0 %v533
      %v658 = vpop.f32.mrb[0].mxu0
      %v659 = vadd.f32 0.0, %v658
      %v660 = vpop.f32.mrb[0].mxu0
      %661 = vmatprep.mubr.f32.mxu0 0.0
      %662 = vmatmul.mubr.f32.gmra.mrb[0].mxu0 %v536
      %v663 = vpop.f32.mrb[0].mxu0
      %v664 = vadd.f32 0.0, %v663
      %v665 = vpop.f32.mrb[0].mxu0
      %666 = vmatprep.mubr.f32.mxu0 0.0
      %667 = vmatmul.mubr.f32.gmra.mrb[0].mxu0 %v539
      %v668 = vpop.f32.mrb[0].mxu0
      %v669 = vadd.f32 0.0, %v668
      %v670 = vpop.f32.mrb[0].mxu0
      %671 = vmatprep.mubr.f32.mxu0 0.0
      %672 = vmatmul.mubr.f32.gmra.mrb[0].mxu0 %v542
      %v673 = vpop.f32.mrb[0].mxu0
      %v674 = vadd.f32 0.0, %v673
      %v675 = vpop.f32.mrb[0].mxu0
      %676 = vmatprep.mubr.f32.mxu0 0.0
      %677 = vmatmul.mubr.f32.gmra.mrb[0].mxu0 %v545
      %v678 = vpop.f32.mrb[0].mxu0
      %v679 = vadd.f32 0.0, %v678
      %v680 = vpop.f32.mrb[0].mxu0
      %681 = vmatprep.mubr.f32.mxu0 0.0
      %682 = vmatmul.mubr.f32.gmra.mrb[0].mxu0 %v548
      %v683 = vpop.f32.mrb[0].mxu0
      %v684 = vadd.f32 0.0, %v683
      %v685 = vpop.f32.mrb[0].mxu0
      %686 = vmatprep.mubr.f32.mxu0 0.0
      %687 = vmatmul.mubr.f32.gmra.mrb[0].mxu0 %v551
      %v688 = vpop.f32.mrb[0].mxu0
      %v689 = vadd.f32 0.0, %v688
      %v690 = vpop.f32.mrb[0].mxu0
      %691 = vmatprep.mubr.f32.mxu0 0.0
      %692 = vmatmul.mubr.f32.gmra.mrb[0].mxu0 %v554
      %v693 = vpop.f32.mrb[0].mxu0
      %v694 = vadd.f32 0.0, %v693
      %v695 = vpop.f32.mrb[0].mxu0
      %696 = vmatprep.mubr.f32.mxu0 0.0
      %697 = vmatmul.mubr.f32.gmra.mrb[0].mxu0 %v557
      %v698 = vpop.f32.mrb[0].mxu0
      %v699 = vadd.f32 0.0, %v698
      %v700 = vpop.f32.mrb[0].mxu0
      %701 = vmatprep.mubr.f32.mxu0 0.0
      %702 = vmatmul.mubr.f32.gmra.mrb[0].mxu0 %v560
      %v703 = vpop.f32.mrb[0].mxu0
      %v704 = vadd.f32 0.0, %v703
      %v705 = vpop.f32.mrb[0].mxu0
      %706 = vdwg.mxu0
      %vm707 = vcmask 31744
      %708 = vst.msk [vmem:[%s274] sm:$0xff] %vm707, %v629
      %709 = vst.msk [vmem:[%s274 + $0x8] sm:$0xff] %vm707, %v634
      %710 = vst.msk [vmem:[%s274 + $0x10] sm:$0xff] %vm707, %v639
      %711 = vst.msk [vmem:[%s274 + $0x18] sm:$0xff] %vm707, %v644
      %712 = vst.msk [vmem:[%s274 + $0x20] sm:$0xff] %vm707, %v649
      %713 = vst.msk [vmem:[%s274 + $0x28] sm:$0xff] %vm707, %v654
      %714 = vst.msk [vmem:[%s274 + $0x30] sm:$0xff] %vm707, %v659
      %715 = vst.msk [vmem:[%s274 + $0x38] sm:$0xff] %vm707, %v664
      %716 = vst.msk [vmem:[%s274 + $0x40] sm:$0xff] %vm707, %v669
      %717 = vst.msk [vmem:[%s274 + $0x48] sm:$0xff] %vm707, %v674
      %718 = vst.msk [vmem:[%s274 + $0x50] sm:$0xff] %vm707, %v679
      %719 = vst.msk [vmem:[%s274 + $0x58] sm:$0xff] %vm707, %v684
      %720 = vst.msk [vmem:[%s274 + $0x60] sm:$0xff] %vm707, %v689
      %721 = vst.msk [vmem:[%s274 + $0x68] sm:$0xff] %vm707, %v694
      %722 = vst.msk [vmem:[%s274 + $0x70] sm:$0xff] %vm707, %v699
      %723 = vst.msk [vmem:[%s274 + $0x78] sm:$0xff] %vm707, %v704
      %v724 = vld [vmem:[%s3] sm:$0xff]
      %v725 = vld [vmem:[%s3 + $0x8] sm:$0xff]
      %726 = vmatprep.subr.mxu0 0.0
      %727 = vmatpush1.msra.mxu0 %v724
      %728 = vmatprep.subr.mxu0 0.0
      %729 = vmatpush1.msra.mxu0 %v725
      %730 = vmatprep.subr.mxu0 0.0
      %731 = vmatpush1.msra.mxu0 0.0
      %732 = vmatprep.subr.mxu0 0.0
      %733 = vmatpush1.msra.mxu0 0.0
      %734 = vmatprep.subr.mxu0 0.0
      %735 = vmatpush1.msra.mxu0 0.0
      %736 = vmatprep.subr.mxu0 0.0
      %737 = vmatpush1.msra.mxu0 0.0
      %738 = vmatprep.subr.mxu0 0.0
      %739 = vmatpush1.msra.mxu0 0.0
      %740 = vmatprep.subr.mxu0 0.0
      %741 = vmatpush1.msra.mxu0 0.0
      %742 = vmatprep.subr.mxu0 0.0
      %743 = vmatpush1.msra.mxu0 0.0
      %744 = vmatprep.subr.mxu0 0.0
      %745 = vmatpush1.msra.mxu0 0.0
      %746 = vmatprep.subr.mxu0 0.0
      %747 = vmatpush1.msra.mxu0 0.0
      %748 = vmatprep.subr.mxu0 0.0
      %749 = vmatpush1.msra.mxu0 0.0
      %750 = vmatprep.subr.mxu0 0.0
      %751 = vmatpush1.msra.mxu0 0.0
      %752 = vmatprep.subr.mxu0 0.0
      %753 = vmatpush1.msra.mxu0 0.0
      %754 = vmatprep.subr.mxu0 0.0
      %755 = vmatpush1.msra.mxu0 0.0
      %756 = vmatprep.subr.mxu0 0.0
      %757 = vmatpush1.msra.mxu0 0.0
      %758 = vmatprep.subr.mxu0 0.0
      %759 = vmatpush1.msra.mxu0 0.0
      %760 = vmatprep.subr.mxu0 0.0
      %761 = vmatpush1.msra.mxu0 0.0
      %762 = vmatprep.subr.mxu0 0.0
      %763 = vmatpush1.msra.mxu0 0.0
      %764 = vmatprep.subr.mxu0 0.0
      %765 = vmatpush1.msra.mxu0 0.0
      %766 = vmatprep.subr.mxu0 0.0
      %767 = vmatpush1.msra.mxu0 0.0
      %768 = vmatprep.subr.mxu0 0.0
      %769 = vmatpush1.msra.mxu0 0.0
      %770 = vmatprep.subr.mxu0 0.0
      %771 = vmatpush1.msra.mxu0 0.0
      %772 = vmatprep.subr.mxu0 0.0
      %773 = vmatpush1.msra.mxu0 0.0
      %774 = vmatprep.subr.mxu0 0.0
      %775 = vmatpush1.msra.mxu0 0.0
      %776 = vmatprep.subr.mxu0 0.0
      %777 = vmatpush1.msra.mxu0 0.0
      %778 = vmatprep.subr.mxu0 0.0
      %779 = vmatpush1.msra.mxu0 0.0
      %780 = vmatprep.subr.mxu0 0.0
      %781 = vmatpush1.msra.mxu0 0.0
      %782 = vmatprep.subr.mxu0 0.0
      %783 = vmatpush1.msra.mxu0 0.0
      %784 = vmatprep.subr.mxu0 0.0
      %785 = vmatpush1.msra.mxu0 0.0
      %786 = vmatprep.subr.mxu0 0.0
      %787 = vmatpush1.msra.mxu0 0.0
      %788 = vmatprep.subr.mxu0 0.0
      %789 = vmatpush1.msra.mxu0 0.0
      %790 = vmatprep.mubr.f32.mxu0 0.0
      %791 = vmatmul.mubr.f32.gmra.mrb[0].mxu0 %v515
      %v792 = vpop.f32.mrb[0].mxu0
      %v793 = vadd.f32 0.0, %v792
      %v794 = vpop.f32.mrb[0].mxu0
      %795 = vmatprep.mubr.f32.mxu0 0.0
      %796 = vmatmul.mubr.f32.gmra.mrb[0].mxu0 %v518
      %v797 = vpop.f32.mrb[0].mxu0
      %v798 = vadd.f32 0.0, %v797
      %v799 = vpop.f32.mrb[0].mxu0
      %800 = vmatprep.mubr.f32.mxu0 0.0
      %801 = vmatmul.mubr.f32.gmra.mrb[0].mxu0 %v521
      %v802 = vpop.f32.mrb[0].mxu0
      %v803 = vadd.f32 0.0, %v802
      %v804 = vpop.f32.mrb[0].mxu0
      %805 = vmatprep.mubr.f32.mxu0 0.0
      %806 = vmatmul.mubr.f32.gmra.mrb[0].mxu0 %v524
      %v807 = vpop.f32.mrb[0].mxu0
      %v808 = vadd.f32 0.0, %v807
      %v809 = vpop.f32.mrb[0].mxu0
      %810 = vmatprep.mubr.f32.mxu0 0.0
      %811 = vmatmul.mubr.f32.gmra.mrb[0].mxu0 %v527
      %v812 = vpop.f32.mrb[0].mxu0
      %v813 = vadd.f32 0.0, %v812
      %v814 = vpop.f32.mrb[0].mxu0
      %815 = vmatprep.mubr.f32.mxu0 0.0
      %816 = vmatmul.mubr.f32.gmra.mrb[0].mxu0 %v530
      %v817 = vpop.f32.mrb[0].mxu0
      %v818 = vadd.f32 0.0, %v817
      %v819 = vpop.f32.mrb[0].mxu0
      %820 = vmatprep.mubr.f32.mxu0 0.0
      %821 = vmatmul.mubr.f32.gmra.mrb[0].mxu0 %v533
      %v822 = vpop.f32.mrb[0].mxu0
      %v823 = vadd.f32 0.0, %v822
      %v824 = vpop.f32.mrb[0].mxu0
      %825 = vmatprep.mubr.f32.mxu0 0.0
      %826 = vmatmul.mubr.f32.gmra.mrb[0].mxu0 %v536
      %v827 = vpop.f32.mrb[0].mxu0
      %v828 = vadd.f32 0.0, %v827
      %v829 = vpop.f32.mrb[0].mxu0
      %830 = vmatprep.mubr.f32.mxu0 0.0
      %831 = vmatmul.mubr.f32.gmra.mrb[0].mxu0 %v539
      %v832 = vpop.f32.mrb[0].mxu0
      %v833 = vadd.f32 0.0, %v832
      %v834 = vpop.f32.mrb[0].mxu0
      %835 = vmatprep.mubr.f32.mxu0 0.0
      %836 = vmatmul.mubr.f32.gmra.mrb[0].mxu0 %v542
      %v837 = vpop.f32.mrb[0].mxu0
      %v838 = vadd.f32 0.0, %v837
      %v839 = vpop.f32.mrb[0].mxu0
      %840 = vmatprep.mubr.f32.mxu0 0.0
      %841 = vmatmul.mubr.f32.gmra.mrb[0].mxu0 %v545
      %v842 = vpop.f32.mrb[0].mxu0
      %v843 = vadd.f32 0.0, %v842
      %v844 = vpop.f32.mrb[0].mxu0
      %845 = vmatprep.mubr.f32.mxu0 0.0
      %846 = vmatmul.mubr.f32.gmra.mrb[0].mxu0 %v548
      %v847 = vpop.f32.mrb[0].mxu0
      %v848 = vadd.f32 0.0, %v847
      %v849 = vpop.f32.mrb[0].mxu0
      %850 = vmatprep.mubr.f32.mxu0 0.0
      %851 = vmatmul.mubr.f32.gmra.mrb[0].mxu0 %v551
      %v852 = vpop.f32.mrb[0].mxu0
      %v853 = vadd.f32 0.0, %v852
      %v854 = vpop.f32.mrb[0].mxu0
      %855 = vmatprep.mubr.f32.mxu0 0.0
      %856 = vmatmul.mubr.f32.gmra.mrb[0].mxu0 %v554
      %v857 = vpop.f32.mrb[0].mxu0
      %v858 = vadd.f32 0.0, %v857
      %v859 = vpop.f32.mrb[0].mxu0
      %860 = vmatprep.mubr.f32.mxu0 0.0
      %861 = vmatmul.mubr.f32.gmra.mrb[0].mxu0 %v557
      %v862 = vpop.f32.mrb[0].mxu0
      %v863 = vadd.f32 0.0, %v862
      %v864 = vpop.f32.mrb[0].mxu0
      %865 = vmatprep.mubr.f32.mxu0 0.0
      %866 = vmatmul.mubr.f32.gmra.mrb[0].mxu0 %v560
      %v867 = vpop.f32.mrb[0].mxu0
      %v868 = vadd.f32 0.0, %v867
      %v869 = vpop.f32.mrb[0].mxu0
      %870 = vdwg.mxu0
      %871 = vst.msk [vmem:[%s280] sm:$0xff] %vm707, %v793
      %872 = vst.msk [vmem:[%s280 + $0x8] sm:$0xff] %vm707, %v798
      %873 = vst.msk [vmem:[%s280 + $0x10] sm:$0xff] %vm707, %v803
      %874 = vst.msk [vmem:[%s280 + $0x18] sm:$0xff] %vm707, %v808
      %875 = vst.msk [vmem:[%s280 + $0x20] sm:$0xff] %vm707, %v813
      %876 = vst.msk [vmem:[%s280 + $0x28] sm:$0xff] %vm707, %v818
      %877 = vst.msk [vmem:[%s280 + $0x30] sm:$0xff] %vm707, %v823
      %878 = vst.msk [vmem:[%s280 + $0x38] sm:$0xff] %vm707, %v828
      %879 = vst.msk [vmem:[%s280 + $0x40] sm:$0xff] %vm707, %v833
      %880 = vst.msk [vmem:[%s280 + $0x48] sm:$0xff] %vm707, %v838
      %881 = vst.msk [vmem:[%s280 + $0x50] sm:$0xff] %vm707, %v843
      %882 = vst.msk [vmem:[%s280 + $0x58] sm:$0xff] %vm707, %v848
      %883 = vst.msk [vmem:[%s280 + $0x60] sm:$0xff] %vm707, %v853
      %884 = vst.msk [vmem:[%s280 + $0x68] sm:$0xff] %vm707, %v858
      %885 = vst.msk [vmem:[%s280 + $0x70] sm:$0xff] %vm707, %v863
      %886 = vst.msk [vmem:[%s280 + $0x78] sm:$0xff] %vm707, %v868
      %s887 = smul.u32 16, %s18
      %p888 = scmp.lt.s32.totalorder %s887, 31
      %s889 = scalar_select %p888, %s887, 31
      %s890 = smul.addr %s889, 4
      %s891 = scalar_lea.vmem %s4, %s890
      %s892 = smul.u32 16, %s18
      %p893 = scmp.lt.s32.totalorder %s892, 31
      %s894 = scalar_select %p893, %s892, 31
      %s895 = smul.addr %s894, 8
      %s896 = scalar_lea.vmem %s5, %s895
      %s897 = smul.u32 16, %s18
      %p898 = scmp.lt.s32.totalorder %s897, 31
      %s899 = scalar_select %p898, %s897, 31
      %s900 = smul.addr %s899, 8
      %s901 = scalar_lea.vmem %s6, %s900
      // Predicated region
      $region37: #{gat_forward.6} parent=35 // pred_check
        %p902 = pneg %p125
      $region38: #{gat_forward.6} parent=35 // pred_check_branch
        %904 = sbr.rel (%p902) target = $region40
      $region39: #{gat_forward.6} parent=35 // pred_region
        %s905 = smul.u32 16, %s18
      $region40: #{gat_forward.6} parent=35 // pred_fallthru
        _
      // Predicated region
      $region41: #{gat_forward.6} parent=35 // pred_check
        %p906 = pneg %p151
      $region42: #{gat_forward.6} parent=35 // pred_check_branch
        %908 = sbr.rel (%p906) target = $region44
      $region43: #{gat_forward.6} parent=35 // pred_region
        %s909 = smul.u32 16, %s18
      $region44: #{gat_forward.6} parent=35 // pred_fallthru
        _
      // Predicated region
      $region45: #{gat_forward.6} parent=35 // pred_check
        %p910 = pneg %p177
      $region46: #{gat_forward.6} parent=35 // pred_check_branch
        %912 = sbr.rel (%p910) target = $region48
      $region47: #{gat_forward.6} parent=35 // pred_region
        %s913 = smul.u32 16, %s18
      $region48: #{gat_forward.6} parent=35 // pred_fallthru
        _
    $region36: #{gat_forward.6} parent=5 // pred_fallthru
      _
    %p914 = scmp.le.s32.totalorder 2, %s13
    // Predicated region
    $region49: #{gat_forward.6} parent=5 // pred_check
      %p915 = pneg %p914
    $region50: #{gat_forward.6} parent=5 // pred_check_branch
      %917 = sbr.rel (%p915) target = $region52
    $region51: #{gat_forward.6} parent=5 // pred_region
      %s918 = ssub.s32 %s13, 2
      // Predicated region
      $region53: #{gat_forward.6} parent=51 // pred_check
        %p919 = pneg %p131
      $region54: #{gat_forward.6} parent=51 // pred_check_branch
        %921 = sbr.rel (%p919) target = $region56
      $region55: #{gat_forward.6} parent=51 // pred_region
        %s922 = smul.u32 16, %s19
        %p923 = scmp.lt.s32.totalorder %s922, 31
        %s924 = scalar_select %p923, %s922, 31
        %s925 = smul.addr %s924, 4
        %s926 = scalar_lea.vmem %s4, %s925
      $region56: #{gat_forward.6} parent=51 // pred_fallthru
        _
      // Predicated region
      $region57: #{gat_forward.6} parent=51 // pred_check
        %p927 = pneg %p157
      $region58: #{gat_forward.6} parent=51 // pred_check_branch
        %929 = sbr.rel (%p927) target = $region60
      $region59: #{gat_forward.6} parent=51 // pred_region
        %s930 = smul.u32 16, %s19
        %p931 = scmp.lt.s32.totalorder %s930, 31
        %s932 = scalar_select %p931, %s930, 31
        %s933 = smul.addr %s932, 8
        %s934 = scalar_lea.vmem %s5, %s933
      $region60: #{gat_forward.6} parent=51 // pred_fallthru
        _
      // Predicated region
      $region61: #{gat_forward.6} parent=51 // pred_check
        %p935 = pneg %p183
      $region62: #{gat_forward.6} parent=51 // pred_check_branch
        %937 = sbr.rel (%p935) target = $region64
      $region63: #{gat_forward.6} parent=51 // pred_region
        %s938 = smul.u32 16, %s19
        %p939 = scmp.lt.s32.totalorder %s938, 31
        %s940 = scalar_select %p939, %s938, 31
        %s941 = smul.addr %s940, 8
        %s942 = scalar_lea.vmem %s6, %s941
      $region64: #{gat_forward.6} parent=51 // pred_fallthru
        _
    $region52: #{gat_forward.6} parent=5 // pred_fallthru
      _
  $region6: #{gat_forward.6} parent=0 // loop_footer
    %s17 = sadd.s32 1, %s13
  $region7: #{gat_forward.6} parent=0 // loop_footer_branch
    %12 = sbr.rel target = $region3
  $region8: #{gat_forward.6} parent=0 // loop_exit
    _

// kernel: gat_forward.8
$region0: #{gat_forward.8}
  #allocation0 [shape = 'u32[]', space=smem, size = 0x4, offset = 0x4, fixed_abs, tag = 'smem constant byte address 0x4 - core index']
  #allocation1 [shape = 'u32[144,128]{1,0:T(1,128)}', space=vmem, size = 0x12000, scoped, tag = 'internal scratch']
  %s0 = inlined_call_operand.vmem [shape: bf16[256,128], index: 0, kind: input, shape index: {}]
  %s1 = inlined_call_operand.vmem [shape: f32[128,128], index: 1, kind: input, shape index: {}]
  %s2 = inlined_call_operand.vmem [shape: f32[128,4], index: 2, kind: input, shape index: {}]
  %s3 = inlined_call_operand.vmem [shape: f32[128,4], index: 3, kind: input, shape index: {}]
  %s4 = inlined_call_operand.vmem [shape: bf16[256,128], index: 4, kind: output, shape index: {0}]
  %s5 = inlined_call_operand.vmem [shape: f32[256,4], index: 5, kind: output, shape index: {1}]
  %s6 = inlined_call_operand.vmem [shape: f32[256,4], index: 6, kind: output, shape index: {2}]
  %7 = xla_tuple %s4, %s5, %s6
  %s8 = sld [smem:[#allocation0]]
  $region65: #{gat_forward.8} parent=0
    _
  %s10 = ssub.s32 1, %s8
  %s11 = scalar_select 0, %s10, %s8
  loop: start=0, step=1, limit=4
  $region2: #{gat_forward.8} parent=0 // loop_pre_header
    _
  $region3: #{gat_forward.8} parent=0 // loop_header
    %s13 = sphi 0, %s17
    %p14 = scmp.ge.s32.totalorder %s13, 4
    %s23 = sphi 0, %s25
    %s26 = sphi 0, %s23
    %s27 = sphi 0, %s26
    %s43 = sphi 0, %s27
    %s47 = sphi 0, %s47
    %s49 = sphi 0, %s47
    %s50 = sphi 0, %s49
    %s64 = sphi 0, %s50
    %s68 = sphi 0, %s68
    %s70 = sphi 0, %s68
    %s71 = sphi 0, %s70
    %s85 = sphi 0, %s71
    %s89 = sphi 0, %s89
    %s91 = sphi 0, %s89
    %s92 = sphi 0, %s91
    %s106 = sphi 0, %s92
    %s112 = sphi 0, %s114
    %s115 = sphi 0, %s112
    %s116 = sphi 0, %s115
    %s132 = sphi 0, %s116
    %s138 = sphi 0, %s140
    %s141 = sphi 0, %s138
    %s142 = sphi 0, %s141
    %s158 = sphi 0, %s142
    %s164 = sphi 0, %s166
    %s167 = sphi 0, %s164
    %s168 = sphi 0, %s167
    %s184 = sphi 0, %s168
  $region4: #{gat_forward.8} parent=0 // loop_header_branch
    %16 = sbr.rel (%p14) target = $region8
  $region5: #{gat_forward.8} parent=0 // loop_body
    %s18 = ssub.s32 %s13, 1
    %s19 = ssub.s32 %s13, 2
    %s20 = sadd.s32 %s13, 1
    %s21 = ssub.s32 %s13, %s20
    %p22 = scmp.eq.s32.totalorder %s21, 0
    %s24 = sadd.s32 %s23, 1
    %s25 = scalar_select %p22, %s23, %s24
    %p28 = pneg %p22
    %p29 = scmp.eq.s32.totalorder %s13, 1
    %p30 = por %p28, %p29
    %p31 = scmp.ne.s32.totalorder %s23, %s26
    %p32 = scmp.eq.s32.totalorder %s13, 0
    %p33 = por %p31, %p32
    %p34 = scmp.ne.s32.totalorder %s23, %s26
    %p35 = scmp.eq.s32.totalorder %s18, 1
    %p36 = por %p34, %p35
    %p37 = scmp.ne.s32.totalorder %s26, %s27
    %p38 = scmp.eq.s32.totalorder %s18, 0
    %p39 = por %p37, %p38
    %p40 = scmp.ne.s32.totalorder %s26, %s27
    %p41 = scmp.eq.s32.totalorder %s19, 1
    %p42 = por %p40, %p41
    %p44 = scmp.ne.s32.totalorder %s27, %s43
    %p45 = scmp.eq.s32.totalorder %s19, 0
    %p46 = por %p44, %p45
    %s48 = sadd.s32 %s47, 1
    %p51 = scmp.eq.s32.totalorder %s13, 1
    %p52 = scmp.ne.s32.totalorder %s47, %s49
    %p53 = scmp.eq.s32.totalorder %s13, 0
    %p54 = por %p52, %p53
    %p55 = scmp.ne.s32.totalorder %s47, %s49
    %p56 = scmp.eq.s32.totalorder %s18, 1
    %p57 = por %p55, %p56
    %p58 = scmp.ne.s32.totalorder %s49, %s50
    %p59 = scmp.eq.s32.totalorder %s18, 0
    %p60 = por %p58, %p59
    %p61 = scmp.ne.s32.totalorder %s49, %s50
    %p62 = scmp.eq.s32.totalorder %s19, 1
    %p63 = por %p61, %p62
    %p65 = scmp.ne.s32.totalorder %s50, %s64
    %p66 = scmp.eq.s32.totalorder %s19, 0
    %p67 = por %p65, %p66
    %s69 = sadd.s32 %s68, 1
    %p72 = scmp.eq.s32.totalorder %s13, 1
    %p73 = scmp.ne.s32.totalorder %s68, %s70
    %p74 = scmp.eq.s32.totalorder %s13, 0
    %p75 = por %p73, %p74
    %p76 = scmp.ne.s32.totalorder %s68, %s70
    %p77 = scmp.eq.s32.totalorder %s18, 1
    %p78 = por %p76, %p77
    %p79 = scmp.ne.s32.totalorder %s70, %s71
    %p80 = scmp.eq.s32.totalorder %s18, 0
    %p81 = por %p79, %p80
    %p82 = scmp.ne.s32.totalorder %s70, %s71
    %p83 = scmp.eq.s32.totalorder %s19, 1
    %p84 = por %p82, %p83
    %p86 = scmp.ne.s32.totalorder %s71, %s85
    %p87 = scmp.eq.s32.totalorder %s19, 0
    %p88 = por %p86, %p87
    %s90 = sadd.s32 %s89, 1
    %p93 = scmp.eq.s32.totalorder %s13, 1
    %p94 = scmp.ne.s32.totalorder %s89, %s91
    %p95 = scmp.eq.s32.totalorder %s13, 0
    %p96 = por %p94, %p95
    %p97 = scmp.ne.s32.totalorder %s89, %s91
    %p98 = scmp.eq.s32.totalorder %s18, 1
    %p99 = por %p97, %p98
    %p100 = scmp.ne.s32.totalorder %s91, %s92
    %p101 = scmp.eq.s32.totalorder %s18, 0
    %p102 = por %p100, %p101
    %p103 = scmp.ne.s32.totalorder %s91, %s92
    %p104 = scmp.eq.s32.totalorder %s19, 1
    %p105 = por %p103, %p104
    %p107 = scmp.ne.s32.totalorder %s92, %s106
    %p108 = scmp.eq.s32.totalorder %s19, 0
    %p109 = por %p107, %p108
    %s110 = ssub.s32 %s13, %s20
    %p111 = scmp.eq.s32.totalorder %s110, 0
    %s113 = sadd.s32 %s112, 1
    %s114 = scalar_select %p111, %s112, %s113
    %p117 = pneg %p111
    %p118 = scmp.eq.s32.totalorder %s13, 1
    %p119 = por %p117, %p118
    %p120 = scmp.ne.s32.totalorder %s112, %s115
    %p121 = scmp.eq.s32.totalorder %s13, 0
    %p122 = por %p120, %p121
    %p123 = scmp.ne.s32.totalorder %s112, %s115
    %p124 = scmp.eq.s32.totalorder %s18, 1
    %p125 = por %p123, %p124
    %p126 = scmp.ne.s32.totalorder %s115, %s116
    %p127 = scmp.eq.s32.totalorder %s18, 0
    %p128 = por %p126, %p127
    %p129 = scmp.ne.s32.totalorder %s115, %s116
    %p130 = scmp.eq.s32.totalorder %s19, 1
    %p131 = por %p129, %p130
    %p133 = scmp.ne.s32.totalorder %s116, %s132
    %p134 = scmp.eq.s32.totalorder %s19, 0
    %p135 = por %p133, %p134
    %s136 = ssub.s32 %s13, %s20
    %p137 = scmp.eq.s32.totalorder %s136, 0
    %s139 = sadd.s32 %s138, 1
    %s140 = scalar_select %p137, %s138, %s139
    %p143 = pneg %p137
    %p144 = scmp.eq.s32.totalorder %s13, 1
    %p145 = por %p143, %p144
    %p146 = scmp.ne.s32.totalorder %s138, %s141
    %p147 = scmp.eq.s32.totalorder %s13, 0
    %p148 = por %p146, %p147
    %p149 = scmp.ne.s32.totalorder %s138, %s141
    %p150 = scmp.eq.s32.totalorder %s18, 1
    %p151 = por %p149, %p150
    %p152 = scmp.ne.s32.totalorder %s141, %s142
    %p153 = scmp.eq.s32.totalorder %s18, 0
    %p154 = por %p152, %p153
    %p155 = scmp.ne.s32.totalorder %s141, %s142
    %p156 = scmp.eq.s32.totalorder %s19, 1
    %p157 = por %p155, %p156
    %p159 = scmp.ne.s32.totalorder %s142, %s158
    %p160 = scmp.eq.s32.totalorder %s19, 0
    %p161 = por %p159, %p160
    %s162 = ssub.s32 %s13, %s20
    %p163 = scmp.eq.s32.totalorder %s162, 0
    %s165 = sadd.s32 %s164, 1
    %s166 = scalar_select %p163, %s164, %s165
    %p169 = pneg %p163
    %p170 = scmp.eq.s32.totalorder %s13, 1
    %p171 = por %p169, %p170
    %p172 = scmp.ne.s32.totalorder %s164, %s167
    %p173 = scmp.eq.s32.totalorder %s13, 0
    %p174 = por %p172, %p173
    %p175 = scmp.ne.s32.totalorder %s164, %s167
    %p176 = scmp.eq.s32.totalorder %s18, 1
    %p177 = por %p175, %p176
    %p178 = scmp.ne.s32.totalorder %s167, %s168
    %p179 = scmp.eq.s32.totalorder %s18, 0
    %p180 = por %p178, %p179
    %p181 = scmp.ne.s32.totalorder %s167, %s168
    %p182 = scmp.eq.s32.totalorder %s19, 1
    %p183 = por %p181, %p182
    %p185 = scmp.ne.s32.totalorder %s168, %s184
    %p186 = scmp.eq.s32.totalorder %s19, 0
    %p187 = por %p185, %p186
    %p188 = scmp.le.s32.totalorder 1, %s13
    %p189 = scmp.lt.s32.totalorder %s13, 3
    %p190 = pnand %p188, %p189
    %p191 = pneg %p190
    // Predicated region
    $region9: #{gat_forward.8} parent=5 // pred_check
      _
    $region10: #{gat_forward.8} parent=5 // pred_check_branch
      %193 = sbr.rel (%p190) target = $region12
    $region11: #{gat_forward.8} parent=5 // pred_region
      %s194 = ssub.s32 %s13, 1
      // Predicated region
      $region13: #{gat_forward.8} parent=11 // pred_check
        %p195 = pneg %p60
      $region14: #{gat_forward.8} parent=11 // pred_check_branch
        %197 = sbr.rel (%p195) target = $region16
      $region15: #{gat_forward.8} parent=11 // pred_region
        _
      $region16: #{gat_forward.8} parent=11 // pred_fallthru
        _
      // Predicated region
      $region17: #{gat_forward.8} parent=11 // pred_check
        %p198 = pneg %p81
      $region18: #{gat_forward.8} parent=11 // pred_check_branch
        %200 = sbr.rel (%p198) target = $region20
      $region19: #{gat_forward.8} parent=11 // pred_region
        _
      $region20: #{gat_forward.8} parent=11 // pred_fallthru
        _
      // Predicated region
      $region21: #{gat_forward.8} parent=11 // pred_check
        %p201 = pneg %p102
      $region22: #{gat_forward.8} parent=11 // pred_check_branch
        %203 = sbr.rel (%p201) target = $region24
      $region23: #{gat_forward.8} parent=11 // pred_region
        _
      $region24: #{gat_forward.8} parent=11 // pred_fallthru
        _
    $region12: #{gat_forward.8} parent=5 // pred_fallthru
      _
    %p204 = scmp.lt.s32.totalorder %s13, 2
    // Predicated region
    $region25: #{gat_forward.8} parent=5 // pred_check
      %p205 = pneg %p204
    $region26: #{gat_forward.8} parent=5 // pred_check_branch
      %207 = sbr.rel (%p205) target = $region28
    $region27: #{gat_forward.8} parent=5 // pred_region
      // Predicated region
      $region29: #{gat_forward.8} parent=27 // pred_check
        %p208 = pneg %p33
      $region30: #{gat_forward.8} parent=27 // pred_check_branch
        %210 = sbr.rel (%p208) target = $region32
      $region31: #{gat_forward.8} parent=27 // pred_region
        %s211 = smul.u32 16, %s13
        %p212 = scmp.lt.s32.totalorder %s211, 31
        %s213 = scalar_select %p212, %s211, 31
        %s214 = smul.addr %s213, 4
        %s215 = scalar_lea.vmem %s0, %s214
        %s216 = smul.u32 16, %s13
      $region32: #{gat_forward.8} parent=27 // pred_fallthru
        _
    $region28: #{gat_forward.8} parent=5 // pred_fallthru
      _
    %p217 = scmp.le.s32.totalorder 1, %s13
    %p218 = scmp.lt.s32.totalorder %s13, 3
    %p219 = pnand %p217, %p218
    %p220 = pneg %p219
    // Predicated region
    $region33: #{gat_forward.8} parent=5 // pred_check
      _
    $region34: #{gat_forward.8} parent=5 // pred_check_branch
      %222 = sbr.rel (%p219) target = $region36
    $region35: #{gat_forward.8} parent=5 // pred_region
      %s223 = ssub.s32 %s13, 1
      %s224 = smul.u32 16, %s18
      %p225 = scmp.lt.s32.totalorder %s224, 31
      %s226 = scalar_select %p225, %s224, 31
      %s227 = smul.addr %s226, 4
      %s228 = scalar_lea.vmem %s0, %s227
      %p229 = pneg %p39
      %p230 = pneg %p36
      %p231 = pneg %p60
      %p232 = pneg %p57
      %p233 = pneg %p81
      %p234 = pneg %p78
      %p235 = pneg %p102
      %p236 = pneg %p99
      %p237 = pneg %p128
      %p238 = pneg %p125
      %s239 = smul.u32 16, %s18
      %p240 = scmp.lt.s32.totalorder %s239, 31
      %s241 = scalar_select %p240, %s239, 31
      %s242 = smul.addr %s241, 4
      %s243 = scalar_lea.vmem %s4, %s242
      %p244 = pneg %p154
      %p245 = pneg %p151
      %s246 = smul.u32 16, %s18
      %p247 = scmp.lt.s32.totalorder %s246, 31
      %s248 = scalar_select %p247, %s246, 31
      %s249 = smul.addr %s248, 8
      %s250 = scalar_lea.vmem %s5, %s249
      %p251 = pneg %p180
      %p252 = pneg %p177
      %s253 = smul.u32 16, %s18
      %p254 = scmp.lt.s32.totalorder %s253, 31
      %s255 = scalar_select %p254, %s253, 31
      %s256 = smul.addr %s255, 8
      %s257 = scalar_lea.vmem %s6, %s256
      %s258 = smul.u32 16, %s18
      %p259 = scmp.lt.s32.totalorder %s258, 31
      %s260 = scalar_select %p259, %s258, 31
      %s261 = smul.addr %s260, 4
      %s262 = scalar_lea.vmem %s0, %s261
      %s263 = smul.u32 16, %s18
      %s264 = smul.u32 16, %s18
      %p265 = scmp.lt.s32.totalorder %s264, 31
      %s266 = scalar_select %p265, %s264, 31
      %s267 = smul.addr %s266, 4
      %s268 = scalar_lea.vmem %s4, %s267
      %s269 = smul.u32 16, %s18
      %s270 = smul.u32 16, %s18
      %p271 = scmp.lt.s32.totalorder %s270, 31
      %s272 = scalar_select %p271, %s270, 31
      %s273 = smul.addr %s272, 8
      %s274 = scalar_lea.vmem %s5, %s273
      %s275 = smul.u32 16, %s18
      %s276 = smul.u32 16, %s18
      %p277 = scmp.lt.s32.totalorder %s276, 31
      %s278 = scalar_select %p277, %s276, 31
      %s279 = smul.addr %s278, 8
      %s280 = scalar_lea.vmem %s6, %s279
      %s281 = smul.u32 16, %s18
      %v283 = vld [vmem:[%s262] sm:$0xf]
      %v284 = vld [vmem:[%s262 + $0x4] sm:$0xf]
      %v285 = vld [vmem:[%s262 + $0x8] sm:$0xf]
      %v286 = vld [vmem:[%s262 + $0xc] sm:$0xf]
      %v287 = vld [vmem:[%s262 + $0x10] sm:$0xf]
      %v288 = vld [vmem:[%s262 + $0x14] sm:$0xf]
      %v289 = vld [vmem:[%s262 + $0x18] sm:$0xf]
      %v290 = vld [vmem:[%s262 + $0x1c] sm:$0xf]
      %v291 = vld [vmem:[%s262 + $0x20] sm:$0xf]
      %v292 = vld [vmem:[%s262 + $0x24] sm:$0xf]
      %v293 = vld [vmem:[%s262 + $0x28] sm:$0xf]
      %v294 = vld [vmem:[%s262 + $0x2c] sm:$0xf]
      %v295 = vld [vmem:[%s262 + $0x30] sm:$0xf]
      %v296 = vld [vmem:[%s262 + $0x34] sm:$0xf]
      %v297 = vld [vmem:[%s262 + $0x38] sm:$0xf]
      %v298 = vld [vmem:[%s262 + $0x3c] sm:$0xf]
      %v299 = vunpack.c.l.bf16 %v283
      %v300 = vunpack.c.l.bf16 %v284
      %v301 = vunpack.c.l.bf16 %v285
      %v302 = vunpack.c.l.bf16 %v286
      %v303 = vunpack.c.l.bf16 %v287
      %v304 = vunpack.c.l.bf16 %v288
      %v305 = vunpack.c.l.bf16 %v289
      %v306 = vunpack.c.l.bf16 %v290
      %v307 = vunpack.c.l.bf16 %v291
      %v308 = vunpack.c.l.bf16 %v292
      %v309 = vunpack.c.l.bf16 %v293
      %v310 = vunpack.c.l.bf16 %v294
      %v311 = vunpack.c.l.bf16 %v295
      %v312 = vunpack.c.l.bf16 %v296
      %v313 = vunpack.c.l.bf16 %v297
      %v314 = vunpack.c.l.bf16 %v298
      %v315 = vld [vmem:[%s1] sm:$0xff]
      %v316 = vld [vmem:[%s1 + $0x8] sm:$0xff]
      %v317 = vld [vmem:[%s1 + $0x10] sm:$0xff]
      %v318 = vld [vmem:[%s1 + $0x18] sm:$0xff]
      %v319 = vld [vmem:[%s1 + $0x20] sm:$0xff]
      %v320 = vld [vmem:[%s1 + $0x28] sm:$0xff]
      %v321 = vld [vmem:[%s1 + $0x30] sm:$0xff]
      %v322 = vld [vmem:[%s1 + $0x38] sm:$0xff]
      %v323 = vld [vmem:[%s1 + $0x40] sm:$0xff]
      %v324 = vld [vmem:[%s1 + $0x48] sm:$0xff]
      %v325 = vld [vmem:[%s1 + $0x50] sm:$0xff]
      %v326 = vld [vmem:[%s1 + $0x58] sm:$0xff]
      %v327 = vld [vmem:[%s1 + $0x60] sm:$0xff]
      %v328 = vld [vmem:[%s1 + $0x68] sm:$0xff]
      %v329 = vld [vmem:[%s1 + $0x70] sm:$0xff]
      %v330 = vld [vmem:[%s1 + $0x78] sm:$0xff]
      %v331 = vpack.c.bf16 %v316, %v315
      %v332 = vpack.c.bf16 %v318, %v317
      %v333 = vpack.c.bf16 %v320, %v319
      %v334 = vpack.c.bf16 %v322, %v321
      %v335 = vpack.c.bf16 %v324, %v323
      %v336 = vpack.c.bf16 %v326, %v325
      %v337 = vpack.c.bf16 %v328, %v327
      %v338 = vpack.c.bf16 %v330, %v329
      %v355 = vunpack.c.l.b16 %v283
      %v356 = vunpack.c.l.b16 %v284
      %v357 = vunpack.c.l.b16 %v285
      %v358 = vunpack.c.l.b16 %v286
      %v359 = vunpack.c.l.b16 %v287
      %v360 = vunpack.c.l.b16 %v288
      %v361 = vunpack.c.l.b16 %v289
      %v362 = vunpack.c.l.b16 %v290
      %v363 = vunpack.c.l.b16 %v291
      %v364 = vunpack.c.l.b16 %v292
      %v365 = vunpack.c.l.b16 %v293
      %v366 = vunpack.c.l.b16 %v294
      %v367 = vunpack.c.l.b16 %v295
      %v368 = vunpack.c.l.b16 %v296
      %v369 = vunpack.c.l.b16 %v297
      %v370 = vunpack.c.l.b16 %v298
      %v371 = vpack.c.b16 %v356, %v355
      %v372 = vpack.c.b16 %v358, %v357
      %v373 = vpack.c.b16 %v360, %v359
      %v374 = vpack.c.b16 %v362, %v361
      %v375 = vpack.c.b16 %v364, %v363
      %v376 = vpack.c.b16 %v366, %v365
      %v377 = vpack.c.b16 %v368, %v367
      %v378 = vpack.c.b16 %v370, %v369
      %387 = vmatprep.subr.bf16.mxu0 0
      %388 = vmatpush1.bf16.msra.mxu0 %v331
      %389 = vmatprep.subr.bf16.mxu0 0
      %390 = vmatpush1.bf16.msra.mxu0 %v332
      %391 = vmatprep.subr.bf16.mxu0 0
      %392 = vmatpush1.bf16.msra.mxu0 %v333
      %393 = vmatprep.subr.bf16.mxu0 0
      %394 = vmatpush1.bf16.msra.mxu0 %v334
      %395 = vmatprep.subr.bf16.mxu0 0
      %396 = vmatpush1.bf16.msra.mxu0 %v335
      %397 = vmatprep.subr.bf16.mxu0 0
      %398 = vmatpush1.bf16.msra.mxu0 %v336
      %399 = vmatprep.subr.bf16.mxu0 0
      %400 = vmatpush1.bf16.msra.mxu0 %v337
      %401 = vmatprep.subr.bf16.mxu0 0
      %402 = vmatpush1.bf16.msra.mxu0 %v338
      %403 = vmatprep.subr.bf16.mxu0 0
      %404 = vmatpush1.bf16.msra.mxu0 0
      %405 = vmatprep.subr.bf16.mxu0 0
      %406 = vmatpush1.bf16.msra.mxu0 0
      %407 = vmatprep.subr.bf16.mxu0 0
      %408 = vmatpush1.bf16.msra.mxu0 0
      %409 = vmatprep.subr.bf16.mxu0 0
      %410 = vmatpush1.bf16.msra.mxu0 0
      %411 = vmatprep.subr.bf16.mxu0 0
      %412 = vmatpush1.bf16.msra.mxu0 0
      %413 = vmatprep.subr.bf16.mxu0 0
      %414 = vmatpush1.bf16.msra.mxu0 0
      %415 = vmatprep.subr.bf16.mxu0 0
      %416 = vmatpush1.bf16.msra.mxu0 0
      %417 = vmatprep.subr.bf16.mxu0 0
      %418 = vmatpush1.bf16.msra.mxu0 0
      %419 = vmatprep.mubr.bf16.mxu0 0
      %420 = vmatmul.mubr.bf16.gmra.mrb[0].mxu0 %v371
      %v421 = vpop.f32.mrb[0].mxu0
      %v422 = vadd.f32 0.0, %v421
      %v423 = vpop.f32.mrb[0].mxu0
      %v424 = vpop.f32.mrb[0].mxu0
      %v425 = vadd.f32 0.0, %v424
      %v426 = vpop.f32.mrb[0].mxu0
      %427 = vmatprep.mubr.bf16.mxu0 0
      %428 = vmatmul.mubr.bf16.gmra.mrb[0].mxu0 %v372
      %v429 = vpop.f32.mrb[0].mxu0
      %v430 = vadd.f32 0.0, %v429
      %v431 = vpop.f32.mrb[0].mxu0
      %v432 = vpop.f32.mrb[0].mxu0
      %v433 = vadd.f32 0.0, %v432
      %v434 = vpop.f32.mrb[0].mxu0
      %435 = vmatprep.mubr.bf16.mxu0 0
      %436 = vmatmul.mubr.bf16.gmra.mrb[0].mxu0 %v373
      %v437 = vpop.f32.mrb[0].mxu0
      %v438 = vadd.f32 0.0, %v437
      %v439 = vpop.f32.mrb[0].mxu0
      %v440 = vpop.f32.mrb[0].mxu0
      %v441 = vadd.f32 0.0, %v440
      %v442 = vpop.f32.mrb[0].mxu0
      %443 = vmatprep.mubr.bf16.mxu0 0
      %444 = vmatmul.mubr.bf16.gmra.mrb[0].mxu0 %v374
      %v445 = vpop.f32.mrb[0].mxu0
      %v446 = vadd.f32 0.0, %v445
      %v447 = vpop.f32.mrb[0].mxu0
      %v448 = vpop.f32.mrb[0].mxu0
      %v449 = vadd.f32 0.0, %v448
      %v450 = vpop.f32.mrb[0].mxu0
      %451 = vmatprep.mubr.bf16.mxu0 0
      %452 = vmatmul.mubr.bf16.gmra.mrb[0].mxu0 %v375
      %v453 = vpop.f32.mrb[0].mxu0
      %v454 = vadd.f32 0.0, %v453
      %v455 = vpop.f32.mrb[0].mxu0
      %v456 = vpop.f32.mrb[0].mxu0
      %v457 = vadd.f32 0.0, %v456
      %v458 = vpop.f32.mrb[0].mxu0
      %459 = vmatprep.mubr.bf16.mxu0 0
      %460 = vmatmul.mubr.bf16.gmra.mrb[0].mxu0 %v376
      %v461 = vpop.f32.mrb[0].mxu0
      %v462 = vadd.f32 0.0, %v461
      %v463 = vpop.f32.mrb[0].mxu0
      %v464 = vpop.f32.mrb[0].mxu0
      %v465 = vadd.f32 0.0, %v464
      %v466 = vpop.f32.mrb[0].mxu0
      %467 = vmatprep.mubr.bf16.mxu0 0
      %468 = vmatmul.mubr.bf16.gmra.mrb[0].mxu0 %v377
      %v469 = vpop.f32.mrb[0].mxu0
      %v470 = vadd.f32 0.0, %v469
      %v471 = vpop.f32.mrb[0].mxu0
      %v472 = vpop.f32.mrb[0].mxu0
      %v473 = vadd.f32 0.0, %v472
      %v474 = vpop.f32.mrb[0].mxu0
      %475 = vmatprep.mubr.bf16.mxu0 0
      %476 = vmatmul.mubr.bf16.gmra.mrb[0].mxu0 %v378
      %v477 = vpop.f32.mrb[0].mxu0
      %v478 = vadd.f32 0.0, %v477
      %v479 = vpop.f32.mrb[0].mxu0
      %v480 = vpop.f32.mrb[0].mxu0
      %v481 = vadd.f32 0.0, %v480
      %v482 = vpop.f32.mrb[0].mxu0
      %483 = vdwg.mxu0
      %v484 = vpack.c.bf16 %v425, %v422
      %v485 = vpack.c.bf16 %v433, %v430
      %v486 = vpack.c.bf16 %v441, %v438
      %v487 = vpack.c.bf16 %v449, %v446
      %v488 = vpack.c.bf16 %v457, %v454
      %v489 = vpack.c.bf16 %v465, %v462
      %v490 = vpack.c.bf16 %v473, %v470
      %v491 = vpack.c.bf16 %v481, %v478
      %v500 = vunpack.c.l.b16 %v484
      %v501 = vunpack.c.h.b16 %v484
      %v502 = vunpack.c.l.b16 %v485
      %v503 = vunpack.c.h.b16 %v485
      %v504 = vunpack.c.l.b16 %v486
      %v505 = vunpack.c.h.b16 %v486
      %v506 = vunpack.c.l.b16 %v487
      %v507 = vunpack.c.h.b16 %v487
      %v508 = vunpack.c.l.b16 %v488
      %v509 = vunpack.c.h.b16 %v488
      %v510 = vunpack.c.l.b16 %v489
      %v511 = vunpack.c.h.b16 %v489
      %v512 = vunpack.c.l.b16 %v490
      %v513 = vunpack.c.h.b16 %v490
      %v514 = vunpack.c.l.b16 %v491
      %v515 = vunpack.c.h.b16 %v491
      %v516 = vpack.c.b16 %v500, %v500
      %v517 = vpack.c.b16 %v501, %v501
      %v518 = vpack.c.b16 %v502, %v502
      %v519 = vpack.c.b16 %v503, %v503
      %v520 = vpack.c.b16 %v504, %v504
      %v521 = vpack.c.b16 %v505, %v505
      %v522 = vpack.c.b16 %v506, %v506
      %v523 = vpack.c.b16 %v507, %v507
      %v524 = vpack.c.b16 %v508, %v508
      %v525 = vpack.c.b16 %v509, %v509
      %v526 = vpack.c.b16 %v510, %v510
      %v527 = vpack.c.b16 %v511, %v511
      %v528 = vpack.c.b16 %v512, %v512
      %v529 = vpack.c.b16 %v513, %v513
      %v530 = vpack.c.b16 %v514, %v514
      %v531 = vpack.c.b16 %v515, %v515
      %548 = vst [vmem:[%s268] sm:$0xf] %v516
      %549 = vst [vmem:[%s268 + $0x4] sm:$0xf] %v517
      %550 = vst [vmem:[%s268 + $0x8] sm:$0xf] %v518
      %551 = vst [vmem:[%s268 + $0xc] sm:$0xf] %v519
      %552 = vst [vmem:[%s268 + $0x10] sm:$0xf] %v520
      %553 = vst [vmem:[%s268 + $0x14] sm:$0xf] %v521
      %554 = vst [vmem:[%s268 + $0x18] sm:$0xf] %v522
      %555 = vst [vmem:[%s268 + $0x1c] sm:$0xf] %v523
      %556 = vst [vmem:[%s268 + $0x20] sm:$0xf] %v524
      %557 = vst [vmem:[%s268 + $0x24] sm:$0xf] %v525
      %558 = vst [vmem:[%s268 + $0x28] sm:$0xf] %v526
      %559 = vst [vmem:[%s268 + $0x2c] sm:$0xf] %v527
      %560 = vst [vmem:[%s268 + $0x30] sm:$0xf] %v528
      %561 = vst [vmem:[%s268 + $0x34] sm:$0xf] %v529
      %562 = vst [vmem:[%s268 + $0x38] sm:$0xf] %v530
      %563 = vst [vmem:[%s268 + $0x3c] sm:$0xf] %v531
      %v564 = vld [vmem:[%s2] sm:$0xff]
      %v565 = vld [vmem:[%s2 + $0x8] sm:$0xff]
      %v566 = vld [vmem:[%s2 + $0x10] sm:$0xff]
      %v567 = vld [vmem:[%s2 + $0x18] sm:$0xff]
      %v568 = vld [vmem:[%s2 + $0x20] sm:$0xff]
      %v569 = vld [vmem:[%s2 + $0x28] sm:$0xff]
      %v570 = vld [vmem:[%s2 + $0x30] sm:$0xff]
      %v571 = vld [vmem:[%s2 + $0x38] sm:$0xff]
      %v572 = vld [vmem:[%s2 + $0x40] sm:$0xff]
      %v573 = vld [vmem:[%s2 + $0x48] sm:$0xff]
      %v574 = vld [vmem:[%s2 + $0x50] sm:$0xff]
      %v575 = vld [vmem:[%s2 + $0x58] sm:$0xff]
      %v576 = vld [vmem:[%s2 + $0x60] sm:$0xff]
      %v577 = vld [vmem:[%s2 + $0x68] sm:$0xff]
      %v578 = vld [vmem:[%s2 + $0x70] sm:$0xff]
      %v579 = vld [vmem:[%s2 + $0x78] sm:$0xff]
      %580 = vmatprep.subr.mxu0 0.0
      %581 = vmatpush1.msra.mxu0 %v564
      %582 = vmatprep.subr.mxu0 0.0
      %583 = vmatpush1.msra.mxu0 %v565
      %584 = vmatprep.subr.mxu0 0.0
      %585 = vmatpush1.msra.mxu0 %v566
      %586 = vmatprep.subr.mxu0 0.0
      %587 = vmatpush1.msra.mxu0 %v567
      %588 = vmatprep.subr.mxu0 0.0
      %589 = vmatpush1.msra.mxu0 %v568
      %590 = vmatprep.subr.mxu0 0.0
      %591 = vmatpush1.msra.mxu0 %v569
      %592 = vmatprep.subr.mxu0 0.0
      %593 = vmatpush1.msra.mxu0 %v570
      %594 = vmatprep.subr.mxu0 0.0
      %595 = vmatpush1.msra.mxu0 %v571
      %596 = vmatprep.subr.mxu0 0.0
      %597 = vmatpush1.msra.mxu0 %v572
      %598 = vmatprep.subr.mxu0 0.0
      %599 = vmatpush1.msra.mxu0 %v573
      %600 = vmatprep.subr.mxu0 0.0
      %601 = vmatpush1.msra.mxu0 %v574
      %602 = vmatprep.subr.mxu0 0.0
      %603 = vmatpush1.msra.mxu0 %v575
      %604 = vmatprep.subr.mxu0 0.0
      %605 = vmatpush1.msra.mxu0 %v576
      %606 = vmatprep.subr.mxu0 0.0
      %607 = vmatpush1.msra.mxu0 %v577
      %608 = vmatprep.subr.mxu0 0.0
      %609 = vmatpush1.msra.mxu0 %v578
      %610 = vmatprep.subr.mxu0 0.0
      %611 = vmatpush1.msra.mxu0 %v579
      %612 = vmatprep.subr.mxu0 0.0
      %613 = vmatpush1.msra.mxu0 0.0
      %614 = vmatprep.subr.mxu0 0.0
      %615 = vmatpush1.msra.mxu0 0.0
      %616 = vmatprep.subr.mxu0 0.0
      %617 = vmatpush1.msra.mxu0 0.0
      %618 = vmatprep.subr.mxu0 0.0
      %619 = vmatpush1.msra.mxu0 0.0
      %620 = vmatprep.subr.mxu0 0.0
      %621 = vmatpush1.msra.mxu0 0.0
      %622 = vmatprep.subr.mxu0 0.0
      %623 = vmatpush1.msra.mxu0 0.0
      %624 = vmatprep.subr.mxu0 0.0
      %625 = vmatpush1.msra.mxu0 0.0
      %626 = vmatprep.subr.mxu0 0.0
      %627 = vmatpush1.msra.mxu0 0.0
      %628 = vmatprep.subr.mxu0 0.0
      %629 = vmatpush1.msra.mxu0 0.0
      %630 = vmatprep.subr.mxu0 0.0
      %631 = vmatpush1.msra.mxu0 0.0
      %632 = vmatprep.subr.mxu0 0.0
      %633 = vmatpush1.msra.mxu0 0.0
      %634 = vmatprep.subr.mxu0 0.0
      %635 = vmatpush1.msra.mxu0 0.0
      %636 = vmatprep.subr.mxu0 0.0
      %637 = vmatpush1.msra.mxu0 0.0
      %638 = vmatprep.subr.mxu0 0.0
      %639 = vmatpush1.msra.mxu0 0.0
      %640 = vmatprep.subr.mxu0 0.0
      %641 = vmatpush1.msra.mxu0 0.0
      %642 = vmatprep.subr.mxu0 0.0
      %643 = vmatpush1.msra.mxu0 0.0
      %644 = vmatprep.mubr.f32.mxu0 0.0
      %645 = vmatmul.mubr.f32.gmra.mrb[0].mxu0 %v299
      %v646 = vpop.f32.mrb[0].mxu0
      %v647 = vadd.f32 0.0, %v646
      %v648 = vpop.f32.mrb[0].mxu0
      %649 = vmatprep.mubr.f32.mxu0 0.0
      %650 = vmatmul.mubr.f32.gmra.mrb[0].mxu0 %v300
      %v651 = vpop.f32.mrb[0].mxu0
      %v652 = vadd.f32 0.0, %v651
      %v653 = vpop.f32.mrb[0].mxu0
      %654 = vmatprep.mubr.f32.mxu0 0.0
      %655 = vmatmul.mubr.f32.gmra.mrb[0].mxu0 %v301
      %v656 = vpop.f32.mrb[0].mxu0
      %v657 = vadd.f32 0.0, %v656
      %v658 = vpop.f32.mrb[0].mxu0
      %659 = vmatprep.mubr.f32.mxu0 0.0
      %660 = vmatmul.mubr.f32.gmra.mrb[0].mxu0 %v302
      %v661 = vpop.f32.mrb[0].mxu0
      %v662 = vadd.f32 0.0, %v661
      %v663 = vpop.f32.mrb[0].mxu0
      %664 = vmatprep.mubr.f32.mxu0 0.0
      %665 = vmatmul.mubr.f32.gmra.mrb[0].mxu0 %v303
      %v666 = vpop.f32.mrb[0].mxu0
      %v667 = vadd.f32 0.0, %v666
      %v668 = vpop.f32.mrb[0].mxu0
      %669 = vmatprep.mubr.f32.mxu0 0.0
      %670 = vmatmul.mubr.f32.gmra.mrb[0].mxu0 %v304
      %v671 = vpop.f32.mrb[0].mxu0
      %v672 = vadd.f32 0.0, %v671
      %v673 = vpop.f32.mrb[0].mxu0
      %674 = vmatprep.mubr.f32.mxu0 0.0
      %675 = vmatmul.mubr.f32.gmra.mrb[0].mxu0 %v305
      %v676 = vpop.f32.mrb[0].mxu0
      %v677 = vadd.f32 0.0, %v676
      %v678 = vpop.f32.mrb[0].mxu0
      %679 = vmatprep.mubr.f32.mxu0 0.0
      %680 = vmatmul.mubr.f32.gmra.mrb[0].mxu0 %v306
      %v681 = vpop.f32.mrb[0].mxu0
      %v682 = vadd.f32 0.0, %v681
      %v683 = vpop.f32.mrb[0].mxu0
      %684 = vmatprep.mubr.f32.mxu0 0.0
      %685 = vmatmul.mubr.f32.gmra.mrb[0].mxu0 %v307
      %v686 = vpop.f32.mrb[0].mxu0
      %v687 = vadd.f32 0.0, %v686
      %v688 = vpop.f32.mrb[0].mxu0
      %689 = vmatprep.mubr.f32.mxu0 0.0
      %690 = vmatmul.mubr.f32.gmra.mrb[0].mxu0 %v308
      %v691 = vpop.f32.mrb[0].mxu0
      %v692 = vadd.f32 0.0, %v691
      %v693 = vpop.f32.mrb[0].mxu0
      %694 = vmatprep.mubr.f32.mxu0 0.0
      %695 = vmatmul.mubr.f32.gmra.mrb[0].mxu0 %v309
      %v696 = vpop.f32.mrb[0].mxu0
      %v697 = vadd.f32 0.0, %v696
      %v698 = vpop.f32.mrb[0].mxu0
      %699 = vmatprep.mubr.f32.mxu0 0.0
      %700 = vmatmul.mubr.f32.gmra.mrb[0].mxu0 %v310
      %v701 = vpop.f32.mrb[0].mxu0
      %v702 = vadd.f32 0.0, %v701
      %v703 = vpop.f32.mrb[0].mxu0
      %704 = vmatprep.mubr.f32.mxu0 0.0
      %705 = vmatmul.mubr.f32.gmra.mrb[0].mxu0 %v311
      %v706 = vpop.f32.mrb[0].mxu0
      %v707 = vadd.f32 0.0, %v706
      %v708 = vpop.f32.mrb[0].mxu0
      %709 = vmatprep.mubr.f32.mxu0 0.0
      %710 = vmatmul.mubr.f32.gmra.mrb[0].mxu0 %v312
      %v711 = vpop.f32.mrb[0].mxu0
      %v712 = vadd.f32 0.0, %v711
      %v713 = vpop.f32.mrb[0].mxu0
      %714 = vmatprep.mubr.f32.mxu0 0.0
      %715 = vmatmul.mubr.f32.gmra.mrb[0].mxu0 %v313
      %v716 = vpop.f32.mrb[0].mxu0
      %v717 = vadd.f32 0.0, %v716
      %v718 = vpop.f32.mrb[0].mxu0
      %719 = vmatprep.mubr.f32.mxu0 0.0
      %720 = vmatmul.mubr.f32.gmra.mrb[0].mxu0 %v314
      %v721 = vpop.f32.mrb[0].mxu0
      %v722 = vadd.f32 0.0, %v721
      %v723 = vpop.f32.mrb[0].mxu0
      %724 = vdwg.mxu0
      %vm725 = vcmask 31744
      %726 = vst.msk [vmem:[%s274] sm:$0xff] %vm725, %v647
      %727 = vst.msk [vmem:[%s274 + $0x8] sm:$0xff] %vm725, %v652
      %728 = vst.msk [vmem:[%s274 + $0x10] sm:$0xff] %vm725, %v657
      %729 = vst.msk [vmem:[%s274 + $0x18] sm:$0xff] %vm725, %v662
      %730 = vst.msk [vmem:[%s274 + $0x20] sm:$0xff] %vm725, %v667
      %731 = vst.msk [vmem:[%s274 + $0x28] sm:$0xff] %vm725, %v672
      %732 = vst.msk [vmem:[%s274 + $0x30] sm:$0xff] %vm725, %v677
      %733 = vst.msk [vmem:[%s274 + $0x38] sm:$0xff] %vm725, %v682
      %734 = vst.msk [vmem:[%s274 + $0x40] sm:$0xff] %vm725, %v687
      %735 = vst.msk [vmem:[%s274 + $0x48] sm:$0xff] %vm725, %v692
      %736 = vst.msk [vmem:[%s274 + $0x50] sm:$0xff] %vm725, %v697
      %737 = vst.msk [vmem:[%s274 + $0x58] sm:$0xff] %vm725, %v702
      %738 = vst.msk [vmem:[%s274 + $0x60] sm:$0xff] %vm725, %v707
      %739 = vst.msk [vmem:[%s274 + $0x68] sm:$0xff] %vm725, %v712
      %740 = vst.msk [vmem:[%s274 + $0x70] sm:$0xff] %vm725, %v717
      %741 = vst.msk [vmem:[%s274 + $0x78] sm:$0xff] %vm725, %v722
      %v742 = vld [vmem:[%s3] sm:$0xff]
      %v743 = vld [vmem:[%s3 + $0x8] sm:$0xff]
      %v744 = vld [vmem:[%s3 + $0x10] sm:$0xff]
      %v745 = vld [vmem:[%s3 + $0x18] sm:$0xff]
      %v746 = vld [vmem:[%s3 + $0x20] sm:$0xff]
      %v747 = vld [vmem:[%s3 + $0x28] sm:$0xff]
      %v748 = vld [vmem:[%s3 + $0x30] sm:$0xff]
      %v749 = vld [vmem:[%s3 + $0x38] sm:$0xff]
      %v750 = vld [vmem:[%s3 + $0x40] sm:$0xff]
      %v751 = vld [vmem:[%s3 + $0x48] sm:$0xff]
      %v752 = vld [vmem:[%s3 + $0x50] sm:$0xff]
      %v753 = vld [vmem:[%s3 + $0x58] sm:$0xff]
      %v754 = vld [vmem:[%s3 + $0x60] sm:$0xff]
      %v755 = vld [vmem:[%s3 + $0x68] sm:$0xff]
      %v756 = vld [vmem:[%s3 + $0x70] sm:$0xff]
      %v757 = vld [vmem:[%s3 + $0x78] sm:$0xff]
      %758 = vmatprep.subr.mxu0 0.0
      %759 = vmatpush1.msra.mxu0 %v742
      %760 = vmatprep.subr.mxu0 0.0
      %761 = vmatpush1.msra.mxu0 %v743
      %762 = vmatprep.subr.mxu0 0.0
      %763 = vmatpush1.msra.mxu0 %v744
      %764 = vmatprep.subr.mxu0 0.0
      %765 = vmatpush1.msra.mxu0 %v745
      %766 = vmatprep.subr.mxu0 0.0
      %767 = vmatpush1.msra.mxu0 %v746
      %768 = vmatprep.subr.mxu0 0.0
      %769 = vmatpush1.msra.mxu0 %v747
      %770 = vmatprep.subr.mxu0 0.0
      %771 = vmatpush1.msra.mxu0 %v748
      %772 = vmatprep.subr.mxu0 0.0
      %773 = vmatpush1.msra.mxu0 %v749
      %774 = vmatprep.subr.mxu0 0.0
      %775 = vmatpush1.msra.mxu0 %v750
      %776 = vmatprep.subr.mxu0 0.0
      %777 = vmatpush1.msra.mxu0 %v751
      %778 = vmatprep.subr.mxu0 0.0
      %779 = vmatpush1.msra.mxu0 %v752
      %780 = vmatprep.subr.mxu0 0.0
      %781 = vmatpush1.msra.mxu0 %v753
      %782 = vmatprep.subr.mxu0 0.0
      %783 = vmatpush1.msra.mxu0 %v754
      %784 = vmatprep.subr.mxu0 0.0
      %785 = vmatpush1.msra.mxu0 %v755
      %786 = vmatprep.subr.mxu0 0.0
      %787 = vmatpush1.msra.mxu0 %v756
      %788 = vmatprep.subr.mxu0 0.0
      %789 = vmatpush1.msra.mxu0 %v757
      %790 = vmatprep.subr.mxu0 0.0
      %791 = vmatpush1.msra.mxu0 0.0
      %792 = vmatprep.subr.mxu0 0.0
      %793 = vmatpush1.msra.mxu0 0.0
      %794 = vmatprep.subr.mxu0 0.0
      %795 = vmatpush1.msra.mxu0 0.0
      %796 = vmatprep.subr.mxu0 0.0
      %797 = vmatpush1.msra.mxu0 0.0
      %798 = vmatprep.subr.mxu0 0.0
      %799 = vmatpush1.msra.mxu0 0.0
      %800 = vmatprep.subr.mxu0 0.0
      %801 = vmatpush1.msra.mxu0 0.0
      %802 = vmatprep.subr.mxu0 0.0
      %803 = vmatpush1.msra.mxu0 0.0
      %804 = vmatprep.subr.mxu0 0.0
      %805 = vmatpush1.msra.mxu0 0.0
      %806 = vmatprep.subr.mxu0 0.0
      %807 = vmatpush1.msra.mxu0 0.0
      %808 = vmatprep.subr.mxu0 0.0
      %809 = vmatpush1.msra.mxu0 0.0
      %810 = vmatprep.subr.mxu0 0.0
      %811 = vmatpush1.msra.mxu0 0.0
      %812 = vmatprep.subr.mxu0 0.0
      %813 = vmatpush1.msra.mxu0 0.0
      %814 = vmatprep.subr.mxu0 0.0
      %815 = vmatpush1.msra.mxu0 0.0
      %816 = vmatprep.subr.mxu0 0.0
      %817 = vmatpush1.msra.mxu0 0.0
      %818 = vmatprep.subr.mxu0 0.0
      %819 = vmatpush1.msra.mxu0 0.0
      %820 = vmatprep.subr.mxu0 0.0
      %821 = vmatpush1.msra.mxu0 0.0
      %822 = vmatprep.mubr.f32.mxu0 0.0
      %823 = vmatmul.mubr.f32.gmra.mrb[0].mxu0 %v299
      %v824 = vpop.f32.mrb[0].mxu0
      %v825 = vadd.f32 0.0, %v824
      %v826 = vpop.f32.mrb[0].mxu0
      %827 = vmatprep.mubr.f32.mxu0 0.0
      %828 = vmatmul.mubr.f32.gmra.mrb[0].mxu0 %v300
      %v829 = vpop.f32.mrb[0].mxu0
      %v830 = vadd.f32 0.0, %v829
      %v831 = vpop.f32.mrb[0].mxu0
      %832 = vmatprep.mubr.f32.mxu0 0.0
      %833 = vmatmul.mubr.f32.gmra.mrb[0].mxu0 %v301
      %v834 = vpop.f32.mrb[0].mxu0
      %v835 = vadd.f32 0.0, %v834
      %v836 = vpop.f32.mrb[0].mxu0
      %837 = vmatprep.mubr.f32.mxu0 0.0
      %838 = vmatmul.mubr.f32.gmra.mrb[0].mxu0 %v302
      %v839 = vpop.f32.mrb[0].mxu0
      %v840 = vadd.f32 0.0, %v839
      %v841 = vpop.f32.mrb[0].mxu0
      %842 = vmatprep.mubr.f32.mxu0 0.0
      %843 = vmatmul.mubr.f32.gmra.mrb[0].mxu0 %v303
      %v844 = vpop.f32.mrb[0].mxu0
      %v845 = vadd.f32 0.0, %v844
      %v846 = vpop.f32.mrb[0].mxu0
      %847 = vmatprep.mubr.f32.mxu0 0.0
      %848 = vmatmul.mubr.f32.gmra.mrb[0].mxu0 %v304
      %v849 = vpop.f32.mrb[0].mxu0
      %v850 = vadd.f32 0.0, %v849
      %v851 = vpop.f32.mrb[0].mxu0
      %852 = vmatprep.mubr.f32.mxu0 0.0
      %853 = vmatmul.mubr.f32.gmra.mrb[0].mxu0 %v305
      %v854 = vpop.f32.mrb[0].mxu0
      %v855 = vadd.f32 0.0, %v854
      %v856 = vpop.f32.mrb[0].mxu0
      %857 = vmatprep.mubr.f32.mxu0 0.0
      %858 = vmatmul.mubr.f32.gmra.mrb[0].mxu0 %v306
      %v859 = vpop.f32.mrb[0].mxu0
      %v860 = vadd.f32 0.0, %v859
      %v861 = vpop.f32.mrb[0].mxu0
      %862 = vmatprep.mubr.f32.mxu0 0.0
      %863 = vmatmul.mubr.f32.gmra.mrb[0].mxu0 %v307
      %v864 = vpop.f32.mrb[0].mxu0
      %v865 = vadd.f32 0.0, %v864
      %v866 = vpop.f32.mrb[0].mxu0
      %867 = vmatprep.mubr.f32.mxu0 0.0
      %868 = vmatmul.mubr.f32.gmra.mrb[0].mxu0 %v308
      %v869 = vpop.f32.mrb[0].mxu0
      %v870 = vadd.f32 0.0, %v869
      %v871 = vpop.f32.mrb[0].mxu0
      %872 = vmatprep.mubr.f32.mxu0 0.0
      %873 = vmatmul.mubr.f32.gmra.mrb[0].mxu0 %v309
      %v874 = vpop.f32.mrb[0].mxu0
      %v875 = vadd.f32 0.0, %v874
      %v876 = vpop.f32.mrb[0].mxu0
      %877 = vmatprep.mubr.f32.mxu0 0.0
      %878 = vmatmul.mubr.f32.gmra.mrb[0].mxu0 %v310
      %v879 = vpop.f32.mrb[0].mxu0
      %v880 = vadd.f32 0.0, %v879
      %v881 = vpop.f32.mrb[0].mxu0
      %882 = vmatprep.mubr.f32.mxu0 0.0
      %883 = vmatmul.mubr.f32.gmra.mrb[0].mxu0 %v311
      %v884 = vpop.f32.mrb[0].mxu0
      %v885 = vadd.f32 0.0, %v884
      %v886 = vpop.f32.mrb[0].mxu0
      %887 = vmatprep.mubr.f32.mxu0 0.0
      %888 = vmatmul.mubr.f32.gmra.mrb[0].mxu0 %v312
      %v889 = vpop.f32.mrb[0].mxu0
      %v890 = vadd.f32 0.0, %v889
      %v891 = vpop.f32.mrb[0].mxu0
      %892 = vmatprep.mubr.f32.mxu0 0.0
      %893 = vmatmul.mubr.f32.gmra.mrb[0].mxu0 %v313
      %v894 = vpop.f32.mrb[0].mxu0
      %v895 = vadd.f32 0.0, %v894
      %v896 = vpop.f32.mrb[0].mxu0
      %897 = vmatprep.mubr.f32.mxu0 0.0
      %898 = vmatmul.mubr.f32.gmra.mrb[0].mxu0 %v314
      %v899 = vpop.f32.mrb[0].mxu0
      %v900 = vadd.f32 0.0, %v899
      %v901 = vpop.f32.mrb[0].mxu0
      %902 = vdwg.mxu0
      %903 = vst.msk [vmem:[%s280] sm:$0xff] %vm725, %v825
      %904 = vst.msk [vmem:[%s280 + $0x8] sm:$0xff] %vm725, %v830
      %905 = vst.msk [vmem:[%s280 + $0x10] sm:$0xff] %vm725, %v835
      %906 = vst.msk [vmem:[%s280 + $0x18] sm:$0xff] %vm725, %v840
      %907 = vst.msk [vmem:[%s280 + $0x20] sm:$0xff] %vm725, %v845
      %908 = vst.msk [vmem:[%s280 + $0x28] sm:$0xff] %vm725, %v850
      %909 = vst.msk [vmem:[%s280 + $0x30] sm:$0xff] %vm725, %v855
      %910 = vst.msk [vmem:[%s280 + $0x38] sm:$0xff] %vm725, %v860
      %911 = vst.msk [vmem:[%s280 + $0x40] sm:$0xff] %vm725, %v865
      %912 = vst.msk [vmem:[%s280 + $0x48] sm:$0xff] %vm725, %v870
      %913 = vst.msk [vmem:[%s280 + $0x50] sm:$0xff] %vm725, %v875
      %914 = vst.msk [vmem:[%s280 + $0x58] sm:$0xff] %vm725, %v880
      %915 = vst.msk [vmem:[%s280 + $0x60] sm:$0xff] %vm725, %v885
      %916 = vst.msk [vmem:[%s280 + $0x68] sm:$0xff] %vm725, %v890
      %917 = vst.msk [vmem:[%s280 + $0x70] sm:$0xff] %vm725, %v895
      %918 = vst.msk [vmem:[%s280 + $0x78] sm:$0xff] %vm725, %v900
      %s919 = smul.u32 16, %s18
      %p920 = scmp.lt.s32.totalorder %s919, 31
      %s921 = scalar_select %p920, %s919, 31
      %s922 = smul.addr %s921, 4
      %s923 = scalar_lea.vmem %s4, %s922
      %s924 = smul.u32 16, %s18
      %p925 = scmp.lt.s32.totalorder %s924, 31
      %s926 = scalar_select %p925, %s924, 31
      %s927 = smul.addr %s926, 8
      %s928 = scalar_lea.vmem %s5, %s927
      %s929 = smul.u32 16, %s18
      %p930 = scmp.lt.s32.totalorder %s929, 31
      %s931 = scalar_select %p930, %s929, 31
      %s932 = smul.addr %s931, 8
      %s933 = scalar_lea.vmem %s6, %s932
      // Predicated region
      $region37: #{gat_forward.8} parent=35 // pred_check
        %p934 = pneg %p125
      $region38: #{gat_forward.8} parent=35 // pred_check_branch
        %936 = sbr.rel (%p934) target = $region40
      $region39: #{gat_forward.8} parent=35 // pred_region
        %s937 = smul.u32 16, %s18
      $region40: #{gat_forward.8} parent=35 // pred_fallthru
        _
      // Predicated region
      $region41: #{gat_forward.8} parent=35 // pred_check
        %p938 = pneg %p151
      $region42: #{gat_forward.8} parent=35 // pred_check_branch
        %940 = sbr.rel (%p938) target = $region44
      $region43: #{gat_forward.8} parent=35 // pred_region
        %s941 = smul.u32 16, %s18
      $region44: #{gat_forward.8} parent=35 // pred_fallthru
        _
      // Predicated region
      $region45: #{gat_forward.8} parent=35 // pred_check
        %p942 = pneg %p177
      $region46: #{gat_forward.8} parent=35 // pred_check_branch
        %944 = sbr.rel (%p942) target = $region48
      $region47: #{gat_forward.8} parent=35 // pred_region
        %s945 = smul.u32 16, %s18
      $region48: #{gat_forward.8} parent=35 // pred_fallthru
        _
    $region36: #{gat_forward.8} parent=5 // pred_fallthru
      _
    %p946 = scmp.le.s32.totalorder 2, %s13
    // Predicated region
    $region49: #{gat_forward.8} parent=5 // pred_check
      %p947 = pneg %p946
    $region50: #{gat_forward.8} parent=5 // pred_check_branch
      %949 = sbr.rel (%p947) target = $region52
    $region51: #{gat_forward.8} parent=5 // pred_region
      %s950 = ssub.s32 %s13, 2
      // Predicated region
      $region53: #{gat_forward.8} parent=51 // pred_check
        %p951 = pneg %p131
      $region54: #{gat_forward.8} parent=51 // pred_check_branch
        %953 = sbr.rel (%p951) target = $region56
      $region55: #{gat_forward.8} parent=51 // pred_region
        %s954 = smul.u32 16, %s19
        %p955 = scmp.lt.s32.totalorder %s954, 31
        %s956 = scalar_select %p955, %s954, 31
        %s957 = smul.addr %s956, 4
        %s958 = scalar_lea.vmem %s4, %s957
      $region56: #{gat_forward.8} parent=51 // pred_fallthru
        _
      // Predicated region
      $region57: #{gat_forward.8} parent=51 // pred_check
        %p959 = pneg %p157
      $region58: #{gat_forward.8} parent=51 // pred_check_branch
        %961 = sbr.rel (%p959) target = $region60
      $region59: #{gat_forward.8} parent=51 // pred_region
        %s962 = smul.u32 16, %s19
        %p963 = scmp.lt.s32.totalorder %s962, 31
        %s964 = scalar_select %p963, %s962, 31
        %s965 = smul.addr %s964, 8
        %s966 = scalar_lea.vmem %s5, %s965
      $region60: #{gat_forward.8} parent=51 // pred_fallthru
        _
      // Predicated region
      $region61: #{gat_forward.8} parent=51 // pred_check
        %p967 = pneg %p183
      $region62: #{gat_forward.8} parent=51 // pred_check_branch
        %969 = sbr.rel (%p967) target = $region64
      $region63: #{gat_forward.8} parent=51 // pred_region
        %s970 = smul.u32 16, %s19
        %p971 = scmp.lt.s32.totalorder %s970, 31
        %s972 = scalar_select %p971, %s970, 31
        %s973 = smul.addr %s972, 8
        %s974 = scalar_lea.vmem %s6, %s973
      $region64: #{gat_forward.8} parent=51 // pred_fallthru
        _
    $region52: #{gat_forward.8} parent=5 // pred_fallthru
      _
  $region6: #{gat_forward.8} parent=0 // loop_footer
    %s17 = sadd.s32 1, %s13
  $region7: #{gat_forward.8} parent=0 // loop_footer_branch
    %12 = sbr.rel target = $region3
  $region8: #{gat_forward.8} parent=0 // loop_exit
    _

// kernel: gat_forward.10
$region0: #{gat_forward.10}
  #allocation0 [shape = 'u32[]', space=smem, size = 0x4, offset = 0x4, fixed_abs, tag = 'smem constant byte address 0x4 - core index']
  #allocation1 [shape = 'u32[144,128]{1,0:T(1,128)}', space=vmem, size = 0x12000, scoped, tag = 'internal scratch']
  %s0 = inlined_call_operand.vmem [shape: bf16[256,128], index: 0, kind: input, shape index: {}]
  %s1 = inlined_call_operand.vmem [shape: f32[128,8], index: 1, kind: input, shape index: {}]
  %s2 = inlined_call_operand.vmem [shape: f32[128,1], index: 2, kind: input, shape index: {}]
  %s3 = inlined_call_operand.vmem [shape: f32[128,1], index: 3, kind: input, shape index: {}]
  %s4 = inlined_call_operand.vmem [shape: bf16[256,8], index: 4, kind: output, shape index: {0}]
  %s5 = inlined_call_operand.vmem [shape: f32[256,1], index: 5, kind: output, shape index: {1}]
  %s6 = inlined_call_operand.vmem [shape: f32[256,1], index: 6, kind: output, shape index: {2}]
  %7 = xla_tuple %s4, %s5, %s6
  %s8 = sld [smem:[#allocation0]]
  $region65: #{gat_forward.10} parent=0
    _
  %s10 = ssub.s32 1, %s8
  %s11 = scalar_select 0, %s10, %s8
  loop: start=0, step=1, limit=4
  $region2: #{gat_forward.10} parent=0 // loop_pre_header
    _
  $region3: #{gat_forward.10} parent=0 // loop_header
    %s13 = sphi 0, %s17
    %p14 = scmp.ge.s32.totalorder %s13, 4
    %s23 = sphi 0, %s25
    %s26 = sphi 0, %s23
    %s27 = sphi 0, %s26
    %s43 = sphi 0, %s27
    %s47 = sphi 0, %s47
    %s49 = sphi 0, %s47
    %s50 = sphi 0, %s49
    %s64 = sphi 0, %s50
    %s68 = sphi 0, %s68
    %s70 = sphi 0, %s68
    %s71 = sphi 0, %s70
    %s85 = sphi 0, %s71
    %s89 = sphi 0, %s89
    %s91 = sphi 0, %s89
    %s92 = sphi 0, %s91
    %s106 = sphi 0, %s92
    %s112 = sphi 0, %s114
    %s115 = sphi 0, %s112
    %s116 = sphi 0, %s115
    %s132 = sphi 0, %s116
    %s138 = sphi 0, %s140
    %s141 = sphi 0, %s138
    %s142 = sphi 0, %s141
    %s158 = sphi 0, %s142
    %s164 = sphi 0, %s166
    %s167 = sphi 0, %s164
    %s168 = sphi 0, %s167
    %s184 = sphi 0, %s168
  $region4: #{gat_forward.10} parent=0 // loop_header_branch
    %16 = sbr.rel (%p14) target = $region8
  $region5: #{gat_forward.10} parent=0 // loop_body
    %s18 = ssub.s32 %s13, 1
    %s19 = ssub.s32 %s13, 2
    %s20 = sadd.s32 %s13, 1
    %s21 = ssub.s32 %s13, %s20
    %p22 = scmp.eq.s32.totalorder %s21, 0
    %s24 = sadd.s32 %s23, 1
    %s25 = scalar_select %p22, %s23, %s24
    %p28 = pneg %p22
    %p29 = scmp.eq.s32.totalorder %s13, 1
    %p30 = por %p28, %p29
    %p31 = scmp.ne.s32.totalorder %s23, %s26
    %p32 = scmp.eq.s32.totalorder %s13, 0
    %p33 = por %p31, %p32
    %p34 = scmp.ne.s32.totalorder %s23, %s26
    %p35 = scmp.eq.s32.totalorder %s18, 1
    %p36 = por %p34, %p35
    %p37 = scmp.ne.s32.totalorder %s26, %s27
    %p38 = scmp.eq.s32.totalorder %s18, 0
    %p39 = por %p37, %p38
    %p40 = scmp.ne.s32.totalorder %s26, %s27
    %p41 = scmp.eq.s32.totalorder %s19, 1
    %p42 = por %p40, %p41
    %p44 = scmp.ne.s32.totalorder %s27, %s43
    %p45 = scmp.eq.s32.totalorder %s19, 0
    %p46 = por %p44, %p45
    %s48 = sadd.s32 %s47, 1
    %p51 = scmp.eq.s32.totalorder %s13, 1
    %p52 = scmp.ne.s32.totalorder %s47, %s49
    %p53 = scmp.eq.s32.totalorder %s13, 0
    %p54 = por %p52, %p53
    %p55 = scmp.ne.s32.totalorder %s47, %s49
    %p56 = scmp.eq.s32.totalorder %s18, 1
    %p57 = por %p55, %p56
    %p58 = scmp.ne.s32.totalorder %s49, %s50
    %p59 = scmp.eq.s32.totalorder %s18, 0
    %p60 = por %p58, %p59
    %p61 = scmp.ne.s32.totalorder %s49, %s50
    %p62 = scmp.eq.s32.totalorder %s19, 1
    %p63 = por %p61, %p62
    %p65 = scmp.ne.s32.totalorder %s50, %s64
    %p66 = scmp.eq.s32.totalorder %s19, 0
    %p67 = por %p65, %p66
    %s69 = sadd.s32 %s68, 1
    %p72 = scmp.eq.s32.totalorder %s13, 1
    %p73 = scmp.ne.s32.totalorder %s68, %s70
    %p74 = scmp.eq.s32.totalorder %s13, 0
    %p75 = por %p73, %p74
    %p76 = scmp.ne.s32.totalorder %s68, %s70
    %p77 = scmp.eq.s32.totalorder %s18, 1
    %p78 = por %p76, %p77
    %p79 = scmp.ne.s32.totalorder %s70, %s71
    %p80 = scmp.eq.s32.totalorder %s18, 0
    %p81 = por %p79, %p80
    %p82 = scmp.ne.s32.totalorder %s70, %s71
    %p83 = scmp.eq.s32.totalorder %s19, 1
    %p84 = por %p82, %p83
    %p86 = scmp.ne.s32.totalorder %s71, %s85
    %p87 = scmp.eq.s32.totalorder %s19, 0
    %p88 = por %p86, %p87
    %s90 = sadd.s32 %s89, 1
    %p93 = scmp.eq.s32.totalorder %s13, 1
    %p94 = scmp.ne.s32.totalorder %s89, %s91
    %p95 = scmp.eq.s32.totalorder %s13, 0
    %p96 = por %p94, %p95
    %p97 = scmp.ne.s32.totalorder %s89, %s91
    %p98 = scmp.eq.s32.totalorder %s18, 1
    %p99 = por %p97, %p98
    %p100 = scmp.ne.s32.totalorder %s91, %s92
    %p101 = scmp.eq.s32.totalorder %s18, 0
    %p102 = por %p100, %p101
    %p103 = scmp.ne.s32.totalorder %s91, %s92
    %p104 = scmp.eq.s32.totalorder %s19, 1
    %p105 = por %p103, %p104
    %p107 = scmp.ne.s32.totalorder %s92, %s106
    %p108 = scmp.eq.s32.totalorder %s19, 0
    %p109 = por %p107, %p108
    %s110 = ssub.s32 %s13, %s20
    %p111 = scmp.eq.s32.totalorder %s110, 0
    %s113 = sadd.s32 %s112, 1
    %s114 = scalar_select %p111, %s112, %s113
    %p117 = pneg %p111
    %p118 = scmp.eq.s32.totalorder %s13, 1
    %p119 = por %p117, %p118
    %p120 = scmp.ne.s32.totalorder %s112, %s115
    %p121 = scmp.eq.s32.totalorder %s13, 0
    %p122 = por %p120, %p121
    %p123 = scmp.ne.s32.totalorder %s112, %s115
    %p124 = scmp.eq.s32.totalorder %s18, 1
    %p125 = por %p123, %p124
    %p126 = scmp.ne.s32.totalorder %s115, %s116
    %p127 = scmp.eq.s32.totalorder %s18, 0
    %p128 = por %p126, %p127
    %p129 = scmp.ne.s32.totalorder %s115, %s116
    %p130 = scmp.eq.s32.totalorder %s19, 1
    %p131 = por %p129, %p130
    %p133 = scmp.ne.s32.totalorder %s116, %s132
    %p134 = scmp.eq.s32.totalorder %s19, 0
    %p135 = por %p133, %p134
    %s136 = ssub.s32 %s13, %s20
    %p137 = scmp.eq.s32.totalorder %s136, 0
    %s139 = sadd.s32 %s138, 1
    %s140 = scalar_select %p137, %s138, %s139
    %p143 = pneg %p137
    %p144 = scmp.eq.s32.totalorder %s13, 1
    %p145 = por %p143, %p144
    %p146 = scmp.ne.s32.totalorder %s138, %s141
    %p147 = scmp.eq.s32.totalorder %s13, 0
    %p148 = por %p146, %p147
    %p149 = scmp.ne.s32.totalorder %s138, %s141
    %p150 = scmp.eq.s32.totalorder %s18, 1
    %p151 = por %p149, %p150
    %p152 = scmp.ne.s32.totalorder %s141, %s142
    %p153 = scmp.eq.s32.totalorder %s18, 0
    %p154 = por %p152, %p153
    %p155 = scmp.ne.s32.totalorder %s141, %s142
    %p156 = scmp.eq.s32.totalorder %s19, 1
    %p157 = por %p155, %p156
    %p159 = scmp.ne.s32.totalorder %s142, %s158
    %p160 = scmp.eq.s32.totalorder %s19, 0
    %p161 = por %p159, %p160
    %s162 = ssub.s32 %s13, %s20
    %p163 = scmp.eq.s32.totalorder %s162, 0
    %s165 = sadd.s32 %s164, 1
    %s166 = scalar_select %p163, %s164, %s165
    %p169 = pneg %p163
    %p170 = scmp.eq.s32.totalorder %s13, 1
    %p171 = por %p169, %p170
    %p172 = scmp.ne.s32.totalorder %s164, %s167
    %p173 = scmp.eq.s32.totalorder %s13, 0
    %p174 = por %p172, %p173
    %p175 = scmp.ne.s32.totalorder %s164, %s167
    %p176 = scmp.eq.s32.totalorder %s18, 1
    %p177 = por %p175, %p176
    %p178 = scmp.ne.s32.totalorder %s167, %s168
    %p179 = scmp.eq.s32.totalorder %s18, 0
    %p180 = por %p178, %p179
    %p181 = scmp.ne.s32.totalorder %s167, %s168
    %p182 = scmp.eq.s32.totalorder %s19, 1
    %p183 = por %p181, %p182
    %p185 = scmp.ne.s32.totalorder %s168, %s184
    %p186 = scmp.eq.s32.totalorder %s19, 0
    %p187 = por %p185, %p186
    %p188 = scmp.le.s32.totalorder 1, %s13
    %p189 = scmp.lt.s32.totalorder %s13, 3
    %p190 = pnand %p188, %p189
    %p191 = pneg %p190
    // Predicated region
    $region9: #{gat_forward.10} parent=5 // pred_check
      _
    $region10: #{gat_forward.10} parent=5 // pred_check_branch
      %193 = sbr.rel (%p190) target = $region12
    $region11: #{gat_forward.10} parent=5 // pred_region
      %s194 = ssub.s32 %s13, 1
      // Predicated region
      $region13: #{gat_forward.10} parent=11 // pred_check
        %p195 = pneg %p60
      $region14: #{gat_forward.10} parent=11 // pred_check_branch
        %197 = sbr.rel (%p195) target = $region16
      $region15: #{gat_forward.10} parent=11 // pred_region
        _
      $region16: #{gat_forward.10} parent=11 // pred_fallthru
        _
      // Predicated region
      $region17: #{gat_forward.10} parent=11 // pred_check
        %p198 = pneg %p81
      $region18: #{gat_forward.10} parent=11 // pred_check_branch
        %200 = sbr.rel (%p198) target = $region20
      $region19: #{gat_forward.10} parent=11 // pred_region
        _
      $region20: #{gat_forward.10} parent=11 // pred_fallthru
        _
      // Predicated region
      $region21: #{gat_forward.10} parent=11 // pred_check
        %p201 = pneg %p102
      $region22: #{gat_forward.10} parent=11 // pred_check_branch
        %203 = sbr.rel (%p201) target = $region24
      $region23: #{gat_forward.10} parent=11 // pred_region
        _
      $region24: #{gat_forward.10} parent=11 // pred_fallthru
        _
    $region12: #{gat_forward.10} parent=5 // pred_fallthru
      _
    %p204 = scmp.lt.s32.totalorder %s13, 2
    // Predicated region
    $region25: #{gat_forward.10} parent=5 // pred_check
      %p205 = pneg %p204
    $region26: #{gat_forward.10} parent=5 // pred_check_branch
      %207 = sbr.rel (%p205) target = $region28
    $region27: #{gat_forward.10} parent=5 // pred_region
      // Predicated region
      $region29: #{gat_forward.10} parent=27 // pred_check
        %p208 = pneg %p33
      $region30: #{gat_forward.10} parent=27 // pred_check_branch
        %210 = sbr.rel (%p208) target = $region32
      $region31: #{gat_forward.10} parent=27 // pred_region
        %s211 = smul.u32 16, %s13
        %p212 = scmp.lt.s32.totalorder %s211, 31
        %s213 = scalar_select %p212, %s211, 31
        %s214 = smul.addr %s213, 4
        %s215 = scalar_lea.vmem %s0, %s214
        %s216 = smul.u32 16, %s13
      $region32: #{gat_forward.10} parent=27 // pred_fallthru
        _
    $region28: #{gat_forward.10} parent=5 // pred_fallthru
      _
    %p217 = scmp.le.s32.totalorder 1, %s13
    %p218 = scmp.lt.s32.totalorder %s13, 3
    %p219 = pnand %p217, %p218
    %p220 = pneg %p219
    // Predicated region
    $region33: #{gat_forward.10} parent=5 // pred_check
      _
    $region34: #{gat_forward.10} parent=5 // pred_check_branch
      %222 = sbr.rel (%p219) target = $region36
    $region35: #{gat_forward.10} parent=5 // pred_region
      %s223 = ssub.s32 %s13, 1
      %s224 = smul.u32 16, %s18
      %p225 = scmp.lt.s32.totalorder %s224, 31
      %s226 = scalar_select %p225, %s224, 31
      %s227 = smul.addr %s226, 4
      %s228 = scalar_lea.vmem %s0, %s227
      %p229 = pneg %p39
      %p230 = pneg %p36
      %p231 = pneg %p60
      %p232 = pneg %p57
      %p233 = pneg %p81
      %p234 = pneg %p78
      %p235 = pneg %p102
      %p236 = pneg %p99
      %p237 = pneg %p128
      %p238 = pneg %p125
      %s239 = smul.u32 16, %s18
      %p240 = scmp.lt.s32.totalorder %s239, 31
      %s241 = scalar_select %p240, %s239, 31
      %s242 = smul.addr %s241, 4
      %s243 = scalar_lea.vmem %s4, %s242
      %p244 = pneg %p154
      %p245 = pneg %p151
      %s246 = smul.u32 16, %s18
      %p247 = scmp.lt.s32.totalorder %s246, 31
      %s248 = scalar_select %p247, %s246, 31
      %s249 = smul.addr %s248, 8
      %s250 = scalar_lea.vmem %s5, %s249
      %p251 = pneg %p180
      %p252 = pneg %p177
      %s253 = smul.u32 16, %s18
      %p254 = scmp.lt.s32.totalorder %s253, 31
      %s255 = scalar_select %p254, %s253, 31
      %s256 = smul.addr %s255, 8
      %s257 = scalar_lea.vmem %s6, %s256
      %s258 = smul.u32 16, %s18
      %p259 = scmp.lt.s32.totalorder %s258, 31
      %s260 = scalar_select %p259, %s258, 31
      %s261 = smul.addr %s260, 4
      %s262 = scalar_lea.vmem %s0, %s261
      %s263 = smul.u32 16, %s18
      %s264 = smul.u32 16, %s18
      %p265 = scmp.lt.s32.totalorder %s264, 31
      %s266 = scalar_select %p265, %s264, 31
      %s267 = smul.addr %s266, 4
      %s268 = scalar_lea.vmem %s4, %s267
      %s269 = smul.u32 16, %s18
      %s270 = smul.u32 16, %s18
      %p271 = scmp.lt.s32.totalorder %s270, 31
      %s272 = scalar_select %p271, %s270, 31
      %s273 = smul.addr %s272, 8
      %s274 = scalar_lea.vmem %s5, %s273
      %s275 = smul.u32 16, %s18
      %s276 = smul.u32 16, %s18
      %p277 = scmp.lt.s32.totalorder %s276, 31
      %s278 = scalar_select %p277, %s276, 31
      %s279 = smul.addr %s278, 8
      %s280 = scalar_lea.vmem %s6, %s279
      %s281 = smul.u32 16, %s18
      %v283 = vld [vmem:[%s262] sm:$0xf]
      %v284 = vld [vmem:[%s262 + $0x4] sm:$0xf]
      %v285 = vld [vmem:[%s262 + $0x8] sm:$0xf]
      %v286 = vld [vmem:[%s262 + $0xc] sm:$0xf]
      %v287 = vld [vmem:[%s262 + $0x10] sm:$0xf]
      %v288 = vld [vmem:[%s262 + $0x14] sm:$0xf]
      %v289 = vld [vmem:[%s262 + $0x18] sm:$0xf]
      %v290 = vld [vmem:[%s262 + $0x1c] sm:$0xf]
      %v291 = vld [vmem:[%s262 + $0x20] sm:$0xf]
      %v292 = vld [vmem:[%s262 + $0x24] sm:$0xf]
      %v293 = vld [vmem:[%s262 + $0x28] sm:$0xf]
      %v294 = vld [vmem:[%s262 + $0x2c] sm:$0xf]
      %v295 = vld [vmem:[%s262 + $0x30] sm:$0xf]
      %v296 = vld [vmem:[%s262 + $0x34] sm:$0xf]
      %v297 = vld [vmem:[%s262 + $0x38] sm:$0xf]
      %v298 = vld [vmem:[%s262 + $0x3c] sm:$0xf]
      %v299 = vunpack.c.l.bf16 %v283
      %v300 = vunpack.c.l.bf16 %v284
      %v301 = vunpack.c.l.bf16 %v285
      %v302 = vunpack.c.l.bf16 %v286
      %v303 = vunpack.c.l.bf16 %v287
      %v304 = vunpack.c.l.bf16 %v288
      %v305 = vunpack.c.l.bf16 %v289
      %v306 = vunpack.c.l.bf16 %v290
      %v307 = vunpack.c.l.bf16 %v291
      %v308 = vunpack.c.l.bf16 %v292
      %v309 = vunpack.c.l.bf16 %v293
      %v310 = vunpack.c.l.bf16 %v294
      %v311 = vunpack.c.l.bf16 %v295
      %v312 = vunpack.c.l.bf16 %v296
      %v313 = vunpack.c.l.bf16 %v297
      %v314 = vunpack.c.l.bf16 %v298
      %v315 = vld [vmem:[%s1] sm:$0xff]
      %v316 = vld [vmem:[%s1 + $0x8] sm:$0xff]
      %v317 = vld [vmem:[%s1 + $0x10] sm:$0xff]
      %v318 = vld [vmem:[%s1 + $0x18] sm:$0xff]
      %v319 = vld [vmem:[%s1 + $0x20] sm:$0xff]
      %v320 = vld [vmem:[%s1 + $0x28] sm:$0xff]
      %v321 = vld [vmem:[%s1 + $0x30] sm:$0xff]
      %v322 = vld [vmem:[%s1 + $0x38] sm:$0xff]
      %v323 = vld [vmem:[%s1 + $0x40] sm:$0xff]
      %v324 = vld [vmem:[%s1 + $0x48] sm:$0xff]
      %v325 = vld [vmem:[%s1 + $0x50] sm:$0xff]
      %v326 = vld [vmem:[%s1 + $0x58] sm:$0xff]
      %v327 = vld [vmem:[%s1 + $0x60] sm:$0xff]
      %v328 = vld [vmem:[%s1 + $0x68] sm:$0xff]
      %v329 = vld [vmem:[%s1 + $0x70] sm:$0xff]
      %v330 = vld [vmem:[%s1 + $0x78] sm:$0xff]
      %v331 = vpack.c.bf16 %v316, %v315
      %v332 = vpack.c.bf16 %v318, %v317
      %v333 = vpack.c.bf16 %v320, %v319
      %v334 = vpack.c.bf16 %v322, %v321
      %v335 = vpack.c.bf16 %v324, %v323
      %v336 = vpack.c.bf16 %v326, %v325
      %v337 = vpack.c.bf16 %v328, %v327
      %v338 = vpack.c.bf16 %v330, %v329
      %v355 = vunpack.c.l.b16 %v283
      %v356 = vunpack.c.l.b16 %v284
      %v357 = vunpack.c.l.b16 %v285
      %v358 = vunpack.c.l.b16 %v286
      %v359 = vunpack.c.l.b16 %v287
      %v360 = vunpack.c.l.b16 %v288
      %v361 = vunpack.c.l.b16 %v289
      %v362 = vunpack.c.l.b16 %v290
      %v363 = vunpack.c.l.b16 %v291
      %v364 = vunpack.c.l.b16 %v292
      %v365 = vunpack.c.l.b16 %v293
      %v366 = vunpack.c.l.b16 %v294
      %v367 = vunpack.c.l.b16 %v295
      %v368 = vunpack.c.l.b16 %v296
      %v369 = vunpack.c.l.b16 %v297
      %v370 = vunpack.c.l.b16 %v298
      %v371 = vpack.c.b16 %v356, %v355
      %v372 = vpack.c.b16 %v358, %v357
      %v373 = vpack.c.b16 %v360, %v359
      %v374 = vpack.c.b16 %v362, %v361
      %v375 = vpack.c.b16 %v364, %v363
      %v376 = vpack.c.b16 %v366, %v365
      %v377 = vpack.c.b16 %v368, %v367
      %v378 = vpack.c.b16 %v370, %v369
      %387 = vmatprep.subr.bf16.mxu0 0
      %388 = vmatpush1.bf16.msra.mxu0 %v331
      %389 = vmatprep.subr.bf16.mxu0 0
      %390 = vmatpush1.bf16.msra.mxu0 %v332
      %391 = vmatprep.subr.bf16.mxu0 0
      %392 = vmatpush1.bf16.msra.mxu0 %v333
      %393 = vmatprep.subr.bf16.mxu0 0
      %394 = vmatpush1.bf16.msra.mxu0 %v334
      %395 = vmatprep.subr.bf16.mxu0 0
      %396 = vmatpush1.bf16.msra.mxu0 %v335
      %397 = vmatprep.subr.bf16.mxu0 0
      %398 = vmatpush1.bf16.msra.mxu0 %v336
      %399 = vmatprep.subr.bf16.mxu0 0
      %400 = vmatpush1.bf16.msra.mxu0 %v337
      %401 = vmatprep.subr.bf16.mxu0 0
      %402 = vmatpush1.bf16.msra.mxu0 %v338
      %403 = vmatprep.subr.bf16.mxu0 0
      %404 = vmatpush1.bf16.msra.mxu0 0
      %405 = vmatprep.subr.bf16.mxu0 0
      %406 = vmatpush1.bf16.msra.mxu0 0
      %407 = vmatprep.subr.bf16.mxu0 0
      %408 = vmatpush1.bf16.msra.mxu0 0
      %409 = vmatprep.subr.bf16.mxu0 0
      %410 = vmatpush1.bf16.msra.mxu0 0
      %411 = vmatprep.subr.bf16.mxu0 0
      %412 = vmatpush1.bf16.msra.mxu0 0
      %413 = vmatprep.subr.bf16.mxu0 0
      %414 = vmatpush1.bf16.msra.mxu0 0
      %415 = vmatprep.subr.bf16.mxu0 0
      %416 = vmatpush1.bf16.msra.mxu0 0
      %417 = vmatprep.subr.bf16.mxu0 0
      %418 = vmatpush1.bf16.msra.mxu0 0
      %419 = vmatprep.mubr.bf16.mxu0 0
      %420 = vmatmul.mubr.bf16.gmra.mrb[0].mxu0 %v371
      %v421 = vpop.f32.mrb[0].mxu0
      %v422 = vadd.f32 0.0, %v421
      %v423 = vpop.f32.mrb[0].mxu0
      %v424 = vpop.f32.mrb[0].mxu0
      %v425 = vadd.f32 0.0, %v424
      %v426 = vpop.f32.mrb[0].mxu0
      %427 = vmatprep.mubr.bf16.mxu0 0
      %428 = vmatmul.mubr.bf16.gmra.mrb[0].mxu0 %v372
      %v429 = vpop.f32.mrb[0].mxu0
      %v430 = vadd.f32 0.0, %v429
      %v431 = vpop.f32.mrb[0].mxu0
      %v432 = vpop.f32.mrb[0].mxu0
      %v433 = vadd.f32 0.0, %v432
      %v434 = vpop.f32.mrb[0].mxu0
      %435 = vmatprep.mubr.bf16.mxu0 0
      %436 = vmatmul.mubr.bf16.gmra.mrb[0].mxu0 %v373
      %v437 = vpop.f32.mrb[0].mxu0
      %v438 = vadd.f32 0.0, %v437
      %v439 = vpop.f32.mrb[0].mxu0
      %v440 = vpop.f32.mrb[0].mxu0
      %v441 = vadd.f32 0.0, %v440
      %v442 = vpop.f32.mrb[0].mxu0
      %443 = vmatprep.mubr.bf16.mxu0 0
      %444 = vmatmul.mubr.bf16.gmra.mrb[0].mxu0 %v374
      %v445 = vpop.f32.mrb[0].mxu0
      %v446 = vadd.f32 0.0, %v445
      %v447 = vpop.f32.mrb[0].mxu0
      %v448 = vpop.f32.mrb[0].mxu0
      %v449 = vadd.f32 0.0, %v448
      %v450 = vpop.f32.mrb[0].mxu0
      %451 = vmatprep.mubr.bf16.mxu0 0
      %452 = vmatmul.mubr.bf16.gmra.mrb[0].mxu0 %v375
      %v453 = vpop.f32.mrb[0].mxu0
      %v454 = vadd.f32 0.0, %v453
      %v455 = vpop.f32.mrb[0].mxu0
      %v456 = vpop.f32.mrb[0].mxu0
      %v457 = vadd.f32 0.0, %v456
      %v458 = vpop.f32.mrb[0].mxu0
      %459 = vmatprep.mubr.bf16.mxu0 0
      %460 = vmatmul.mubr.bf16.gmra.mrb[0].mxu0 %v376
      %v461 = vpop.f32.mrb[0].mxu0
      %v462 = vadd.f32 0.0, %v461
      %v463 = vpop.f32.mrb[0].mxu0
      %v464 = vpop.f32.mrb[0].mxu0
      %v465 = vadd.f32 0.0, %v464
      %v466 = vpop.f32.mrb[0].mxu0
      %467 = vmatprep.mubr.bf16.mxu0 0
      %468 = vmatmul.mubr.bf16.gmra.mrb[0].mxu0 %v377
      %v469 = vpop.f32.mrb[0].mxu0
      %v470 = vadd.f32 0.0, %v469
      %v471 = vpop.f32.mrb[0].mxu0
      %v472 = vpop.f32.mrb[0].mxu0
      %v473 = vadd.f32 0.0, %v472
      %v474 = vpop.f32.mrb[0].mxu0
      %475 = vmatprep.mubr.bf16.mxu0 0
      %476 = vmatmul.mubr.bf16.gmra.mrb[0].mxu0 %v378
      %v477 = vpop.f32.mrb[0].mxu0
      %v478 = vadd.f32 0.0, %v477
      %v479 = vpop.f32.mrb[0].mxu0
      %v480 = vpop.f32.mrb[0].mxu0
      %v481 = vadd.f32 0.0, %v480
      %v482 = vpop.f32.mrb[0].mxu0
      %483 = vdwg.mxu0
      %v484 = vpack.c.bf16 %v425, %v422
      %v485 = vpack.c.bf16 %v433, %v430
      %v486 = vpack.c.bf16 %v441, %v438
      %v487 = vpack.c.bf16 %v449, %v446
      %v488 = vpack.c.bf16 %v457, %v454
      %v489 = vpack.c.bf16 %v465, %v462
      %v490 = vpack.c.bf16 %v473, %v470
      %v491 = vpack.c.bf16 %v481, %v478
      %v500 = vunpack.c.l.b16 %v484
      %v501 = vunpack.c.h.b16 %v484
      %v502 = vunpack.c.l.b16 %v485
      %v503 = vunpack.c.h.b16 %v485
      %v504 = vunpack.c.l.b16 %v486
      %v505 = vunpack.c.h.b16 %v486
      %v506 = vunpack.c.l.b16 %v487
      %v507 = vunpack.c.h.b16 %v487
      %v508 = vunpack.c.l.b16 %v488
      %v509 = vunpack.c.h.b16 %v488
      %v510 = vunpack.c.l.b16 %v489
      %v511 = vunpack.c.h.b16 %v489
      %v512 = vunpack.c.l.b16 %v490
      %v513 = vunpack.c.h.b16 %v490
      %v514 = vunpack.c.l.b16 %v491
      %v515 = vunpack.c.h.b16 %v491
      %v516 = vpack.c.b16 %v500, %v500
      %v517 = vpack.c.b16 %v501, %v501
      %v518 = vpack.c.b16 %v502, %v502
      %v519 = vpack.c.b16 %v503, %v503
      %v520 = vpack.c.b16 %v504, %v504
      %v521 = vpack.c.b16 %v505, %v505
      %v522 = vpack.c.b16 %v506, %v506
      %v523 = vpack.c.b16 %v507, %v507
      %v524 = vpack.c.b16 %v508, %v508
      %v525 = vpack.c.b16 %v509, %v509
      %v526 = vpack.c.b16 %v510, %v510
      %v527 = vpack.c.b16 %v511, %v511
      %v528 = vpack.c.b16 %v512, %v512
      %v529 = vpack.c.b16 %v513, %v513
      %v530 = vpack.c.b16 %v514, %v514
      %v531 = vpack.c.b16 %v515, %v515
      %vm548 = vcmask 60416
      %549 = vst.msk [vmem:[%s268] sm:$0xf] %vm548, %v516
      %550 = vst.msk [vmem:[%s268 + $0x4] sm:$0xf] %vm548, %v517
      %551 = vst.msk [vmem:[%s268 + $0x8] sm:$0xf] %vm548, %v518
      %552 = vst.msk [vmem:[%s268 + $0xc] sm:$0xf] %vm548, %v519
      %553 = vst.msk [vmem:[%s268 + $0x10] sm:$0xf] %vm548, %v520
      %554 = vst.msk [vmem:[%s268 + $0x14] sm:$0xf] %vm548, %v521
      %555 = vst.msk [vmem:[%s268 + $0x18] sm:$0xf] %vm548, %v522
      %556 = vst.msk [vmem:[%s268 + $0x1c] sm:$0xf] %vm548, %v523
      %557 = vst.msk [vmem:[%s268 + $0x20] sm:$0xf] %vm548, %v524
      %558 = vst.msk [vmem:[%s268 + $0x24] sm:$0xf] %vm548, %v525
      %559 = vst.msk [vmem:[%s268 + $0x28] sm:$0xf] %vm548, %v526
      %560 = vst.msk [vmem:[%s268 + $0x2c] sm:$0xf] %vm548, %v527
      %561 = vst.msk [vmem:[%s268 + $0x30] sm:$0xf] %vm548, %v528
      %562 = vst.msk [vmem:[%s268 + $0x34] sm:$0xf] %vm548, %v529
      %563 = vst.msk [vmem:[%s268 + $0x38] sm:$0xf] %vm548, %v530
      %564 = vst.msk [vmem:[%s268 + $0x3c] sm:$0xf] %vm548, %v531
      %v565 = vld [vmem:[%s2] sm:$0xff]
      %v566 = vld [vmem:[%s2 + $0x8] sm:$0xff]
      %v567 = vld [vmem:[%s2 + $0x10] sm:$0xff]
      %v568 = vld [vmem:[%s2 + $0x18] sm:$0xff]
      %v569 = vld [vmem:[%s2 + $0x20] sm:$0xff]
      %v570 = vld [vmem:[%s2 + $0x28] sm:$0xff]
      %v571 = vld [vmem:[%s2 + $0x30] sm:$0xff]
      %v572 = vld [vmem:[%s2 + $0x38] sm:$0xff]
      %v573 = vld [vmem:[%s2 + $0x40] sm:$0xff]
      %v574 = vld [vmem:[%s2 + $0x48] sm:$0xff]
      %v575 = vld [vmem:[%s2 + $0x50] sm:$0xff]
      %v576 = vld [vmem:[%s2 + $0x58] sm:$0xff]
      %v577 = vld [vmem:[%s2 + $0x60] sm:$0xff]
      %v578 = vld [vmem:[%s2 + $0x68] sm:$0xff]
      %v579 = vld [vmem:[%s2 + $0x70] sm:$0xff]
      %v580 = vld [vmem:[%s2 + $0x78] sm:$0xff]
      %581 = vmatprep.subr.mxu0 0.0
      %582 = vmatpush1.msra.mxu0 %v565
      %583 = vmatprep.subr.mxu0 0.0
      %584 = vmatpush1.msra.mxu0 %v566
      %585 = vmatprep.subr.mxu0 0.0
      %586 = vmatpush1.msra.mxu0 %v567
      %587 = vmatprep.subr.mxu0 0.0
      %588 = vmatpush1.msra.mxu0 %v568
      %589 = vmatprep.subr.mxu0 0.0
      %590 = vmatpush1.msra.mxu0 %v569
      %591 = vmatprep.subr.mxu0 0.0
      %592 = vmatpush1.msra.mxu0 %v570
      %593 = vmatprep.subr.mxu0 0.0
      %594 = vmatpush1.msra.mxu0 %v571
      %595 = vmatprep.subr.mxu0 0.0
      %596 = vmatpush1.msra.mxu0 %v572
      %597 = vmatprep.subr.mxu0 0.0
      %598 = vmatpush1.msra.mxu0 %v573
      %599 = vmatprep.subr.mxu0 0.0
      %600 = vmatpush1.msra.mxu0 %v574
      %601 = vmatprep.subr.mxu0 0.0
      %602 = vmatpush1.msra.mxu0 %v575
      %603 = vmatprep.subr.mxu0 0.0
      %604 = vmatpush1.msra.mxu0 %v576
      %605 = vmatprep.subr.mxu0 0.0
      %606 = vmatpush1.msra.mxu0 %v577
      %607 = vmatprep.subr.mxu0 0.0
      %608 = vmatpush1.msra.mxu0 %v578
      %609 = vmatprep.subr.mxu0 0.0
      %610 = vmatpush1.msra.mxu0 %v579
      %611 = vmatprep.subr.mxu0 0.0
      %612 = vmatpush1.msra.mxu0 %v580
      %613 = vmatprep.subr.mxu0 0.0
      %614 = vmatpush1.msra.mxu0 0.0
      %615 = vmatprep.subr.mxu0 0.0
      %616 = vmatpush1.msra.mxu0 0.0
      %617 = vmatprep.subr.mxu0 0.0
      %618 = vmatpush1.msra.mxu0 0.0
      %619 = vmatprep.subr.mxu0 0.0
      %620 = vmatpush1.msra.mxu0 0.0
      %621 = vmatprep.subr.mxu0 0.0
      %622 = vmatpush1.msra.mxu0 0.0
      %623 = vmatprep.subr.mxu0 0.0
      %624 = vmatpush1.msra.mxu0 0.0
      %625 = vmatprep.subr.mxu0 0.0
      %626 = vmatpush1.msra.mxu0 0.0
      %627 = vmatprep.subr.mxu0 0.0
      %628 = vmatpush1.msra.mxu0 0.0
      %629 = vmatprep.subr.mxu0 0.0
      %630 = vmatpush1.msra.mxu0 0.0
      %631 = vmatprep.subr.mxu0 0.0
      %632 = vmatpush1.msra.mxu0 0.0
      %633 = vmatprep.subr.mxu0 0.0
      %634 = vmatpush1.msra.mxu0 0.0
      %635 = vmatprep.subr.mxu0 0.0
      %636 = vmatpush1.msra.mxu0 0.0
      %637 = vmatprep.subr.mxu0 0.0
      %638 = vmatpush1.msra.mxu0 0.0
      %639 = vmatprep.subr.mxu0 0.0
      %640 = vmatpush1.msra.mxu0 0.0
      %641 = vmatprep.subr.mxu0 0.0
      %642 = vmatpush1.msra.mxu0 0.0
      %643 = vmatprep.subr.mxu0 0.0
      %644 = vmatpush1.msra.mxu0 0.0
      %645 = vmatprep.mubr.f32.mxu0 0.0
      %646 = vmatmul.mubr.f32.gmra.mrb[0].mxu0 %v299
      %v647 = vpop.f32.mrb[0].mxu0
      %v648 = vadd.f32 0.0, %v647
      %v649 = vpop.f32.mrb[0].mxu0
      %650 = vmatprep.mubr.f32.mxu0 0.0
      %651 = vmatmul.mubr.f32.gmra.mrb[0].mxu0 %v300
      %v652 = vpop.f32.mrb[0].mxu0
      %v653 = vadd.f32 0.0, %v652
      %v654 = vpop.f32.mrb[0].mxu0
      %655 = vmatprep.mubr.f32.mxu0 0.0
      %656 = vmatmul.mubr.f32.gmra.mrb[0].mxu0 %v301
      %v657 = vpop.f32.mrb[0].mxu0
      %v658 = vadd.f32 0.0, %v657
      %v659 = vpop.f32.mrb[0].mxu0
      %660 = vmatprep.mubr.f32.mxu0 0.0
      %661 = vmatmul.mubr.f32.gmra.mrb[0].mxu0 %v302
      %v662 = vpop.f32.mrb[0].mxu0
      %v663 = vadd.f32 0.0, %v662
      %v664 = vpop.f32.mrb[0].mxu0
      %665 = vmatprep.mubr.f32.mxu0 0.0
      %666 = vmatmul.mubr.f32.gmra.mrb[0].mxu0 %v303
      %v667 = vpop.f32.mrb[0].mxu0
      %v668 = vadd.f32 0.0, %v667
      %v669 = vpop.f32.mrb[0].mxu0
      %670 = vmatprep.mubr.f32.mxu0 0.0
      %671 = vmatmul.mubr.f32.gmra.mrb[0].mxu0 %v304
      %v672 = vpop.f32.mrb[0].mxu0
      %v673 = vadd.f32 0.0, %v672
      %v674 = vpop.f32.mrb[0].mxu0
      %675 = vmatprep.mubr.f32.mxu0 0.0
      %676 = vmatmul.mubr.f32.gmra.mrb[0].mxu0 %v305
      %v677 = vpop.f32.mrb[0].mxu0
      %v678 = vadd.f32 0.0, %v677
      %v679 = vpop.f32.mrb[0].mxu0
      %680 = vmatprep.mubr.f32.mxu0 0.0
      %681 = vmatmul.mubr.f32.gmra.mrb[0].mxu0 %v306
      %v682 = vpop.f32.mrb[0].mxu0
      %v683 = vadd.f32 0.0, %v682
      %v684 = vpop.f32.mrb[0].mxu0
      %685 = vmatprep.mubr.f32.mxu0 0.0
      %686 = vmatmul.mubr.f32.gmra.mrb[0].mxu0 %v307
      %v687 = vpop.f32.mrb[0].mxu0
      %v688 = vadd.f32 0.0, %v687
      %v689 = vpop.f32.mrb[0].mxu0
      %690 = vmatprep.mubr.f32.mxu0 0.0
      %691 = vmatmul.mubr.f32.gmra.mrb[0].mxu0 %v308
      %v692 = vpop.f32.mrb[0].mxu0
      %v693 = vadd.f32 0.0, %v692
      %v694 = vpop.f32.mrb[0].mxu0
      %695 = vmatprep.mubr.f32.mxu0 0.0
      %696 = vmatmul.mubr.f32.gmra.mrb[0].mxu0 %v309
      %v697 = vpop.f32.mrb[0].mxu0
      %v698 = vadd.f32 0.0, %v697
      %v699 = vpop.f32.mrb[0].mxu0
      %700 = vmatprep.mubr.f32.mxu0 0.0
      %701 = vmatmul.mubr.f32.gmra.mrb[0].mxu0 %v310
      %v702 = vpop.f32.mrb[0].mxu0
      %v703 = vadd.f32 0.0, %v702
      %v704 = vpop.f32.mrb[0].mxu0
      %705 = vmatprep.mubr.f32.mxu0 0.0
      %706 = vmatmul.mubr.f32.gmra.mrb[0].mxu0 %v311
      %v707 = vpop.f32.mrb[0].mxu0
      %v708 = vadd.f32 0.0, %v707
      %v709 = vpop.f32.mrb[0].mxu0
      %710 = vmatprep.mubr.f32.mxu0 0.0
      %711 = vmatmul.mubr.f32.gmra.mrb[0].mxu0 %v312
      %v712 = vpop.f32.mrb[0].mxu0
      %v713 = vadd.f32 0.0, %v712
      %v714 = vpop.f32.mrb[0].mxu0
      %715 = vmatprep.mubr.f32.mxu0 0.0
      %716 = vmatmul.mubr.f32.gmra.mrb[0].mxu0 %v313
      %v717 = vpop.f32.mrb[0].mxu0
      %v718 = vadd.f32 0.0, %v717
      %v719 = vpop.f32.mrb[0].mxu0
      %720 = vmatprep.mubr.f32.mxu0 0.0
      %721 = vmatmul.mubr.f32.gmra.mrb[0].mxu0 %v314
      %v722 = vpop.f32.mrb[0].mxu0
      %v723 = vadd.f32 0.0, %v722
      %v724 = vpop.f32.mrb[0].mxu0
      %725 = vdwg.mxu0
      %vm726 = vcmask 7168
      %727 = vst.msk [vmem:[%s274] sm:$0xff] %vm726, %v648
      %728 = vst.msk [vmem:[%s274 + $0x8] sm:$0xff] %vm726, %v653
      %729 = vst.msk [vmem:[%s274 + $0x10] sm:$0xff] %vm726, %v658
      %730 = vst.msk [vmem:[%s274 + $0x18] sm:$0xff] %vm726, %v663
      %731 = vst.msk [vmem:[%s274 + $0x20] sm:$0xff] %vm726, %v668
      %732 = vst.msk [vmem:[%s274 + $0x28] sm:$0xff] %vm726, %v673
      %733 = vst.msk [vmem:[%s274 + $0x30] sm:$0xff] %vm726, %v678
      %734 = vst.msk [vmem:[%s274 + $0x38] sm:$0xff] %vm726, %v683
      %735 = vst.msk [vmem:[%s274 + $0x40] sm:$0xff] %vm726, %v688
      %736 = vst.msk [vmem:[%s274 + $0x48] sm:$0xff] %vm726, %v693
      %737 = vst.msk [vmem:[%s274 + $0x50] sm:$0xff] %vm726, %v698
      %738 = vst.msk [vmem:[%s274 + $0x58] sm:$0xff] %vm726, %v703
      %739 = vst.msk [vmem:[%s274 + $0x60] sm:$0xff] %vm726, %v708
      %740 = vst.msk [vmem:[%s274 + $0x68] sm:$0xff] %vm726, %v713
      %741 = vst.msk [vmem:[%s274 + $0x70] sm:$0xff] %vm726, %v718
      %742 = vst.msk [vmem:[%s274 + $0x78] sm:$0xff] %vm726, %v723
      %v743 = vld [vmem:[%s3] sm:$0xff]
      %v744 = vld [vmem:[%s3 + $0x8] sm:$0xff]
      %v745 = vld [vmem:[%s3 + $0x10] sm:$0xff]
      %v746 = vld [vmem:[%s3 + $0x18] sm:$0xff]
      %v747 = vld [vmem:[%s3 + $0x20] sm:$0xff]
      %v748 = vld [vmem:[%s3 + $0x28] sm:$0xff]
      %v749 = vld [vmem:[%s3 + $0x30] sm:$0xff]
      %v750 = vld [vmem:[%s3 + $0x38] sm:$0xff]
      %v751 = vld [vmem:[%s3 + $0x40] sm:$0xff]
      %v752 = vld [vmem:[%s3 + $0x48] sm:$0xff]
      %v753 = vld [vmem:[%s3 + $0x50] sm:$0xff]
      %v754 = vld [vmem:[%s3 + $0x58] sm:$0xff]
      %v755 = vld [vmem:[%s3 + $0x60] sm:$0xff]
      %v756 = vld [vmem:[%s3 + $0x68] sm:$0xff]
      %v757 = vld [vmem:[%s3 + $0x70] sm:$0xff]
      %v758 = vld [vmem:[%s3 + $0x78] sm:$0xff]
      %759 = vmatprep.subr.mxu0 0.0
      %760 = vmatpush1.msra.mxu0 %v743
      %761 = vmatprep.subr.mxu0 0.0
      %762 = vmatpush1.msra.mxu0 %v744
      %763 = vmatprep.subr.mxu0 0.0
      %764 = vmatpush1.msra.mxu0 %v745
      %765 = vmatprep.subr.mxu0 0.0
      %766 = vmatpush1.msra.mxu0 %v746
      %767 = vmatprep.subr.mxu0 0.0
      %768 = vmatpush1.msra.mxu0 %v747
      %769 = vmatprep.subr.mxu0 0.0
      %770 = vmatpush1.msra.mxu0 %v748
      %771 = vmatprep.subr.mxu0 0.0
      %772 = vmatpush1.msra.mxu0 %v749
      %773 = vmatprep.subr.mxu0 0.0
      %774 = vmatpush1.msra.mxu0 %v750
      %775 = vmatprep.subr.mxu0 0.0
      %776 = vmatpush1.msra.mxu0 %v751
      %777 = vmatprep.subr.mxu0 0.0
      %778 = vmatpush1.msra.mxu0 %v752
      %779 = vmatprep.subr.mxu0 0.0
      %780 = vmatpush1.msra.mxu0 %v753
      %781 = vmatprep.subr.mxu0 0.0
      %782 = vmatpush1.msra.mxu0 %v754
      %783 = vmatprep.subr.mxu0 0.0
      %784 = vmatpush1.msra.mxu0 %v755
      %785 = vmatprep.subr.mxu0 0.0
      %786 = vmatpush1.msra.mxu0 %v756
      %787 = vmatprep.subr.mxu0 0.0
      %788 = vmatpush1.msra.mxu0 %v757
      %789 = vmatprep.subr.mxu0 0.0
      %790 = vmatpush1.msra.mxu0 %v758
      %791 = vmatprep.subr.mxu0 0.0
      %792 = vmatpush1.msra.mxu0 0.0
      %793 = vmatprep.subr.mxu0 0.0
      %794 = vmatpush1.msra.mxu0 0.0
      %795 = vmatprep.subr.mxu0 0.0
      %796 = vmatpush1.msra.mxu0 0.0
      %797 = vmatprep.subr.mxu0 0.0
      %798 = vmatpush1.msra.mxu0 0.0
      %799 = vmatprep.subr.mxu0 0.0
      %800 = vmatpush1.msra.mxu0 0.0
      %801 = vmatprep.subr.mxu0 0.0
      %802 = vmatpush1.msra.mxu0 0.0
      %803 = vmatprep.subr.mxu0 0.0
      %804 = vmatpush1.msra.mxu0 0.0
      %805 = vmatprep.subr.mxu0 0.0
      %806 = vmatpush1.msra.mxu0 0.0
      %807 = vmatprep.subr.mxu0 0.0
      %808 = vmatpush1.msra.mxu0 0.0
      %809 = vmatprep.subr.mxu0 0.0
      %810 = vmatpush1.msra.mxu0 0.0
      %811 = vmatprep.subr.mxu0 0.0
      %812 = vmatpush1.msra.mxu0 0.0
      %813 = vmatprep.subr.mxu0 0.0
      %814 = vmatpush1.msra.mxu0 0.0
      %815 = vmatprep.subr.mxu0 0.0
      %816 = vmatpush1.msra.mxu0 0.0
      %817 = vmatprep.subr.mxu0 0.0
      %818 = vmatpush1.msra.mxu0 0.0
      %819 = vmatprep.subr.mxu0 0.0
      %820 = vmatpush1.msra.mxu0 0.0
      %821 = vmatprep.subr.mxu0 0.0
      %822 = vmatpush1.msra.mxu0 0.0
      %823 = vmatprep.mubr.f32.mxu0 0.0
      %824 = vmatmul.mubr.f32.gmra.mrb[0].mxu0 %v299
      %v825 = vpop.f32.mrb[0].mxu0
      %v826 = vadd.f32 0.0, %v825
      %v827 = vpop.f32.mrb[0].mxu0
      %828 = vmatprep.mubr.f32.mxu0 0.0
      %829 = vmatmul.mubr.f32.gmra.mrb[0].mxu0 %v300
      %v830 = vpop.f32.mrb[0].mxu0
      %v831 = vadd.f32 0.0, %v830
      %v832 = vpop.f32.mrb[0].mxu0
      %833 = vmatprep.mubr.f32.mxu0 0.0
      %834 = vmatmul.mubr.f32.gmra.mrb[0].mxu0 %v301
      %v835 = vpop.f32.mrb[0].mxu0
      %v836 = vadd.f32 0.0, %v835
      %v837 = vpop.f32.mrb[0].mxu0
      %838 = vmatprep.mubr.f32.mxu0 0.0
      %839 = vmatmul.mubr.f32.gmra.mrb[0].mxu0 %v302
      %v840 = vpop.f32.mrb[0].mxu0
      %v841 = vadd.f32 0.0, %v840
      %v842 = vpop.f32.mrb[0].mxu0
      %843 = vmatprep.mubr.f32.mxu0 0.0
      %844 = vmatmul.mubr.f32.gmra.mrb[0].mxu0 %v303
      %v845 = vpop.f32.mrb[0].mxu0
      %v846 = vadd.f32 0.0, %v845
      %v847 = vpop.f32.mrb[0].mxu0
      %848 = vmatprep.mubr.f32.mxu0 0.0
      %849 = vmatmul.mubr.f32.gmra.mrb[0].mxu0 %v304
      %v850 = vpop.f32.mrb[0].mxu0
      %v851 = vadd.f32 0.0, %v850
      %v852 = vpop.f32.mrb[0].mxu0
      %853 = vmatprep.mubr.f32.mxu0 0.0
      %854 = vmatmul.mubr.f32.gmra.mrb[0].mxu0 %v305
      %v855 = vpop.f32.mrb[0].mxu0
      %v856 = vadd.f32 0.0, %v855
      %v857 = vpop.f32.mrb[0].mxu0
      %858 = vmatprep.mubr.f32.mxu0 0.0
      %859 = vmatmul.mubr.f32.gmra.mrb[0].mxu0 %v306
      %v860 = vpop.f32.mrb[0].mxu0
      %v861 = vadd.f32 0.0, %v860
      %v862 = vpop.f32.mrb[0].mxu0
      %863 = vmatprep.mubr.f32.mxu0 0.0
      %864 = vmatmul.mubr.f32.gmra.mrb[0].mxu0 %v307
      %v865 = vpop.f32.mrb[0].mxu0
      %v866 = vadd.f32 0.0, %v865
      %v867 = vpop.f32.mrb[0].mxu0
      %868 = vmatprep.mubr.f32.mxu0 0.0
      %869 = vmatmul.mubr.f32.gmra.mrb[0].mxu0 %v308
      %v870 = vpop.f32.mrb[0].mxu0
      %v871 = vadd.f32 0.0, %v870
      %v872 = vpop.f32.mrb[0].mxu0
      %873 = vmatprep.mubr.f32.mxu0 0.0
      %874 = vmatmul.mubr.f32.gmra.mrb[0].mxu0 %v309
      %v875 = vpop.f32.mrb[0].mxu0
      %v876 = vadd.f32 0.0, %v875
      %v877 = vpop.f32.mrb[0].mxu0
      %878 = vmatprep.mubr.f32.mxu0 0.0
      %879 = vmatmul.mubr.f32.gmra.mrb[0].mxu0 %v310
      %v880 = vpop.f32.mrb[0].mxu0
      %v881 = vadd.f32 0.0, %v880
      %v882 = vpop.f32.mrb[0].mxu0
      %883 = vmatprep.mubr.f32.mxu0 0.0
      %884 = vmatmul.mubr.f32.gmra.mrb[0].mxu0 %v311
      %v885 = vpop.f32.mrb[0].mxu0
      %v886 = vadd.f32 0.0, %v885
      %v887 = vpop.f32.mrb[0].mxu0
      %888 = vmatprep.mubr.f32.mxu0 0.0
      %889 = vmatmul.mubr.f32.gmra.mrb[0].mxu0 %v312
      %v890 = vpop.f32.mrb[0].mxu0
      %v891 = vadd.f32 0.0, %v890
      %v892 = vpop.f32.mrb[0].mxu0
      %893 = vmatprep.mubr.f32.mxu0 0.0
      %894 = vmatmul.mubr.f32.gmra.mrb[0].mxu0 %v313
      %v895 = vpop.f32.mrb[0].mxu0
      %v896 = vadd.f32 0.0, %v895
      %v897 = vpop.f32.mrb[0].mxu0
      %898 = vmatprep.mubr.f32.mxu0 0.0
      %899 = vmatmul.mubr.f32.gmra.mrb[0].mxu0 %v314
      %v900 = vpop.f32.mrb[0].mxu0
      %v901 = vadd.f32 0.0, %v900
      %v902 = vpop.f32.mrb[0].mxu0
      %903 = vdwg.mxu0
      %904 = vst.msk [vmem:[%s280] sm:$0xff] %vm726, %v826
      %905 = vst.msk [vmem:[%s280 + $0x8] sm:$0xff] %vm726, %v831
      %906 = vst.msk [vmem:[%s280 + $0x10] sm:$0xff] %vm726, %v836
      %907 = vst.msk [vmem:[%s280 + $0x18] sm:$0xff] %vm726, %v841
      %908 = vst.msk [vmem:[%s280 + $0x20] sm:$0xff] %vm726, %v846
      %909 = vst.msk [vmem:[%s280 + $0x28] sm:$0xff] %vm726, %v851
      %910 = vst.msk [vmem:[%s280 + $0x30] sm:$0xff] %vm726, %v856
      %911 = vst.msk [vmem:[%s280 + $0x38] sm:$0xff] %vm726, %v861
      %912 = vst.msk [vmem:[%s280 + $0x40] sm:$0xff] %vm726, %v866
      %913 = vst.msk [vmem:[%s280 + $0x48] sm:$0xff] %vm726, %v871
      %914 = vst.msk [vmem:[%s280 + $0x50] sm:$0xff] %vm726, %v876
      %915 = vst.msk [vmem:[%s280 + $0x58] sm:$0xff] %vm726, %v881
      %916 = vst.msk [vmem:[%s280 + $0x60] sm:$0xff] %vm726, %v886
      %917 = vst.msk [vmem:[%s280 + $0x68] sm:$0xff] %vm726, %v891
      %918 = vst.msk [vmem:[%s280 + $0x70] sm:$0xff] %vm726, %v896
      %919 = vst.msk [vmem:[%s280 + $0x78] sm:$0xff] %vm726, %v901
      %s920 = smul.u32 16, %s18
      %p921 = scmp.lt.s32.totalorder %s920, 31
      %s922 = scalar_select %p921, %s920, 31
      %s923 = smul.addr %s922, 4
      %s924 = scalar_lea.vmem %s4, %s923
      %s925 = smul.u32 16, %s18
      %p926 = scmp.lt.s32.totalorder %s925, 31
      %s927 = scalar_select %p926, %s925, 31
      %s928 = smul.addr %s927, 8
      %s929 = scalar_lea.vmem %s5, %s928
      %s930 = smul.u32 16, %s18
      %p931 = scmp.lt.s32.totalorder %s930, 31
      %s932 = scalar_select %p931, %s930, 31
      %s933 = smul.addr %s932, 8
      %s934 = scalar_lea.vmem %s6, %s933
      // Predicated region
      $region37: #{gat_forward.10} parent=35 // pred_check
        %p935 = pneg %p125
      $region38: #{gat_forward.10} parent=35 // pred_check_branch
        %937 = sbr.rel (%p935) target = $region40
      $region39: #{gat_forward.10} parent=35 // pred_region
        %s938 = smul.u32 16, %s18
      $region40: #{gat_forward.10} parent=35 // pred_fallthru
        _
      // Predicated region
      $region41: #{gat_forward.10} parent=35 // pred_check
        %p939 = pneg %p151
      $region42: #{gat_forward.10} parent=35 // pred_check_branch
        %941 = sbr.rel (%p939) target = $region44
      $region43: #{gat_forward.10} parent=35 // pred_region
        %s942 = smul.u32 16, %s18
      $region44: #{gat_forward.10} parent=35 // pred_fallthru
        _
      // Predicated region
      $region45: #{gat_forward.10} parent=35 // pred_check
        %p943 = pneg %p177
      $region46: #{gat_forward.10} parent=35 // pred_check_branch
        %945 = sbr.rel (%p943) target = $region48
      $region47: #{gat_forward.10} parent=35 // pred_region
        %s946 = smul.u32 16, %s18
      $region48: #{gat_forward.10} parent=35 // pred_fallthru
        _
    $region36: #{gat_forward.10} parent=5 // pred_fallthru
      _
    %p947 = scmp.le.s32.totalorder 2, %s13
    // Predicated region
    $region49: #{gat_forward.10} parent=5 // pred_check
      %p948 = pneg %p947
    $region50: #{gat_forward.10} parent=5 // pred_check_branch
      %950 = sbr.rel (%p948) target = $region52
    $region51: #{gat_forward.10} parent=5 // pred_region
      %s951 = ssub.s32 %s13, 2
      // Predicated region
      $region53: #{gat_forward.10} parent=51 // pred_check
        %p952 = pneg %p131
      $region54: #{gat_forward.10} parent=51 // pred_check_branch
        %954 = sbr.rel (%p952) target = $region56
      $region55: #{gat_forward.10} parent=51 // pred_region
        %s955 = smul.u32 16, %s19
        %p956 = scmp.lt.s32.totalorder %s955, 31
        %s957 = scalar_select %p956, %s955, 31
        %s958 = smul.addr %s957, 4
        %s959 = scalar_lea.vmem %s4, %s958
      $region56: #{gat_forward.10} parent=51 // pred_fallthru
        _
      // Predicated region
      $region57: #{gat_forward.10} parent=51 // pred_check
        %p960 = pneg %p157
      $region58: #{gat_forward.10} parent=51 // pred_check_branch
        %962 = sbr.rel (%p960) target = $region60
      $region59: #{gat_forward.10} parent=51 // pred_region
        %s963 = smul.u32 16, %s19
        %p964 = scmp.lt.s32.totalorder %s963, 31
        %s965 = scalar_select %p964, %s963, 31
        %s966 = smul.addr %s965, 8
        %s967 = scalar_lea.vmem %s5, %s966
      $region60: #{gat_forward.10} parent=51 // pred_fallthru
        _
      // Predicated region
      $region61: #{gat_forward.10} parent=51 // pred_check
        %p968 = pneg %p183
      $region62: #{gat_forward.10} parent=51 // pred_check_branch
        %970 = sbr.rel (%p968) target = $region64
      $region63: #{gat_forward.10} parent=51 // pred_region
        %s971 = smul.u32 16, %s19
        %p972 = scmp.lt.s32.totalorder %s971, 31
        %s973 = scalar_select %p972, %s971, 31
        %s974 = smul.addr %s973, 8
        %s975 = scalar_lea.vmem %s6, %s974
      $region64: #{gat_forward.10} parent=51 // pred_fallthru
        _
    $region52: #{gat_forward.10} parent=5 // pred_fallthru
      _
  $region6: #{gat_forward.10} parent=0 // loop_footer
    %s17 = sadd.s32 1, %s13
  $region7: #{gat_forward.10} parent=0 // loop_footer_branch
    %12 = sbr.rel target = $region3
  $region8: #{gat_forward.10} parent=0 // loop_exit
    _

// kernel: gat_forward.11
$region0: #{gat_forward.11}
  #allocation0 [shape = 'u32[]', space=smem, size = 0x4, offset = 0x4, fixed_abs, tag = 'smem constant byte address 0x4 - core index']
  #allocation1 [shape = 'u32[144,128]{1,0:T(1,128)}', space=vmem, size = 0x12000, scoped, tag = 'internal scratch']
  #allocation2 [shape = 'f32[128,1]{1,0:T(8,128)}', space=vmem, size = 0x10000, scoped, tag = 'scratch operand']
  #allocation3 [shape = 'f32[128,1]{1,0:T(8,128)}', space=vmem, size = 0x10000, scoped, tag = 'scratch operand']
  #allocation4 [shape = 'f32[128,8]{1,0:T(8,128)}', space=vmem, size = 0x10000, scoped, tag = 'scratch operand']
  %s0 = inlined_call_operand.vmem [shape: bf16[256,256], index: 0, kind: input, shape index: {}]
  %s1 = inlined_call_operand.vmem [shape: bf16[256,8], index: 1, kind: input, shape index: {}]
  %s2 = inlined_call_operand.vmem [shape: f32[256,1], index: 2, kind: input, shape index: {}]
  %s3 = inlined_call_operand.vmem [shape: f32[1,256], index: 3, kind: input, shape index: {}]
  %s4 = inlined_call_operand.vmem [shape: f32[1,8], index: 4, kind: input, shape index: {}]
  %s5 = inlined_call_operand.vmem [shape: f32[256,8], index: 5, kind: output, shape index: {}]
  %s6 = sld [smem:[#allocation0]]
  $region102: #{gat_forward.11} parent=0
    _
  %s8 = ssub.s32 1, %s6
  %s9 = scalar_select 0, %s8, %s6
  $region1: #{gat_forward.11} parent=0
    #allocation5 [shape = 'u8[65536]{0}', space=vmem, size = 0x10000, scoped, tag = 'input window, operand 0']
    loop: start=0, step=1, limit=6
    $region2: #{gat_forward.11} parent=1 // loop_pre_header
      _
    $region3: #{gat_forward.11} parent=1 // loop_header
      %s11 = sphi 0, %s15
      %p12 = scmp.ge.s32.totalorder %s11, 6
      %s18 = sphi 0, %s30
      %s19 = sphi 0, %s26
      %s20 = sphi 0, %s18
      %s21 = sphi 0, %s19
      %s22 = sphi 0, %s20
      %s23 = sphi 0, %s21
      %s35 = sphi 0, %s37
      %s38 = sphi 0, %s35
      %s39 = sphi 0, %s38
      %s55 = sphi 0, %s39
      %s61 = sphi 0, %s63
      %s64 = sphi 0, %s61
      %s65 = sphi 0, %s64
      %s81 = sphi 0, %s65
      %s87 = sphi 0, %s89
      %s90 = sphi 0, %s87
      %s91 = sphi 0, %s90
      %s107 = sphi 0, %s91
      %s113 = sphi 0, %s115
      %s116 = sphi 0, %s113
      %s117 = sphi 0, %s116
      %s133 = sphi 0, %s117
      %s137 = sphi 0, %s137
      %s139 = sphi 0, %s137
      %s140 = sphi 0, %s139
      %s154 = sphi 0, %s140
      %s160 = sphi 0, %s162
      %s163 = sphi 0, %s160
      %s164 = sphi 0, %s163
      %s180 = sphi 0, %s164
    $region4: #{gat_forward.11} parent=1 // loop_header_branch
      %14 = sbr.rel (%p12) target = $region8
    $region5: #{gat_forward.11} parent=1 // loop_body
      %s16 = ssub.s32 %s11, 1
      %s17 = ssub.s32 %s11, 2
      %s24 = sadd.s32 1, %s19
      %p25 = scmp.ge.s32.totalorder %s24, 2
      %s26 = scalar_select %p25, 0, %s24
      %s27 = sadd.s32 1, %s18
      %s28 = scalar_select %p25, %s27, %s18
      %p29 = scmp.ge.s32.totalorder %s28, 2
      %s30 = scalar_select %p29, 0, %s28
      %s31 = ssub.s32 %s18, %s30
      %s32 = ssub.s32 %s19, %s26
      %s33 = sor.u32 %s31, %s32
      %p34 = scmp.eq.s32.totalorder %s33, 0
      %s36 = sadd.s32 %s35, 1
      %s37 = scalar_select %p34, %s35, %s36
      %p40 = pneg %p34
      %p41 = scmp.eq.s32.totalorder %s11, 3
      %p42 = por %p40, %p41
      %p43 = scmp.ne.s32.totalorder %s35, %s38
      %p44 = scmp.eq.s32.totalorder %s11, 0
      %p45 = por %p43, %p44
      %p46 = scmp.ne.s32.totalorder %s35, %s38
      %p47 = scmp.eq.s32.totalorder %s16, 3
      %p48 = por %p46, %p47
      %p49 = scmp.ne.s32.totalorder %s38, %s39
      %p50 = scmp.eq.s32.totalorder %s16, 0
      %p51 = por %p49, %p50
      %p52 = scmp.ne.s32.totalorder %s38, %s39
      %p53 = scmp.eq.s32.totalorder %s17, 3
      %p54 = por %p52, %p53
      %p56 = scmp.ne.s32.totalorder %s39, %s55
      %p57 = scmp.eq.s32.totalorder %s17, 0
      %p58 = por %p56, %p57
      %s59 = ssub.s32 %s19, %s26
      %p60 = scmp.eq.s32.totalorder %s59, 0
      %s62 = sadd.s32 %s61, 1
      %s63 = scalar_select %p60, %s61, %s62
      %p66 = pneg %p60
      %p67 = scmp.eq.s32.totalorder %s11, 3
      %p68 = por %p66, %p67
      %p69 = scmp.ne.s32.totalorder %s61, %s64
      %p70 = scmp.eq.s32.totalorder %s11, 0
      %p71 = por %p69, %p70
      %p72 = scmp.ne.s32.totalorder %s61, %s64
      %p73 = scmp.eq.s32.totalorder %s16, 3
      %p74 = por %p72, %p73
      %p75 = scmp.ne.s32.totalorder %s64, %s65
      %p76 = scmp.eq.s32.totalorder %s16, 0
      %p77 = por %p75, %p76
      %p78 = scmp.ne.s32.totalorder %s64, %s65
      %p79 = scmp.eq.s32.totalorder %s17, 3
      %p80 = por %p78, %p79
      %p82 = scmp.ne.s32.totalorder %s65, %s81
      %p83 = scmp.eq.s32.totalorder %s17, 0
      %p84 = por %p82, %p83
      %s85 = ssub.s32 %s18, %s30
      %p86 = scmp.eq.s32.totalorder %s85, 0
      %s88 = sadd.s32 %s87, 1
      %s89 = scalar_select %p86, %s87, %s88
      %p92 = pneg %p86
      %p93 = scmp.eq.s32.totalorder %s11, 3
      %p94 = por %p92, %p93
      %p95 = scmp.ne.s32.totalorder %s87, %s90
      %p96 = scmp.eq.s32.totalorder %s11, 0
      %p97 = por %p95, %p96
      %p98 = scmp.ne.s32.totalorder %s87, %s90
      %p99 = scmp.eq.s32.totalorder %s16, 3
      %p100 = por %p98, %p99
      %p101 = scmp.ne.s32.totalorder %s90, %s91
      %p102 = scmp.eq.s32.totalorder %s16, 0
      %p103 = por %p101, %p102
      %p104 = scmp.ne.s32.totalorder %s90, %s91
      %p105 = scmp.eq.s32.totalorder %s17, 3
      %p106 = por %p104, %p105
      %p108 = scmp.ne.s32.totalorder %s91, %s107
      %p109 = scmp.eq.s32.totalorder %s17, 0
      %p110 = por %p108, %p109
      %s111 = ssub.s32 %s19, %s26
      %p112 = scmp.eq.s32.totalorder %s111, 0
      %s114 = sadd.s32 %s113, 1
      %s115 = scalar_select %p112, %s113, %s114
      %p118 = pneg %p112
      %p119 = scmp.eq.s32.totalorder %s11, 3
      %p120 = por %p118, %p119
      %p121 = scmp.ne.s32.totalorder %s113, %s116
      %p122 = scmp.eq.s32.totalorder %s11, 0
      %p123 = por %p121, %p122
      %p124 = scmp.ne.s32.totalorder %s113, %s116
      %p125 = scmp.eq.s32.totalorder %s16, 3
      %p126 = por %p124, %p125
      %p127 = scmp.ne.s32.totalorder %s116, %s117
      %p128 = scmp.eq.s32.totalorder %s16, 0
      %p129 = por %p127, %p128
      %p130 = scmp.ne.s32.totalorder %s116, %s117
      %p131 = scmp.eq.s32.totalorder %s17, 3
      %p132 = por %p130, %p131
      %p134 = scmp.ne.s32.totalorder %s117, %s133
      %p135 = scmp.eq.s32.totalorder %s17, 0
      %p136 = por %p134, %p135
      %s138 = sadd.s32 %s137, 1
      %p141 = scmp.eq.s32.totalorder %s11, 3
      %p142 = scmp.ne.s32.totalorder %s137, %s139
      %p143 = scmp.eq.s32.totalorder %s11, 0
      %p144 = por %p142, %p143
      %p145 = scmp.ne.s32.totalorder %s137, %s139
      %p146 = scmp.eq.s32.totalorder %s16, 3
      %p147 = por %p145, %p146
      %p148 = scmp.ne.s32.totalorder %s139, %s140
      %p149 = scmp.eq.s32.totalorder %s16, 0
      %p150 = por %p148, %p149
      %p151 = scmp.ne.s32.totalorder %s139, %s140
      %p152 = scmp.eq.s32.totalorder %s17, 3
      %p153 = por %p151, %p152
      %p155 = scmp.ne.s32.totalorder %s140, %s154
      %p156 = scmp.eq.s32.totalorder %s17, 0
      %p157 = por %p155, %p156
      %s158 = ssub.s32 %s18, %s30
      %p159 = scmp.eq.s32.totalorder %s158, 0
      %s161 = sadd.s32 %s160, 1
      %s162 = scalar_select %p159, %s160, %s161
      %p165 = pneg %p159
      %p166 = scmp.eq.s32.totalorder %s11, 3
      %p167 = por %p165, %p166
      %p168 = scmp.ne.s32.totalorder %s160, %s163
      %p169 = scmp.eq.s32.totalorder %s11, 0
      %p170 = por %p168, %p169
      %p171 = scmp.ne.s32.totalorder %s160, %s163
      %p172 = scmp.eq.s32.totalorder %s16, 3
      %p173 = por %p171, %p172
      %p174 = scmp.ne.s32.totalorder %s163, %s164
      %p175 = scmp.eq.s32.totalorder %s16, 0
      %p176 = por %p174, %p175
      %p177 = scmp.ne.s32.totalorder %s163, %s164
      %p178 = scmp.eq.s32.totalorder %s17, 3
      %p179 = por %p177, %p178
      %p181 = scmp.ne.s32.totalorder %s164, %s180
      %p182 = scmp.eq.s32.totalorder %s17, 0
      %p183 = por %p181, %p182
      %p184 = scmp.le.s32.totalorder 1, %s11
      %p185 = scmp.lt.s32.totalorder %s11, 5
      %p186 = pnand %p184, %p185
      %p187 = pneg %p186
      // Predicated region
      $region9: #{gat_forward.11} parent=5 // pred_check
        _
      $region10: #{gat_forward.11} parent=5 // pred_check_branch
        %189 = sbr.rel (%p186) target = $region12
      $region11: #{gat_forward.11} parent=5 // pred_region
        %s190 = ssub.s32 %s11, 1
        // Predicated region
        $region13: #{gat_forward.11} parent=11 // pred_check
          %p191 = pneg %p150
        $region14: #{gat_forward.11} parent=11 // pred_check_branch
          %193 = sbr.rel (%p191) target = $region16
        $region15: #{gat_forward.11} parent=11 // pred_region
          _
        $region16: #{gat_forward.11} parent=11 // pred_fallthru
          _
      $region12: #{gat_forward.11} parent=5 // pred_fallthru
        _
      %p194 = scmp.lt.s32.totalorder %s11, 4
      // Predicated region
      $region17: #{gat_forward.11} parent=5 // pred_check
        %p195 = pneg %p194
      $region18: #{gat_forward.11} parent=5 // pred_check_branch
        %197 = sbr.rel (%p195) target = $region20
      $region19: #{gat_forward.11} parent=5 // pred_region
        // Predicated region
        $region21: #{gat_forward.11} parent=19 // pred_check
          %p198 = pneg %p45
        $region22: #{gat_forward.11} parent=19 // pred_check_branch
          %200 = sbr.rel (%p198) target = $region24
        $region23: #{gat_forward.11} parent=19 // pred_region
          %s201 = sand.u32 %s35, 1
          %s202 = sand.u32 %s35, 1
          %s203 = smul.addr %s202, 64
          %s204 = scalar_lea.vmem [#allocation5], %s203
          %s205 = smul.u32 16, %s18
          %s206 = smul.addr %s205, 2
          %s207 = sadd.s32 %s19, %s206
          %s208 = smul.addr %s207, 4
          %s209 = scalar_lea.vmem %s0, %s208
          // Predicated region
          $region25: #{gat_forward.11} parent=23 // pred_check
            _
          $region26: #{gat_forward.11} parent=23 // pred_check_branch
            %211 = sbr.rel (0) target = $region28
          $region27: #{gat_forward.11} parent=23 // pred_region
            // Predicated region
            $region29: #{gat_forward.11} parent=27 // pred_check
              _
            $region30: #{gat_forward.11} parent=27 // pred_check_branch
              %213 = sbr.rel target = $region32
            $region31: #{gat_forward.11} parent=27 // pred_region
              // Predicated region
              $region44: #{gat_forward.11} parent=31 // pred_check
                _
              $region45: #{gat_forward.11} parent=31 // pred_check_branch
                %258 = sbr.rel (0) target = $region47
              $region46: #{gat_forward.11} parent=31 // pred_region
                loop: start=0, step=1, limit=1
                $region48: #{gat_forward.11} parent=46 // loop_pre_header
                  _
                $region49: #{gat_forward.11} parent=46 // loop_header
                  %s260 = sphi 0, %s264
                  %p261 = scmp.ge.s32.totalorder %s260, 1
                  %s265 = sphi %s209, %s209
                  %s266 = sphi %s204, %s204
                $region50: #{gat_forward.11} parent=46 // loop_header_branch
                  %263 = sbr.rel (%p261) target = $region54
                $region51: #{gat_forward.11} parent=46 // loop_body
                  _
                $region52: #{gat_forward.11} parent=46 // loop_footer
                  %s264 = sadd.s32 1, %s260
                $region53: #{gat_forward.11} parent=46 // loop_footer_branch
                  %259 = sbr.rel target = $region49
                $region54: #{gat_forward.11} parent=46 // loop_exit
                  _
                loop: start=0, step=1, limit=1
                $region55: #{gat_forward.11} parent=46 // loop_pre_header
                  _
                $region56: #{gat_forward.11} parent=46 // loop_header
                  %s269 = sphi 0, %s273
                  %p270 = scmp.ge.s32.totalorder %s269, 1
                  %s274 = sphi %s209, %s209
                  %s275 = sphi %s204, %s204
                $region57: #{gat_forward.11} parent=46 // loop_header_branch
                  %272 = sbr.rel (%p270) target = $region61
                $region58: #{gat_forward.11} parent=46 // loop_body
                  %v276 = vld [vmem:[%s274] sm:$0xf]
                  %277 = vst [vmem:[%s275] sm:$0xf] %v276
                  %v278 = vld [vmem:[%s274 + $0x8] sm:$0xf]
                  %279 = vst [vmem:[%s275 + $0x4] sm:$0xf] %v278
                  %v280 = vld [vmem:[%s274 + $0x10] sm:$0xf]
                  %281 = vst [vmem:[%s275 + $0x8] sm:$0xf] %v280
                  %v282 = vld [vmem:[%s274 + $0x18] sm:$0xf]
                  %283 = vst [vmem:[%s275 + $0xc] sm:$0xf] %v282
                  %v284 = vld [vmem:[%s274 + $0x20] sm:$0xf]
                  %285 = vst [vmem:[%s275 + $0x10] sm:$0xf] %v284
                  %v286 = vld [vmem:[%s274 + $0x28] sm:$0xf]
                  %287 = vst [vmem:[%s275 + $0x14] sm:$0xf] %v286
                  %v288 = vld [vmem:[%s274 + $0x30] sm:$0xf]
                  %289 = vst [vmem:[%s275 + $0x18] sm:$0xf] %v288
                  %v290 = vld [vmem:[%s274 + $0x38] sm:$0xf]
                  %291 = vst [vmem:[%s275 + $0x1c] sm:$0xf] %v290
                  %v292 = vld [vmem:[%s274 + $0x40] sm:$0xf]
                  %293 = vst [vmem:[%s275 + $0x20] sm:$0xf] %v292
                  %v294 = vld [vmem:[%s274 + $0x48] sm:$0xf]
                  %295 = vst [vmem:[%s275 + $0x24] sm:$0xf] %v294
                  %v296 = vld [vmem:[%s274 + $0x50] sm:$0xf]
                  %297 = vst [vmem:[%s275 + $0x28] sm:$0xf] %v296
                  %v298 = vld [vmem:[%s274 + $0x58] sm:$0xf]
                  %299 = vst [vmem:[%s275 + $0x2c] sm:$0xf] %v298
                  %v300 = vld [vmem:[%s274 + $0x60] sm:$0xf]
                  %301 = vst [vmem:[%s275 + $0x30] sm:$0xf] %v300
                  %v302 = vld [vmem:[%s274 + $0x68] sm:$0xf]
                  %303 = vst [vmem:[%s275 + $0x34] sm:$0xf] %v302
                  %v304 = vld [vmem:[%s274 + $0x70] sm:$0xf]
                  %305 = vst [vmem:[%s275 + $0x38] sm:$0xf] %v304
                  %v306 = vld [vmem:[%s274 + $0x78] sm:$0xf]
                  %307 = vst [vmem:[%s275 + $0x3c] sm:$0xf] %v306
                $region59: #{gat_forward.11} parent=46 // loop_footer
                  %s273 = sadd.s32 1, %s269
                $region60: #{gat_forward.11} parent=46 // loop_footer_branch
                  %268 = sbr.rel target = $region56
                $region61: #{gat_forward.11} parent=46 // loop_exit
                  _
              $region47: #{gat_forward.11} parent=31 // pred_fallthru
                _
            $region32: #{gat_forward.11} parent=27 // pred_fallthru
              _
            // Predicated region
            $region33: #{gat_forward.11} parent=27 // pred_check
              _
            $region34: #{gat_forward.11} parent=27 // pred_check_branch
              %215 = sbr.rel (0) target = $region36
            $region35: #{gat_forward.11} parent=27 // pred_region
              loop: start=0, step=1, limit=1
              $region37: #{gat_forward.11} parent=35 // loop_pre_header
                _
              $region38: #{gat_forward.11} parent=35 // loop_header
                %s218 = sphi 0, %s222
                %p219 = scmp.ge.s32.totalorder %s218, 1
                %s223 = sphi %s209, %s209
                %s224 = sphi %s204, %s204
              $region39: #{gat_forward.11} parent=35 // loop_header_branch
                %221 = sbr.rel (%p219) target = $region43
              $region40: #{gat_forward.11} parent=35 // loop_body
                %v225 = vld [vmem:[%s223] sm:$0xf]
                %226 = vst [vmem:[%s224] sm:$0xf] %v225
                %v227 = vld [vmem:[%s223 + $0x8] sm:$0xf]
                %228 = vst [vmem:[%s224 + $0x4] sm:$0xf] %v227
                %v229 = vld [vmem:[%s223 + $0x10] sm:$0xf]
                %230 = vst [vmem:[%s224 + $0x8] sm:$0xf] %v229
                %v231 = vld [vmem:[%s223 + $0x18] sm:$0xf]
                %232 = vst [vmem:[%s224 + $0xc] sm:$0xf] %v231
                %v233 = vld [vmem:[%s223 + $0x20] sm:$0xf]
                %234 = vst [vmem:[%s224 + $0x10] sm:$0xf] %v233
                %v235 = vld [vmem:[%s223 + $0x28] sm:$0xf]
                %236 = vst [vmem:[%s224 + $0x14] sm:$0xf] %v235
                %v237 = vld [vmem:[%s223 + $0x30] sm:$0xf]
                %238 = vst [vmem:[%s224 + $0x18] sm:$0xf] %v237
                %v239 = vld [vmem:[%s223 + $0x38] sm:$0xf]
                %240 = vst [vmem:[%s224 + $0x1c] sm:$0xf] %v239
                %v241 = vld [vmem:[%s223 + $0x40] sm:$0xf]
                %242 = vst [vmem:[%s224 + $0x20] sm:$0xf] %v241
                %v243 = vld [vmem:[%s223 + $0x48] sm:$0xf]
                %244 = vst [vmem:[%s224 + $0x24] sm:$0xf] %v243
                %v245 = vld [vmem:[%s223 + $0x50] sm:$0xf]
                %246 = vst [vmem:[%s224 + $0x28] sm:$0xf] %v245
                %v247 = vld [vmem:[%s223 + $0x58] sm:$0xf]
                %248 = vst [vmem:[%s224 + $0x2c] sm:$0xf] %v247
                %v249 = vld [vmem:[%s223 + $0x60] sm:$0xf]
                %250 = vst [vmem:[%s224 + $0x30] sm:$0xf] %v249
                %v251 = vld [vmem:[%s223 + $0x68] sm:$0xf]
                %252 = vst [vmem:[%s224 + $0x34] sm:$0xf] %v251
                %v253 = vld [vmem:[%s223 + $0x70] sm:$0xf]
                %254 = vst [vmem:[%s224 + $0x38] sm:$0xf] %v253
                %v255 = vld [vmem:[%s223 + $0x78] sm:$0xf]
                %256 = vst [vmem:[%s224 + $0x3c] sm:$0xf] %v255
              $region41: #{gat_forward.11} parent=35 // loop_footer
                %s222 = sadd.s32 1, %s218
              $region42: #{gat_forward.11} parent=35 // loop_footer_branch
                %217 = sbr.rel target = $region38
              $region43: #{gat_forward.11} parent=35 // loop_exit
                _
            $region36: #{gat_forward.11} parent=27 // pred_fallthru
              _
          $region28: #{gat_forward.11} parent=23 // pred_fallthru
            _
          %308 = vnop
        $region24: #{gat_forward.11} parent=19 // pred_fallthru
          _
        // Predicated region
        $region62: #{gat_forward.11} parent=19 // pred_check
          %p309 = pneg %p71
        $region63: #{gat_forward.11} parent=19 // pred_check_branch
          %311 = sbr.rel (%p309) target = $region65
        $region64: #{gat_forward.11} parent=19 // pred_region
          %s312 = smul.u32 16, %s19
          %p313 = scmp.lt.s32.totalorder %s312, 31
          %s314 = scalar_select %p313, %s312, 31
          %s315 = smul.addr %s314, 4
          %s316 = scalar_lea.vmem %s1, %s315
          %s317 = smul.u32 16, %s19
        $region65: #{gat_forward.11} parent=19 // pred_fallthru
          _
        // Predicated region
        $region66: #{gat_forward.11} parent=19 // pred_check
          %p318 = pneg %p97
        $region67: #{gat_forward.11} parent=19 // pred_check_branch
          %320 = sbr.rel (%p318) target = $region69
        $region68: #{gat_forward.11} parent=19 // pred_region
          %s321 = smul.u32 16, %s18
          %p322 = scmp.lt.s32.totalorder %s321, 31
          %s323 = scalar_select %p322, %s321, 31
          %s324 = smul.addr %s323, 8
          %s325 = scalar_lea.vmem %s2, %s324
          %s326 = smul.u32 16, %s18
        $region69: #{gat_forward.11} parent=19 // pred_fallthru
          _
        // Predicated region
        $region70: #{gat_forward.11} parent=19 // pred_check
          %p327 = pneg %p123
        $region71: #{gat_forward.11} parent=19 // pred_check_branch
          %329 = sbr.rel (%p327) target = $region73
        $region72: #{gat_forward.11} parent=19 // pred_region
          %p330 = scmp.lt.s32.totalorder %s19, 1
          %s331 = scalar_select %p330, %s19, 1
          %s332 = scalar_lea.vmem %s3, %s331
        $region73: #{gat_forward.11} parent=19 // pred_fallthru
          _
      $region20: #{gat_forward.11} parent=5 // pred_fallthru
        _
      %p333 = scmp.le.s32.totalorder 1, %s11
      %p334 = scmp.lt.s32.totalorder %s11, 5
      %p335 = pnand %p333, %p334
      %p336 = pneg %p335
      // Predicated region
      $region74: #{gat_forward.11} parent=5 // pred_check
        _
      $region75: #{gat_forward.11} parent=5 // pred_check_branch
        %338 = sbr.rel (%p335) target = $region77
      $region76: #{gat_forward.11} parent=5 // pred_region
        %s339 = ssub.s32 %s11, 1
        %s340 = sand.u32 %s38, 1
        %s341 = sand.u32 %s38, 1
        %s342 = smul.addr %s341, 64
        %s343 = scalar_lea.vmem [#allocation5], %s342
        // Predicated region
        $region78: #{gat_forward.11} parent=76 // pred_check
          %p344 = pneg %p51
        $region79: #{gat_forward.11} parent=76 // pred_check_branch
          %346 = sbr.rel (%p344) target = $region81
        $region80: #{gat_forward.11} parent=76 // pred_region
          _
        $region81: #{gat_forward.11} parent=76 // pred_fallthru
          _
        %s347 = sand.u32 %s38, 1
        %s348 = sand.u32 %s38, 1
        %s349 = smul.addr %s348, 64
        %s350 = scalar_lea.vmem [#allocation5], %s349
        %p351 = pneg %p51
        %p352 = pneg %p48
        %s353 = smul.u32 16, %s21
        %p354 = scmp.lt.s32.totalorder %s353, 31
        %s355 = scalar_select %p354, %s353, 31
        %s356 = smul.addr %s355, 4
        %s357 = scalar_lea.vmem %s1, %s356
        %p358 = pneg %p77
        %p359 = pneg %p74
        %s360 = smul.u32 16, %s20
        %p361 = scmp.lt.s32.totalorder %s360, 31
        %s362 = scalar_select %p361, %s360, 31
        %s363 = smul.addr %s362, 8
        %s364 = scalar_lea.vmem %s2, %s363
        %p365 = pneg %p103
        %p366 = pneg %p100
        %p367 = scmp.lt.s32.totalorder %s21, 1
        %s368 = scalar_select %p367, %s21, 1
        %s369 = scalar_lea.vmem %s3, %s368
        %p370 = pneg %p129
        %p371 = pneg %p126
        %p372 = pneg %p150
        %p373 = pneg %p147
        %p374 = pneg %p176
        %p375 = pneg %p173
        %s376 = smul.u32 16, %s20
        %p377 = scmp.lt.s32.totalorder %s376, 31
        %s378 = scalar_select %p377, %s376, 31
        %s379 = smul.addr %s378, 8
        %s380 = scalar_lea.vmem %s5, %s379
        %s381 = smul.u32 16, %s20
        %s382 = smul.u32 16, %s21
        %p383 = scmp.lt.s32.totalorder %s382, 31
        %s384 = scalar_select %p383, %s382, 31
        %s385 = smul.addr %s384, 4
        %s386 = scalar_lea.vmem %s1, %s385
        %s387 = smul.u32 16, %s21
        %s388 = smul.u32 16, %s20
        %p389 = scmp.lt.s32.totalorder %s388, 31
        %s390 = scalar_select %p389, %s388, 31
        %s391 = smul.addr %s390, 8
        %s392 = scalar_lea.vmem %s2, %s391
        %s393 = smul.u32 16, %s20
        %p394 = scmp.lt.s32.totalorder %s21, 1
        %s395 = scalar_select %p394, %s21, 1
        %s396 = scalar_lea.vmem %s3, %s395
        %s397 = smul.u32 16, %s20
        %p398 = scmp.lt.s32.totalorder %s397, 31
        %s399 = scalar_select %p398, %s397, 31
        %s400 = smul.addr %s399, 8
        %s401 = scalar_lea.vmem %s5, %s400
        %s402 = smul.u32 16, %s20
        %p406 = scmp.eq.s32.totalorder %s21, 0
        // Predicated region
        $region82: #{gat_forward.11} parent=76 // pred_check
          %p407 = pneg %p406
        $region83: #{gat_forward.11} parent=76 // pred_check_branch
          %409 = sbr.rel (%p407) target = $region85
        $region84: #{gat_forward.11} parent=76 // pred_region
          %vm410 = vcmask 7168
          %411 = vst.msk [vmem:[#allocation2] sm:$0xff] %vm410, -1e+30
          %412 = vst.msk [vmem:[#allocation2 + $0x8] sm:$0xff] %vm410, -1e+30
          %413 = vst.msk [vmem:[#allocation2 + $0x10] sm:$0xff] %vm410, -1e+30
          %414 = vst.msk [vmem:[#allocation2 + $0x18] sm:$0xff] %vm410, -1e+30
          %415 = vst.msk [vmem:[#allocation2 + $0x20] sm:$0xff] %vm410, -1e+30
          %416 = vst.msk [vmem:[#allocation2 + $0x28] sm:$0xff] %vm410, -1e+30
          %417 = vst.msk [vmem:[#allocation2 + $0x30] sm:$0xff] %vm410, -1e+30
          %418 = vst.msk [vmem:[#allocation2 + $0x38] sm:$0xff] %vm410, -1e+30
          %419 = vst.msk [vmem:[#allocation2 + $0x40] sm:$0xff] %vm410, -1e+30
          %420 = vst.msk [vmem:[#allocation2 + $0x48] sm:$0xff] %vm410, -1e+30
          %421 = vst.msk [vmem:[#allocation2 + $0x50] sm:$0xff] %vm410, -1e+30
          %422 = vst.msk [vmem:[#allocation2 + $0x58] sm:$0xff] %vm410, -1e+30
          %423 = vst.msk [vmem:[#allocation2 + $0x60] sm:$0xff] %vm410, -1e+30
          %424 = vst.msk [vmem:[#allocation2 + $0x68] sm:$0xff] %vm410, -1e+30
          %425 = vst.msk [vmem:[#allocation2 + $0x70] sm:$0xff] %vm410, -1e+30
          %426 = vst.msk [vmem:[#allocation2 + $0x78] sm:$0xff] %vm410, -1e+30
          %427 = vst.msk [vmem:[#allocation3] sm:$0xff] %vm410, 0.0
          %428 = vst.msk [vmem:[#allocation3 + $0x8] sm:$0xff] %vm410, 0.0
          %429 = vst.msk [vmem:[#allocation3 + $0x10] sm:$0xff] %vm410, 0.0
          %430 = vst.msk [vmem:[#allocation3 + $0x18] sm:$0xff] %vm410, 0.0
          %431 = vst.msk [vmem:[#allocation3 + $0x20] sm:$0xff] %vm410, 0.0
          %432 = vst.msk [vmem:[#allocation3 + $0x28] sm:$0xff] %vm410, 0.0
          %433 = vst.msk [vmem:[#allocation3 + $0x30] sm:$0xff] %vm410, 0.0
          %434 = vst.msk [vmem:[#allocation3 + $0x38] sm:$0xff] %vm410, 0.0
          %435 = vst.msk [vmem:[#allocation3 + $0x40] sm:$0xff] %vm410, 0.0
          %436 = vst.msk [vmem:[#allocation3 + $0x48] sm:$0xff] %vm410, 0.0
          %437 = vst.msk [vmem:[#allocation3 + $0x50] sm:$0xff] %vm410, 0.0
          %438 = vst.msk [vmem:[#allocation3 + $0x58] sm:$0xff] %vm410, 0.0
          %439 = vst.msk [vmem:[#allocation3 + $0x60] sm:$0xff] %vm410, 0.0
          %440 = vst.msk [vmem:[#allocation3 + $0x68] sm:$0xff] %vm410, 0.0
          %441 = vst.msk [vmem:[#allocation3 + $0x70] sm:$0xff] %vm410, 0.0
          %442 = vst.msk [vmem:[#allocation3 + $0x78] sm:$0xff] %vm410, 0.0
          %vm443 = vcmask 64512
          %444 = vst.msk [vmem:[#allocation4] sm:$0xff] %vm443, 0.0
          %445 = vst.msk [vmem:[#allocation4 + $0x8] sm:$0xff] %vm443, 0.0
          %446 = vst.msk [vmem:[#allocation4 + $0x10] sm:$0xff] %vm443, 0.0
          %447 = vst.msk [vmem:[#allocation4 + $0x18] sm:$0xff] %vm443, 0.0
          %448 = vst.msk [vmem:[#allocation4 + $0x20] sm:$0xff] %vm443, 0.0
          %449 = vst.msk [vmem:[#allocation4 + $0x28] sm:$0xff] %vm443, 0.0
          %450 = vst.msk [vmem:[#allocation4 + $0x30] sm:$0xff] %vm443, 0.0
          %451 = vst.msk [vmem:[#allocation4 + $0x38] sm:$0xff] %vm443, 0.0
          %452 = vst.msk [vmem:[#allocation4 + $0x40] sm:$0xff] %vm443, 0.0
          %453 = vst.msk [vmem:[#allocation4 + $0x48] sm:$0xff] %vm443, 0.0
          %454 = vst.msk [vmem:[#allocation4 + $0x50] sm:$0xff] %vm443, 0.0
          %455 = vst.msk [vmem:[#allocation4 + $0x58] sm:$0xff] %vm443, 0.0
          %456 = vst.msk [vmem:[#allocation4 + $0x60] sm:$0xff] %vm443, 0.0
          %457 = vst.msk [vmem:[#allocation4 + $0x68] sm:$0xff] %vm443, 0.0
          %458 = vst.msk [vmem:[#allocation4 + $0x70] sm:$0xff] %vm443, 0.0
          %459 = vst.msk [vmem:[#allocation4 + $0x78] sm:$0xff] %vm443, 0.0
        $region85: #{gat_forward.11} parent=76 // pred_fallthru
          _
        %v460 = vld [vmem:[%s343] sm:$0xf]
        %v461 = vld [vmem:[%s343 + $0x4] sm:$0xf]
        %v462 = vld [vmem:[%s343 + $0x8] sm:$0xf]
        %v463 = vld [vmem:[%s343 + $0xc] sm:$0xf]
        %v464 = vld [vmem:[%s343 + $0x10] sm:$0xf]
        %v465 = vld [vmem:[%s343 + $0x14] sm:$0xf]
        %v466 = vld [vmem:[%s343 + $0x18] sm:$0xf]
        %v467 = vld [vmem:[%s343 + $0x1c] sm:$0xf]
        %v468 = vld [vmem:[%s343 + $0x20] sm:$0xf]
        %v469 = vld [vmem:[%s343 + $0x24] sm:$0xf]
        %v470 = vld [vmem:[%s343 + $0x28] sm:$0xf]
        %v471 = vld [vmem:[%s343 + $0x2c] sm:$0xf]
        %v472 = vld [vmem:[%s343 + $0x30] sm:$0xf]
        %v473 = vld [vmem:[%s343 + $0x34] sm:$0xf]
        %v474 = vld [vmem:[%s343 + $0x38] sm:$0xf]
        %v475 = vld [vmem:[%s343 + $0x3c] sm:$0xf]
        %vm476 = vcmp.gt.bf16.partialorder %v460, 0
        %vm477 = vcmp.gt.bf16.partialorder %v461, 0
        %vm478 = vcmp.gt.bf16.partialorder %v462, 0
        %vm479 = vcmp.gt.bf16.partialorder %v463, 0
        %vm480 = vcmp.gt.bf16.partialorder %v464, 0
        %vm481 = vcmp.gt.bf16.partialorder %v465, 0
        %vm482 = vcmp.gt.bf16.partialorder %v466, 0
        %vm483 = vcmp.gt.bf16.partialorder %v467, 0
        %vm484 = vcmp.gt.bf16.partialorder %v468, 0
        %vm485 = vcmp.gt.bf16.partialorder %v469, 0
        %vm486 = vcmp.gt.bf16.partialorder %v470, 0
        %vm487 = vcmp.gt.bf16.partialorder %v471, 0
        %vm488 = vcmp.gt.bf16.partialorder %v472, 0
        %vm489 = vcmp.gt.bf16.partialorder %v473, 0
        %vm490 = vcmp.gt.bf16.partialorder %v474, 0
        %vm491 = vcmp.gt.bf16.partialorder %v475, 0
        %v492 = vld [vmem:[%s392] sm:$0xff]
        %v493 = vld [vmem:[%s392 + $0x8] sm:$0xff]
        %v494 = vld [vmem:[%s392 + $0x10] sm:$0xff]
        %v495 = vld [vmem:[%s392 + $0x18] sm:$0xff]
        %v496 = vld [vmem:[%s392 + $0x20] sm:$0xff]
        %v497 = vld [vmem:[%s392 + $0x28] sm:$0xff]
        %v498 = vld [vmem:[%s392 + $0x30] sm:$0xff]
        %v499 = vld [vmem:[%s392 + $0x38] sm:$0xff]
        %v500 = vld [vmem:[%s392 + $0x40] sm:$0xff]
        %v501 = vld [vmem:[%s392 + $0x48] sm:$0xff]
        %v502 = vld [vmem:[%s392 + $0x50] sm:$0xff]
        %v503 = vld [vmem:[%s392 + $0x58] sm:$0xff]
        %v504 = vld [vmem:[%s392 + $0x60] sm:$0xff]
        %v505 = vld [vmem:[%s392 + $0x68] sm:$0xff]
        %v506 = vld [vmem:[%s392 + $0x70] sm:$0xff]
        %v507 = vld [vmem:[%s392 + $0x78] sm:$0xff]
        %v508 = vld [vmem:[%s396] sm:$0x1]
        %v509 = vld [vmem:[%s386] sm:$0xf]
        %v510 = vld [vmem:[%s386 + $0x4] sm:$0xf]
        %v511 = vld [vmem:[%s386 + $0x8] sm:$0xf]
        %v512 = vld [vmem:[%s386 + $0xc] sm:$0xf]
        %v513 = vld [vmem:[%s386 + $0x10] sm:$0xf]
        %v514 = vld [vmem:[%s386 + $0x14] sm:$0xf]
        %v515 = vld [vmem:[%s386 + $0x18] sm:$0xf]
        %v516 = vld [vmem:[%s386 + $0x1c] sm:$0xf]
        %v517 = vld [vmem:[%s386 + $0x20] sm:$0xf]
        %v518 = vld [vmem:[%s386 + $0x24] sm:$0xf]
        %v519 = vld [vmem:[%s386 + $0x28] sm:$0xf]
        %v520 = vld [vmem:[%s386 + $0x2c] sm:$0xf]
        %v521 = vld [vmem:[%s386 + $0x30] sm:$0xf]
        %v522 = vld [vmem:[%s386 + $0x34] sm:$0xf]
        %v523 = vld [vmem:[%s386 + $0x38] sm:$0xf]
        %v524 = vld [vmem:[%s386 + $0x3c] sm:$0xf]
        %526 = vset.pattern.permute.xlu0 0
        %527 = vperm.xlu0 %526, %v492
        %v528 = vpop.permute.xlu0 %527
        %531 = vset.pattern.permute.xlu0 0
        %532 = vperm.xlu0 %531, %v493
        %v533 = vpop.permute.xlu0 %532
        %536 = vset.pattern.permute.xlu0 0
        %537 = vperm.xlu0 %536, %v494
        %v538 = vpop.permute.xlu0 %537
        %541 = vset.pattern.permute.xlu0 0
        %542 = vperm.xlu0 %541, %v495
        %v543 = vpop.permute.xlu0 %542
        %546 = vset.pattern.permute.xlu0 0
        %547 = vperm.xlu0 %546, %v496
        %v548 = vpop.permute.xlu0 %547
        %551 = vset.pattern.permute.xlu0 0
        %552 = vperm.xlu0 %551, %v497
        %v553 = vpop.permute.xlu0 %552
        %556 = vset.pattern.permute.xlu0 0
        %557 = vperm.xlu0 %556, %v498
        %v558 = vpop.permute.xlu0 %557
        %561 = vset.pattern.permute.xlu0 0
        %562 = vperm.xlu0 %561, %v499
        %v563 = vpop.permute.xlu0 %562
        %566 = vset.pattern.permute.xlu0 0
        %567 = vperm.xlu0 %566, %v500
        %v568 = vpop.permute.xlu0 %567
        %571 = vset.pattern.permute.xlu0 0
        %572 = vperm.xlu0 %571, %v501
        %v573 = vpop.permute.xlu0 %572
        %576 = vset.pattern.permute.xlu0 0
        %577 = vperm.xlu0 %576, %v502
        %v578 = vpop.permute.xlu0 %577
        %581 = vset.pattern.permute.xlu0 0
        %582 = vperm.xlu0 %581, %v503
        %v583 = vpop.permute.xlu0 %582
        %586 = vset.pattern.permute.xlu0 0
        %587 = vperm.xlu0 %586, %v504
        %v588 = vpop.permute.xlu0 %587
        %591 = vset.pattern.permute.xlu0 0
        %592 = vperm.xlu0 %591, %v505
        %v593 = vpop.permute.xlu0 %592
        %596 = vset.pattern.permute.xlu0 0
        %597 = vperm.xlu0 %596, %v506
        %v598 = vpop.permute.xlu0 %597
        %601 = vset.pattern.permute.xlu0 0
        %602 = vperm.xlu0 %601, %v507
        %v603 = vpop.permute.xlu0 %602
        %v606 = vlaneseq
        %v607 = vshrl.u32 %v606, 7
        %v608 = vsub.s32 0, %v607
        %v609 = vrot.slane %v508, %v608
        %v611 = vadd.f32 %v528, %v609
        %v612 = vadd.f32 %v533, %v609
        %v613 = vadd.f32 %v538, %v609
        %v614 = vadd.f32 %v543, %v609
        %v615 = vadd.f32 %v548, %v609
        %v616 = vadd.f32 %v553, %v609
        %v617 = vadd.f32 %v558, %v609
        %v618 = vadd.f32 %v563, %v609
        %v619 = vadd.f32 %v568, %v609
        %v620 = vadd.f32 %v573, %v609
        %v621 = vadd.f32 %v578, %v609
        %v622 = vadd.f32 %v583, %v609
        %v623 = vadd.f32 %v588, %v609
        %v624 = vadd.f32 %v593, %v609
        %v625 = vadd.f32 %v598, %v609
        %v626 = vadd.f32 %v603, %v609
        %vm627 = vcmp.gt.f32.partialorder %v611, 0.0
        %vm628 = vcmp.gt.f32.partialorder %v612, 0.0
        %vm629 = vcmp.gt.f32.partialorder %v613, 0.0
        %vm630 = vcmp.gt.f32.partialorder %v614, 0.0
        %vm631 = vcmp.gt.f32.partialorder %v615, 0.0
        %vm632 = vcmp.gt.f32.partialorder %v616, 0.0
        %vm633 = vcmp.gt.f32.partialorder %v617, 0.0
        %vm634 = vcmp.gt.f32.partialorder %v618, 0.0
        %vm635 = vcmp.gt.f32.partialorder %v619, 0.0
        %vm636 = vcmp.gt.f32.partialorder %v620, 0.0
        %vm637 = vcmp.gt.f32.partialorder %v621, 0.0
        %vm638 = vcmp.gt.f32.partialorder %v622, 0.0
        %vm639 = vcmp.gt.f32.partialorder %v623, 0.0
        %vm640 = vcmp.gt.f32.partialorder %v624, 0.0
        %vm641 = vcmp.gt.f32.partialorder %v625, 0.0
        %vm642 = vcmp.gt.f32.partialorder %v626, 0.0
        %v643 = vmul.f32 %v611, 0.2
        %v644 = vmul.f32 %v612, 0.2
        %v645 = vmul.f32 %v613, 0.2
        %v646 = vmul.f32 %v614, 0.2
        %v647 = vmul.f32 %v615, 0.2
        %v648 = vmul.f32 %v616, 0.2
        %v649 = vmul.f32 %v617, 0.2
        %v650 = vmul.f32 %v618, 0.2
        %v651 = vmul.f32 %v619, 0.2
        %v652 = vmul.f32 %v620, 0.2
        %v653 = vmul.f32 %v621, 0.2
        %v654 = vmul.f32 %v622, 0.2
        %v655 = vmul.f32 %v623, 0.2
        %v656 = vmul.f32 %v624, 0.2
        %v657 = vmul.f32 %v625, 0.2
        %v658 = vmul.f32 %v626, 0.2
        %v659 = vsel %vm627, %v611, %v643
        %v660 = vsel %vm628, %v612, %v644
        %v661 = vsel %vm629, %v613, %v645
        %v662 = vsel %vm630, %v614, %v646
        %v663 = vsel %vm631, %v615, %v647
        %v664 = vsel %vm632, %v616, %v648
        %v665 = vsel %vm633, %v617, %v649
        %v666 = vsel %vm634, %v618, %v650
        %v667 = vsel %vm635, %v619, %v651
        %v668 = vsel %vm636, %v620, %v652
        %v669 = vsel %vm637, %v621, %v653
        %v670 = vsel %vm638, %v622, %v654
        %v671 = vsel %vm639, %v623, %v655
        %v672 = vsel %vm640, %v624, %v656
        %v673 = vsel %vm641, %v625, %v657
        %v674 = vsel %vm642, %v626, %v658
        %v675 = vsel %vm476, 65537, 0
        %v676 = vsel %vm477, 65537, 0
        %v677 = vsel %vm478, 65537, 0
        %v678 = vsel %vm479, 65537, 0
        %v679 = vsel %vm480, 65537, 0
        %v680 = vsel %vm481, 65537, 0
        %v681 = vsel %vm482, 65537, 0
        %v682 = vsel %vm483, 65537, 0
        %v683 = vsel %vm484, 65537, 0
        %v684 = vsel %vm485, 65537, 0
        %v685 = vsel %vm486, 65537, 0
        %v686 = vsel %vm487, 65537, 0
        %v687 = vsel %vm488, 65537, 0
        %v688 = vsel %vm489, 65537, 0
        %v689 = vsel %vm490, 65537, 0
        %v690 = vsel %vm491, 65537, 0
        %v691 = vunpack.c.l.b16 %v675
        %v692 = vunpack.c.l.b16 %v676
        %v693 = vunpack.c.l.b16 %v677
        %v694 = vunpack.c.l.b16 %v678
        %v695 = vunpack.c.l.b16 %v679
        %v696 = vunpack.c.l.b16 %v680
        %v697 = vunpack.c.l.b16 %v681
        %v698 = vunpack.c.l.b16 %v682
        %v699 = vunpack.c.l.b16 %v683
        %v700 = vunpack.c.l.b16 %v684
        %v701 = vunpack.c.l.b16 %v685
        %v702 = vunpack.c.l.b16 %v686
        %v703 = vunpack.c.l.b16 %v687
        %v704 = vunpack.c.l.b16 %v688
        %v705 = vunpack.c.l.b16 %v689
        %v706 = vunpack.c.l.b16 %v690
        %vm707 = vcmp.ne.s32.totalorder %v691, 0
        %vm708 = vcmp.ne.s32.totalorder %v692, 0
        %vm709 = vcmp.ne.s32.totalorder %v693, 0
        %vm710 = vcmp.ne.s32.totalorder %v694, 0
        %vm711 = vcmp.ne.s32.totalorder %v695, 0
        %vm712 = vcmp.ne.s32.totalorder %v696, 0
        %vm713 = vcmp.ne.s32.totalorder %v697, 0
        %vm714 = vcmp.ne.s32.totalorder %v698, 0
        %vm715 = vcmp.ne.s32.totalorder %v699, 0
        %vm716 = vcmp.ne.s32.totalorder %v700, 0
        %vm717 = vcmp.ne.s32.totalorder %v701, 0
        %vm718 = vcmp.ne.s32.totalorder %v702, 0
        %vm719 = vcmp.ne.s32.totalorder %v703, 0
        %vm720 = vcmp.ne.s32.totalorder %v704, 0
        %vm721 = vcmp.ne.s32.totalorder %v705, 0
        %vm722 = vcmp.ne.s32.totalorder %v706, 0
        %v723 = vsel %vm707, %v659, -1e+30
        %v724 = vsel %vm708, %v660, -1e+30
        %v725 = vsel %vm709, %v661, -1e+30
        %v726 = vsel %vm710, %v662, -1e+30
        %v727 = vsel %vm711, %v663, -1e+30
        %v728 = vsel %vm712, %v664, -1e+30
        %v729 = vsel %vm713, %v665, -1e+30
        %v730 = vsel %vm714, %v666, -1e+30
        %v731 = vsel %vm715, %v667, -1e+30
        %v732 = vsel %vm716, %v668, -1e+30
        %v733 = vsel %vm717, %v669, -1e+30
        %v734 = vsel %vm718, %v670, -1e+30
        %v735 = vsel %vm719, %v671, -1e+30
        %v736 = vsel %vm720, %v672, -1e+30
        %v737 = vsel %vm721, %v673, -1e+30
        %v738 = vsel %vm722, %v674, -1e+30
        %v739 = vld [vmem:[#allocation2] sm:$0xff]
        %v740 = vld [vmem:[#allocation2 + $0x8] sm:$0xff]
        %v741 = vld [vmem:[#allocation2 + $0x10] sm:$0xff]
        %v742 = vld [vmem:[#allocation2 + $0x18] sm:$0xff]
        %v743 = vld [vmem:[#allocation2 + $0x20] sm:$0xff]
        %v744 = vld [vmem:[#allocation2 + $0x28] sm:$0xff]
        %v745 = vld [vmem:[#allocation2 + $0x30] sm:$0xff]
        %v746 = vld [vmem:[#allocation2 + $0x38] sm:$0xff]
        %v747 = vld [vmem:[#allocation2 + $0x40] sm:$0xff]
        %v748 = vld [vmem:[#allocation2 + $0x48] sm:$0xff]
        %v749 = vld [vmem:[#allocation2 + $0x50] sm:$0xff]
        %v750 = vld [vmem:[#allocation2 + $0x58] sm:$0xff]
        %v751 = vld [vmem:[#allocation2 + $0x60] sm:$0xff]
        %v752 = vld [vmem:[#allocation2 + $0x68] sm:$0xff]
        %v753 = vld [vmem:[#allocation2 + $0x70] sm:$0xff]
        %v754 = vld [vmem:[#allocation2 + $0x78] sm:$0xff]
        %755 = vmax.xlane.f32.xlu0 %v723
        %v756 = vpop.xlane.xlu0 %755
        %757 = vmax.xlane.f32.xlu0 %v724
        %v758 = vpop.xlane.xlu0 %757
        %759 = vmax.xlane.f32.xlu0 %v725
        %v760 = vpop.xlane.xlu0 %759
        %761 = vmax.xlane.f32.xlu0 %v726
        %v762 = vpop.xlane.xlu0 %761
        %763 = vmax.xlane.f32.xlu0 %v727
        %v764 = vpop.xlane.xlu0 %763
        %765 = vmax.xlane.f32.xlu0 %v728
        %v766 = vpop.xlane.xlu0 %765
        %767 = vmax.xlane.f32.xlu0 %v729
        %v768 = vpop.xlane.xlu0 %767
        %769 = vmax.xlane.f32.xlu0 %v730
        %v770 = vpop.xlane.xlu0 %769
        %771 = vmax.xlane.f32.xlu0 %v731
        %v772 = vpop.xlane.xlu0 %771
        %773 = vmax.xlane.f32.xlu0 %v732
        %v774 = vpop.xlane.xlu0 %773
        %775 = vmax.xlane.f32.xlu0 %v733
        %v776 = vpop.xlane.xlu0 %775
        %777 = vmax.xlane.f32.xlu0 %v734
        %v778 = vpop.xlane.xlu0 %777
        %779 = vmax.xlane.f32.xlu0 %v735
        %v780 = vpop.xlane.xlu0 %779
        %781 = vmax.xlane.f32.xlu0 %v736
        %v782 = vpop.xlane.xlu0 %781
        %783 = vmax.xlane.f32.xlu0 %v737
        %v784 = vpop.xlane.xlu0 %783
        %785 = vmax.xlane.f32.xlu0 %v738
        %v786 = vpop.xlane.xlu0 %785
        %v787 = vmax.f32 %v739, %v756
        %v788 = vmax.f32 %v740, %v758
        %v789 = vmax.f32 %v741, %v760
        %v790 = vmax.f32 %v742, %v762
        %v791 = vmax.f32 %v743, %v764
        %v792 = vmax.f32 %v744, %v766
        %v793 = vmax.f32 %v745, %v768
        %v794 = vmax.f32 %v746, %v770
        %v795 = vmax.f32 %v747, %v772
        %v796 = vmax.f32 %v748, %v774
        %v797 = vmax.f32 %v749, %v776
        %v798 = vmax.f32 %v750, %v778
        %v799 = vmax.f32 %v751, %v780
        %v800 = vmax.f32 %v752, %v782
        %v801 = vmax.f32 %v753, %v784
        %v802 = vmax.f32 %v754, %v786
        %v803 = vsub.f32 %v739, %v787
        %v804 = vsub.f32 %v740, %v788
        %v805 = vsub.f32 %v741, %v789
        %v806 = vsub.f32 %v742, %v790
        %v807 = vsub.f32 %v743, %v791
        %v808 = vsub.f32 %v744, %v792
        %v809 = vsub.f32 %v745, %v793
        %v810 = vsub.f32 %v746, %v794
        %v811 = vsub.f32 %v747, %v795
        %v812 = vsub.f32 %v748, %v796
        %v813 = vsub.f32 %v749, %v797
        %v814 = vsub.f32 %v750, %v798
        %v815 = vsub.f32 %v751, %v799
        %v816 = vsub.f32 %v752, %v800
        %v817 = vsub.f32 %v753, %v801
        %v818 = vsub.f32 %v754, %v802
        %v819 = vmul.f32 %v803, 1.442695
        %v820 = vpow.pop %v819
        %v821 = vmul.f32 %v804, 1.442695
        %v822 = vpow.pop %v821
        %v823 = vmul.f32 %v805, 1.442695
        %v824 = vpow.pop %v823
        %v825 = vmul.f32 %v806, 1.442695
        %v826 = vpow.pop %v825
        %v827 = vmul.f32 %v807, 1.442695
        %v828 = vpow.pop %v827
        %v829 = vmul.f32 %v808, 1.442695
        %v830 = vpow.pop %v829
        %v831 = vmul.f32 %v809, 1.442695
        %v832 = vpow.pop %v831
        %v833 = vmul.f32 %v810, 1.442695
        %v834 = vpow.pop %v833
        %v835 = vmul.f32 %v811, 1.442695
        %v836 = vpow.pop %v835
        %v837 = vmul.f32 %v812, 1.442695
        %v838 = vpow.pop %v837
        %v839 = vmul.f32 %v813, 1.442695
        %v840 = vpow.pop %v839
        %v841 = vmul.f32 %v814, 1.442695
        %v842 = vpow.pop %v841
        %v843 = vmul.f32 %v815, 1.442695
        %v844 = vpow.pop %v843
        %v845 = vmul.f32 %v816, 1.442695
        %v846 = vpow.pop %v845
        %v847 = vmul.f32 %v817, 1.442695
        %v848 = vpow.pop %v847
        %v849 = vmul.f32 %v818, 1.442695
        %v850 = vpow.pop %v849
        %852 = vset.pattern.permute.xlu0 0
        %853 = vperm.xlu0 %852, %v787
        %v854 = vpop.permute.xlu0 %853
        %857 = vset.pattern.permute.xlu0 0
        %858 = vperm.xlu0 %857, %v788
        %v859 = vpop.permute.xlu0 %858
        %862 = vset.pattern.permute.xlu0 0
        %863 = vperm.xlu0 %862, %v789
        %v864 = vpop.permute.xlu0 %863
        %867 = vset.pattern.permute.xlu0 0
        %868 = vperm.xlu0 %867, %v790
        %v869 = vpop.permute.xlu0 %868
        %872 = vset.pattern.permute.xlu0 0
        %873 = vperm.xlu0 %872, %v791
        %v874 = vpop.permute.xlu0 %873
        %877 = vset.pattern.permute.xlu0 0
        %878 = vperm.xlu0 %877, %v792
        %v879 = vpop.permute.xlu0 %878
        %882 = vset.pattern.permute.xlu0 0
        %883 = vperm.xlu0 %882, %v793
        %v884 = vpop.permute.xlu0 %883
        %887 = vset.pattern.permute.xlu0 0
        %888 = vperm.xlu0 %887, %v794
        %v889 = vpop.permute.xlu0 %888
        %892 = vset.pattern.permute.xlu0 0
        %893 = vperm.xlu0 %892, %v795
        %v894 = vpop.permute.xlu0 %893
        %897 = vset.pattern.permute.xlu0 0
        %898 = vperm.xlu0 %897, %v796
        %v899 = vpop.permute.xlu0 %898
        %902 = vset.pattern.permute.xlu0 0
        %903 = vperm.xlu0 %902, %v797
        %v904 = vpop.permute.xlu0 %903
        %907 = vset.pattern.permute.xlu0 0
        %908 = vperm.xlu0 %907, %v798
        %v909 = vpop.permute.xlu0 %908
        %912 = vset.pattern.permute.xlu0 0
        %913 = vperm.xlu0 %912, %v799
        %v914 = vpop.permute.xlu0 %913
        %917 = vset.pattern.permute.xlu0 0
        %918 = vperm.xlu0 %917, %v800
        %v919 = vpop.permute.xlu0 %918
        %922 = vset.pattern.permute.xlu0 0
        %923 = vperm.xlu0 %922, %v801
        %v924 = vpop.permute.xlu0 %923
        %927 = vset.pattern.permute.xlu0 0
        %928 = vperm.xlu0 %927, %v802
        %v929 = vpop.permute.xlu0 %928
        %v931 = vsub.f32 %v723, %v854
        %v932 = vsub.f32 %v724, %v859
        %v933 = vsub.f32 %v725, %v864
        %v934 = vsub.f32 %v726, %v869
        %v935 = vsub.f32 %v727, %v874
        %v936 = vsub.f32 %v728, %v879
        %v937 = vsub.f32 %v729, %v884
        %v938 = vsub.f32 %v730, %v889
        %v939 = vsub.f32 %v731, %v894
        %v940 = vsub.f32 %v732, %v899
        %v941 = vsub.f32 %v733, %v904
        %v942 = vsub.f32 %v734, %v909
        %v943 = vsub.f32 %v735, %v914
        %v944 = vsub.f32 %v736, %v919
        %v945 = vsub.f32 %v737, %v924
        %v946 = vsub.f32 %v738, %v929
        %v947 = vmul.f32 %v931, 1.442695
        %v948 = vpow.pop %v947
        %v949 = vmul.f32 %v932, 1.442695
        %v950 = vpow.pop %v949
        %v951 = vmul.f32 %v933, 1.442695
        %v952 = vpow.pop %v951
        %v953 = vmul.f32 %v934, 1.442695
        %v954 = vpow.pop %v953
        %v955 = vmul.f32 %v935, 1.442695
        %v956 = vpow.pop %v955
        %v957 = vmul.f32 %v936, 1.442695
        %v958 = vpow.pop %v957
        %v959 = vmul.f32 %v937, 1.442695
        %v960 = vpow.pop %v959
        %v961 = vmul.f32 %v938, 1.442695
        %v962 = vpow.pop %v961
        %v963 = vmul.f32 %v939, 1.442695
        %v964 = vpow.pop %v963
        %v965 = vmul.f32 %v940, 1.442695
        %v966 = vpow.pop %v965
        %v967 = vmul.f32 %v941, 1.442695
        %v968 = vpow.pop %v967
        %v969 = vmul.f32 %v942, 1.442695
        %v970 = vpow.pop %v969
        %v971 = vmul.f32 %v943, 1.442695
        %v972 = vpow.pop %v971
        %v973 = vmul.f32 %v944, 1.442695
        %v974 = vpow.pop %v973
        %v975 = vmul.f32 %v945, 1.442695
        %v976 = vpow.pop %v975
        %v977 = vmul.f32 %v946, 1.442695
        %v978 = vpow.pop %v977
        %v979 = vsel %vm707, %v948, 0.0
        %v980 = vsel %vm708, %v950, 0.0
        %v981 = vsel %vm709, %v952, 0.0
        %v982 = vsel %vm710, %v954, 0.0
        %v983 = vsel %vm711, %v956, 0.0
        %v984 = vsel %vm712, %v958, 0.0
        %v985 = vsel %vm713, %v960, 0.0
        %v986 = vsel %vm714, %v962, 0.0
        %v987 = vsel %vm715, %v964, 0.0
        %v988 = vsel %vm716, %v966, 0.0
        %v989 = vsel %vm717, %v968, 0.0
        %v990 = vsel %vm718, %v970, 0.0
        %v991 = vsel %vm719, %v972, 0.0
        %v992 = vsel %vm720, %v974, 0.0
        %v993 = vsel %vm721, %v976, 0.0
        %v994 = vsel %vm722, %v978, 0.0
        %v995 = vld [vmem:[#allocation3] sm:$0xff]
        %v996 = vld [vmem:[#allocation3 + $0x8] sm:$0xff]
        %v997 = vld [vmem:[#allocation3 + $0x10] sm:$0xff]
        %v998 = vld [vmem:[#allocation3 + $0x18] sm:$0xff]
        %v999 = vld [vmem:[#allocation3 + $0x20] sm:$0xff]
        %v1000 = vld [vmem:[#allocation3 + $0x28] sm:$0xff]
        %v1001 = vld [vmem:[#allocation3 + $0x30] sm:$0xff]
        %v1002 = vld [vmem:[#allocation3 + $0x38] sm:$0xff]
        %v1003 = vld [vmem:[#allocation3 + $0x40] sm:$0xff]
        %v1004 = vld [vmem:[#allocation3 + $0x48] sm:$0xff]
        %v1005 = vld [vmem:[#allocation3 + $0x50] sm:$0xff]
        %v1006 = vld [vmem:[#allocation3 + $0x58] sm:$0xff]
        %v1007 = vld [vmem:[#allocation3 + $0x60] sm:$0xff]
        %v1008 = vld [vmem:[#allocation3 + $0x68] sm:$0xff]
        %v1009 = vld [vmem:[#allocation3 + $0x70] sm:$0xff]
        %v1010 = vld [vmem:[#allocation3 + $0x78] sm:$0xff]
        %v1011 = vmul.f32 %v820, %v995
        %v1012 = vmul.f32 %v822, %v996
        %v1013 = vmul.f32 %v824, %v997
        %v1014 = vmul.f32 %v826, %v998
        %v1015 = vmul.f32 %v828, %v999
        %v1016 = vmul.f32 %v830, %v1000
        %v1017 = vmul.f32 %v832, %v1001
        %v1018 = vmul.f32 %v834, %v1002
        %v1019 = vmul.f32 %v836, %v1003
        %v1020 = vmul.f32 %v838, %v1004
        %v1021 = vmul.f32 %v840, %v1005
        %v1022 = vmul.f32 %v842, %v1006
        %v1023 = vmul.f32 %v844, %v1007
        %v1024 = vmul.f32 %v846, %v1008
        %v1025 = vmul.f32 %v848, %v1009
        %v1026 = vmul.f32 %v850, %v1010
        %1027 = vadd.xlane.f32.xlu0 %v979
        %v1028 = vpop.xlane.xlu0 %1027
        %1029 = vadd.xlane.f32.xlu0 %v980
        %v1030 = vpop.xlane.xlu0 %1029
        %1031 = vadd.xlane.f32.xlu0 %v981
        %v1032 = vpop.xlane.xlu0 %1031
        %1033 = vadd.xlane.f32.xlu0 %v982
        %v1034 = vpop.xlane.xlu0 %1033
        %1035 = vadd.xlane.f32.xlu0 %v983
        %v1036 = vpop.xlane.xlu0 %1035
        %1037 = vadd.xlane.f32.xlu0 %v984
        %v1038 = vpop.xlane.xlu0 %1037
        %1039 = vadd.xlane.f32.xlu0 %v985
        %v1040 = vpop.xlane.xlu0 %1039
        %1041 = vadd.xlane.f32.xlu0 %v986
        %v1042 = vpop.xlane.xlu0 %1041
        %1043 = vadd.xlane.f32.xlu0 %v987
        %v1044 = vpop.xlane.xlu0 %1043
        %1045 = vadd.xlane.f32.xlu0 %v988
        %v1046 = vpop.xlane.xlu0 %1045
        %1047 = vadd.xlane.f32.xlu0 %v989
        %v1048 = vpop.xlane.xlu0 %1047
        %1049 = vadd.xlane.f32.xlu0 %v990
        %v1050 = vpop.xlane.xlu0 %1049
        %1051 = vadd.xlane.f32.xlu0 %v991
        %v1052 = vpop.xlane.xlu0 %1051
        %1053 = vadd.xlane.f32.xlu0 %v992
        %v1054 = vpop.xlane.xlu0 %1053
        %1055 = vadd.xlane.f32.xlu0 %v993
        %v1056 = vpop.xlane.xlu0 %1055
        %1057 = vadd.xlane.f32.xlu0 %v994
        %v1058 = vpop.xlane.xlu0 %1057
        %v1059 = vadd.f32 %v1011, %v1028
        %v1060 = vadd.f32 %v1012, %v1030
        %v1061 = vadd.f32 %v1013, %v1032
        %v1062 = vadd.f32 %v1014, %v1034
        %v1063 = vadd.f32 %v1015, %v1036
        %v1064 = vadd.f32 %v1016, %v1038
        %v1065 = vadd.f32 %v1017, %v1040
        %v1066 = vadd.f32 %v1018, %v1042
        %v1067 = vadd.f32 %v1019, %v1044
        %v1068 = vadd.f32 %v1020, %v1046
        %v1069 = vadd.f32 %v1021, %v1048
        %v1070 = vadd.f32 %v1022, %v1050
        %v1071 = vadd.f32 %v1023, %v1052
        %v1072 = vadd.f32 %v1024, %v1054
        %v1073 = vadd.f32 %v1025, %v1056
        %v1074 = vadd.f32 %v1026, %v1058
        %vm1075 = vcmask 7168
        %1076 = vst.msk [vmem:[#allocation3] sm:$0xff] %vm1075, %v1059
        %1077 = vst.msk [vmem:[#allocation3 + $0x8] sm:$0xff] %vm1075, %v1060
        %1078 = vst.msk [vmem:[#allocation3 + $0x10] sm:$0xff] %vm1075, %v1061
        %1079 = vst.msk [vmem:[#allocation3 + $0x18] sm:$0xff] %vm1075, %v1062
        %1080 = vst.msk [vmem:[#allocation3 + $0x20] sm:$0xff] %vm1075, %v1063
        %1081 = vst.msk [vmem:[#allocation3 + $0x28] sm:$0xff] %vm1075, %v1064
        %1082 = vst.msk [vmem:[#allocation3 + $0x30] sm:$0xff] %vm1075, %v1065
        %1083 = vst.msk [vmem:[#allocation3 + $0x38] sm:$0xff] %vm1075, %v1066
        %1084 = vst.msk [vmem:[#allocation3 + $0x40] sm:$0xff] %vm1075, %v1067
        %1085 = vst.msk [vmem:[#allocation3 + $0x48] sm:$0xff] %vm1075, %v1068
        %1086 = vst.msk [vmem:[#allocation3 + $0x50] sm:$0xff] %vm1075, %v1069
        %1087 = vst.msk [vmem:[#allocation3 + $0x58] sm:$0xff] %vm1075, %v1070
        %1088 = vst.msk [vmem:[#allocation3 + $0x60] sm:$0xff] %vm1075, %v1071
        %1089 = vst.msk [vmem:[#allocation3 + $0x68] sm:$0xff] %vm1075, %v1072
        %1090 = vst.msk [vmem:[#allocation3 + $0x70] sm:$0xff] %vm1075, %v1073
        %1091 = vst.msk [vmem:[#allocation3 + $0x78] sm:$0xff] %vm1075, %v1074
        %v1092 = vld [vmem:[#allocation4] sm:$0xff]
        %v1093 = vld [vmem:[#allocation4 + $0x8] sm:$0xff]
        %v1094 = vld [vmem:[#allocation4 + $0x10] sm:$0xff]
        %v1095 = vld [vmem:[#allocation4 + $0x18] sm:$0xff]
        %v1096 = vld [vmem:[#allocation4 + $0x20] sm:$0xff]
        %v1097 = vld [vmem:[#allocation4 + $0x28] sm:$0xff]
        %v1098 = vld [vmem:[#allocation4 + $0x30] sm:$0xff]
        %v1099 = vld [vmem:[#allocation4 + $0x38] sm:$0xff]
        %v1100 = vld [vmem:[#allocation4 + $0x40] sm:$0xff]
        %v1101 = vld [vmem:[#allocation4 + $0x48] sm:$0xff]
        %v1102 = vld [vmem:[#allocation4 + $0x50] sm:$0xff]
        %v1103 = vld [vmem:[#allocation4 + $0x58] sm:$0xff]
        %v1104 = vld [vmem:[#allocation4 + $0x60] sm:$0xff]
        %v1105 = vld [vmem:[#allocation4 + $0x68] sm:$0xff]
        %v1106 = vld [vmem:[#allocation4 + $0x70] sm:$0xff]
        %v1107 = vld [vmem:[#allocation4 + $0x78] sm:$0xff]
        %1109 = vset.pattern.permute.xlu0 0
        %1110 = vperm.xlu0 %1109, %v820
        %v1111 = vpop.permute.xlu0 %1110
        %1114 = vset.pattern.permute.xlu0 0
        %1115 = vperm.xlu0 %1114, %v822
        %v1116 = vpop.permute.xlu0 %1115
        %1119 = vset.pattern.permute.xlu0 0
        %1120 = vperm.xlu0 %1119, %v824
        %v1121 = vpop.permute.xlu0 %1120
        %1124 = vset.pattern.permute.xlu0 0
        %1125 = vperm.xlu0 %1124, %v826
        %v1126 = vpop.permute.xlu0 %1125
        %1129 = vset.pattern.permute.xlu0 0
        %1130 = vperm.xlu0 %1129, %v828
        %v1131 = vpop.permute.xlu0 %1130
        %1134 = vset.pattern.permute.xlu0 0
        %1135 = vperm.xlu0 %1134, %v830
        %v1136 = vpop.permute.xlu0 %1135
        %1139 = vset.pattern.permute.xlu0 0
        %1140 = vperm.xlu0 %1139, %v832
        %v1141 = vpop.permute.xlu0 %1140
        %1144 = vset.pattern.permute.xlu0 0
        %1145 = vperm.xlu0 %1144, %v834
        %v1146 = vpop.permute.xlu0 %1145
        %1149 = vset.pattern.permute.xlu0 0
        %1150 = vperm.xlu0 %1149, %v836
        %v1151 = vpop.permute.xlu0 %1150
        %1154 = vset.pattern.permute.xlu0 0
        %1155 = vperm.xlu0 %1154, %v838
        %v1156 = vpop.permute.xlu0 %1155
        %1159 = vset.pattern.permute.xlu0 0
        %1160 = vperm.xlu0 %1159, %v840
        %v1161 = vpop.permute.xlu0 %1160
        %1164 = vset.pattern.permute.xlu0 0
        %1165 = vperm.xlu0 %1164, %v842
        %v1166 = vpop.permute.xlu0 %1165
        %1169 = vset.pattern.permute.xlu0 0
        %1170 = vperm.xlu0 %1169, %v844
        %v1171 = vpop.permute.xlu0 %1170
        %1174 = vset.pattern.permute.xlu0 0
        %1175 = vperm.xlu0 %1174, %v846
        %v1176 = vpop.permute.xlu0 %1175
        %1179 = vset.pattern.permute.xlu0 0
        %1180 = vperm.xlu0 %1179, %v848
        %v1181 = vpop.permute.xlu0 %1180
        %1184 = vset.pattern.permute.xlu0 0
        %1185 = vperm.xlu0 %1184, %v850
        %v1186 = vpop.permute.xlu0 %1185
        %v1188 = vmul.f32 %v1111, %v1092
        %v1189 = vmul.f32 %v1116, %v1093
        %v1190 = vmul.f32 %v1121, %v1094
        %v1191 = vmul.f32 %v1126, %v1095
        %v1192 = vmul.f32 %v1131, %v1096
        %v1193 = vmul.f32 %v1136, %v1097
        %v1194 = vmul.f32 %v1141, %v1098
        %v1195 = vmul.f32 %v1146, %v1099
        %v1196 = vmul.f32 %v1151, %v1100
        %v1197 = vmul.f32 %v1156, %v1101
        %v1198 = vmul.f32 %v1161, %v1102
        %v1199 = vmul.f32 %v1166, %v1103
        %v1200 = vmul.f32 %v1171, %v1104
        %v1201 = vmul.f32 %v1176, %v1105
        %v1202 = vmul.f32 %v1181, %v1106
        %v1203 = vmul.f32 %v1186, %v1107
        %v1204 = vpack.c.bf16 %v980, %v979
        %v1205 = vpack.c.bf16 %v982, %v981
        %v1206 = vpack.c.bf16 %v984, %v983
        %v1207 = vpack.c.bf16 %v986, %v985
        %v1208 = vpack.c.bf16 %v988, %v987
        %v1209 = vpack.c.bf16 %v990, %v989
        %v1210 = vpack.c.bf16 %v992, %v991
        %v1211 = vpack.c.bf16 %v994, %v993
        %v1228 = vunpack.c.l.b16 %v509
        %v1229 = vunpack.c.l.b16 %v510
        %v1230 = vunpack.c.l.b16 %v511
        %v1231 = vunpack.c.l.b16 %v512
        %v1232 = vunpack.c.l.b16 %v513
        %v1233 = vunpack.c.l.b16 %v514
        %v1234 = vunpack.c.l.b16 %v515
        %v1235 = vunpack.c.l.b16 %v516
        %v1236 = vunpack.c.l.b16 %v517
        %v1237 = vunpack.c.l.b16 %v518
        %v1238 = vunpack.c.l.b16 %v519
        %v1239 = vunpack.c.l.b16 %v520
        %v1240 = vunpack.c.l.b16 %v521
        %v1241 = vunpack.c.l.b16 %v522
        %v1242 = vunpack.c.l.b16 %v523
        %v1243 = vunpack.c.l.b16 %v524
        %v1244 = vpack.c.b16 %v1229, %v1228
        %v1245 = vpack.c.b16 %v1231, %v1230
        %v1246 = vpack.c.b16 %v1233, %v1232
        %v1247 = vpack.c.b16 %v1235, %v1234
        %v1248 = vpack.c.b16 %v1237, %v1236
        %v1249 = vpack.c.b16 %v1239, %v1238
        %v1250 = vpack.c.b16 %v1241, %v1240
        %v1251 = vpack.c.b16 %v1243, %v1242
        %1260 = vmatprep.subr.bf16.mxu0 0
        %1261 = vmatpush1.bf16.msra.mxu0 %v1244
        %1262 = vmatprep.subr.bf16.mxu0 0
        %1263 = vmatpush1.bf16.msra.mxu0 %v1245
        %1264 = vmatprep.subr.bf16.mxu0 0
        %1265 = vmatpush1.bf16.msra.mxu0 %v1246
        %1266 = vmatprep.subr.bf16.mxu0 0
        %1267 = vmatpush1.bf16.msra.mxu0 %v1247
        %1268 = vmatprep.subr.bf16.mxu0 0
        %1269 = vmatpush1.bf16.msra.mxu0 %v1248
        %1270 = vmatprep.subr.bf16.mxu0 0
        %1271 = vmatpush1.bf16.msra.mxu0 %v1249
        %1272 = vmatprep.subr.bf16.mxu0 0
        %1273 = vmatpush1.bf16.msra.mxu0 %v1250
        %1274 = vmatprep.subr.bf16.mxu0 0
        %1275 = vmatpush1.bf16.msra.mxu0 %v1251
        %1276 = vmatprep.subr.bf16.mxu0 0
        %1277 = vmatpush1.bf16.msra.mxu0 0
        %1278 = vmatprep.subr.bf16.mxu0 0
        %1279 = vmatpush1.bf16.msra.mxu0 0
        %1280 = vmatprep.subr.bf16.mxu0 0
        %1281 = vmatpush1.bf16.msra.mxu0 0
        %1282 = vmatprep.subr.bf16.mxu0 0
        %1283 = vmatpush1.bf16.msra.mxu0 0
        %1284 = vmatprep.subr.bf16.mxu0 0
        %1285 = vmatpush1.bf16.msra.mxu0 0
        %1286 = vmatprep.subr.bf16.mxu0 0
        %1287 = vmatpush1.bf16.msra.mxu0 0
        %1288 = vmatprep.subr.bf16.mxu0 0
        %1289 = vmatpush1.bf16.msra.mxu0 0
        %1290 = vmatprep.subr.bf16.mxu0 0
        %1291 = vmatpush1.bf16.msra.mxu0 0
        %1292 = vmatprep.mubr.bf16.mxu0 0
        %1293 = vmatmul.mubr.bf16.gmra.mrb[0].mxu0 %v1204
        %v1294 = vpop.f32.mrb[0].mxu0
        %v1295 = vadd.f32 0.0, %v1294
        %v1296 = vpop.f32.mrb[0].mxu0
        %v1297 = vpop.f32.mrb[0].mxu0
        %v1298 = vadd.f32 0.0, %v1297
        %v1299 = vpop.f32.mrb[0].mxu0
        %1300 = vmatprep.mubr.bf16.mxu0 0
        %1301 = vmatmul.mubr.bf16.gmra.mrb[0].mxu0 %v1205
        %v1302 = vpop.f32.mrb[0].mxu0
        %v1303 = vadd.f32 0.0, %v1302
        %v1304 = vpop.f32.mrb[0].mxu0
        %v1305 = vpop.f32.mrb[0].mxu0
        %v1306 = vadd.f32 0.0, %v1305
        %v1307 = vpop.f32.mrb[0].mxu0
        %1308 = vmatprep.mubr.bf16.mxu0 0
        %1309 = vmatmul.mubr.bf16.gmra.mrb[0].mxu0 %v1206
        %v1310 = vpop.f32.mrb[0].mxu0
        %v1311 = vadd.f32 0.0, %v1310
        %v1312 = vpop.f32.mrb[0].mxu0
        %v1313 = vpop.f32.mrb[0].mxu0
        %v1314 = vadd.f32 0.0, %v1313
        %v1315 = vpop.f32.mrb[0].mxu0
        %1316 = vmatprep.mubr.bf16.mxu0 0
        %1317 = vmatmul.mubr.bf16.gmra.mrb[0].mxu0 %v1207
        %v1318 = vpop.f32.mrb[0].mxu0
        %v1319 = vadd.f32 0.0, %v1318
        %v1320 = vpop.f32.mrb[0].mxu0
        %v1321 = vpop.f32.mrb[0].mxu0
        %v1322 = vadd.f32 0.0, %v1321
        %v1323 = vpop.f32.mrb[0].mxu0
        %1324 = vmatprep.mubr.bf16.mxu0 0
        %1325 = vmatmul.mubr.bf16.gmra.mrb[0].mxu0 %v1208
        %v1326 = vpop.f32.mrb[0].mxu0
        %v1327 = vadd.f32 0.0, %v1326
        %v1328 = vpop.f32.mrb[0].mxu0
        %v1329 = vpop.f32.mrb[0].mxu0
        %v1330 = vadd.f32 0.0, %v1329
        %v1331 = vpop.f32.mrb[0].mxu0
        %1332 = vmatprep.mubr.bf16.mxu0 0
        %1333 = vmatmul.mubr.bf16.gmra.mrb[0].mxu0 %v1209
        %v1334 = vpop.f32.mrb[0].mxu0
        %v1335 = vadd.f32 0.0, %v1334
        %v1336 = vpop.f32.mrb[0].mxu0
        %v1337 = vpop.f32.mrb[0].mxu0
        %v1338 = vadd.f32 0.0, %v1337
        %v1339 = vpop.f32.mrb[0].mxu0
        %1340 = vmatprep.mubr.bf16.mxu0 0
        %1341 = vmatmul.mubr.bf16.gmra.mrb[0].mxu0 %v1210
        %v1342 = vpop.f32.mrb[0].mxu0
        %v1343 = vadd.f32 0.0, %v1342
        %v1344 = vpop.f32.mrb[0].mxu0
        %v1345 = vpop.f32.mrb[0].mxu0
        %v1346 = vadd.f32 0.0, %v1345
        %v1347 = vpop.f32.mrb[0].mxu0
        %1348 = vmatprep.mubr.bf16.mxu0 0
        %1349 = vmatmul.mubr.bf16.gmra.mrb[0].mxu0 %v1211
        %v1350 = vpop.f32.mrb[0].mxu0
        %v1351 = vadd.f32 0.0, %v1350
        %v1352 = vpop.f32.mrb[0].mxu0
        %v1353 = vpop.f32.mrb[0].mxu0
        %v1354 = vadd.f32 0.0, %v1353
        %v1355 = vpop.f32.mrb[0].mxu0
        %1356 = vdwg.mxu0
        %v1357 = vadd.f32 %v1188, %v1295
        %v1358 = vadd.f32 %v1189, %v1298
        %v1359 = vadd.f32 %v1190, %v1303
        %v1360 = vadd.f32 %v1191, %v1306
        %v1361 = vadd.f32 %v1192, %v1311
        %v1362 = vadd.f32 %v1193, %v1314
        %v1363 = vadd.f32 %v1194, %v1319
        %v1364 = vadd.f32 %v1195, %v1322
        %v1365 = vadd.f32 %v1196, %v1327
        %v1366 = vadd.f32 %v1197, %v1330
        %v1367 = vadd.f32 %v1198, %v1335
        %v1368 = vadd.f32 %v1199, %v1338
        %v1369 = vadd.f32 %v1200, %v1343
        %v1370 = vadd.f32 %v1201, %v1346
        %v1371 = vadd.f32 %v1202, %v1351
        %v1372 = vadd.f32 %v1203, %v1354
        %vm1373 = vcmask 64512
        %1374 = vst.msk [vmem:[#allocation4] sm:$0xff] %vm1373, %v1357
        %1375 = vst.msk [vmem:[#allocation4 + $0x8] sm:$0xff] %vm1373, %v1358
        %1376 = vst.msk [vmem:[#allocation4 + $0x10] sm:$0xff] %vm1373, %v1359
        %1377 = vst.msk [vmem:[#allocation4 + $0x18] sm:$0xff] %vm1373, %v1360
        %1378 = vst.msk [vmem:[#allocation4 + $0x20] sm:$0xff] %vm1373, %v1361
        %1379 = vst.msk [vmem:[#allocation4 + $0x28] sm:$0xff] %vm1373, %v1362
        %1380 = vst.msk [vmem:[#allocation4 + $0x30] sm:$0xff] %vm1373, %v1363
        %1381 = vst.msk [vmem:[#allocation4 + $0x38] sm:$0xff] %vm1373, %v1364
        %1382 = vst.msk [vmem:[#allocation4 + $0x40] sm:$0xff] %vm1373, %v1365
        %1383 = vst.msk [vmem:[#allocation4 + $0x48] sm:$0xff] %vm1373, %v1366
        %1384 = vst.msk [vmem:[#allocation4 + $0x50] sm:$0xff] %vm1373, %v1367
        %1385 = vst.msk [vmem:[#allocation4 + $0x58] sm:$0xff] %vm1373, %v1368
        %1386 = vst.msk [vmem:[#allocation4 + $0x60] sm:$0xff] %vm1373, %v1369
        %1387 = vst.msk [vmem:[#allocation4 + $0x68] sm:$0xff] %vm1373, %v1370
        %1388 = vst.msk [vmem:[#allocation4 + $0x70] sm:$0xff] %vm1373, %v1371
        %1389 = vst.msk [vmem:[#allocation4 + $0x78] sm:$0xff] %vm1373, %v1372
        %1390 = vst.msk [vmem:[#allocation2] sm:$0xff] %vm1075, %v787
        %1391 = vst.msk [vmem:[#allocation2 + $0x8] sm:$0xff] %vm1075, %v788
        %1392 = vst.msk [vmem:[#allocation2 + $0x10] sm:$0xff] %vm1075, %v789
        %1393 = vst.msk [vmem:[#allocation2 + $0x18] sm:$0xff] %vm1075, %v790
        %1394 = vst.msk [vmem:[#allocation2 + $0x20] sm:$0xff] %vm1075, %v791
        %1395 = vst.msk [vmem:[#allocation2 + $0x28] sm:$0xff] %vm1075, %v792
        %1396 = vst.msk [vmem:[#allocation2 + $0x30] sm:$0xff] %vm1075, %v793
        %1397 = vst.msk [vmem:[#allocation2 + $0x38] sm:$0xff] %vm1075, %v794
        %1398 = vst.msk [vmem:[#allocation2 + $0x40] sm:$0xff] %vm1075, %v795
        %1399 = vst.msk [vmem:[#allocation2 + $0x48] sm:$0xff] %vm1075, %v796
        %1400 = vst.msk [vmem:[#allocation2 + $0x50] sm:$0xff] %vm1075, %v797
        %1401 = vst.msk [vmem:[#allocation2 + $0x58] sm:$0xff] %vm1075, %v798
        %1402 = vst.msk [vmem:[#allocation2 + $0x60] sm:$0xff] %vm1075, %v799
        %1403 = vst.msk [vmem:[#allocation2 + $0x68] sm:$0xff] %vm1075, %v800
        %1404 = vst.msk [vmem:[#allocation2 + $0x70] sm:$0xff] %vm1075, %v801
        %1405 = vst.msk [vmem:[#allocation2 + $0x78] sm:$0xff] %vm1075, %v802
        %p1406 = scmp.eq.s32.totalorder %s21, 1
        // Predicated region
        $region86: #{gat_forward.11} parent=76 // pred_check
          %p1407 = pneg %p1406
        $region87: #{gat_forward.11} parent=76 // pred_check_branch
          %1409 = sbr.rel (%p1407) target = $region89
        $region88: #{gat_forward.11} parent=76 // pred_region
          %v1410 = vld [vmem:[#allocation3] sm:$0xff]
          %v1411 = vld [vmem:[#allocation3 + $0x8] sm:$0xff]
          %v1412 = vld [vmem:[#allocation3 + $0x10] sm:$0xff]
          %v1413 = vld [vmem:[#allocation3 + $0x18] sm:$0xff]
          %v1414 = vld [vmem:[#allocation3 + $0x20] sm:$0xff]
          %v1415 = vld [vmem:[#allocation3 + $0x28] sm:$0xff]
          %v1416 = vld [vmem:[#allocation3 + $0x30] sm:$0xff]
          %v1417 = vld [vmem:[#allocation3 + $0x38] sm:$0xff]
          %v1418 = vld [vmem:[#allocation3 + $0x40] sm:$0xff]
          %v1419 = vld [vmem:[#allocation3 + $0x48] sm:$0xff]
          %v1420 = vld [vmem:[#allocation3 + $0x50] sm:$0xff]
          %v1421 = vld [vmem:[#allocation3 + $0x58] sm:$0xff]
          %v1422 = vld [vmem:[#allocation3 + $0x60] sm:$0xff]
          %v1423 = vld [vmem:[#allocation3 + $0x68] sm:$0xff]
          %v1424 = vld [vmem:[#allocation3 + $0x70] sm:$0xff]
          %v1425 = vld [vmem:[#allocation3 + $0x78] sm:$0xff]
          %v1426 = vmax.f32 %v1410, 1e-20
          %v1427 = vmax.f32 %v1411, 1e-20
          %v1428 = vmax.f32 %v1412, 1e-20
          %v1429 = vmax.f32 %v1413, 1e-20
          %v1430 = vmax.f32 %v1414, 1e-20
          %v1431 = vmax.f32 %v1415, 1e-20
          %v1432 = vmax.f32 %v1416, 1e-20
          %v1433 = vmax.f32 %v1417, 1e-20
          %v1434 = vmax.f32 %v1418, 1e-20
          %v1435 = vmax.f32 %v1419, 1e-20
          %v1436 = vmax.f32 %v1420, 1e-20
          %v1437 = vmax.f32 %v1421, 1e-20
          %v1438 = vmax.f32 %v1422, 1e-20
          %v1439 = vmax.f32 %v1423, 1e-20
          %v1440 = vmax.f32 %v1424, 1e-20
          %v1441 = vmax.f32 %v1425, 1e-20
          %v1442 = vrcp.pop %v1426
          %v1443 = vrcp.pop %v1427
          %v1444 = vrcp.pop %v1428
          %v1445 = vrcp.pop %v1429
          %v1446 = vrcp.pop %v1430
          %v1447 = vrcp.pop %v1431
          %v1448 = vrcp.pop %v1432
          %v1449 = vrcp.pop %v1433
          %v1450 = vrcp.pop %v1434
          %v1451 = vrcp.pop %v1435
          %v1452 = vrcp.pop %v1436
          %v1453 = vrcp.pop %v1437
          %v1454 = vrcp.pop %v1438
          %v1455 = vrcp.pop %v1439
          %v1456 = vrcp.pop %v1440
          %v1457 = vrcp.pop %v1441
          %v1458 = vld [vmem:[%s4] sm:$0x1]
          %v1459 = vld [vmem:[#allocation4] sm:$0xff]
          %v1460 = vld [vmem:[#allocation4 + $0x8] sm:$0xff]
          %v1461 = vld [vmem:[#allocation4 + $0x10] sm:$0xff]
          %v1462 = vld [vmem:[#allocation4 + $0x18] sm:$0xff]
          %v1463 = vld [vmem:[#allocation4 + $0x20] sm:$0xff]
          %v1464 = vld [vmem:[#allocation4 + $0x28] sm:$0xff]
          %v1465 = vld [vmem:[#allocation4 + $0x30] sm:$0xff]
          %v1466 = vld [vmem:[#allocation4 + $0x38] sm:$0xff]
          %v1467 = vld [vmem:[#allocation4 + $0x40] sm:$0xff]
          %v1468 = vld [vmem:[#allocation4 + $0x48] sm:$0xff]
          %v1469 = vld [vmem:[#allocation4 + $0x50] sm:$0xff]
          %v1470 = vld [vmem:[#allocation4 + $0x58] sm:$0xff]
          %v1471 = vld [vmem:[#allocation4 + $0x60] sm:$0xff]
          %v1472 = vld [vmem:[#allocation4 + $0x68] sm:$0xff]
          %v1473 = vld [vmem:[#allocation4 + $0x70] sm:$0xff]
          %v1474 = vld [vmem:[#allocation4 + $0x78] sm:$0xff]
          %1476 = vset.pattern.permute.xlu0 0
          %1477 = vperm.xlu0 %1476, %v1442
          %v1478 = vpop.permute.xlu0 %1477
          %1481 = vset.pattern.permute.xlu0 0
          %1482 = vperm.xlu0 %1481, %v1443
          %v1483 = vpop.permute.xlu0 %1482
          %1486 = vset.pattern.permute.xlu0 0
          %1487 = vperm.xlu0 %1486, %v1444
          %v1488 = vpop.permute.xlu0 %1487
          %1491 = vset.pattern.permute.xlu0 0
          %1492 = vperm.xlu0 %1491, %v1445
          %v1493 = vpop.permute.xlu0 %1492
          %1496 = vset.pattern.permute.xlu0 0
          %1497 = vperm.xlu0 %1496, %v1446
          %v1498 = vpop.permute.xlu0 %1497
          %1501 = vset.pattern.permute.xlu0 0
          %1502 = vperm.xlu0 %1501, %v1447
          %v1503 = vpop.permute.xlu0 %1502
          %1506 = vset.pattern.permute.xlu0 0
          %1507 = vperm.xlu0 %1506, %v1448
          %v1508 = vpop.permute.xlu0 %1507
          %1511 = vset.pattern.permute.xlu0 0
          %1512 = vperm.xlu0 %1511, %v1449
          %v1513 = vpop.permute.xlu0 %1512
          %1516 = vset.pattern.permute.xlu0 0
          %1517 = vperm.xlu0 %1516, %v1450
          %v1518 = vpop.permute.xlu0 %1517
          %1521 = vset.pattern.permute.xlu0 0
          %1522 = vperm.xlu0 %1521, %v1451
          %v1523 = vpop.permute.xlu0 %1522
          %1526 = vset.pattern.permute.xlu0 0
          %1527 = vperm.xlu0 %1526, %v1452
          %v1528 = vpop.permute.xlu0 %1527
          %1531 = vset.pattern.permute.xlu0 0
          %1532 = vperm.xlu0 %1531, %v1453
          %v1533 = vpop.permute.xlu0 %1532
          %1536 = vset.pattern.permute.xlu0 0
          %1537 = vperm.xlu0 %1536, %v1454
          %v1538 = vpop.permute.xlu0 %1537
          %1541 = vset.pattern.permute.xlu0 0
          %1542 = vperm.xlu0 %1541, %v1455
          %v1543 = vpop.permute.xlu0 %1542
          %1546 = vset.pattern.permute.xlu0 0
          %1547 = vperm.xlu0 %1546, %v1456
          %v1548 = vpop.permute.xlu0 %1547
          %1551 = vset.pattern.permute.xlu0 0
          %1552 = vperm.xlu0 %1551, %v1457
          %v1553 = vpop.permute.xlu0 %1552
          %v1555 = vmul.f32 %v1459, %v1478
          %v1556 = vmul.f32 %v1460, %v1483
          %v1557 = vmul.f32 %v1461, %v1488
          %v1558 = vmul.f32 %v1462, %v1493
          %v1559 = vmul.f32 %v1463, %v1498
          %v1560 = vmul.f32 %v1464, %v1503
          %v1561 = vmul.f32 %v1465, %v1508
          %v1562 = vmul.f32 %v1466, %v1513
          %v1563 = vmul.f32 %v1467, %v1518
          %v1564 = vmul.f32 %v1468, %v1523
          %v1565 = vmul.f32 %v1469, %v1528
          %v1566 = vmul.f32 %v1470, %v1533
          %v1567 = vmul.f32 %v1471, %v1538
          %v1568 = vmul.f32 %v1472, %v1543
          %v1569 = vmul.f32 %v1473, %v1548
          %v1570 = vmul.f32 %v1474, %v1553
          %v1572 = vlaneseq
          %v1573 = vshrl.u32 %v1572, 7
          %v1574 = vsub.s32 0, %v1573
          %v1575 = vrot.slane %v1458, %v1574
          %v1577 = vadd.f32 %v1555, %v1575
          %v1578 = vadd.f32 %v1556, %v1575
          %v1579 = vadd.f32 %v1557, %v1575
          %v1580 = vadd.f32 %v1558, %v1575
          %v1581 = vadd.f32 %v1559, %v1575
          %v1582 = vadd.f32 %v1560, %v1575
          %v1583 = vadd.f32 %v1561, %v1575
          %v1584 = vadd.f32 %v1562, %v1575
          %v1585 = vadd.f32 %v1563, %v1575
          %v1586 = vadd.f32 %v1564, %v1575
          %v1587 = vadd.f32 %v1565, %v1575
          %v1588 = vadd.f32 %v1566, %v1575
          %v1589 = vadd.f32 %v1567, %v1575
          %v1590 = vadd.f32 %v1568, %v1575
          %v1591 = vadd.f32 %v1569, %v1575
          %v1592 = vadd.f32 %v1570, %v1575
          %1593 = vst.msk [vmem:[%s401] sm:$0xff] %vm1373, %v1577
          %1594 = vst.msk [vmem:[%s401 + $0x8] sm:$0xff] %vm1373, %v1578
          %1595 = vst.msk [vmem:[%s401 + $0x10] sm:$0xff] %vm1373, %v1579
          %1596 = vst.msk [vmem:[%s401 + $0x18] sm:$0xff] %vm1373, %v1580
          %1597 = vst.msk [vmem:[%s401 + $0x20] sm:$0xff] %vm1373, %v1581
          %1598 = vst.msk [vmem:[%s401 + $0x28] sm:$0xff] %vm1373, %v1582
          %1599 = vst.msk [vmem:[%s401 + $0x30] sm:$0xff] %vm1373, %v1583
          %1600 = vst.msk [vmem:[%s401 + $0x38] sm:$0xff] %vm1373, %v1584
          %1601 = vst.msk [vmem:[%s401 + $0x40] sm:$0xff] %vm1373, %v1585
          %1602 = vst.msk [vmem:[%s401 + $0x48] sm:$0xff] %vm1373, %v1586
          %1603 = vst.msk [vmem:[%s401 + $0x50] sm:$0xff] %vm1373, %v1587
          %1604 = vst.msk [vmem:[%s401 + $0x58] sm:$0xff] %vm1373, %v1588
          %1605 = vst.msk [vmem:[%s401 + $0x60] sm:$0xff] %vm1373, %v1589
          %1606 = vst.msk [vmem:[%s401 + $0x68] sm:$0xff] %vm1373, %v1590
          %1607 = vst.msk [vmem:[%s401 + $0x70] sm:$0xff] %vm1373, %v1591
          %1608 = vst.msk [vmem:[%s401 + $0x78] sm:$0xff] %vm1373, %v1592
        $region89: #{gat_forward.11} parent=76 // pred_fallthru
          _
        %s1609 = smul.u32 16, %s20
        %p1610 = scmp.lt.s32.totalorder %s1609, 31
        %s1611 = scalar_select %p1610, %s1609, 31
        %s1612 = smul.addr %s1611, 8
        %s1613 = scalar_lea.vmem %s5, %s1612
        // Predicated region
        $region90: #{gat_forward.11} parent=76 // pred_check
          %p1614 = pneg %p173
        $region91: #{gat_forward.11} parent=76 // pred_check_branch
          %1616 = sbr.rel (%p1614) target = $region93
        $region92: #{gat_forward.11} parent=76 // pred_region
          %s1617 = smul.u32 16, %s20
        $region93: #{gat_forward.11} parent=76 // pred_fallthru
          _
      $region77: #{gat_forward.11} parent=5 // pred_fallthru
        _
      %p1618 = scmp.le.s32.totalorder 2, %s11
      // Predicated region
      $region94: #{gat_forward.11} parent=5 // pred_check
        %p1619 = pneg %p1618
      $region95: #{gat_forward.11} parent=5 // pred_check_branch
        %1621 = sbr.rel (%p1619) target = $region97
      $region96: #{gat_forward.11} parent=5 // pred_region
        %s1622 = ssub.s32 %s11, 2
        // Predicated region
        $region98: #{gat_forward.11} parent=96 // pred_check
          %p1623 = pneg %p179
        $region99: #{gat_forward.11} parent=96 // pred_check_branch
          %1625 = sbr.rel (%p1623) target = $region101
        $region100: #{gat_forward.11} parent=96 // pred_region
          %s1626 = smul.u32 16, %s22
          %p1627 = scmp.lt.s32.totalorder %s1626, 31
          %s1628 = scalar_select %p1627, %s1626, 31
          %s1629 = smul.addr %s1628, 8
          %s1630 = scalar_lea.vmem %s5, %s1629
        $region101: #{gat_forward.11} parent=96 // pred_fallthru
          _
      $region97: #{gat_forward.11} parent=5 // pred_fallthru
        _
    $region6: #{gat_forward.11} parent=1 // loop_footer
      %s15 = sadd.s32 1, %s11
    $region7: #{gat_forward.11} parent=1 // loop_footer_branch
      %10 = sbr.rel target = $region3
    $region8: #{gat_forward.11} parent=1 // loop_exit
      _

// kernel: gat_forward.7
$region0: #{gat_forward.7}
  #allocation0 [shape = 'u32[]', space=smem, size = 0x4, offset = 0x4, fixed_abs, tag = 'smem constant byte address 0x4 - core index']
  #allocation1 [shape = 'u32[144,128]{1,0:T(1,128)}', space=vmem, size = 0x12000, scoped, tag = 'internal scratch']
  #allocation2 [shape = 'f32[128,4]{1,0:T(8,128)}', space=vmem, size = 0x10000, scoped, tag = 'scratch operand']
  #allocation3 [shape = 'f32[128,4]{1,0:T(8,128)}', space=vmem, size = 0x10000, scoped, tag = 'scratch operand']
  #allocation4 [shape = 'f32[128,128]{1,0:T(8,128)}', space=vmem, size = 0x10000, scoped, tag = 'scratch operand']
  %s0 = inlined_call_operand.vmem [shape: bf16[256,256], index: 0, kind: input, shape index: {}]
  %s1 = inlined_call_operand.vmem [shape: bf16[256,128], index: 1, kind: input, shape index: {}]
  %s2 = inlined_call_operand.vmem [shape: f32[256,4], index: 2, kind: input, shape index: {}]
  %s3 = inlined_call_operand.vmem [shape: f32[4,256], index: 3, kind: input, shape index: {}]
  %s4 = inlined_call_operand.vmem [shape: f32[1,128], index: 4, kind: input, shape index: {}]
  %s5 = inlined_call_operand.vmem [shape: bf16[256,128], index: 5, kind: output, shape index: {}]
  %s6 = sld [smem:[#allocation0]]
  $region102: #{gat_forward.7} parent=0
    _
  %s8 = ssub.s32 1, %s6
  %s9 = scalar_select 0, %s8, %s6
  $region1: #{gat_forward.7} parent=0
    #allocation5 [shape = 'u8[65536]{0}', space=vmem, size = 0x10000, scoped, tag = 'input window, operand 0']
    loop: start=0, step=1, limit=6
    $region2: #{gat_forward.7} parent=1 // loop_pre_header
      _
    $region3: #{gat_forward.7} parent=1 // loop_header
      %s11 = sphi 0, %s15
      %p12 = scmp.ge.s32.totalorder %s11, 6
      %s18 = sphi 0, %s30
      %s19 = sphi 0, %s26
      %s20 = sphi 0, %s18
      %s21 = sphi 0, %s19
      %s22 = sphi 0, %s20
      %s23 = sphi 0, %s21
      %s35 = sphi 0, %s37
      %s38 = sphi 0, %s35
      %s39 = sphi 0, %s38
      %s55 = sphi 0, %s39
      %s61 = sphi 0, %s63
      %s64 = sphi 0, %s61
      %s65 = sphi 0, %s64
      %s81 = sphi 0, %s65
      %s87 = sphi 0, %s89
      %s90 = sphi 0, %s87
      %s91 = sphi 0, %s90
      %s107 = sphi 0, %s91
      %s113 = sphi 0, %s115
      %s116 = sphi 0, %s113
      %s117 = sphi 0, %s116
      %s133 = sphi 0, %s117
      %s137 = sphi 0, %s137
      %s139 = sphi 0, %s137
      %s140 = sphi 0, %s139
      %s154 = sphi 0, %s140
      %s160 = sphi 0, %s162
      %s163 = sphi 0, %s160
      %s164 = sphi 0, %s163
      %s180 = sphi 0, %s164
    $region4: #{gat_forward.7} parent=1 // loop_header_branch
      %14 = sbr.rel (%p12) target = $region8
    $region5: #{gat_forward.7} parent=1 // loop_body
      %s16 = ssub.s32 %s11, 1
      %s17 = ssub.s32 %s11, 2
      %s24 = sadd.s32 1, %s19
      %p25 = scmp.ge.s32.totalorder %s24, 2
      %s26 = scalar_select %p25, 0, %s24
      %s27 = sadd.s32 1, %s18
      %s28 = scalar_select %p25, %s27, %s18
      %p29 = scmp.ge.s32.totalorder %s28, 2
      %s30 = scalar_select %p29, 0, %s28
      %s31 = ssub.s32 %s18, %s30
      %s32 = ssub.s32 %s19, %s26
      %s33 = sor.u32 %s31, %s32
      %p34 = scmp.eq.s32.totalorder %s33, 0
      %s36 = sadd.s32 %s35, 1
      %s37 = scalar_select %p34, %s35, %s36
      %p40 = pneg %p34
      %p41 = scmp.eq.s32.totalorder %s11, 3
      %p42 = por %p40, %p41
      %p43 = scmp.ne.s32.totalorder %s35, %s38
      %p44 = scmp.eq.s32.totalorder %s11, 0
      %p45 = por %p43, %p44
      %p46 = scmp.ne.s32.totalorder %s35, %s38
      %p47 = scmp.eq.s32.totalorder %s16, 3
      %p48 = por %p46, %p47
      %p49 = scmp.ne.s32.totalorder %s38, %s39
      %p50 = scmp.eq.s32.totalorder %s16, 0
      %p51 = por %p49, %p50
      %p52 = scmp.ne.s32.totalorder %s38, %s39
      %p53 = scmp.eq.s32.totalorder %s17, 3
      %p54 = por %p52, %p53
      %p56 = scmp.ne.s32.totalorder %s39, %s55
      %p57 = scmp.eq.s32.totalorder %s17, 0
      %p58 = por %p56, %p57
      %s59 = ssub.s32 %s19, %s26
      %p60 = scmp.eq.s32.totalorder %s59, 0
      %s62 = sadd.s32 %s61, 1
      %s63 = scalar_select %p60, %s61, %s62
      %p66 = pneg %p60
      %p67 = scmp.eq.s32.totalorder %s11, 3
      %p68 = por %p66, %p67
      %p69 = scmp.ne.s32.totalorder %s61, %s64
      %p70 = scmp.eq.s32.totalorder %s11, 0
      %p71 = por %p69, %p70
      %p72 = scmp.ne.s32.totalorder %s61, %s64
      %p73 = scmp.eq.s32.totalorder %s16, 3
      %p74 = por %p72, %p73
      %p75 = scmp.ne.s32.totalorder %s64, %s65
      %p76 = scmp.eq.s32.totalorder %s16, 0
      %p77 = por %p75, %p76
      %p78 = scmp.ne.s32.totalorder %s64, %s65
      %p79 = scmp.eq.s32.totalorder %s17, 3
      %p80 = por %p78, %p79
      %p82 = scmp.ne.s32.totalorder %s65, %s81
      %p83 = scmp.eq.s32.totalorder %s17, 0
      %p84 = por %p82, %p83
      %s85 = ssub.s32 %s18, %s30
      %p86 = scmp.eq.s32.totalorder %s85, 0
      %s88 = sadd.s32 %s87, 1
      %s89 = scalar_select %p86, %s87, %s88
      %p92 = pneg %p86
      %p93 = scmp.eq.s32.totalorder %s11, 3
      %p94 = por %p92, %p93
      %p95 = scmp.ne.s32.totalorder %s87, %s90
      %p96 = scmp.eq.s32.totalorder %s11, 0
      %p97 = por %p95, %p96
      %p98 = scmp.ne.s32.totalorder %s87, %s90
      %p99 = scmp.eq.s32.totalorder %s16, 3
      %p100 = por %p98, %p99
      %p101 = scmp.ne.s32.totalorder %s90, %s91
      %p102 = scmp.eq.s32.totalorder %s16, 0
      %p103 = por %p101, %p102
      %p104 = scmp.ne.s32.totalorder %s90, %s91
      %p105 = scmp.eq.s32.totalorder %s17, 3
      %p106 = por %p104, %p105
      %p108 = scmp.ne.s32.totalorder %s91, %s107
      %p109 = scmp.eq.s32.totalorder %s17, 0
      %p110 = por %p108, %p109
      %s111 = ssub.s32 %s19, %s26
      %p112 = scmp.eq.s32.totalorder %s111, 0
      %s114 = sadd.s32 %s113, 1
      %s115 = scalar_select %p112, %s113, %s114
      %p118 = pneg %p112
      %p119 = scmp.eq.s32.totalorder %s11, 3
      %p120 = por %p118, %p119
      %p121 = scmp.ne.s32.totalorder %s113, %s116
      %p122 = scmp.eq.s32.totalorder %s11, 0
      %p123 = por %p121, %p122
      %p124 = scmp.ne.s32.totalorder %s113, %s116
      %p125 = scmp.eq.s32.totalorder %s16, 3
      %p126 = por %p124, %p125
      %p127 = scmp.ne.s32.totalorder %s116, %s117
      %p128 = scmp.eq.s32.totalorder %s16, 0
      %p129 = por %p127, %p128
      %p130 = scmp.ne.s32.totalorder %s116, %s117
      %p131 = scmp.eq.s32.totalorder %s17, 3
      %p132 = por %p130, %p131
      %p134 = scmp.ne.s32.totalorder %s117, %s133
      %p135 = scmp.eq.s32.totalorder %s17, 0
      %p136 = por %p134, %p135
      %s138 = sadd.s32 %s137, 1
      %p141 = scmp.eq.s32.totalorder %s11, 3
      %p142 = scmp.ne.s32.totalorder %s137, %s139
      %p143 = scmp.eq.s32.totalorder %s11, 0
      %p144 = por %p142, %p143
      %p145 = scmp.ne.s32.totalorder %s137, %s139
      %p146 = scmp.eq.s32.totalorder %s16, 3
      %p147 = por %p145, %p146
      %p148 = scmp.ne.s32.totalorder %s139, %s140
      %p149 = scmp.eq.s32.totalorder %s16, 0
      %p150 = por %p148, %p149
      %p151 = scmp.ne.s32.totalorder %s139, %s140
      %p152 = scmp.eq.s32.totalorder %s17, 3
      %p153 = por %p151, %p152
      %p155 = scmp.ne.s32.totalorder %s140, %s154
      %p156 = scmp.eq.s32.totalorder %s17, 0
      %p157 = por %p155, %p156
      %s158 = ssub.s32 %s18, %s30
      %p159 = scmp.eq.s32.totalorder %s158, 0
      %s161 = sadd.s32 %s160, 1
      %s162 = scalar_select %p159, %s160, %s161
      %p165 = pneg %p159
      %p166 = scmp.eq.s32.totalorder %s11, 3
      %p167 = por %p165, %p166
      %p168 = scmp.ne.s32.totalorder %s160, %s163
      %p169 = scmp.eq.s32.totalorder %s11, 0
      %p170 = por %p168, %p169
      %p171 = scmp.ne.s32.totalorder %s160, %s163
      %p172 = scmp.eq.s32.totalorder %s16, 3
      %p173 = por %p171, %p172
      %p174 = scmp.ne.s32.totalorder %s163, %s164
      %p175 = scmp.eq.s32.totalorder %s16, 0
      %p176 = por %p174, %p175
      %p177 = scmp.ne.s32.totalorder %s163, %s164
      %p178 = scmp.eq.s32.totalorder %s17, 3
      %p179 = por %p177, %p178
      %p181 = scmp.ne.s32.totalorder %s164, %s180
      %p182 = scmp.eq.s32.totalorder %s17, 0
      %p183 = por %p181, %p182
      %p184 = scmp.le.s32.totalorder 1, %s11
      %p185 = scmp.lt.s32.totalorder %s11, 5
      %p186 = pnand %p184, %p185
      %p187 = pneg %p186
      // Predicated region
      $region9: #{gat_forward.7} parent=5 // pred_check
        _
      $region10: #{gat_forward.7} parent=5 // pred_check_branch
        %189 = sbr.rel (%p186) target = $region12
      $region11: #{gat_forward.7} parent=5 // pred_region
        %s190 = ssub.s32 %s11, 1
        // Predicated region
        $region13: #{gat_forward.7} parent=11 // pred_check
          %p191 = pneg %p150
        $region14: #{gat_forward.7} parent=11 // pred_check_branch
          %193 = sbr.rel (%p191) target = $region16
        $region15: #{gat_forward.7} parent=11 // pred_region
          _
        $region16: #{gat_forward.7} parent=11 // pred_fallthru
          _
      $region12: #{gat_forward.7} parent=5 // pred_fallthru
        _
      %p194 = scmp.lt.s32.totalorder %s11, 4
      // Predicated region
      $region17: #{gat_forward.7} parent=5 // pred_check
        %p195 = pneg %p194
      $region18: #{gat_forward.7} parent=5 // pred_check_branch
        %197 = sbr.rel (%p195) target = $region20
      $region19: #{gat_forward.7} parent=5 // pred_region
        // Predicated region
        $region21: #{gat_forward.7} parent=19 // pred_check
          %p198 = pneg %p45
        $region22: #{gat_forward.7} parent=19 // pred_check_branch
          %200 = sbr.rel (%p198) target = $region24
        $region23: #{gat_forward.7} parent=19 // pred_region
          %s201 = sand.u32 %s35, 1
          %s202 = sand.u32 %s35, 1
          %s203 = smul.addr %s202, 64
          %s204 = scalar_lea.vmem [#allocation5], %s203
          %s205 = smul.u32 16, %s18
          %s206 = smul.addr %s205, 2
          %s207 = sadd.s32 %s19, %s206
          %s208 = smul.addr %s207, 4
          %s209 = scalar_lea.vmem %s0, %s208
          // Predicated region
          $region25: #{gat_forward.7} parent=23 // pred_check
            _
          $region26: #{gat_forward.7} parent=23 // pred_check_branch
            %211 = sbr.rel (0) target = $region28
          $region27: #{gat_forward.7} parent=23 // pred_region
            // Predicated region
            $region29: #{gat_forward.7} parent=27 // pred_check
              _
            $region30: #{gat_forward.7} parent=27 // pred_check_branch
              %213 = sbr.rel target = $region32
            $region31: #{gat_forward.7} parent=27 // pred_region
              // Predicated region
              $region44: #{gat_forward.7} parent=31 // pred_check
                _
              $region45: #{gat_forward.7} parent=31 // pred_check_branch
                %258 = sbr.rel (0) target = $region47
              $region46: #{gat_forward.7} parent=31 // pred_region
                loop: start=0, step=1, limit=1
                $region48: #{gat_forward.7} parent=46 // loop_pre_header
                  _
                $region49: #{gat_forward.7} parent=46 // loop_header
                  %s260 = sphi 0, %s264
                  %p261 = scmp.ge.s32.totalorder %s260, 1
                  %s265 = sphi %s209, %s209
                  %s266 = sphi %s204, %s204
                $region50: #{gat_forward.7} parent=46 // loop_header_branch
                  %263 = sbr.rel (%p261) target = $region54
                $region51: #{gat_forward.7} parent=46 // loop_body
                  _
                $region52: #{gat_forward.7} parent=46 // loop_footer
                  %s264 = sadd.s32 1, %s260
                $region53: #{gat_forward.7} parent=46 // loop_footer_branch
                  %259 = sbr.rel target = $region49
                $region54: #{gat_forward.7} parent=46 // loop_exit
                  _
                loop: start=0, step=1, limit=1
                $region55: #{gat_forward.7} parent=46 // loop_pre_header
                  _
                $region56: #{gat_forward.7} parent=46 // loop_header
                  %s269 = sphi 0, %s273
                  %p270 = scmp.ge.s32.totalorder %s269, 1
                  %s274 = sphi %s209, %s209
                  %s275 = sphi %s204, %s204
                $region57: #{gat_forward.7} parent=46 // loop_header_branch
                  %272 = sbr.rel (%p270) target = $region61
                $region58: #{gat_forward.7} parent=46 // loop_body
                  %v276 = vld [vmem:[%s274] sm:$0xf]
                  %277 = vst [vmem:[%s275] sm:$0xf] %v276
                  %v278 = vld [vmem:[%s274 + $0x8] sm:$0xf]
                  %279 = vst [vmem:[%s275 + $0x4] sm:$0xf] %v278
                  %v280 = vld [vmem:[%s274 + $0x10] sm:$0xf]
                  %281 = vst [vmem:[%s275 + $0x8] sm:$0xf] %v280
                  %v282 = vld [vmem:[%s274 + $0x18] sm:$0xf]
                  %283 = vst [vmem:[%s275 + $0xc] sm:$0xf] %v282
                  %v284 = vld [vmem:[%s274 + $0x20] sm:$0xf]
                  %285 = vst [vmem:[%s275 + $0x10] sm:$0xf] %v284
                  %v286 = vld [vmem:[%s274 + $0x28] sm:$0xf]
                  %287 = vst [vmem:[%s275 + $0x14] sm:$0xf] %v286
                  %v288 = vld [vmem:[%s274 + $0x30] sm:$0xf]
                  %289 = vst [vmem:[%s275 + $0x18] sm:$0xf] %v288
                  %v290 = vld [vmem:[%s274 + $0x38] sm:$0xf]
                  %291 = vst [vmem:[%s275 + $0x1c] sm:$0xf] %v290
                  %v292 = vld [vmem:[%s274 + $0x40] sm:$0xf]
                  %293 = vst [vmem:[%s275 + $0x20] sm:$0xf] %v292
                  %v294 = vld [vmem:[%s274 + $0x48] sm:$0xf]
                  %295 = vst [vmem:[%s275 + $0x24] sm:$0xf] %v294
                  %v296 = vld [vmem:[%s274 + $0x50] sm:$0xf]
                  %297 = vst [vmem:[%s275 + $0x28] sm:$0xf] %v296
                  %v298 = vld [vmem:[%s274 + $0x58] sm:$0xf]
                  %299 = vst [vmem:[%s275 + $0x2c] sm:$0xf] %v298
                  %v300 = vld [vmem:[%s274 + $0x60] sm:$0xf]
                  %301 = vst [vmem:[%s275 + $0x30] sm:$0xf] %v300
                  %v302 = vld [vmem:[%s274 + $0x68] sm:$0xf]
                  %303 = vst [vmem:[%s275 + $0x34] sm:$0xf] %v302
                  %v304 = vld [vmem:[%s274 + $0x70] sm:$0xf]
                  %305 = vst [vmem:[%s275 + $0x38] sm:$0xf] %v304
                  %v306 = vld [vmem:[%s274 + $0x78] sm:$0xf]
                  %307 = vst [vmem:[%s275 + $0x3c] sm:$0xf] %v306
                $region59: #{gat_forward.7} parent=46 // loop_footer
                  %s273 = sadd.s32 1, %s269
                $region60: #{gat_forward.7} parent=46 // loop_footer_branch
                  %268 = sbr.rel target = $region56
                $region61: #{gat_forward.7} parent=46 // loop_exit
                  _
              $region47: #{gat_forward.7} parent=31 // pred_fallthru
                _
            $region32: #{gat_forward.7} parent=27 // pred_fallthru
              _
            // Predicated region
            $region33: #{gat_forward.7} parent=27 // pred_check
              _
            $region34: #{gat_forward.7} parent=27 // pred_check_branch
              %215 = sbr.rel (0) target = $region36
            $region35: #{gat_forward.7} parent=27 // pred_region
              loop: start=0, step=1, limit=1
              $region37: #{gat_forward.7} parent=35 // loop_pre_header
                _
              $region38: #{gat_forward.7} parent=35 // loop_header
                %s218 = sphi 0, %s222
                %p219 = scmp.ge.s32.totalorder %s218, 1
                %s223 = sphi %s209, %s209
                %s224 = sphi %s204, %s204
              $region39: #{gat_forward.7} parent=35 // loop_header_branch
                %221 = sbr.rel (%p219) target = $region43
              $region40: #{gat_forward.7} parent=35 // loop_body
                %v225 = vld [vmem:[%s223] sm:$0xf]
                %226 = vst [vmem:[%s224] sm:$0xf] %v225
                %v227 = vld [vmem:[%s223 + $0x8] sm:$0xf]
                %228 = vst [vmem:[%s224 + $0x4] sm:$0xf] %v227
                %v229 = vld [vmem:[%s223 + $0x10] sm:$0xf]
                %230 = vst [vmem:[%s224 + $0x8] sm:$0xf] %v229
                %v231 = vld [vmem:[%s223 + $0x18] sm:$0xf]
                %232 = vst [vmem:[%s224 + $0xc] sm:$0xf] %v231
                %v233 = vld [vmem:[%s223 + $0x20] sm:$0xf]
                %234 = vst [vmem:[%s224 + $0x10] sm:$0xf] %v233
                %v235 = vld [vmem:[%s223 + $0x28] sm:$0xf]
                %236 = vst [vmem:[%s224 + $0x14] sm:$0xf] %v235
                %v237 = vld [vmem:[%s223 + $0x30] sm:$0xf]
                %238 = vst [vmem:[%s224 + $0x18] sm:$0xf] %v237
                %v239 = vld [vmem:[%s223 + $0x38] sm:$0xf]
                %240 = vst [vmem:[%s224 + $0x1c] sm:$0xf] %v239
                %v241 = vld [vmem:[%s223 + $0x40] sm:$0xf]
                %242 = vst [vmem:[%s224 + $0x20] sm:$0xf] %v241
                %v243 = vld [vmem:[%s223 + $0x48] sm:$0xf]
                %244 = vst [vmem:[%s224 + $0x24] sm:$0xf] %v243
                %v245 = vld [vmem:[%s223 + $0x50] sm:$0xf]
                %246 = vst [vmem:[%s224 + $0x28] sm:$0xf] %v245
                %v247 = vld [vmem:[%s223 + $0x58] sm:$0xf]
                %248 = vst [vmem:[%s224 + $0x2c] sm:$0xf] %v247
                %v249 = vld [vmem:[%s223 + $0x60] sm:$0xf]
                %250 = vst [vmem:[%s224 + $0x30] sm:$0xf] %v249
                %v251 = vld [vmem:[%s223 + $0x68] sm:$0xf]
                %252 = vst [vmem:[%s224 + $0x34] sm:$0xf] %v251
                %v253 = vld [vmem:[%s223 + $0x70] sm:$0xf]
                %254 = vst [vmem:[%s224 + $0x38] sm:$0xf] %v253
                %v255 = vld [vmem:[%s223 + $0x78] sm:$0xf]
                %256 = vst [vmem:[%s224 + $0x3c] sm:$0xf] %v255
              $region41: #{gat_forward.7} parent=35 // loop_footer
                %s222 = sadd.s32 1, %s218
              $region42: #{gat_forward.7} parent=35 // loop_footer_branch
                %217 = sbr.rel target = $region38
              $region43: #{gat_forward.7} parent=35 // loop_exit
                _
            $region36: #{gat_forward.7} parent=27 // pred_fallthru
              _
          $region28: #{gat_forward.7} parent=23 // pred_fallthru
            _
          %308 = vnop
        $region24: #{gat_forward.7} parent=19 // pred_fallthru
          _
        // Predicated region
        $region62: #{gat_forward.7} parent=19 // pred_check
          %p309 = pneg %p71
        $region63: #{gat_forward.7} parent=19 // pred_check_branch
          %311 = sbr.rel (%p309) target = $region65
        $region64: #{gat_forward.7} parent=19 // pred_region
          %s312 = smul.u32 16, %s19
          %p313 = scmp.lt.s32.totalorder %s312, 31
          %s314 = scalar_select %p313, %s312, 31
          %s315 = smul.addr %s314, 4
          %s316 = scalar_lea.vmem %s1, %s315
          %s317 = smul.u32 16, %s19
        $region65: #{gat_forward.7} parent=19 // pred_fallthru
          _
        // Predicated region
        $region66: #{gat_forward.7} parent=19 // pred_check
          %p318 = pneg %p97
        $region67: #{gat_forward.7} parent=19 // pred_check_branch
          %320 = sbr.rel (%p318) target = $region69
        $region68: #{gat_forward.7} parent=19 // pred_region
          %s321 = smul.u32 16, %s18
          %p322 = scmp.lt.s32.totalorder %s321, 31
          %s323 = scalar_select %p322, %s321, 31
          %s324 = smul.addr %s323, 8
          %s325 = scalar_lea.vmem %s2, %s324
          %s326 = smul.u32 16, %s18
        $region69: #{gat_forward.7} parent=19 // pred_fallthru
          _
        // Predicated region
        $region70: #{gat_forward.7} parent=19 // pred_check
          %p327 = pneg %p123
        $region71: #{gat_forward.7} parent=19 // pred_check_branch
          %329 = sbr.rel (%p327) target = $region73
        $region72: #{gat_forward.7} parent=19 // pred_region
          %p330 = scmp.lt.s32.totalorder %s19, 1
          %s331 = scalar_select %p330, %s19, 1
          %s332 = smul.addr %s331, 4
          %s333 = scalar_lea.vmem %s3, %s332
        $region73: #{gat_forward.7} parent=19 // pred_fallthru
          _
      $region20: #{gat_forward.7} parent=5 // pred_fallthru
        _
      %p334 = scmp.le.s32.totalorder 1, %s11
      %p335 = scmp.lt.s32.totalorder %s11, 5
      %p336 = pnand %p334, %p335
      %p337 = pneg %p336
      // Predicated region
      $region74: #{gat_forward.7} parent=5 // pred_check
        _
      $region75: #{gat_forward.7} parent=5 // pred_check_branch
        %339 = sbr.rel (%p336) target = $region77
      $region76: #{gat_forward.7} parent=5 // pred_region
        %s340 = ssub.s32 %s11, 1
        %s341 = sand.u32 %s38, 1
        %s342 = sand.u32 %s38, 1
        %s343 = smul.addr %s342, 64
        %s344 = scalar_lea.vmem [#allocation5], %s343
        // Predicated region
        $region78: #{gat_forward.7} parent=76 // pred_check
          %p345 = pneg %p51
        $region79: #{gat_forward.7} parent=76 // pred_check_branch
          %347 = sbr.rel (%p345) target = $region81
        $region80: #{gat_forward.7} parent=76 // pred_region
          _
        $region81: #{gat_forward.7} parent=76 // pred_fallthru
          _
        %s348 = sand.u32 %s38, 1
        %s349 = sand.u32 %s38, 1
        %s350 = smul.addr %s349, 64
        %s351 = scalar_lea.vmem [#allocation5], %s350
        %p352 = pneg %p51
        %p353 = pneg %p48
        %s354 = smul.u32 16, %s21
        %p355 = scmp.lt.s32.totalorder %s354, 31
        %s356 = scalar_select %p355, %s354, 31
        %s357 = smul.addr %s356, 4
        %s358 = scalar_lea.vmem %s1, %s357
        %p359 = pneg %p77
        %p360 = pneg %p74
        %s361 = smul.u32 16, %s20
        %p362 = scmp.lt.s32.totalorder %s361, 31
        %s363 = scalar_select %p362, %s361, 31
        %s364 = smul.addr %s363, 8
        %s365 = scalar_lea.vmem %s2, %s364
        %p366 = pneg %p103
        %p367 = pneg %p100
        %p368 = scmp.lt.s32.totalorder %s21, 1
        %s369 = scalar_select %p368, %s21, 1
        %s370 = smul.addr %s369, 4
        %s371 = scalar_lea.vmem %s3, %s370
        %p372 = pneg %p129
        %p373 = pneg %p126
        %p374 = pneg %p150
        %p375 = pneg %p147
        %p376 = pneg %p176
        %p377 = pneg %p173
        %s378 = smul.u32 16, %s20
        %p379 = scmp.lt.s32.totalorder %s378, 31
        %s380 = scalar_select %p379, %s378, 31
        %s381 = smul.addr %s380, 4
        %s382 = scalar_lea.vmem %s5, %s381
        %s383 = smul.u32 16, %s20
        %s384 = smul.u32 16, %s21
        %p385 = scmp.lt.s32.totalorder %s384, 31
        %s386 = scalar_select %p385, %s384, 31
        %s387 = smul.addr %s386, 4
        %s388 = scalar_lea.vmem %s1, %s387
        %s389 = smul.u32 16, %s21
        %s390 = smul.u32 16, %s20
        %p391 = scmp.lt.s32.totalorder %s390, 31
        %s392 = scalar_select %p391, %s390, 31
        %s393 = smul.addr %s392, 8
        %s394 = scalar_lea.vmem %s2, %s393
        %s395 = smul.u32 16, %s20
        %p396 = scmp.lt.s32.totalorder %s21, 1
        %s397 = scalar_select %p396, %s21, 1
        %s398 = smul.addr %s397, 4
        %s399 = scalar_lea.vmem %s3, %s398
        %s400 = smul.u32 16, %s20
        %p401 = scmp.lt.s32.totalorder %s400, 31
        %s402 = scalar_select %p401, %s400, 31
        %s403 = smul.addr %s402, 4
        %s404 = scalar_lea.vmem %s5, %s403
        %s405 = smul.u32 16, %s20
        %p409 = scmp.eq.s32.totalorder %s21, 0
        // Predicated region
        $region82: #{gat_forward.7} parent=76 // pred_check
          %p410 = pneg %p409
        $region83: #{gat_forward.7} parent=76 // pred_check_branch
          %412 = sbr.rel (%p410) target = $region85
        $region84: #{gat_forward.7} parent=76 // pred_region
          %vm413 = vcmask 31744
          %414 = vst.msk [vmem:[#allocation2] sm:$0xff] %vm413, -1e+30
          %415 = vst.msk [vmem:[#allocation2 + $0x8] sm:$0xff] %vm413, -1e+30
          %416 = vst.msk [vmem:[#allocation2 + $0x10] sm:$0xff] %vm413, -1e+30
          %417 = vst.msk [vmem:[#allocation2 + $0x18] sm:$0xff] %vm413, -1e+30
          %418 = vst.msk [vmem:[#allocation2 + $0x20] sm:$0xff] %vm413, -1e+30
          %419 = vst.msk [vmem:[#allocation2 + $0x28] sm:$0xff] %vm413, -1e+30
          %420 = vst.msk [vmem:[#allocation2 + $0x30] sm:$0xff] %vm413, -1e+30
          %421 = vst.msk [vmem:[#allocation2 + $0x38] sm:$0xff] %vm413, -1e+30
          %422 = vst.msk [vmem:[#allocation2 + $0x40] sm:$0xff] %vm413, -1e+30
          %423 = vst.msk [vmem:[#allocation2 + $0x48] sm:$0xff] %vm413, -1e+30
          %424 = vst.msk [vmem:[#allocation2 + $0x50] sm:$0xff] %vm413, -1e+30
          %425 = vst.msk [vmem:[#allocation2 + $0x58] sm:$0xff] %vm413, -1e+30
          %426 = vst.msk [vmem:[#allocation2 + $0x60] sm:$0xff] %vm413, -1e+30
          %427 = vst.msk [vmem:[#allocation2 + $0x68] sm:$0xff] %vm413, -1e+30
          %428 = vst.msk [vmem:[#allocation2 + $0x70] sm:$0xff] %vm413, -1e+30
          %429 = vst.msk [vmem:[#allocation2 + $0x78] sm:$0xff] %vm413, -1e+30
          %430 = vst.msk [vmem:[#allocation3] sm:$0xff] %vm413, 0.0
          %431 = vst.msk [vmem:[#allocation3 + $0x8] sm:$0xff] %vm413, 0.0
          %432 = vst.msk [vmem:[#allocation3 + $0x10] sm:$0xff] %vm413, 0.0
          %433 = vst.msk [vmem:[#allocation3 + $0x18] sm:$0xff] %vm413, 0.0
          %434 = vst.msk [vmem:[#allocation3 + $0x20] sm:$0xff] %vm413, 0.0
          %435 = vst.msk [vmem:[#allocation3 + $0x28] sm:$0xff] %vm413, 0.0
          %436 = vst.msk [vmem:[#allocation3 + $0x30] sm:$0xff] %vm413, 0.0
          %437 = vst.msk [vmem:[#allocation3 + $0x38] sm:$0xff] %vm413, 0.0
          %438 = vst.msk [vmem:[#allocation3 + $0x40] sm:$0xff] %vm413, 0.0
          %439 = vst.msk [vmem:[#allocation3 + $0x48] sm:$0xff] %vm413, 0.0
          %440 = vst.msk [vmem:[#allocation3 + $0x50] sm:$0xff] %vm413, 0.0
          %441 = vst.msk [vmem:[#allocation3 + $0x58] sm:$0xff] %vm413, 0.0
          %442 = vst.msk [vmem:[#allocation3 + $0x60] sm:$0xff] %vm413, 0.0
          %443 = vst.msk [vmem:[#allocation3 + $0x68] sm:$0xff] %vm413, 0.0
          %444 = vst.msk [vmem:[#allocation3 + $0x70] sm:$0xff] %vm413, 0.0
          %445 = vst.msk [vmem:[#allocation3 + $0x78] sm:$0xff] %vm413, 0.0
          %446 = vst [vmem:[#allocation4] sm:$0xff] 0.0
          %447 = vst [vmem:[#allocation4 + $0x8] sm:$0xff] 0.0
          %448 = vst [vmem:[#allocation4 + $0x10] sm:$0xff] 0.0
          %449 = vst [vmem:[#allocation4 + $0x18] sm:$0xff] 0.0
          %450 = vst [vmem:[#allocation4 + $0x20] sm:$0xff] 0.0
          %451 = vst [vmem:[#allocation4 + $0x28] sm:$0xff] 0.0
          %452 = vst [vmem:[#allocation4 + $0x30] sm:$0xff] 0.0
          %453 = vst [vmem:[#allocation4 + $0x38] sm:$0xff] 0.0
          %454 = vst [vmem:[#allocation4 + $0x40] sm:$0xff] 0.0
          %455 = vst [vmem:[#allocation4 + $0x48] sm:$0xff] 0.0
          %456 = vst [vmem:[#allocation4 + $0x50] sm:$0xff] 0.0
          %457 = vst [vmem:[#allocation4 + $0x58] sm:$0xff] 0.0
          %458 = vst [vmem:[#allocation4 + $0x60] sm:$0xff] 0.0
          %459 = vst [vmem:[#allocation4 + $0x68] sm:$0xff] 0.0
          %460 = vst [vmem:[#allocation4 + $0x70] sm:$0xff] 0.0
          %461 = vst [vmem:[#allocation4 + $0x78] sm:$0xff] 0.0
        $region85: #{gat_forward.7} parent=76 // pred_fallthru
          _
        %v462 = vld [vmem:[%s344] sm:$0xf]
        %v463 = vld [vmem:[%s344 + $0x4] sm:$0xf]
        %v464 = vld [vmem:[%s344 + $0x8] sm:$0xf]
        %v465 = vld [vmem:[%s344 + $0xc] sm:$0xf]
        %v466 = vld [vmem:[%s344 + $0x10] sm:$0xf]
        %v467 = vld [vmem:[%s344 + $0x14] sm:$0xf]
        %v468 = vld [vmem:[%s344 + $0x18] sm:$0xf]
        %v469 = vld [vmem:[%s344 + $0x1c] sm:$0xf]
        %v470 = vld [vmem:[%s344 + $0x20] sm:$0xf]
        %v471 = vld [vmem:[%s344 + $0x24] sm:$0xf]
        %v472 = vld [vmem:[%s344 + $0x28] sm:$0xf]
        %v473 = vld [vmem:[%s344 + $0x2c] sm:$0xf]
        %v474 = vld [vmem:[%s344 + $0x30] sm:$0xf]
        %v475 = vld [vmem:[%s344 + $0x34] sm:$0xf]
        %v476 = vld [vmem:[%s344 + $0x38] sm:$0xf]
        %v477 = vld [vmem:[%s344 + $0x3c] sm:$0xf]
        %vm478 = vcmp.gt.bf16.partialorder %v462, 0
        %vm479 = vcmp.gt.bf16.partialorder %v463, 0
        %vm480 = vcmp.gt.bf16.partialorder %v464, 0
        %vm481 = vcmp.gt.bf16.partialorder %v465, 0
        %vm482 = vcmp.gt.bf16.partialorder %v466, 0
        %vm483 = vcmp.gt.bf16.partialorder %v467, 0
        %vm484 = vcmp.gt.bf16.partialorder %v468, 0
        %vm485 = vcmp.gt.bf16.partialorder %v469, 0
        %vm486 = vcmp.gt.bf16.partialorder %v470, 0
        %vm487 = vcmp.gt.bf16.partialorder %v471, 0
        %vm488 = vcmp.gt.bf16.partialorder %v472, 0
        %vm489 = vcmp.gt.bf16.partialorder %v473, 0
        %vm490 = vcmp.gt.bf16.partialorder %v474, 0
        %vm491 = vcmp.gt.bf16.partialorder %v475, 0
        %vm492 = vcmp.gt.bf16.partialorder %v476, 0
        %vm493 = vcmp.gt.bf16.partialorder %v477, 0
        %v494 = vld [vmem:[%s394] sm:$0xff]
        %v495 = vld [vmem:[%s394 + $0x8] sm:$0xff]
        %v496 = vld [vmem:[%s394 + $0x10] sm:$0xff]
        %v497 = vld [vmem:[%s394 + $0x18] sm:$0xff]
        %v498 = vld [vmem:[%s394 + $0x20] sm:$0xff]
        %v499 = vld [vmem:[%s394 + $0x28] sm:$0xff]
        %v500 = vld [vmem:[%s394 + $0x30] sm:$0xff]
        %v501 = vld [vmem:[%s394 + $0x38] sm:$0xff]
        %v502 = vld [vmem:[%s394 + $0x40] sm:$0xff]
        %v503 = vld [vmem:[%s394 + $0x48] sm:$0xff]
        %v504 = vld [vmem:[%s394 + $0x50] sm:$0xff]
        %v505 = vld [vmem:[%s394 + $0x58] sm:$0xff]
        %v506 = vld [vmem:[%s394 + $0x60] sm:$0xff]
        %v507 = vld [vmem:[%s394 + $0x68] sm:$0xff]
        %v508 = vld [vmem:[%s394 + $0x70] sm:$0xff]
        %v509 = vld [vmem:[%s394 + $0x78] sm:$0xff]
        %v510 = vld [vmem:[%s399] sm:$0xf]
        %v511 = vld [vmem:[%s388] sm:$0xf]
        %v512 = vld [vmem:[%s388 + $0x4] sm:$0xf]
        %v513 = vld [vmem:[%s388 + $0x8] sm:$0xf]
        %v514 = vld [vmem:[%s388 + $0xc] sm:$0xf]
        %v515 = vld [vmem:[%s388 + $0x10] sm:$0xf]
        %v516 = vld [vmem:[%s388 + $0x14] sm:$0xf]
        %v517 = vld [vmem:[%s388 + $0x18] sm:$0xf]
        %v518 = vld [vmem:[%s388 + $0x1c] sm:$0xf]
        %v519 = vld [vmem:[%s388 + $0x20] sm:$0xf]
        %v520 = vld [vmem:[%s388 + $0x24] sm:$0xf]
        %v521 = vld [vmem:[%s388 + $0x28] sm:$0xf]
        %v522 = vld [vmem:[%s388 + $0x2c] sm:$0xf]
        %v523 = vld [vmem:[%s388 + $0x30] sm:$0xf]
        %v524 = vld [vmem:[%s388 + $0x34] sm:$0xf]
        %v525 = vld [vmem:[%s388 + $0x38] sm:$0xf]
        %v526 = vld [vmem:[%s388 + $0x3c] sm:$0xf]
        %528 = vset.pattern.permute.xlu0 0
        %529 = vperm.xlu0 %528, %v494
        %v530 = vpop.permute.xlu0 %529
        %533 = vset.pattern.permute.xlu0 0
        %534 = vperm.xlu0 %533, %v495
        %v535 = vpop.permute.xlu0 %534
        %538 = vset.pattern.permute.xlu0 0
        %539 = vperm.xlu0 %538, %v496
        %v540 = vpop.permute.xlu0 %539
        %543 = vset.pattern.permute.xlu0 0
        %544 = vperm.xlu0 %543, %v497
        %v545 = vpop.permute.xlu0 %544
        %548 = vset.pattern.permute.xlu0 0
        %549 = vperm.xlu0 %548, %v498
        %v550 = vpop.permute.xlu0 %549
        %553 = vset.pattern.permute.xlu0 0
        %554 = vperm.xlu0 %553, %v499
        %v555 = vpop.permute.xlu0 %554
        %558 = vset.pattern.permute.xlu0 0
        %559 = vperm.xlu0 %558, %v500
        %v560 = vpop.permute.xlu0 %559
        %563 = vset.pattern.permute.xlu0 0
        %564 = vperm.xlu0 %563, %v501
        %v565 = vpop.permute.xlu0 %564
        %568 = vset.pattern.permute.xlu0 0
        %569 = vperm.xlu0 %568, %v502
        %v570 = vpop.permute.xlu0 %569
        %573 = vset.pattern.permute.xlu0 0
        %574 = vperm.xlu0 %573, %v503
        %v575 = vpop.permute.xlu0 %574
        %578 = vset.pattern.permute.xlu0 0
        %579 = vperm.xlu0 %578, %v504
        %v580 = vpop.permute.xlu0 %579
        %583 = vset.pattern.permute.xlu0 0
        %584 = vperm.xlu0 %583, %v505
        %v585 = vpop.permute.xlu0 %584
        %588 = vset.pattern.permute.xlu0 0
        %589 = vperm.xlu0 %588, %v506
        %v590 = vpop.permute.xlu0 %589
        %593 = vset.pattern.permute.xlu0 0
        %594 = vperm.xlu0 %593, %v507
        %v595 = vpop.permute.xlu0 %594
        %598 = vset.pattern.permute.xlu0 0
        %599 = vperm.xlu0 %598, %v508
        %v600 = vpop.permute.xlu0 %599
        %603 = vset.pattern.permute.xlu0 0
        %604 = vperm.xlu0 %603, %v509
        %v605 = vpop.permute.xlu0 %604
        %v607 = vlaneseq
        %v608 = vshrl.u32 %v607, 7
        %v609 = vsub.s32 0, %v608
        %v610 = vrot.slane %v510, %v609
        %v611 = vadd.f32 %v530, %v610
        %v612 = vadd.f32 %v535, %v610
        %v613 = vadd.f32 %v540, %v610
        %v614 = vadd.f32 %v545, %v610
        %v615 = vadd.f32 %v550, %v610
        %v616 = vadd.f32 %v555, %v610
        %v617 = vadd.f32 %v560, %v610
        %v618 = vadd.f32 %v565, %v610
        %v619 = vadd.f32 %v570, %v610
        %v620 = vadd.f32 %v575, %v610
        %v621 = vadd.f32 %v580, %v610
        %v622 = vadd.f32 %v585, %v610
        %v623 = vadd.f32 %v590, %v610
        %v624 = vadd.f32 %v595, %v610
        %v625 = vadd.f32 %v600, %v610
        %v626 = vadd.f32 %v605, %v610
        %vm627 = vcmp.gt.f32.partialorder %v611, 0.0
        %vm628 = vcmp.gt.f32.partialorder %v612, 0.0
        %vm629 = vcmp.gt.f32.partialorder %v613, 0.0
        %vm630 = vcmp.gt.f32.partialorder %v614, 0.0
        %vm631 = vcmp.gt.f32.partialorder %v615, 0.0
        %vm632 = vcmp.gt.f32.partialorder %v616, 0.0
        %vm633 = vcmp.gt.f32.partialorder %v617, 0.0
        %vm634 = vcmp.gt.f32.partialorder %v618, 0.0
        %vm635 = vcmp.gt.f32.partialorder %v619, 0.0
        %vm636 = vcmp.gt.f32.partialorder %v620, 0.0
        %vm637 = vcmp.gt.f32.partialorder %v621, 0.0
        %vm638 = vcmp.gt.f32.partialorder %v622, 0.0
        %vm639 = vcmp.gt.f32.partialorder %v623, 0.0
        %vm640 = vcmp.gt.f32.partialorder %v624, 0.0
        %vm641 = vcmp.gt.f32.partialorder %v625, 0.0
        %vm642 = vcmp.gt.f32.partialorder %v626, 0.0
        %v643 = vmul.f32 %v611, 0.2
        %v644 = vmul.f32 %v612, 0.2
        %v645 = vmul.f32 %v613, 0.2
        %v646 = vmul.f32 %v614, 0.2
        %v647 = vmul.f32 %v615, 0.2
        %v648 = vmul.f32 %v616, 0.2
        %v649 = vmul.f32 %v617, 0.2
        %v650 = vmul.f32 %v618, 0.2
        %v651 = vmul.f32 %v619, 0.2
        %v652 = vmul.f32 %v620, 0.2
        %v653 = vmul.f32 %v621, 0.2
        %v654 = vmul.f32 %v622, 0.2
        %v655 = vmul.f32 %v623, 0.2
        %v656 = vmul.f32 %v624, 0.2
        %v657 = vmul.f32 %v625, 0.2
        %v658 = vmul.f32 %v626, 0.2
        %v659 = vsel %vm627, %v611, %v643
        %v660 = vsel %vm628, %v612, %v644
        %v661 = vsel %vm629, %v613, %v645
        %v662 = vsel %vm630, %v614, %v646
        %v663 = vsel %vm631, %v615, %v647
        %v664 = vsel %vm632, %v616, %v648
        %v665 = vsel %vm633, %v617, %v649
        %v666 = vsel %vm634, %v618, %v650
        %v667 = vsel %vm635, %v619, %v651
        %v668 = vsel %vm636, %v620, %v652
        %v669 = vsel %vm637, %v621, %v653
        %v670 = vsel %vm638, %v622, %v654
        %v671 = vsel %vm639, %v623, %v655
        %v672 = vsel %vm640, %v624, %v656
        %v673 = vsel %vm641, %v625, %v657
        %v674 = vsel %vm642, %v626, %v658
        %v675 = vsel %vm478, 65537, 0
        %v676 = vsel %vm479, 65537, 0
        %v677 = vsel %vm480, 65537, 0
        %v678 = vsel %vm481, 65537, 0
        %v679 = vsel %vm482, 65537, 0
        %v680 = vsel %vm483, 65537, 0
        %v681 = vsel %vm484, 65537, 0
        %v682 = vsel %vm485, 65537, 0
        %v683 = vsel %vm486, 65537, 0
        %v684 = vsel %vm487, 65537, 0
        %v685 = vsel %vm488, 65537, 0
        %v686 = vsel %vm489, 65537, 0
        %v687 = vsel %vm490, 65537, 0
        %v688 = vsel %vm491, 65537, 0
        %v689 = vsel %vm492, 65537, 0
        %v690 = vsel %vm493, 65537, 0
        %v691 = vunpack.c.l.b16 %v675
        %v692 = vunpack.c.l.b16 %v676
        %v693 = vunpack.c.l.b16 %v677
        %v694 = vunpack.c.l.b16 %v678
        %v695 = vunpack.c.l.b16 %v679
        %v696 = vunpack.c.l.b16 %v680
        %v697 = vunpack.c.l.b16 %v681
        %v698 = vunpack.c.l.b16 %v682
        %v699 = vunpack.c.l.b16 %v683
        %v700 = vunpack.c.l.b16 %v684
        %v701 = vunpack.c.l.b16 %v685
        %v702 = vunpack.c.l.b16 %v686
        %v703 = vunpack.c.l.b16 %v687
        %v704 = vunpack.c.l.b16 %v688
        %v705 = vunpack.c.l.b16 %v689
        %v706 = vunpack.c.l.b16 %v690
        %vm707 = vcmp.ne.s32.totalorder %v691, 0
        %vm708 = vcmp.ne.s32.totalorder %v692, 0
        %vm709 = vcmp.ne.s32.totalorder %v693, 0
        %vm710 = vcmp.ne.s32.totalorder %v694, 0
        %vm711 = vcmp.ne.s32.totalorder %v695, 0
        %vm712 = vcmp.ne.s32.totalorder %v696, 0
        %vm713 = vcmp.ne.s32.totalorder %v697, 0
        %vm714 = vcmp.ne.s32.totalorder %v698, 0
        %vm715 = vcmp.ne.s32.totalorder %v699, 0
        %vm716 = vcmp.ne.s32.totalorder %v700, 0
        %vm717 = vcmp.ne.s32.totalorder %v701, 0
        %vm718 = vcmp.ne.s32.totalorder %v702, 0
        %vm719 = vcmp.ne.s32.totalorder %v703, 0
        %vm720 = vcmp.ne.s32.totalorder %v704, 0
        %vm721 = vcmp.ne.s32.totalorder %v705, 0
        %vm722 = vcmp.ne.s32.totalorder %v706, 0
        %v723 = vsel %vm707, %v659, -1e+30
        %v724 = vsel %vm708, %v660, -1e+30
        %v725 = vsel %vm709, %v661, -1e+30
        %v726 = vsel %vm710, %v662, -1e+30
        %v727 = vsel %vm711, %v663, -1e+30
        %v728 = vsel %vm712, %v664, -1e+30
        %v729 = vsel %vm713, %v665, -1e+30
        %v730 = vsel %vm714, %v666, -1e+30
        %v731 = vsel %vm715, %v667, -1e+30
        %v732 = vsel %vm716, %v668, -1e+30
        %v733 = vsel %vm717, %v669, -1e+30
        %v734 = vsel %vm718, %v670, -1e+30
        %v735 = vsel %vm719, %v671, -1e+30
        %v736 = vsel %vm720, %v672, -1e+30
        %v737 = vsel %vm721, %v673, -1e+30
        %v738 = vsel %vm722, %v674, -1e+30
        %v739 = vld [vmem:[#allocation2] sm:$0xff]
        %v740 = vld [vmem:[#allocation2 + $0x8] sm:$0xff]
        %v741 = vld [vmem:[#allocation2 + $0x10] sm:$0xff]
        %v742 = vld [vmem:[#allocation2 + $0x18] sm:$0xff]
        %v743 = vld [vmem:[#allocation2 + $0x20] sm:$0xff]
        %v744 = vld [vmem:[#allocation2 + $0x28] sm:$0xff]
        %v745 = vld [vmem:[#allocation2 + $0x30] sm:$0xff]
        %v746 = vld [vmem:[#allocation2 + $0x38] sm:$0xff]
        %v747 = vld [vmem:[#allocation2 + $0x40] sm:$0xff]
        %v748 = vld [vmem:[#allocation2 + $0x48] sm:$0xff]
        %v749 = vld [vmem:[#allocation2 + $0x50] sm:$0xff]
        %v750 = vld [vmem:[#allocation2 + $0x58] sm:$0xff]
        %v751 = vld [vmem:[#allocation2 + $0x60] sm:$0xff]
        %v752 = vld [vmem:[#allocation2 + $0x68] sm:$0xff]
        %v753 = vld [vmem:[#allocation2 + $0x70] sm:$0xff]
        %v754 = vld [vmem:[#allocation2 + $0x78] sm:$0xff]
        %755 = vmax.xlane.f32.xlu0 %v723
        %v756 = vpop.xlane.xlu0 %755
        %757 = vmax.xlane.f32.xlu0 %v724
        %v758 = vpop.xlane.xlu0 %757
        %759 = vmax.xlane.f32.xlu0 %v725
        %v760 = vpop.xlane.xlu0 %759
        %761 = vmax.xlane.f32.xlu0 %v726
        %v762 = vpop.xlane.xlu0 %761
        %763 = vmax.xlane.f32.xlu0 %v727
        %v764 = vpop.xlane.xlu0 %763
        %765 = vmax.xlane.f32.xlu0 %v728
        %v766 = vpop.xlane.xlu0 %765
        %767 = vmax.xlane.f32.xlu0 %v729
        %v768 = vpop.xlane.xlu0 %767
        %769 = vmax.xlane.f32.xlu0 %v730
        %v770 = vpop.xlane.xlu0 %769
        %771 = vmax.xlane.f32.xlu0 %v731
        %v772 = vpop.xlane.xlu0 %771
        %773 = vmax.xlane.f32.xlu0 %v732
        %v774 = vpop.xlane.xlu0 %773
        %775 = vmax.xlane.f32.xlu0 %v733
        %v776 = vpop.xlane.xlu0 %775
        %777 = vmax.xlane.f32.xlu0 %v734
        %v778 = vpop.xlane.xlu0 %777
        %779 = vmax.xlane.f32.xlu0 %v735
        %v780 = vpop.xlane.xlu0 %779
        %781 = vmax.xlane.f32.xlu0 %v736
        %v782 = vpop.xlane.xlu0 %781
        %783 = vmax.xlane.f32.xlu0 %v737
        %v784 = vpop.xlane.xlu0 %783
        %785 = vmax.xlane.f32.xlu0 %v738
        %v786 = vpop.xlane.xlu0 %785
        %v787 = vmax.f32 %v739, %v756
        %v788 = vmax.f32 %v740, %v758
        %v789 = vmax.f32 %v741, %v760
        %v790 = vmax.f32 %v742, %v762
        %v791 = vmax.f32 %v743, %v764
        %v792 = vmax.f32 %v744, %v766
        %v793 = vmax.f32 %v745, %v768
        %v794 = vmax.f32 %v746, %v770
        %v795 = vmax.f32 %v747, %v772
        %v796 = vmax.f32 %v748, %v774
        %v797 = vmax.f32 %v749, %v776
        %v798 = vmax.f32 %v750, %v778
        %v799 = vmax.f32 %v751, %v780
        %v800 = vmax.f32 %v752, %v782
        %v801 = vmax.f32 %v753, %v784
        %v802 = vmax.f32 %v754, %v786
        %v803 = vsub.f32 %v739, %v787
        %v804 = vsub.f32 %v740, %v788
        %v805 = vsub.f32 %v741, %v789
        %v806 = vsub.f32 %v742, %v790
        %v807 = vsub.f32 %v743, %v791
        %v808 = vsub.f32 %v744, %v792
        %v809 = vsub.f32 %v745, %v793
        %v810 = vsub.f32 %v746, %v794
        %v811 = vsub.f32 %v747, %v795
        %v812 = vsub.f32 %v748, %v796
        %v813 = vsub.f32 %v749, %v797
        %v814 = vsub.f32 %v750, %v798
        %v815 = vsub.f32 %v751, %v799
        %v816 = vsub.f32 %v752, %v800
        %v817 = vsub.f32 %v753, %v801
        %v818 = vsub.f32 %v754, %v802
        %v819 = vmul.f32 %v803, 1.442695
        %v820 = vpow.pop %v819
        %v821 = vmul.f32 %v804, 1.442695
        %v822 = vpow.pop %v821
        %v823 = vmul.f32 %v805, 1.442695
        %v824 = vpow.pop %v823
        %v825 = vmul.f32 %v806, 1.442695
        %v826 = vpow.pop %v825
        %v827 = vmul.f32 %v807, 1.442695
        %v828 = vpow.pop %v827
        %v829 = vmul.f32 %v808, 1.442695
        %v830 = vpow.pop %v829
        %v831 = vmul.f32 %v809, 1.442695
        %v832 = vpow.pop %v831
        %v833 = vmul.f32 %v810, 1.442695
        %v834 = vpow.pop %v833
        %v835 = vmul.f32 %v811, 1.442695
        %v836 = vpow.pop %v835
        %v837 = vmul.f32 %v812, 1.442695
        %v838 = vpow.pop %v837
        %v839 = vmul.f32 %v813, 1.442695
        %v840 = vpow.pop %v839
        %v841 = vmul.f32 %v814, 1.442695
        %v842 = vpow.pop %v841
        %v843 = vmul.f32 %v815, 1.442695
        %v844 = vpow.pop %v843
        %v845 = vmul.f32 %v816, 1.442695
        %v846 = vpow.pop %v845
        %v847 = vmul.f32 %v817, 1.442695
        %v848 = vpow.pop %v847
        %v849 = vmul.f32 %v818, 1.442695
        %v850 = vpow.pop %v849
        %852 = vset.pattern.permute.xlu0 0
        %853 = vperm.xlu0 %852, %v787
        %v854 = vpop.permute.xlu0 %853
        %857 = vset.pattern.permute.xlu0 0
        %858 = vperm.xlu0 %857, %v788
        %v859 = vpop.permute.xlu0 %858
        %862 = vset.pattern.permute.xlu0 0
        %863 = vperm.xlu0 %862, %v789
        %v864 = vpop.permute.xlu0 %863
        %867 = vset.pattern.permute.xlu0 0
        %868 = vperm.xlu0 %867, %v790
        %v869 = vpop.permute.xlu0 %868
        %872 = vset.pattern.permute.xlu0 0
        %873 = vperm.xlu0 %872, %v791
        %v874 = vpop.permute.xlu0 %873
        %877 = vset.pattern.permute.xlu0 0
        %878 = vperm.xlu0 %877, %v792
        %v879 = vpop.permute.xlu0 %878
        %882 = vset.pattern.permute.xlu0 0
        %883 = vperm.xlu0 %882, %v793
        %v884 = vpop.permute.xlu0 %883
        %887 = vset.pattern.permute.xlu0 0
        %888 = vperm.xlu0 %887, %v794
        %v889 = vpop.permute.xlu0 %888
        %892 = vset.pattern.permute.xlu0 0
        %893 = vperm.xlu0 %892, %v795
        %v894 = vpop.permute.xlu0 %893
        %897 = vset.pattern.permute.xlu0 0
        %898 = vperm.xlu0 %897, %v796
        %v899 = vpop.permute.xlu0 %898
        %902 = vset.pattern.permute.xlu0 0
        %903 = vperm.xlu0 %902, %v797
        %v904 = vpop.permute.xlu0 %903
        %907 = vset.pattern.permute.xlu0 0
        %908 = vperm.xlu0 %907, %v798
        %v909 = vpop.permute.xlu0 %908
        %912 = vset.pattern.permute.xlu0 0
        %913 = vperm.xlu0 %912, %v799
        %v914 = vpop.permute.xlu0 %913
        %917 = vset.pattern.permute.xlu0 0
        %918 = vperm.xlu0 %917, %v800
        %v919 = vpop.permute.xlu0 %918
        %922 = vset.pattern.permute.xlu0 0
        %923 = vperm.xlu0 %922, %v801
        %v924 = vpop.permute.xlu0 %923
        %927 = vset.pattern.permute.xlu0 0
        %928 = vperm.xlu0 %927, %v802
        %v929 = vpop.permute.xlu0 %928
        %v931 = vsub.f32 %v723, %v854
        %v932 = vsub.f32 %v724, %v859
        %v933 = vsub.f32 %v725, %v864
        %v934 = vsub.f32 %v726, %v869
        %v935 = vsub.f32 %v727, %v874
        %v936 = vsub.f32 %v728, %v879
        %v937 = vsub.f32 %v729, %v884
        %v938 = vsub.f32 %v730, %v889
        %v939 = vsub.f32 %v731, %v894
        %v940 = vsub.f32 %v732, %v899
        %v941 = vsub.f32 %v733, %v904
        %v942 = vsub.f32 %v734, %v909
        %v943 = vsub.f32 %v735, %v914
        %v944 = vsub.f32 %v736, %v919
        %v945 = vsub.f32 %v737, %v924
        %v946 = vsub.f32 %v738, %v929
        %v947 = vmul.f32 %v931, 1.442695
        %v948 = vpow.pop %v947
        %v949 = vmul.f32 %v932, 1.442695
        %v950 = vpow.pop %v949
        %v951 = vmul.f32 %v933, 1.442695
        %v952 = vpow.pop %v951
        %v953 = vmul.f32 %v934, 1.442695
        %v954 = vpow.pop %v953
        %v955 = vmul.f32 %v935, 1.442695
        %v956 = vpow.pop %v955
        %v957 = vmul.f32 %v936, 1.442695
        %v958 = vpow.pop %v957
        %v959 = vmul.f32 %v937, 1.442695
        %v960 = vpow.pop %v959
        %v961 = vmul.f32 %v938, 1.442695
        %v962 = vpow.pop %v961
        %v963 = vmul.f32 %v939, 1.442695
        %v964 = vpow.pop %v963
        %v965 = vmul.f32 %v940, 1.442695
        %v966 = vpow.pop %v965
        %v967 = vmul.f32 %v941, 1.442695
        %v968 = vpow.pop %v967
        %v969 = vmul.f32 %v942, 1.442695
        %v970 = vpow.pop %v969
        %v971 = vmul.f32 %v943, 1.442695
        %v972 = vpow.pop %v971
        %v973 = vmul.f32 %v944, 1.442695
        %v974 = vpow.pop %v973
        %v975 = vmul.f32 %v945, 1.442695
        %v976 = vpow.pop %v975
        %v977 = vmul.f32 %v946, 1.442695
        %v978 = vpow.pop %v977
        %v979 = vsel %vm707, %v948, 0.0
        %v980 = vsel %vm708, %v950, 0.0
        %v981 = vsel %vm709, %v952, 0.0
        %v982 = vsel %vm710, %v954, 0.0
        %v983 = vsel %vm711, %v956, 0.0
        %v984 = vsel %vm712, %v958, 0.0
        %v985 = vsel %vm713, %v960, 0.0
        %v986 = vsel %vm714, %v962, 0.0
        %v987 = vsel %vm715, %v964, 0.0
        %v988 = vsel %vm716, %v966, 0.0
        %v989 = vsel %vm717, %v968, 0.0
        %v990 = vsel %vm718, %v970, 0.0
        %v991 = vsel %vm719, %v972, 0.0
        %v992 = vsel %vm720, %v974, 0.0
        %v993 = vsel %vm721, %v976, 0.0
        %v994 = vsel %vm722, %v978, 0.0
        %v995 = vld [vmem:[#allocation3] sm:$0xff]
        %v996 = vld [vmem:[#allocation3 + $0x8] sm:$0xff]
        %v997 = vld [vmem:[#allocation3 + $0x10] sm:$0xff]
        %v998 = vld [vmem:[#allocation3 + $0x18] sm:$0xff]
        %v999 = vld [vmem:[#allocation3 + $0x20] sm:$0xff]
        %v1000 = vld [vmem:[#allocation3 + $0x28] sm:$0xff]
        %v1001 = vld [vmem:[#allocation3 + $0x30] sm:$0xff]
        %v1002 = vld [vmem:[#allocation3 + $0x38] sm:$0xff]
        %v1003 = vld [vmem:[#allocation3 + $0x40] sm:$0xff]
        %v1004 = vld [vmem:[#allocation3 + $0x48] sm:$0xff]
        %v1005 = vld [vmem:[#allocation3 + $0x50] sm:$0xff]
        %v1006 = vld [vmem:[#allocation3 + $0x58] sm:$0xff]
        %v1007 = vld [vmem:[#allocation3 + $0x60] sm:$0xff]
        %v1008 = vld [vmem:[#allocation3 + $0x68] sm:$0xff]
        %v1009 = vld [vmem:[#allocation3 + $0x70] sm:$0xff]
        %v1010 = vld [vmem:[#allocation3 + $0x78] sm:$0xff]
        %v1011 = vmul.f32 %v820, %v995
        %v1012 = vmul.f32 %v822, %v996
        %v1013 = vmul.f32 %v824, %v997
        %v1014 = vmul.f32 %v826, %v998
        %v1015 = vmul.f32 %v828, %v999
        %v1016 = vmul.f32 %v830, %v1000
        %v1017 = vmul.f32 %v832, %v1001
        %v1018 = vmul.f32 %v834, %v1002
        %v1019 = vmul.f32 %v836, %v1003
        %v1020 = vmul.f32 %v838, %v1004
        %v1021 = vmul.f32 %v840, %v1005
        %v1022 = vmul.f32 %v842, %v1006
        %v1023 = vmul.f32 %v844, %v1007
        %v1024 = vmul.f32 %v846, %v1008
        %v1025 = vmul.f32 %v848, %v1009
        %v1026 = vmul.f32 %v850, %v1010
        %1027 = vadd.xlane.f32.xlu0 %v979
        %v1028 = vpop.xlane.xlu0 %1027
        %1029 = vadd.xlane.f32.xlu0 %v980
        %v1030 = vpop.xlane.xlu0 %1029
        %1031 = vadd.xlane.f32.xlu0 %v981
        %v1032 = vpop.xlane.xlu0 %1031
        %1033 = vadd.xlane.f32.xlu0 %v982
        %v1034 = vpop.xlane.xlu0 %1033
        %1035 = vadd.xlane.f32.xlu0 %v983
        %v1036 = vpop.xlane.xlu0 %1035
        %1037 = vadd.xlane.f32.xlu0 %v984
        %v1038 = vpop.xlane.xlu0 %1037
        %1039 = vadd.xlane.f32.xlu0 %v985
        %v1040 = vpop.xlane.xlu0 %1039
        %1041 = vadd.xlane.f32.xlu0 %v986
        %v1042 = vpop.xlane.xlu0 %1041
        %1043 = vadd.xlane.f32.xlu0 %v987
        %v1044 = vpop.xlane.xlu0 %1043
        %1045 = vadd.xlane.f32.xlu0 %v988
        %v1046 = vpop.xlane.xlu0 %1045
        %1047 = vadd.xlane.f32.xlu0 %v989
        %v1048 = vpop.xlane.xlu0 %1047
        %1049 = vadd.xlane.f32.xlu0 %v990
        %v1050 = vpop.xlane.xlu0 %1049
        %1051 = vadd.xlane.f32.xlu0 %v991
        %v1052 = vpop.xlane.xlu0 %1051
        %1053 = vadd.xlane.f32.xlu0 %v992
        %v1054 = vpop.xlane.xlu0 %1053
        %1055 = vadd.xlane.f32.xlu0 %v993
        %v1056 = vpop.xlane.xlu0 %1055
        %1057 = vadd.xlane.f32.xlu0 %v994
        %v1058 = vpop.xlane.xlu0 %1057
        %v1059 = vadd.f32 %v1011, %v1028
        %v1060 = vadd.f32 %v1012, %v1030
        %v1061 = vadd.f32 %v1013, %v1032
        %v1062 = vadd.f32 %v1014, %v1034
        %v1063 = vadd.f32 %v1015, %v1036
        %v1064 = vadd.f32 %v1016, %v1038
        %v1065 = vadd.f32 %v1017, %v1040
        %v1066 = vadd.f32 %v1018, %v1042
        %v1067 = vadd.f32 %v1019, %v1044
        %v1068 = vadd.f32 %v1020, %v1046
        %v1069 = vadd.f32 %v1021, %v1048
        %v1070 = vadd.f32 %v1022, %v1050
        %v1071 = vadd.f32 %v1023, %v1052
        %v1072 = vadd.f32 %v1024, %v1054
        %v1073 = vadd.f32 %v1025, %v1056
        %v1074 = vadd.f32 %v1026, %v1058
        %vm1075 = vcmask 7168
        %1076 = vst.msk [vmem:[#allocation3] sm:$0xff] %vm1075, %v1059
        %1077 = vst.msk [vmem:[#allocation3 + $0x8] sm:$0xff] %vm1075, %v1060
        %1078 = vst.msk [vmem:[#allocation3 + $0x10] sm:$0xff] %vm1075, %v1061
        %1079 = vst.msk [vmem:[#allocation3 + $0x18] sm:$0xff] %vm1075, %v1062
        %1080 = vst.msk [vmem:[#allocation3 + $0x20] sm:$0xff] %vm1075, %v1063
        %1081 = vst.msk [vmem:[#allocation3 + $0x28] sm:$0xff] %vm1075, %v1064
        %1082 = vst.msk [vmem:[#allocation3 + $0x30] sm:$0xff] %vm1075, %v1065
        %1083 = vst.msk [vmem:[#allocation3 + $0x38] sm:$0xff] %vm1075, %v1066
        %1084 = vst.msk [vmem:[#allocation3 + $0x40] sm:$0xff] %vm1075, %v1067
        %1085 = vst.msk [vmem:[#allocation3 + $0x48] sm:$0xff] %vm1075, %v1068
        %1086 = vst.msk [vmem:[#allocation3 + $0x50] sm:$0xff] %vm1075, %v1069
        %1087 = vst.msk [vmem:[#allocation3 + $0x58] sm:$0xff] %vm1075, %v1070
        %1088 = vst.msk [vmem:[#allocation3 + $0x60] sm:$0xff] %vm1075, %v1071
        %1089 = vst.msk [vmem:[#allocation3 + $0x68] sm:$0xff] %vm1075, %v1072
        %1090 = vst.msk [vmem:[#allocation3 + $0x70] sm:$0xff] %vm1075, %v1073
        %1091 = vst.msk [vmem:[#allocation3 + $0x78] sm:$0xff] %vm1075, %v1074
        %v1092 = vld [vmem:[#allocation4] sm:$0xff]
        %v1093 = vld [vmem:[#allocation4 + $0x8] sm:$0xff]
        %v1094 = vld [vmem:[#allocation4 + $0x10] sm:$0xff]
        %v1095 = vld [vmem:[#allocation4 + $0x18] sm:$0xff]
        %v1096 = vld [vmem:[#allocation4 + $0x20] sm:$0xff]
        %v1097 = vld [vmem:[#allocation4 + $0x28] sm:$0xff]
        %v1098 = vld [vmem:[#allocation4 + $0x30] sm:$0xff]
        %v1099 = vld [vmem:[#allocation4 + $0x38] sm:$0xff]
        %v1100 = vld [vmem:[#allocation4 + $0x40] sm:$0xff]
        %v1101 = vld [vmem:[#allocation4 + $0x48] sm:$0xff]
        %v1102 = vld [vmem:[#allocation4 + $0x50] sm:$0xff]
        %v1103 = vld [vmem:[#allocation4 + $0x58] sm:$0xff]
        %v1104 = vld [vmem:[#allocation4 + $0x60] sm:$0xff]
        %v1105 = vld [vmem:[#allocation4 + $0x68] sm:$0xff]
        %v1106 = vld [vmem:[#allocation4 + $0x70] sm:$0xff]
        %v1107 = vld [vmem:[#allocation4 + $0x78] sm:$0xff]
        %1109 = vset.pattern.permute.xlu0 0
        %1110 = vperm.xlu0 %1109, %v820
        %v1111 = vpop.permute.xlu0 %1110
        %1114 = vset.pattern.permute.xlu0 0
        %1115 = vperm.xlu0 %1114, %v822
        %v1116 = vpop.permute.xlu0 %1115
        %1119 = vset.pattern.permute.xlu0 0
        %1120 = vperm.xlu0 %1119, %v824
        %v1121 = vpop.permute.xlu0 %1120
        %1124 = vset.pattern.permute.xlu0 0
        %1125 = vperm.xlu0 %1124, %v826
        %v1126 = vpop.permute.xlu0 %1125
        %1129 = vset.pattern.permute.xlu0 0
        %1130 = vperm.xlu0 %1129, %v828
        %v1131 = vpop.permute.xlu0 %1130
        %1134 = vset.pattern.permute.xlu0 0
        %1135 = vperm.xlu0 %1134, %v830
        %v1136 = vpop.permute.xlu0 %1135
        %1139 = vset.pattern.permute.xlu0 0
        %1140 = vperm.xlu0 %1139, %v832
        %v1141 = vpop.permute.xlu0 %1140
        %1144 = vset.pattern.permute.xlu0 0
        %1145 = vperm.xlu0 %1144, %v834
        %v1146 = vpop.permute.xlu0 %1145
        %1149 = vset.pattern.permute.xlu0 0
        %1150 = vperm.xlu0 %1149, %v836
        %v1151 = vpop.permute.xlu0 %1150
        %1154 = vset.pattern.permute.xlu0 0
        %1155 = vperm.xlu0 %1154, %v838
        %v1156 = vpop.permute.xlu0 %1155
        %1159 = vset.pattern.permute.xlu0 0
        %1160 = vperm.xlu0 %1159, %v840
        %v1161 = vpop.permute.xlu0 %1160
        %1164 = vset.pattern.permute.xlu0 0
        %1165 = vperm.xlu0 %1164, %v842
        %v1166 = vpop.permute.xlu0 %1165
        %1169 = vset.pattern.permute.xlu0 0
        %1170 = vperm.xlu0 %1169, %v844
        %v1171 = vpop.permute.xlu0 %1170
        %1174 = vset.pattern.permute.xlu0 0
        %1175 = vperm.xlu0 %1174, %v846
        %v1176 = vpop.permute.xlu0 %1175
        %1179 = vset.pattern.permute.xlu0 0
        %1180 = vperm.xlu0 %1179, %v848
        %v1181 = vpop.permute.xlu0 %1180
        %1184 = vset.pattern.permute.xlu0 0
        %1185 = vperm.xlu0 %1184, %v850
        %v1186 = vpop.permute.xlu0 %1185
        %v1188 = vmul.f32 %v1111, %v1092
        %v1189 = vmul.f32 %v1116, %v1093
        %v1190 = vmul.f32 %v1121, %v1094
        %v1191 = vmul.f32 %v1126, %v1095
        %v1192 = vmul.f32 %v1131, %v1096
        %v1193 = vmul.f32 %v1136, %v1097
        %v1194 = vmul.f32 %v1141, %v1098
        %v1195 = vmul.f32 %v1146, %v1099
        %v1196 = vmul.f32 %v1151, %v1100
        %v1197 = vmul.f32 %v1156, %v1101
        %v1198 = vmul.f32 %v1161, %v1102
        %v1199 = vmul.f32 %v1166, %v1103
        %v1200 = vmul.f32 %v1171, %v1104
        %v1201 = vmul.f32 %v1176, %v1105
        %v1202 = vmul.f32 %v1181, %v1106
        %v1203 = vmul.f32 %v1186, %v1107
        %v1204 = vpack.c.bf16 %v980, %v979
        %v1205 = vpack.c.bf16 %v982, %v981
        %v1206 = vpack.c.bf16 %v984, %v983
        %v1207 = vpack.c.bf16 %v986, %v985
        %v1208 = vpack.c.bf16 %v988, %v987
        %v1209 = vpack.c.bf16 %v990, %v989
        %v1210 = vpack.c.bf16 %v992, %v991
        %v1211 = vpack.c.bf16 %v994, %v993
        %v1228 = vunpack.c.l.b16 %v511
        %v1229 = vunpack.c.l.b16 %v512
        %v1230 = vunpack.c.l.b16 %v513
        %v1231 = vunpack.c.l.b16 %v514
        %v1232 = vunpack.c.l.b16 %v515
        %v1233 = vunpack.c.l.b16 %v516
        %v1234 = vunpack.c.l.b16 %v517
        %v1235 = vunpack.c.l.b16 %v518
        %v1236 = vunpack.c.l.b16 %v519
        %v1237 = vunpack.c.l.b16 %v520
        %v1238 = vunpack.c.l.b16 %v521
        %v1239 = vunpack.c.l.b16 %v522
        %v1240 = vunpack.c.l.b16 %v523
        %v1241 = vunpack.c.l.b16 %v524
        %v1242 = vunpack.c.l.b16 %v525
        %v1243 = vunpack.c.l.b16 %v526
        %v1244 = vpack.c.b16 %v1229, %v1228
        %v1245 = vpack.c.b16 %v1231, %v1230
        %v1246 = vpack.c.b16 %v1233, %v1232
        %v1247 = vpack.c.b16 %v1235, %v1234
        %v1248 = vpack.c.b16 %v1237, %v1236
        %v1249 = vpack.c.b16 %v1239, %v1238
        %v1250 = vpack.c.b16 %v1241, %v1240
        %v1251 = vpack.c.b16 %v1243, %v1242
        %1260 = vmatprep.subr.bf16.mxu0 0
        %1261 = vmatpush1.bf16.msra.mxu0 %v1244
        %1262 = vmatprep.subr.bf16.mxu0 0
        %1263 = vmatpush1.bf16.msra.mxu0 %v1245
        %1264 = vmatprep.subr.bf16.mxu0 0
        %1265 = vmatpush1.bf16.msra.mxu0 %v1246
        %1266 = vmatprep.subr.bf16.mxu0 0
        %1267 = vmatpush1.bf16.msra.mxu0 %v1247
        %1268 = vmatprep.subr.bf16.mxu0 0
        %1269 = vmatpush1.bf16.msra.mxu0 %v1248
        %1270 = vmatprep.subr.bf16.mxu0 0
        %1271 = vmatpush1.bf16.msra.mxu0 %v1249
        %1272 = vmatprep.subr.bf16.mxu0 0
        %1273 = vmatpush1.bf16.msra.mxu0 %v1250
        %1274 = vmatprep.subr.bf16.mxu0 0
        %1275 = vmatpush1.bf16.msra.mxu0 %v1251
        %1276 = vmatprep.subr.bf16.mxu0 0
        %1277 = vmatpush1.bf16.msra.mxu0 0
        %1278 = vmatprep.subr.bf16.mxu0 0
        %1279 = vmatpush1.bf16.msra.mxu0 0
        %1280 = vmatprep.subr.bf16.mxu0 0
        %1281 = vmatpush1.bf16.msra.mxu0 0
        %1282 = vmatprep.subr.bf16.mxu0 0
        %1283 = vmatpush1.bf16.msra.mxu0 0
        %1284 = vmatprep.subr.bf16.mxu0 0
        %1285 = vmatpush1.bf16.msra.mxu0 0
        %1286 = vmatprep.subr.bf16.mxu0 0
        %1287 = vmatpush1.bf16.msra.mxu0 0
        %1288 = vmatprep.subr.bf16.mxu0 0
        %1289 = vmatpush1.bf16.msra.mxu0 0
        %1290 = vmatprep.subr.bf16.mxu0 0
        %1291 = vmatpush1.bf16.msra.mxu0 0
        %1292 = vmatprep.mubr.bf16.mxu0 0
        %1293 = vmatmul.mubr.bf16.gmra.mrb[0].mxu0 %v1204
        %v1294 = vpop.f32.mrb[0].mxu0
        %v1295 = vadd.f32 0.0, %v1294
        %v1296 = vpop.f32.mrb[0].mxu0
        %v1297 = vpop.f32.mrb[0].mxu0
        %v1298 = vadd.f32 0.0, %v1297
        %v1299 = vpop.f32.mrb[0].mxu0
        %1300 = vmatprep.mubr.bf16.mxu0 0
        %1301 = vmatmul.mubr.bf16.gmra.mrb[0].mxu0 %v1205
        %v1302 = vpop.f32.mrb[0].mxu0
        %v1303 = vadd.f32 0.0, %v1302
        %v1304 = vpop.f32.mrb[0].mxu0
        %v1305 = vpop.f32.mrb[0].mxu0
        %v1306 = vadd.f32 0.0, %v1305
        %v1307 = vpop.f32.mrb[0].mxu0
        %1308 = vmatprep.mubr.bf16.mxu0 0
        %1309 = vmatmul.mubr.bf16.gmra.mrb[0].mxu0 %v1206
        %v1310 = vpop.f32.mrb[0].mxu0
        %v1311 = vadd.f32 0.0, %v1310
        %v1312 = vpop.f32.mrb[0].mxu0
        %v1313 = vpop.f32.mrb[0].mxu0
        %v1314 = vadd.f32 0.0, %v1313
        %v1315 = vpop.f32.mrb[0].mxu0
        %1316 = vmatprep.mubr.bf16.mxu0 0
        %1317 = vmatmul.mubr.bf16.gmra.mrb[0].mxu0 %v1207
        %v1318 = vpop.f32.mrb[0].mxu0
        %v1319 = vadd.f32 0.0, %v1318
        %v1320 = vpop.f32.mrb[0].mxu0
        %v1321 = vpop.f32.mrb[0].mxu0
        %v1322 = vadd.f32 0.0, %v1321
        %v1323 = vpop.f32.mrb[0].mxu0
        %1324 = vmatprep.mubr.bf16.mxu0 0
        %1325 = vmatmul.mubr.bf16.gmra.mrb[0].mxu0 %v1208
        %v1326 = vpop.f32.mrb[0].mxu0
        %v1327 = vadd.f32 0.0, %v1326
        %v1328 = vpop.f32.mrb[0].mxu0
        %v1329 = vpop.f32.mrb[0].mxu0
        %v1330 = vadd.f32 0.0, %v1329
        %v1331 = vpop.f32.mrb[0].mxu0
        %1332 = vmatprep.mubr.bf16.mxu0 0
        %1333 = vmatmul.mubr.bf16.gmra.mrb[0].mxu0 %v1209
        %v1334 = vpop.f32.mrb[0].mxu0
        %v1335 = vadd.f32 0.0, %v1334
        %v1336 = vpop.f32.mrb[0].mxu0
        %v1337 = vpop.f32.mrb[0].mxu0
        %v1338 = vadd.f32 0.0, %v1337
        %v1339 = vpop.f32.mrb[0].mxu0
        %1340 = vmatprep.mubr.bf16.mxu0 0
        %1341 = vmatmul.mubr.bf16.gmra.mrb[0].mxu0 %v1210
        %v1342 = vpop.f32.mrb[0].mxu0
        %v1343 = vadd.f32 0.0, %v1342
        %v1344 = vpop.f32.mrb[0].mxu0
        %v1345 = vpop.f32.mrb[0].mxu0
        %v1346 = vadd.f32 0.0, %v1345
        %v1347 = vpop.f32.mrb[0].mxu0
        %1348 = vmatprep.mubr.bf16.mxu0 0
        %1349 = vmatmul.mubr.bf16.gmra.mrb[0].mxu0 %v1211
        %v1350 = vpop.f32.mrb[0].mxu0
        %v1351 = vadd.f32 0.0, %v1350
        %v1352 = vpop.f32.mrb[0].mxu0
        %v1353 = vpop.f32.mrb[0].mxu0
        %v1354 = vadd.f32 0.0, %v1353
        %v1355 = vpop.f32.mrb[0].mxu0
        %1356 = vdwg.mxu0
        %v1357 = vadd.f32 %v1188, %v1295
        %v1358 = vadd.f32 %v1189, %v1298
        %v1359 = vadd.f32 %v1190, %v1303
        %v1360 = vadd.f32 %v1191, %v1306
        %v1361 = vadd.f32 %v1192, %v1311
        %v1362 = vadd.f32 %v1193, %v1314
        %v1363 = vadd.f32 %v1194, %v1319
        %v1364 = vadd.f32 %v1195, %v1322
        %v1365 = vadd.f32 %v1196, %v1327
        %v1366 = vadd.f32 %v1197, %v1330
        %v1367 = vadd.f32 %v1198, %v1335
        %v1368 = vadd.f32 %v1199, %v1338
        %v1369 = vadd.f32 %v1200, %v1343
        %v1370 = vadd.f32 %v1201, %v1346
        %v1371 = vadd.f32 %v1202, %v1351
        %v1372 = vadd.f32 %v1203, %v1354
        %vm1373 = vcmask 261120
        %1374 = vst.msk [vmem:[#allocation4] sm:$0xff] %vm1373, %v1357
        %1375 = vst.msk [vmem:[#allocation4 + $0x8] sm:$0xff] %vm1373, %v1358
        %1376 = vst.msk [vmem:[#allocation4 + $0x10] sm:$0xff] %vm1373, %v1359
        %1377 = vst.msk [vmem:[#allocation4 + $0x18] sm:$0xff] %vm1373, %v1360
        %1378 = vst.msk [vmem:[#allocation4 + $0x20] sm:$0xff] %vm1373, %v1361
        %1379 = vst.msk [vmem:[#allocation4 + $0x28] sm:$0xff] %vm1373, %v1362
        %1380 = vst.msk [vmem:[#allocation4 + $0x30] sm:$0xff] %vm1373, %v1363
        %1381 = vst.msk [vmem:[#allocation4 + $0x38] sm:$0xff] %vm1373, %v1364
        %1382 = vst.msk [vmem:[#allocation4 + $0x40] sm:$0xff] %vm1373, %v1365
        %1383 = vst.msk [vmem:[#allocation4 + $0x48] sm:$0xff] %vm1373, %v1366
        %1384 = vst.msk [vmem:[#allocation4 + $0x50] sm:$0xff] %vm1373, %v1367
        %1385 = vst.msk [vmem:[#allocation4 + $0x58] sm:$0xff] %vm1373, %v1368
        %1386 = vst.msk [vmem:[#allocation4 + $0x60] sm:$0xff] %vm1373, %v1369
        %1387 = vst.msk [vmem:[#allocation4 + $0x68] sm:$0xff] %vm1373, %v1370
        %1388 = vst.msk [vmem:[#allocation4 + $0x70] sm:$0xff] %vm1373, %v1371
        %1389 = vst.msk [vmem:[#allocation4 + $0x78] sm:$0xff] %vm1373, %v1372
        %1390 = vst.msk [vmem:[#allocation2] sm:$0xff] %vm1075, %v787
        %1391 = vst.msk [vmem:[#allocation2 + $0x8] sm:$0xff] %vm1075, %v788
        %1392 = vst.msk [vmem:[#allocation2 + $0x10] sm:$0xff] %vm1075, %v789
        %1393 = vst.msk [vmem:[#allocation2 + $0x18] sm:$0xff] %vm1075, %v790
        %1394 = vst.msk [vmem:[#allocation2 + $0x20] sm:$0xff] %vm1075, %v791
        %1395 = vst.msk [vmem:[#allocation2 + $0x28] sm:$0xff] %vm1075, %v792
        %1396 = vst.msk [vmem:[#allocation2 + $0x30] sm:$0xff] %vm1075, %v793
        %1397 = vst.msk [vmem:[#allocation2 + $0x38] sm:$0xff] %vm1075, %v794
        %1398 = vst.msk [vmem:[#allocation2 + $0x40] sm:$0xff] %vm1075, %v795
        %1399 = vst.msk [vmem:[#allocation2 + $0x48] sm:$0xff] %vm1075, %v796
        %1400 = vst.msk [vmem:[#allocation2 + $0x50] sm:$0xff] %vm1075, %v797
        %1401 = vst.msk [vmem:[#allocation2 + $0x58] sm:$0xff] %vm1075, %v798
        %1402 = vst.msk [vmem:[#allocation2 + $0x60] sm:$0xff] %vm1075, %v799
        %1403 = vst.msk [vmem:[#allocation2 + $0x68] sm:$0xff] %vm1075, %v800
        %1404 = vst.msk [vmem:[#allocation2 + $0x70] sm:$0xff] %vm1075, %v801
        %1405 = vst.msk [vmem:[#allocation2 + $0x78] sm:$0xff] %vm1075, %v802
        %1406 = vset.pattern.permute.xlu0 1
        %1407 = vperm.xlu0 %1406, %v494
        %v1408 = vpop.permute.xlu0 %1407
        %1410 = vset.pattern.permute.xlu0 1
        %1411 = vperm.xlu0 %1410, %v495
        %v1412 = vpop.permute.xlu0 %1411
        %1414 = vset.pattern.permute.xlu0 1
        %1415 = vperm.xlu0 %1414, %v496
        %v1416 = vpop.permute.xlu0 %1415
        %1418 = vset.pattern.permute.xlu0 1
        %1419 = vperm.xlu0 %1418, %v497
        %v1420 = vpop.permute.xlu0 %1419
        %1422 = vset.pattern.permute.xlu0 1
        %1423 = vperm.xlu0 %1422, %v498
        %v1424 = vpop.permute.xlu0 %1423
        %1426 = vset.pattern.permute.xlu0 1
        %1427 = vperm.xlu0 %1426, %v499
        %v1428 = vpop.permute.xlu0 %1427
        %1430 = vset.pattern.permute.xlu0 1
        %1431 = vperm.xlu0 %1430, %v500
        %v1432 = vpop.permute.xlu0 %1431
        %1434 = vset.pattern.permute.xlu0 1
        %1435 = vperm.xlu0 %1434, %v501
        %v1436 = vpop.permute.xlu0 %1435
        %1438 = vset.pattern.permute.xlu0 1
        %1439 = vperm.xlu0 %1438, %v502
        %v1440 = vpop.permute.xlu0 %1439
        %1442 = vset.pattern.permute.xlu0 1
        %1443 = vperm.xlu0 %1442, %v503
        %v1444 = vpop.permute.xlu0 %1443
        %1446 = vset.pattern.permute.xlu0 1
        %1447 = vperm.xlu0 %1446, %v504
        %v1448 = vpop.permute.xlu0 %1447
        %1450 = vset.pattern.permute.xlu0 1
        %1451 = vperm.xlu0 %1450, %v505
        %v1452 = vpop.permute.xlu0 %1451
        %1454 = vset.pattern.permute.xlu0 1
        %1455 = vperm.xlu0 %1454, %v506
        %v1456 = vpop.permute.xlu0 %1455
        %1458 = vset.pattern.permute.xlu0 1
        %1459 = vperm.xlu0 %1458, %v507
        %v1460 = vpop.permute.xlu0 %1459
        %1462 = vset.pattern.permute.xlu0 1
        %1463 = vperm.xlu0 %1462, %v508
        %v1464 = vpop.permute.xlu0 %1463
        %1466 = vset.pattern.permute.xlu0 1
        %1467 = vperm.xlu0 %1466, %v509
        %v1468 = vpop.permute.xlu0 %1467
        %v1470 = vlaneseq
        %v1471 = vshrl.u32 %v1470, 7
        %v1472 = vsub.s32 1, %v1471
        %v1473 = vrot.slane %v510, %v1472
        %v1474 = vadd.f32 %v1408, %v1473
        %v1475 = vadd.f32 %v1412, %v1473
        %v1476 = vadd.f32 %v1416, %v1473
        %v1477 = vadd.f32 %v1420, %v1473
        %v1478 = vadd.f32 %v1424, %v1473
        %v1479 = vadd.f32 %v1428, %v1473
        %v1480 = vadd.f32 %v1432, %v1473
        %v1481 = vadd.f32 %v1436, %v1473
        %v1482 = vadd.f32 %v1440, %v1473
        %v1483 = vadd.f32 %v1444, %v1473
        %v1484 = vadd.f32 %v1448, %v1473
        %v1485 = vadd.f32 %v1452, %v1473
        %v1486 = vadd.f32 %v1456, %v1473
        %v1487 = vadd.f32 %v1460, %v1473
        %v1488 = vadd.f32 %v1464, %v1473
        %v1489 = vadd.f32 %v1468, %v1473
        %vm1490 = vcmp.gt.f32.partialorder %v1474, 0.0
        %vm1491 = vcmp.gt.f32.partialorder %v1475, 0.0
        %vm1492 = vcmp.gt.f32.partialorder %v1476, 0.0
        %vm1493 = vcmp.gt.f32.partialorder %v1477, 0.0
        %vm1494 = vcmp.gt.f32.partialorder %v1478, 0.0
        %vm1495 = vcmp.gt.f32.partialorder %v1479, 0.0
        %vm1496 = vcmp.gt.f32.partialorder %v1480, 0.0
        %vm1497 = vcmp.gt.f32.partialorder %v1481, 0.0
        %vm1498 = vcmp.gt.f32.partialorder %v1482, 0.0
        %vm1499 = vcmp.gt.f32.partialorder %v1483, 0.0
        %vm1500 = vcmp.gt.f32.partialorder %v1484, 0.0
        %vm1501 = vcmp.gt.f32.partialorder %v1485, 0.0
        %vm1502 = vcmp.gt.f32.partialorder %v1486, 0.0
        %vm1503 = vcmp.gt.f32.partialorder %v1487, 0.0
        %vm1504 = vcmp.gt.f32.partialorder %v1488, 0.0
        %vm1505 = vcmp.gt.f32.partialorder %v1489, 0.0
        %v1506 = vmul.f32 %v1474, 0.2
        %v1507 = vmul.f32 %v1475, 0.2
        %v1508 = vmul.f32 %v1476, 0.2
        %v1509 = vmul.f32 %v1477, 0.2
        %v1510 = vmul.f32 %v1478, 0.2
        %v1511 = vmul.f32 %v1479, 0.2
        %v1512 = vmul.f32 %v1480, 0.2
        %v1513 = vmul.f32 %v1481, 0.2
        %v1514 = vmul.f32 %v1482, 0.2
        %v1515 = vmul.f32 %v1483, 0.2
        %v1516 = vmul.f32 %v1484, 0.2
        %v1517 = vmul.f32 %v1485, 0.2
        %v1518 = vmul.f32 %v1486, 0.2
        %v1519 = vmul.f32 %v1487, 0.2
        %v1520 = vmul.f32 %v1488, 0.2
        %v1521 = vmul.f32 %v1489, 0.2
        %v1522 = vsel %vm1490, %v1474, %v1506
        %v1523 = vsel %vm1491, %v1475, %v1507
        %v1524 = vsel %vm1492, %v1476, %v1508
        %v1525 = vsel %vm1493, %v1477, %v1509
        %v1526 = vsel %vm1494, %v1478, %v1510
        %v1527 = vsel %vm1495, %v1479, %v1511
        %v1528 = vsel %vm1496, %v1480, %v1512
        %v1529 = vsel %vm1497, %v1481, %v1513
        %v1530 = vsel %vm1498, %v1482, %v1514
        %v1531 = vsel %vm1499, %v1483, %v1515
        %v1532 = vsel %vm1500, %v1484, %v1516
        %v1533 = vsel %vm1501, %v1485, %v1517
        %v1534 = vsel %vm1502, %v1486, %v1518
        %v1535 = vsel %vm1503, %v1487, %v1519
        %v1536 = vsel %vm1504, %v1488, %v1520
        %v1537 = vsel %vm1505, %v1489, %v1521
        %v1538 = vsel %vm707, %v1522, -1e+30
        %v1539 = vsel %vm708, %v1523, -1e+30
        %v1540 = vsel %vm709, %v1524, -1e+30
        %v1541 = vsel %vm710, %v1525, -1e+30
        %v1542 = vsel %vm711, %v1526, -1e+30
        %v1543 = vsel %vm712, %v1527, -1e+30
        %v1544 = vsel %vm713, %v1528, -1e+30
        %v1545 = vsel %vm714, %v1529, -1e+30
        %v1546 = vsel %vm715, %v1530, -1e+30
        %v1547 = vsel %vm716, %v1531, -1e+30
        %v1548 = vsel %vm717, %v1532, -1e+30
        %v1549 = vsel %vm718, %v1533, -1e+30
        %v1550 = vsel %vm719, %v1534, -1e+30
        %v1551 = vsel %vm720, %v1535, -1e+30
        %v1552 = vsel %vm721, %v1536, -1e+30
        %v1553 = vsel %vm722, %v1537, -1e+30
        %v1554 = vld [vmem:[#allocation2] sm:$0xff]
        %v1555 = vld [vmem:[#allocation2 + $0x8] sm:$0xff]
        %v1556 = vld [vmem:[#allocation2 + $0x10] sm:$0xff]
        %v1557 = vld [vmem:[#allocation2 + $0x18] sm:$0xff]
        %v1558 = vld [vmem:[#allocation2 + $0x20] sm:$0xff]
        %v1559 = vld [vmem:[#allocation2 + $0x28] sm:$0xff]
        %v1560 = vld [vmem:[#allocation2 + $0x30] sm:$0xff]
        %v1561 = vld [vmem:[#allocation2 + $0x38] sm:$0xff]
        %v1562 = vld [vmem:[#allocation2 + $0x40] sm:$0xff]
        %v1563 = vld [vmem:[#allocation2 + $0x48] sm:$0xff]
        %v1564 = vld [vmem:[#allocation2 + $0x50] sm:$0xff]
        %v1565 = vld [vmem:[#allocation2 + $0x58] sm:$0xff]
        %v1566 = vld [vmem:[#allocation2 + $0x60] sm:$0xff]
        %v1567 = vld [vmem:[#allocation2 + $0x68] sm:$0xff]
        %v1568 = vld [vmem:[#allocation2 + $0x70] sm:$0xff]
        %v1569 = vld [vmem:[#allocation2 + $0x78] sm:$0xff]
        %1570 = vmax.xlane.f32.xlu0 %v1538
        %v1571 = vpop.xlane.xlu0 %1570
        %1572 = vmax.xlane.f32.xlu0 %v1539
        %v1573 = vpop.xlane.xlu0 %1572
        %1574 = vmax.xlane.f32.xlu0 %v1540
        %v1575 = vpop.xlane.xlu0 %1574
        %1576 = vmax.xlane.f32.xlu0 %v1541
        %v1577 = vpop.xlane.xlu0 %1576
        %1578 = vmax.xlane.f32.xlu0 %v1542
        %v1579 = vpop.xlane.xlu0 %1578
        %1580 = vmax.xlane.f32.xlu0 %v1543
        %v1581 = vpop.xlane.xlu0 %1580
        %1582 = vmax.xlane.f32.xlu0 %v1544
        %v1583 = vpop.xlane.xlu0 %1582
        %1584 = vmax.xlane.f32.xlu0 %v1545
        %v1585 = vpop.xlane.xlu0 %1584
        %1586 = vmax.xlane.f32.xlu0 %v1546
        %v1587 = vpop.xlane.xlu0 %1586
        %1588 = vmax.xlane.f32.xlu0 %v1547
        %v1589 = vpop.xlane.xlu0 %1588
        %1590 = vmax.xlane.f32.xlu0 %v1548
        %v1591 = vpop.xlane.xlu0 %1590
        %1592 = vmax.xlane.f32.xlu0 %v1549
        %v1593 = vpop.xlane.xlu0 %1592
        %1594 = vmax.xlane.f32.xlu0 %v1550
        %v1595 = vpop.xlane.xlu0 %1594
        %1596 = vmax.xlane.f32.xlu0 %v1551
        %v1597 = vpop.xlane.xlu0 %1596
        %1598 = vmax.xlane.f32.xlu0 %v1552
        %v1599 = vpop.xlane.xlu0 %1598
        %1600 = vmax.xlane.f32.xlu0 %v1553
        %v1601 = vpop.xlane.xlu0 %1600
        %v1602 = vmax.f32 %v1554, %v1571
        %v1603 = vmax.f32 %v1555, %v1573
        %v1604 = vmax.f32 %v1556, %v1575
        %v1605 = vmax.f32 %v1557, %v1577
        %v1606 = vmax.f32 %v1558, %v1579
        %v1607 = vmax.f32 %v1559, %v1581
        %v1608 = vmax.f32 %v1560, %v1583
        %v1609 = vmax.f32 %v1561, %v1585
        %v1610 = vmax.f32 %v1562, %v1587
        %v1611 = vmax.f32 %v1563, %v1589
        %v1612 = vmax.f32 %v1564, %v1591
        %v1613 = vmax.f32 %v1565, %v1593
        %v1614 = vmax.f32 %v1566, %v1595
        %v1615 = vmax.f32 %v1567, %v1597
        %v1616 = vmax.f32 %v1568, %v1599
        %v1617 = vmax.f32 %v1569, %v1601
        %v1618 = vsub.f32 %v1554, %v1602
        %v1619 = vsub.f32 %v1555, %v1603
        %v1620 = vsub.f32 %v1556, %v1604
        %v1621 = vsub.f32 %v1557, %v1605
        %v1622 = vsub.f32 %v1558, %v1606
        %v1623 = vsub.f32 %v1559, %v1607
        %v1624 = vsub.f32 %v1560, %v1608
        %v1625 = vsub.f32 %v1561, %v1609
        %v1626 = vsub.f32 %v1562, %v1610
        %v1627 = vsub.f32 %v1563, %v1611
        %v1628 = vsub.f32 %v1564, %v1612
        %v1629 = vsub.f32 %v1565, %v1613
        %v1630 = vsub.f32 %v1566, %v1614
        %v1631 = vsub.f32 %v1567, %v1615
        %v1632 = vsub.f32 %v1568, %v1616
        %v1633 = vsub.f32 %v1569, %v1617
        %v1634 = vmul.f32 %v1618, 1.442695
        %v1635 = vpow.pop %v1634
        %v1636 = vmul.f32 %v1619, 1.442695
        %v1637 = vpow.pop %v1636
        %v1638 = vmul.f32 %v1620, 1.442695
        %v1639 = vpow.pop %v1638
        %v1640 = vmul.f32 %v1621, 1.442695
        %v1641 = vpow.pop %v1640
        %v1642 = vmul.f32 %v1622, 1.442695
        %v1643 = vpow.pop %v1642
        %v1644 = vmul.f32 %v1623, 1.442695
        %v1645 = vpow.pop %v1644
        %v1646 = vmul.f32 %v1624, 1.442695
        %v1647 = vpow.pop %v1646
        %v1648 = vmul.f32 %v1625, 1.442695
        %v1649 = vpow.pop %v1648
        %v1650 = vmul.f32 %v1626, 1.442695
        %v1651 = vpow.pop %v1650
        %v1652 = vmul.f32 %v1627, 1.442695
        %v1653 = vpow.pop %v1652
        %v1654 = vmul.f32 %v1628, 1.442695
        %v1655 = vpow.pop %v1654
        %v1656 = vmul.f32 %v1629, 1.442695
        %v1657 = vpow.pop %v1656
        %v1658 = vmul.f32 %v1630, 1.442695
        %v1659 = vpow.pop %v1658
        %v1660 = vmul.f32 %v1631, 1.442695
        %v1661 = vpow.pop %v1660
        %v1662 = vmul.f32 %v1632, 1.442695
        %v1663 = vpow.pop %v1662
        %v1664 = vmul.f32 %v1633, 1.442695
        %v1665 = vpow.pop %v1664
        %1667 = vset.pattern.permute.xlu0 1
        %1668 = vperm.xlu0 %1667, %v1602
        %v1669 = vpop.permute.xlu0 %1668
        %1672 = vset.pattern.permute.xlu0 1
        %1673 = vperm.xlu0 %1672, %v1603
        %v1674 = vpop.permute.xlu0 %1673
        %1677 = vset.pattern.permute.xlu0 1
        %1678 = vperm.xlu0 %1677, %v1604
        %v1679 = vpop.permute.xlu0 %1678
        %1682 = vset.pattern.permute.xlu0 1
        %1683 = vperm.xlu0 %1682, %v1605
        %v1684 = vpop.permute.xlu0 %1683
        %1687 = vset.pattern.permute.xlu0 1
        %1688 = vperm.xlu0 %1687, %v1606
        %v1689 = vpop.permute.xlu0 %1688
        %1692 = vset.pattern.permute.xlu0 1
        %1693 = vperm.xlu0 %1692, %v1607
        %v1694 = vpop.permute.xlu0 %1693
        %1697 = vset.pattern.permute.xlu0 1
        %1698 = vperm.xlu0 %1697, %v1608
        %v1699 = vpop.permute.xlu0 %1698
        %1702 = vset.pattern.permute.xlu0 1
        %1703 = vperm.xlu0 %1702, %v1609
        %v1704 = vpop.permute.xlu0 %1703
        %1707 = vset.pattern.permute.xlu0 1
        %1708 = vperm.xlu0 %1707, %v1610
        %v1709 = vpop.permute.xlu0 %1708
        %1712 = vset.pattern.permute.xlu0 1
        %1713 = vperm.xlu0 %1712, %v1611
        %v1714 = vpop.permute.xlu0 %1713
        %1717 = vset.pattern.permute.xlu0 1
        %1718 = vperm.xlu0 %1717, %v1612
        %v1719 = vpop.permute.xlu0 %1718
        %1722 = vset.pattern.permute.xlu0 1
        %1723 = vperm.xlu0 %1722, %v1613
        %v1724 = vpop.permute.xlu0 %1723
        %1727 = vset.pattern.permute.xlu0 1
        %1728 = vperm.xlu0 %1727, %v1614
        %v1729 = vpop.permute.xlu0 %1728
        %1732 = vset.pattern.permute.xlu0 1
        %1733 = vperm.xlu0 %1732, %v1615
        %v1734 = vpop.permute.xlu0 %1733
        %1737 = vset.pattern.permute.xlu0 1
        %1738 = vperm.xlu0 %1737, %v1616
        %v1739 = vpop.permute.xlu0 %1738
        %1742 = vset.pattern.permute.xlu0 1
        %1743 = vperm.xlu0 %1742, %v1617
        %v1744 = vpop.permute.xlu0 %1743
        %v1746 = vsub.f32 %v1538, %v1669
        %v1747 = vsub.f32 %v1539, %v1674
        %v1748 = vsub.f32 %v1540, %v1679
        %v1749 = vsub.f32 %v1541, %v1684
        %v1750 = vsub.f32 %v1542, %v1689
        %v1751 = vsub.f32 %v1543, %v1694
        %v1752 = vsub.f32 %v1544, %v1699
        %v1753 = vsub.f32 %v1545, %v1704
        %v1754 = vsub.f32 %v1546, %v1709
        %v1755 = vsub.f32 %v1547, %v1714
        %v1756 = vsub.f32 %v1548, %v1719
        %v1757 = vsub.f32 %v1549, %v1724
        %v1758 = vsub.f32 %v1550, %v1729
        %v1759 = vsub.f32 %v1551, %v1734
        %v1760 = vsub.f32 %v1552, %v1739
        %v1761 = vsub.f32 %v1553, %v1744
        %v1762 = vmul.f32 %v1746, 1.442695
        %v1763 = vpow.pop %v1762
        %v1764 = vmul.f32 %v1747, 1.442695
        %v1765 = vpow.pop %v1764
        %v1766 = vmul.f32 %v1748, 1.442695
        %v1767 = vpow.pop %v1766
        %v1768 = vmul.f32 %v1749, 1.442695
        %v1769 = vpow.pop %v1768
        %v1770 = vmul.f32 %v1750, 1.442695
        %v1771 = vpow.pop %v1770
        %v1772 = vmul.f32 %v1751, 1.442695
        %v1773 = vpow.pop %v1772
        %v1774 = vmul.f32 %v1752, 1.442695
        %v1775 = vpow.pop %v1774
        %v1776 = vmul.f32 %v1753, 1.442695
        %v1777 = vpow.pop %v1776
        %v1778 = vmul.f32 %v1754, 1.442695
        %v1779 = vpow.pop %v1778
        %v1780 = vmul.f32 %v1755, 1.442695
        %v1781 = vpow.pop %v1780
        %v1782 = vmul.f32 %v1756, 1.442695
        %v1783 = vpow.pop %v1782
        %v1784 = vmul.f32 %v1757, 1.442695
        %v1785 = vpow.pop %v1784
        %v1786 = vmul.f32 %v1758, 1.442695
        %v1787 = vpow.pop %v1786
        %v1788 = vmul.f32 %v1759, 1.442695
        %v1789 = vpow.pop %v1788
        %v1790 = vmul.f32 %v1760, 1.442695
        %v1791 = vpow.pop %v1790
        %v1792 = vmul.f32 %v1761, 1.442695
        %v1793 = vpow.pop %v1792
        %v1794 = vsel %vm707, %v1763, 0.0
        %v1795 = vsel %vm708, %v1765, 0.0
        %v1796 = vsel %vm709, %v1767, 0.0
        %v1797 = vsel %vm710, %v1769, 0.0
        %v1798 = vsel %vm711, %v1771, 0.0
        %v1799 = vsel %vm712, %v1773, 0.0
        %v1800 = vsel %vm713, %v1775, 0.0
        %v1801 = vsel %vm714, %v1777, 0.0
        %v1802 = vsel %vm715, %v1779, 0.0
        %v1803 = vsel %vm716, %v1781, 0.0
        %v1804 = vsel %vm717, %v1783, 0.0
        %v1805 = vsel %vm718, %v1785, 0.0
        %v1806 = vsel %vm719, %v1787, 0.0
        %v1807 = vsel %vm720, %v1789, 0.0
        %v1808 = vsel %vm721, %v1791, 0.0
        %v1809 = vsel %vm722, %v1793, 0.0
        %v1810 = vld [vmem:[#allocation3] sm:$0xff]
        %v1811 = vld [vmem:[#allocation3 + $0x8] sm:$0xff]
        %v1812 = vld [vmem:[#allocation3 + $0x10] sm:$0xff]
        %v1813 = vld [vmem:[#allocation3 + $0x18] sm:$0xff]
        %v1814 = vld [vmem:[#allocation3 + $0x20] sm:$0xff]
        %v1815 = vld [vmem:[#allocation3 + $0x28] sm:$0xff]
        %v1816 = vld [vmem:[#allocation3 + $0x30] sm:$0xff]
        %v1817 = vld [vmem:[#allocation3 + $0x38] sm:$0xff]
        %v1818 = vld [vmem:[#allocation3 + $0x40] sm:$0xff]
        %v1819 = vld [vmem:[#allocation3 + $0x48] sm:$0xff]
        %v1820 = vld [vmem:[#allocation3 + $0x50] sm:$0xff]
        %v1821 = vld [vmem:[#allocation3 + $0x58] sm:$0xff]
        %v1822 = vld [vmem:[#allocation3 + $0x60] sm:$0xff]
        %v1823 = vld [vmem:[#allocation3 + $0x68] sm:$0xff]
        %v1824 = vld [vmem:[#allocation3 + $0x70] sm:$0xff]
        %v1825 = vld [vmem:[#allocation3 + $0x78] sm:$0xff]
        %v1826 = vmul.f32 %v1635, %v1810
        %v1827 = vmul.f32 %v1637, %v1811
        %v1828 = vmul.f32 %v1639, %v1812
        %v1829 = vmul.f32 %v1641, %v1813
        %v1830 = vmul.f32 %v1643, %v1814
        %v1831 = vmul.f32 %v1645, %v1815
        %v1832 = vmul.f32 %v1647, %v1816
        %v1833 = vmul.f32 %v1649, %v1817
        %v1834 = vmul.f32 %v1651, %v1818
        %v1835 = vmul.f32 %v1653, %v1819
        %v1836 = vmul.f32 %v1655, %v1820
        %v1837 = vmul.f32 %v1657, %v1821
        %v1838 = vmul.f32 %v1659, %v1822
        %v1839 = vmul.f32 %v1661, %v1823
        %v1840 = vmul.f32 %v1663, %v1824
        %v1841 = vmul.f32 %v1665, %v1825
        %1842 = vadd.xlane.f32.xlu0 %v1794
        %v1843 = vpop.xlane.xlu0 %1842
        %1844 = vadd.xlane.f32.xlu0 %v1795
        %v1845 = vpop.xlane.xlu0 %1844
        %1846 = vadd.xlane.f32.xlu0 %v1796
        %v1847 = vpop.xlane.xlu0 %1846
        %1848 = vadd.xlane.f32.xlu0 %v1797
        %v1849 = vpop.xlane.xlu0 %1848
        %1850 = vadd.xlane.f32.xlu0 %v1798
        %v1851 = vpop.xlane.xlu0 %1850
        %1852 = vadd.xlane.f32.xlu0 %v1799
        %v1853 = vpop.xlane.xlu0 %1852
        %1854 = vadd.xlane.f32.xlu0 %v1800
        %v1855 = vpop.xlane.xlu0 %1854
        %1856 = vadd.xlane.f32.xlu0 %v1801
        %v1857 = vpop.xlane.xlu0 %1856
        %1858 = vadd.xlane.f32.xlu0 %v1802
        %v1859 = vpop.xlane.xlu0 %1858
        %1860 = vadd.xlane.f32.xlu0 %v1803
        %v1861 = vpop.xlane.xlu0 %1860
        %1862 = vadd.xlane.f32.xlu0 %v1804
        %v1863 = vpop.xlane.xlu0 %1862
        %1864 = vadd.xlane.f32.xlu0 %v1805
        %v1865 = vpop.xlane.xlu0 %1864
        %1866 = vadd.xlane.f32.xlu0 %v1806
        %v1867 = vpop.xlane.xlu0 %1866
        %1868 = vadd.xlane.f32.xlu0 %v1807
        %v1869 = vpop.xlane.xlu0 %1868
        %1870 = vadd.xlane.f32.xlu0 %v1808
        %v1871 = vpop.xlane.xlu0 %1870
        %1872 = vadd.xlane.f32.xlu0 %v1809
        %v1873 = vpop.xlane.xlu0 %1872
        %v1874 = vadd.f32 %v1826, %v1843
        %v1875 = vadd.f32 %v1827, %v1845
        %v1876 = vadd.f32 %v1828, %v1847
        %v1877 = vadd.f32 %v1829, %v1849
        %v1878 = vadd.f32 %v1830, %v1851
        %v1879 = vadd.f32 %v1831, %v1853
        %v1880 = vadd.f32 %v1832, %v1855
        %v1881 = vadd.f32 %v1833, %v1857
        %v1882 = vadd.f32 %v1834, %v1859
        %v1883 = vadd.f32 %v1835, %v1861
        %v1884 = vadd.f32 %v1836, %v1863
        %v1885 = vadd.f32 %v1837, %v1865
        %v1886 = vadd.f32 %v1838, %v1867
        %v1887 = vadd.f32 %v1839, %v1869
        %v1888 = vadd.f32 %v1840, %v1871
        %v1889 = vadd.f32 %v1841, %v1873
        %vm1890 = vcmask 15368
        %1891 = vst.msk [vmem:[#allocation3] sm:$0xff] %vm1890, %v1874
        %1892 = vst.msk [vmem:[#allocation3 + $0x8] sm:$0xff] %vm1890, %v1875
        %1893 = vst.msk [vmem:[#allocation3 + $0x10] sm:$0xff] %vm1890, %v1876
        %1894 = vst.msk [vmem:[#allocation3 + $0x18] sm:$0xff] %vm1890, %v1877
        %1895 = vst.msk [vmem:[#allocation3 + $0x20] sm:$0xff] %vm1890, %v1878
        %1896 = vst.msk [vmem:[#allocation3 + $0x28] sm:$0xff] %vm1890, %v1879
        %1897 = vst.msk [vmem:[#allocation3 + $0x30] sm:$0xff] %vm1890, %v1880
        %1898 = vst.msk [vmem:[#allocation3 + $0x38] sm:$0xff] %vm1890, %v1881
        %1899 = vst.msk [vmem:[#allocation3 + $0x40] sm:$0xff] %vm1890, %v1882
        %1900 = vst.msk [vmem:[#allocation3 + $0x48] sm:$0xff] %vm1890, %v1883
        %1901 = vst.msk [vmem:[#allocation3 + $0x50] sm:$0xff] %vm1890, %v1884
        %1902 = vst.msk [vmem:[#allocation3 + $0x58] sm:$0xff] %vm1890, %v1885
        %1903 = vst.msk [vmem:[#allocation3 + $0x60] sm:$0xff] %vm1890, %v1886
        %1904 = vst.msk [vmem:[#allocation3 + $0x68] sm:$0xff] %vm1890, %v1887
        %1905 = vst.msk [vmem:[#allocation3 + $0x70] sm:$0xff] %vm1890, %v1888
        %1906 = vst.msk [vmem:[#allocation3 + $0x78] sm:$0xff] %vm1890, %v1889
        %v1907 = vld [vmem:[#allocation4] sm:$0xff]
        %v1908 = vld [vmem:[#allocation4 + $0x8] sm:$0xff]
        %v1909 = vld [vmem:[#allocation4 + $0x10] sm:$0xff]
        %v1910 = vld [vmem:[#allocation4 + $0x18] sm:$0xff]
        %v1911 = vld [vmem:[#allocation4 + $0x20] sm:$0xff]
        %v1912 = vld [vmem:[#allocation4 + $0x28] sm:$0xff]
        %v1913 = vld [vmem:[#allocation4 + $0x30] sm:$0xff]
        %v1914 = vld [vmem:[#allocation4 + $0x38] sm:$0xff]
        %v1915 = vld [vmem:[#allocation4 + $0x40] sm:$0xff]
        %v1916 = vld [vmem:[#allocation4 + $0x48] sm:$0xff]
        %v1917 = vld [vmem:[#allocation4 + $0x50] sm:$0xff]
        %v1918 = vld [vmem:[#allocation4 + $0x58] sm:$0xff]
        %v1919 = vld [vmem:[#allocation4 + $0x60] sm:$0xff]
        %v1920 = vld [vmem:[#allocation4 + $0x68] sm:$0xff]
        %v1921 = vld [vmem:[#allocation4 + $0x70] sm:$0xff]
        %v1922 = vld [vmem:[#allocation4 + $0x78] sm:$0xff]
        %1924 = vset.pattern.permute.xlu0 1
        %1925 = vperm.xlu0 %1924, %v1635
        %v1926 = vpop.permute.xlu0 %1925
        %1929 = vset.pattern.permute.xlu0 1
        %1930 = vperm.xlu0 %1929, %v1637
        %v1931 = vpop.permute.xlu0 %1930
        %1934 = vset.pattern.permute.xlu0 1
        %1935 = vperm.xlu0 %1934, %v1639
        %v1936 = vpop.permute.xlu0 %1935
        %1939 = vset.pattern.permute.xlu0 1
        %1940 = vperm.xlu0 %1939, %v1641
        %v1941 = vpop.permute.xlu0 %1940
        %1944 = vset.pattern.permute.xlu0 1
        %1945 = vperm.xlu0 %1944, %v1643
        %v1946 = vpop.permute.xlu0 %1945
        %1949 = vset.pattern.permute.xlu0 1
        %1950 = vperm.xlu0 %1949, %v1645
        %v1951 = vpop.permute.xlu0 %1950
        %1954 = vset.pattern.permute.xlu0 1
        %1955 = vperm.xlu0 %1954, %v1647
        %v1956 = vpop.permute.xlu0 %1955
        %1959 = vset.pattern.permute.xlu0 1
        %1960 = vperm.xlu0 %1959, %v1649
        %v1961 = vpop.permute.xlu0 %1960
        %1964 = vset.pattern.permute.xlu0 1
        %1965 = vperm.xlu0 %1964, %v1651
        %v1966 = vpop.permute.xlu0 %1965
        %1969 = vset.pattern.permute.xlu0 1
        %1970 = vperm.xlu0 %1969, %v1653
        %v1971 = vpop.permute.xlu0 %1970
        %1974 = vset.pattern.permute.xlu0 1
        %1975 = vperm.xlu0 %1974, %v1655
        %v1976 = vpop.permute.xlu0 %1975
        %1979 = vset.pattern.permute.xlu0 1
        %1980 = vperm.xlu0 %1979, %v1657
        %v1981 = vpop.permute.xlu0 %1980
        %1984 = vset.pattern.permute.xlu0 1
        %1985 = vperm.xlu0 %1984, %v1659
        %v1986 = vpop.permute.xlu0 %1985
        %1989 = vset.pattern.permute.xlu0 1
        %1990 = vperm.xlu0 %1989, %v1661
        %v1991 = vpop.permute.xlu0 %1990
        %1994 = vset.pattern.permute.xlu0 1
        %1995 = vperm.xlu0 %1994, %v1663
        %v1996 = vpop.permute.xlu0 %1995
        %1999 = vset.pattern.permute.xlu0 1
        %2000 = vperm.xlu0 %1999, %v1665
        %v2001 = vpop.permute.xlu0 %2000
        %v2003 = vmul.f32 %v1926, %v1907
        %v2004 = vmul.f32 %v1931, %v1908
        %v2005 = vmul.f32 %v1936, %v1909
        %v2006 = vmul.f32 %v1941, %v1910
        %v2007 = vmul.f32 %v1946, %v1911
        %v2008 = vmul.f32 %v1951, %v1912
        %v2009 = vmul.f32 %v1956, %v1913
        %v2010 = vmul.f32 %v1961, %v1914
        %v2011 = vmul.f32 %v1966, %v1915
        %v2012 = vmul.f32 %v1971, %v1916
        %v2013 = vmul.f32 %v1976, %v1917
        %v2014 = vmul.f32 %v1981, %v1918
        %v2015 = vmul.f32 %v1986, %v1919
        %v2016 = vmul.f32 %v1991, %v1920
        %v2017 = vmul.f32 %v1996, %v1921
        %v2018 = vmul.f32 %v2001, %v1922
        %v2019 = vpack.c.bf16 %v1795, %v1794
        %v2020 = vpack.c.bf16 %v1797, %v1796
        %v2021 = vpack.c.bf16 %v1799, %v1798
        %v2022 = vpack.c.bf16 %v1801, %v1800
        %v2023 = vpack.c.bf16 %v1803, %v1802
        %v2024 = vpack.c.bf16 %v1805, %v1804
        %v2025 = vpack.c.bf16 %v1807, %v1806
        %v2026 = vpack.c.bf16 %v1809, %v1808
        %2027 = vrot.lane.b32.xlu0 %v1244, 96
        %v2028 = vpop.permute.xlu0 %2027
        %2029 = vrot.lane.b32.xlu0 %v1245, 96
        %v2030 = vpop.permute.xlu0 %2029
        %2031 = vrot.lane.b32.xlu0 %v1246, 96
        %v2032 = vpop.permute.xlu0 %2031
        %2033 = vrot.lane.b32.xlu0 %v1247, 96
        %v2034 = vpop.permute.xlu0 %2033
        %2035 = vrot.lane.b32.xlu0 %v1248, 96
        %v2036 = vpop.permute.xlu0 %2035
        %2037 = vrot.lane.b32.xlu0 %v1249, 96
        %v2038 = vpop.permute.xlu0 %2037
        %2039 = vrot.lane.b32.xlu0 %v1250, 96
        %v2040 = vpop.permute.xlu0 %2039
        %2041 = vrot.lane.b32.xlu0 %v1251, 96
        %v2042 = vpop.permute.xlu0 %2041
        %2051 = vmatprep.subr.bf16.mxu0 0
        %2052 = vmatpush1.bf16.msra.mxu0 %v2028
        %2053 = vmatprep.subr.bf16.mxu0 0
        %2054 = vmatpush1.bf16.msra.mxu0 %v2030
        %2055 = vmatprep.subr.bf16.mxu0 0
        %2056 = vmatpush1.bf16.msra.mxu0 %v2032
        %2057 = vmatprep.subr.bf16.mxu0 0
        %2058 = vmatpush1.bf16.msra.mxu0 %v2034
        %2059 = vmatprep.subr.bf16.mxu0 0
        %2060 = vmatpush1.bf16.msra.mxu0 %v2036
        %2061 = vmatprep.subr.bf16.mxu0 0
        %2062 = vmatpush1.bf16.msra.mxu0 %v2038
        %2063 = vmatprep.subr.bf16.mxu0 0
        %2064 = vmatpush1.bf16.msra.mxu0 %v2040
        %2065 = vmatprep.subr.bf16.mxu0 0
        %2066 = vmatpush1.bf16.msra.mxu0 %v2042
        %2067 = vmatprep.subr.bf16.mxu0 0
        %2068 = vmatpush1.bf16.msra.mxu0 0
        %2069 = vmatprep.subr.bf16.mxu0 0
        %2070 = vmatpush1.bf16.msra.mxu0 0
        %2071 = vmatprep.subr.bf16.mxu0 0
        %2072 = vmatpush1.bf16.msra.mxu0 0
        %2073 = vmatprep.subr.bf16.mxu0 0
        %2074 = vmatpush1.bf16.msra.mxu0 0
        %2075 = vmatprep.subr.bf16.mxu0 0
        %2076 = vmatpush1.bf16.msra.mxu0 0
        %2077 = vmatprep.subr.bf16.mxu0 0
        %2078 = vmatpush1.bf16.msra.mxu0 0
        %2079 = vmatprep.subr.bf16.mxu0 0
        %2080 = vmatpush1.bf16.msra.mxu0 0
        %2081 = vmatprep.subr.bf16.mxu0 0
        %2082 = vmatpush1.bf16.msra.mxu0 0
        %2083 = vmatprep.mubr.bf16.mxu0 0
        %2084 = vmatmul.mubr.bf16.gmra.mrb[0].mxu0 %v2019
        %v2085 = vpop.f32.mrb[0].mxu0
        %v2086 = vadd.f32 0.0, %v2085
        %v2087 = vpop.f32.mrb[0].mxu0
        %v2088 = vpop.f32.mrb[0].mxu0
        %v2089 = vadd.f32 0.0, %v2088
        %v2090 = vpop.f32.mrb[0].mxu0
        %2091 = vmatprep.mubr.bf16.mxu0 0
        %2092 = vmatmul.mubr.bf16.gmra.mrb[0].mxu0 %v2020
        %v2093 = vpop.f32.mrb[0].mxu0
        %v2094 = vadd.f32 0.0, %v2093
        %v2095 = vpop.f32.mrb[0].mxu0
        %v2096 = vpop.f32.mrb[0].mxu0
        %v2097 = vadd.f32 0.0, %v2096
        %v2098 = vpop.f32.mrb[0].mxu0
        %2099 = vmatprep.mubr.bf16.mxu0 0
        %2100 = vmatmul.mubr.bf16.gmra.mrb[0].mxu0 %v2021
        %v2101 = vpop.f32.mrb[0].mxu0
        %v2102 = vadd.f32 0.0, %v2101
        %v2103 = vpop.f32.mrb[0].mxu0
        %v2104 = vpop.f32.mrb[0].mxu0
        %v2105 = vadd.f32 0.0, %v2104
        %v2106 = vpop.f32.mrb[0].mxu0
        %2107 = vmatprep.mubr.bf16.mxu0 0
        %2108 = vmatmul.mubr.bf16.gmra.mrb[0].mxu0 %v2022
        %v2109 = vpop.f32.mrb[0].mxu0
        %v2110 = vadd.f32 0.0, %v2109
        %v2111 = vpop.f32.mrb[0].mxu0
        %v2112 = vpop.f32.mrb[0].mxu0
        %v2113 = vadd.f32 0.0, %v2112
        %v2114 = vpop.f32.mrb[0].mxu0
        %2115 = vmatprep.mubr.bf16.mxu0 0
        %2116 = vmatmul.mubr.bf16.gmra.mrb[0].mxu0 %v2023
        %v2117 = vpop.f32.mrb[0].mxu0
        %v2118 = vadd.f32 0.0, %v2117
        %v2119 = vpop.f32.mrb[0].mxu0
        %v2120 = vpop.f32.mrb[0].mxu0
        %v2121 = vadd.f32 0.0, %v2120
        %v2122 = vpop.f32.mrb[0].mxu0
        %2123 = vmatprep.mubr.bf16.mxu0 0
        %2124 = vmatmul.mubr.bf16.gmra.mrb[0].mxu0 %v2024
        %v2125 = vpop.f32.mrb[0].mxu0
        %v2126 = vadd.f32 0.0, %v2125
        %v2127 = vpop.f32.mrb[0].mxu0
        %v2128 = vpop.f32.mrb[0].mxu0
        %v2129 = vadd.f32 0.0, %v2128
        %v2130 = vpop.f32.mrb[0].mxu0
        %2131 = vmatprep.mubr.bf16.mxu0 0
        %2132 = vmatmul.mubr.bf16.gmra.mrb[0].mxu0 %v2025
        %v2133 = vpop.f32.mrb[0].mxu0
        %v2134 = vadd.f32 0.0, %v2133
        %v2135 = vpop.f32.mrb[0].mxu0
        %v2136 = vpop.f32.mrb[0].mxu0
        %v2137 = vadd.f32 0.0, %v2136
        %v2138 = vpop.f32.mrb[0].mxu0
        %2139 = vmatprep.mubr.bf16.mxu0 0
        %2140 = vmatmul.mubr.bf16.gmra.mrb[0].mxu0 %v2026
        %v2141 = vpop.f32.mrb[0].mxu0
        %v2142 = vadd.f32 0.0, %v2141
        %v2143 = vpop.f32.mrb[0].mxu0
        %v2144 = vpop.f32.mrb[0].mxu0
        %v2145 = vadd.f32 0.0, %v2144
        %v2146 = vpop.f32.mrb[0].mxu0
        %2147 = vdwg.mxu0
        %2164 = vrot.lane.b32.xlu0 %v2086, 32
        %v2165 = vpop.permute.xlu0 %2164
        %2166 = vrot.lane.b32.xlu0 %v2089, 32
        %v2167 = vpop.permute.xlu0 %2166
        %2168 = vrot.lane.b32.xlu0 %v2094, 32
        %v2169 = vpop.permute.xlu0 %2168
        %2170 = vrot.lane.b32.xlu0 %v2097, 32
        %v2171 = vpop.permute.xlu0 %2170
        %2172 = vrot.lane.b32.xlu0 %v2102, 32
        %v2173 = vpop.permute.xlu0 %2172
        %2174 = vrot.lane.b32.xlu0 %v2105, 32
        %v2175 = vpop.permute.xlu0 %2174
        %2176 = vrot.lane.b32.xlu0 %v2110, 32
        %v2177 = vpop.permute.xlu0 %2176
        %2178 = vrot.lane.b32.xlu0 %v2113, 32
        %v2179 = vpop.permute.xlu0 %2178
        %2180 = vrot.lane.b32.xlu0 %v2118, 32
        %v2181 = vpop.permute.xlu0 %2180
        %2182 = vrot.lane.b32.xlu0 %v2121, 32
        %v2183 = vpop.permute.xlu0 %2182
        %2184 = vrot.lane.b32.xlu0 %v2126, 32
        %v2185 = vpop.permute.xlu0 %2184
        %2186 = vrot.lane.b32.xlu0 %v2129, 32
        %v2187 = vpop.permute.xlu0 %2186
        %2188 = vrot.lane.b32.xlu0 %v2134, 32
        %v2189 = vpop.permute.xlu0 %2188
        %2190 = vrot.lane.b32.xlu0 %v2137, 32
        %v2191 = vpop.permute.xlu0 %2190
        %2192 = vrot.lane.b32.xlu0 %v2142, 32
        %v2193 = vpop.permute.xlu0 %2192
        %2194 = vrot.lane.b32.xlu0 %v2145, 32
        %v2195 = vpop.permute.xlu0 %2194
        %v2212 = vadd.f32 %v2003, %v2165
        %v2213 = vadd.f32 %v2004, %v2167
        %v2214 = vadd.f32 %v2005, %v2169
        %v2215 = vadd.f32 %v2006, %v2171
        %v2216 = vadd.f32 %v2007, %v2173
        %v2217 = vadd.f32 %v2008, %v2175
        %v2218 = vadd.f32 %v2009, %v2177
        %v2219 = vadd.f32 %v2010, %v2179
        %v2220 = vadd.f32 %v2011, %v2181
        %v2221 = vadd.f32 %v2012, %v2183
        %v2222 = vadd.f32 %v2013, %v2185
        %v2223 = vadd.f32 %v2014, %v2187
        %v2224 = vadd.f32 %v2015, %v2189
        %v2225 = vadd.f32 %v2016, %v2191
        %v2226 = vadd.f32 %v2017, %v2193
        %v2227 = vadd.f32 %v2018, %v2195
        %vm2228 = vcmask 523520
        %2229 = vst.msk [vmem:[#allocation4] sm:$0xff] %vm2228, %v2212
        %2230 = vst.msk [vmem:[#allocation4 + $0x8] sm:$0xff] %vm2228, %v2213
        %2231 = vst.msk [vmem:[#allocation4 + $0x10] sm:$0xff] %vm2228, %v2214
        %2232 = vst.msk [vmem:[#allocation4 + $0x18] sm:$0xff] %vm2228, %v2215
        %2233 = vst.msk [vmem:[#allocation4 + $0x20] sm:$0xff] %vm2228, %v2216
        %2234 = vst.msk [vmem:[#allocation4 + $0x28] sm:$0xff] %vm2228, %v2217
        %2235 = vst.msk [vmem:[#allocation4 + $0x30] sm:$0xff] %vm2228, %v2218
        %2236 = vst.msk [vmem:[#allocation4 + $0x38] sm:$0xff] %vm2228, %v2219
        %2237 = vst.msk [vmem:[#allocation4 + $0x40] sm:$0xff] %vm2228, %v2220
        %2238 = vst.msk [vmem:[#allocation4 + $0x48] sm:$0xff] %vm2228, %v2221
        %2239 = vst.msk [vmem:[#allocation4 + $0x50] sm:$0xff] %vm2228, %v2222
        %2240 = vst.msk [vmem:[#allocation4 + $0x58] sm:$0xff] %vm2228, %v2223
        %2241 = vst.msk [vmem:[#allocation4 + $0x60] sm:$0xff] %vm2228, %v2224
        %2242 = vst.msk [vmem:[#allocation4 + $0x68] sm:$0xff] %vm2228, %v2225
        %2243 = vst.msk [vmem:[#allocation4 + $0x70] sm:$0xff] %vm2228, %v2226
        %2244 = vst.msk [vmem:[#allocation4 + $0x78] sm:$0xff] %vm2228, %v2227
        %2245 = vst.msk [vmem:[#allocation2] sm:$0xff] %vm1890, %v1602
        %2246 = vst.msk [vmem:[#allocation2 + $0x8] sm:$0xff] %vm1890, %v1603
        %2247 = vst.msk [vmem:[#allocation2 + $0x10] sm:$0xff] %vm1890, %v1604
        %2248 = vst.msk [vmem:[#allocation2 + $0x18] sm:$0xff] %vm1890, %v1605
        %2249 = vst.msk [vmem:[#allocation2 + $0x20] sm:$0xff] %vm1890, %v1606
        %2250 = vst.msk [vmem:[#allocation2 + $0x28] sm:$0xff] %vm1890, %v1607
        %2251 = vst.msk [vmem:[#allocation2 + $0x30] sm:$0xff] %vm1890, %v1608
        %2252 = vst.msk [vmem:[#allocation2 + $0x38] sm:$0xff] %vm1890, %v1609
        %2253 = vst.msk [vmem:[#allocation2 + $0x40] sm:$0xff] %vm1890, %v1610
        %2254 = vst.msk [vmem:[#allocation2 + $0x48] sm:$0xff] %vm1890, %v1611
        %2255 = vst.msk [vmem:[#allocation2 + $0x50] sm:$0xff] %vm1890, %v1612
        %2256 = vst.msk [vmem:[#allocation2 + $0x58] sm:$0xff] %vm1890, %v1613
        %2257 = vst.msk [vmem:[#allocation2 + $0x60] sm:$0xff] %vm1890, %v1614
        %2258 = vst.msk [vmem:[#allocation2 + $0x68] sm:$0xff] %vm1890, %v1615
        %2259 = vst.msk [vmem:[#allocation2 + $0x70] sm:$0xff] %vm1890, %v1616
        %2260 = vst.msk [vmem:[#allocation2 + $0x78] sm:$0xff] %vm1890, %v1617
        %2261 = vset.pattern.permute.xlu0 2
        %2262 = vperm.xlu0 %2261, %v494
        %v2263 = vpop.permute.xlu0 %2262
        %2265 = vset.pattern.permute.xlu0 2
        %2266 = vperm.xlu0 %2265, %v495
        %v2267 = vpop.permute.xlu0 %2266
        %2269 = vset.pattern.permute.xlu0 2
        %2270 = vperm.xlu0 %2269, %v496
        %v2271 = vpop.permute.xlu0 %2270
        %2273 = vset.pattern.permute.xlu0 2
        %2274 = vperm.xlu0 %2273, %v497
        %v2275 = vpop.permute.xlu0 %2274
        %2277 = vset.pattern.permute.xlu0 2
        %2278 = vperm.xlu0 %2277, %v498
        %v2279 = vpop.permute.xlu0 %2278
        %2281 = vset.pattern.permute.xlu0 2
        %2282 = vperm.xlu0 %2281, %v499
        %v2283 = vpop.permute.xlu0 %2282
        %2285 = vset.pattern.permute.xlu0 2
        %2286 = vperm.xlu0 %2285, %v500
        %v2287 = vpop.permute.xlu0 %2286
        %2289 = vset.pattern.permute.xlu0 2
        %2290 = vperm.xlu0 %2289, %v501
        %v2291 = vpop.permute.xlu0 %2290
        %2293 = vset.pattern.permute.xlu0 2
        %2294 = vperm.xlu0 %2293, %v502
        %v2295 = vpop.permute.xlu0 %2294
        %2297 = vset.pattern.permute.xlu0 2
        %2298 = vperm.xlu0 %2297, %v503
        %v2299 = vpop.permute.xlu0 %2298
        %2301 = vset.pattern.permute.xlu0 2
        %2302 = vperm.xlu0 %2301, %v504
        %v2303 = vpop.permute.xlu0 %2302
        %2305 = vset.pattern.permute.xlu0 2
        %2306 = vperm.xlu0 %2305, %v505
        %v2307 = vpop.permute.xlu0 %2306
        %2309 = vset.pattern.permute.xlu0 2
        %2310 = vperm.xlu0 %2309, %v506
        %v2311 = vpop.permute.xlu0 %2310
        %2313 = vset.pattern.permute.xlu0 2
        %2314 = vperm.xlu0 %2313, %v507
        %v2315 = vpop.permute.xlu0 %2314
        %2317 = vset.pattern.permute.xlu0 2
        %2318 = vperm.xlu0 %2317, %v508
        %v2319 = vpop.permute.xlu0 %2318
        %2321 = vset.pattern.permute.xlu0 2
        %2322 = vperm.xlu0 %2321, %v509
        %v2323 = vpop.permute.xlu0 %2322
        %v2325 = vlaneseq
        %v2326 = vshrl.u32 %v2325, 7
        %v2327 = vsub.s32 2, %v2326
        %v2328 = vrot.slane %v510, %v2327
        %v2329 = vadd.f32 %v2263, %v2328
        %v2330 = vadd.f32 %v2267, %v2328
        %v2331 = vadd.f32 %v2271, %v2328
        %v2332 = vadd.f32 %v2275, %v2328
        %v2333 = vadd.f32 %v2279, %v2328
        %v2334 = vadd.f32 %v2283, %v2328
        %v2335 = vadd.f32 %v2287, %v2328
        %v2336 = vadd.f32 %v2291, %v2328
        %v2337 = vadd.f32 %v2295, %v2328
        %v2338 = vadd.f32 %v2299, %v2328
        %v2339 = vadd.f32 %v2303, %v2328
        %v2340 = vadd.f32 %v2307, %v2328
        %v2341 = vadd.f32 %v2311, %v2328
        %v2342 = vadd.f32 %v2315, %v2328
        %v2343 = vadd.f32 %v2319, %v2328
        %v2344 = vadd.f32 %v2323, %v2328
        %vm2345 = vcmp.gt.f32.partialorder %v2329, 0.0
        %vm2346 = vcmp.gt.f32.partialorder %v2330, 0.0
        %vm2347 = vcmp.gt.f32.partialorder %v2331, 0.0
        %vm2348 = vcmp.gt.f32.partialorder %v2332, 0.0
        %vm2349 = vcmp.gt.f32.partialorder %v2333, 0.0
        %vm2350 = vcmp.gt.f32.partialorder %v2334, 0.0
        %vm2351 = vcmp.gt.f32.partialorder %v2335, 0.0
        %vm2352 = vcmp.gt.f32.partialorder %v2336, 0.0
        %vm2353 = vcmp.gt.f32.partialorder %v2337, 0.0
        %vm2354 = vcmp.gt.f32.partialorder %v2338, 0.0
        %vm2355 = vcmp.gt.f32.partialorder %v2339, 0.0
        %vm2356 = vcmp.gt.f32.partialorder %v2340, 0.0
        %vm2357 = vcmp.gt.f32.partialorder %v2341, 0.0
        %vm2358 = vcmp.gt.f32.partialorder %v2342, 0.0
        %vm2359 = vcmp.gt.f32.partialorder %v2343, 0.0
        %vm2360 = vcmp.gt.f32.partialorder %v2344, 0.0
        %v2361 = vmul.f32 %v2329, 0.2
        %v2362 = vmul.f32 %v2330, 0.2
        %v2363 = vmul.f32 %v2331, 0.2
        %v2364 = vmul.f32 %v2332, 0.2
        %v2365 = vmul.f32 %v2333, 0.2
        %v2366 = vmul.f32 %v2334, 0.2
        %v2367 = vmul.f32 %v2335, 0.2
        %v2368 = vmul.f32 %v2336, 0.2
        %v2369 = vmul.f32 %v2337, 0.2
        %v2370 = vmul.f32 %v2338, 0.2
        %v2371 = vmul.f32 %v2339, 0.2
        %v2372 = vmul.f32 %v2340, 0.2
        %v2373 = vmul.f32 %v2341, 0.2
        %v2374 = vmul.f32 %v2342, 0.2
        %v2375 = vmul.f32 %v2343, 0.2
        %v2376 = vmul.f32 %v2344, 0.2
        %v2377 = vsel %vm2345, %v2329, %v2361
        %v2378 = vsel %vm2346, %v2330, %v2362
        %v2379 = vsel %vm2347, %v2331, %v2363
        %v2380 = vsel %vm2348, %v2332, %v2364
        %v2381 = vsel %vm2349, %v2333, %v2365
        %v2382 = vsel %vm2350, %v2334, %v2366
        %v2383 = vsel %vm2351, %v2335, %v2367
        %v2384 = vsel %vm2352, %v2336, %v2368
        %v2385 = vsel %vm2353, %v2337, %v2369
        %v2386 = vsel %vm2354, %v2338, %v2370
        %v2387 = vsel %vm2355, %v2339, %v2371
        %v2388 = vsel %vm2356, %v2340, %v2372
        %v2389 = vsel %vm2357, %v2341, %v2373
        %v2390 = vsel %vm2358, %v2342, %v2374
        %v2391 = vsel %vm2359, %v2343, %v2375
        %v2392 = vsel %vm2360, %v2344, %v2376
        %v2393 = vsel %vm707, %v2377, -1e+30
        %v2394 = vsel %vm708, %v2378, -1e+30
        %v2395 = vsel %vm709, %v2379, -1e+30
        %v2396 = vsel %vm710, %v2380, -1e+30
        %v2397 = vsel %vm711, %v2381, -1e+30
        %v2398 = vsel %vm712, %v2382, -1e+30
        %v2399 = vsel %vm713, %v2383, -1e+30
        %v2400 = vsel %vm714, %v2384, -1e+30
        %v2401 = vsel %vm715, %v2385, -1e+30
        %v2402 = vsel %vm716, %v2386, -1e+30
        %v2403 = vsel %vm717, %v2387, -1e+30
        %v2404 = vsel %vm718, %v2388, -1e+30
        %v2405 = vsel %vm719, %v2389, -1e+30
        %v2406 = vsel %vm720, %v2390, -1e+30
        %v2407 = vsel %vm721, %v2391, -1e+30
        %v2408 = vsel %vm722, %v2392, -1e+30
        %v2409 = vld [vmem:[#allocation2] sm:$0xff]
        %v2410 = vld [vmem:[#allocation2 + $0x8] sm:$0xff]
        %v2411 = vld [vmem:[#allocation2 + $0x10] sm:$0xff]
        %v2412 = vld [vmem:[#allocation2 + $0x18] sm:$0xff]
        %v2413 = vld [vmem:[#allocation2 + $0x20] sm:$0xff]
        %v2414 = vld [vmem:[#allocation2 + $0x28] sm:$0xff]
        %v2415 = vld [vmem:[#allocation2 + $0x30] sm:$0xff]
        %v2416 = vld [vmem:[#allocation2 + $0x38] sm:$0xff]
        %v2417 = vld [vmem:[#allocation2 + $0x40] sm:$0xff]
        %v2418 = vld [vmem:[#allocation2 + $0x48] sm:$0xff]
        %v2419 = vld [vmem:[#allocation2 + $0x50] sm:$0xff]
        %v2420 = vld [vmem:[#allocation2 + $0x58] sm:$0xff]
        %v2421 = vld [vmem:[#allocation2 + $0x60] sm:$0xff]
        %v2422 = vld [vmem:[#allocation2 + $0x68] sm:$0xff]
        %v2423 = vld [vmem:[#allocation2 + $0x70] sm:$0xff]
        %v2424 = vld [vmem:[#allocation2 + $0x78] sm:$0xff]
        %2425 = vmax.xlane.f32.xlu0 %v2393
        %v2426 = vpop.xlane.xlu0 %2425
        %2427 = vmax.xlane.f32.xlu0 %v2394
        %v2428 = vpop.xlane.xlu0 %2427
        %2429 = vmax.xlane.f32.xlu0 %v2395
        %v2430 = vpop.xlane.xlu0 %2429
        %2431 = vmax.xlane.f32.xlu0 %v2396
        %v2432 = vpop.xlane.xlu0 %2431
        %2433 = vmax.xlane.f32.xlu0 %v2397
        %v2434 = vpop.xlane.xlu0 %2433
        %2435 = vmax.xlane.f32.xlu0 %v2398
        %v2436 = vpop.xlane.xlu0 %2435
        %2437 = vmax.xlane.f32.xlu0 %v2399
        %v2438 = vpop.xlane.xlu0 %2437
        %2439 = vmax.xlane.f32.xlu0 %v2400
        %v2440 = vpop.xlane.xlu0 %2439
        %2441 = vmax.xlane.f32.xlu0 %v2401
        %v2442 = vpop.xlane.xlu0 %2441
        %2443 = vmax.xlane.f32.xlu0 %v2402
        %v2444 = vpop.xlane.xlu0 %2443
        %2445 = vmax.xlane.f32.xlu0 %v2403
        %v2446 = vpop.xlane.xlu0 %2445
        %2447 = vmax.xlane.f32.xlu0 %v2404
        %v2448 = vpop.xlane.xlu0 %2447
        %2449 = vmax.xlane.f32.xlu0 %v2405
        %v2450 = vpop.xlane.xlu0 %2449
        %2451 = vmax.xlane.f32.xlu0 %v2406
        %v2452 = vpop.xlane.xlu0 %2451
        %2453 = vmax.xlane.f32.xlu0 %v2407
        %v2454 = vpop.xlane.xlu0 %2453
        %2455 = vmax.xlane.f32.xlu0 %v2408
        %v2456 = vpop.xlane.xlu0 %2455
        %v2457 = vmax.f32 %v2409, %v2426
        %v2458 = vmax.f32 %v2410, %v2428
        %v2459 = vmax.f32 %v2411, %v2430
        %v2460 = vmax.f32 %v2412, %v2432
        %v2461 = vmax.f32 %v2413, %v2434
        %v2462 = vmax.f32 %v2414, %v2436
        %v2463 = vmax.f32 %v2415, %v2438
        %v2464 = vmax.f32 %v2416, %v2440
        %v2465 = vmax.f32 %v2417, %v2442
        %v2466 = vmax.f32 %v2418, %v2444
        %v2467 = vmax.f32 %v2419, %v2446
        %v2468 = vmax.f32 %v2420, %v2448
        %v2469 = vmax.f32 %v2421, %v2450
        %v2470 = vmax.f32 %v2422, %v2452
        %v2471 = vmax.f32 %v2423, %v2454
        %v2472 = vmax.f32 %v2424, %v2456
        %v2473 = vsub.f32 %v2409, %v2457
        %v2474 = vsub.f32 %v2410, %v2458
        %v2475 = vsub.f32 %v2411, %v2459
        %v2476 = vsub.f32 %v2412, %v2460
        %v2477 = vsub.f32 %v2413, %v2461
        %v2478 = vsub.f32 %v2414, %v2462
        %v2479 = vsub.f32 %v2415, %v2463
        %v2480 = vsub.f32 %v2416, %v2464
        %v2481 = vsub.f32 %v2417, %v2465
        %v2482 = vsub.f32 %v2418, %v2466
        %v2483 = vsub.f32 %v2419, %v2467
        %v2484 = vsub.f32 %v2420, %v2468
        %v2485 = vsub.f32 %v2421, %v2469
        %v2486 = vsub.f32 %v2422, %v2470
        %v2487 = vsub.f32 %v2423, %v2471
        %v2488 = vsub.f32 %v2424, %v2472
        %v2489 = vmul.f32 %v2473, 1.442695
        %v2490 = vpow.pop %v2489
        %v2491 = vmul.f32 %v2474, 1.442695
        %v2492 = vpow.pop %v2491
        %v2493 = vmul.f32 %v2475, 1.442695
        %v2494 = vpow.pop %v2493
        %v2495 = vmul.f32 %v2476, 1.442695
        %v2496 = vpow.pop %v2495
        %v2497 = vmul.f32 %v2477, 1.442695
        %v2498 = vpow.pop %v2497
        %v2499 = vmul.f32 %v2478, 1.442695
        %v2500 = vpow.pop %v2499
        %v2501 = vmul.f32 %v2479, 1.442695
        %v2502 = vpow.pop %v2501
        %v2503 = vmul.f32 %v2480, 1.442695
        %v2504 = vpow.pop %v2503
        %v2505 = vmul.f32 %v2481, 1.442695
        %v2506 = vpow.pop %v2505
        %v2507 = vmul.f32 %v2482, 1.442695
        %v2508 = vpow.pop %v2507
        %v2509 = vmul.f32 %v2483, 1.442695
        %v2510 = vpow.pop %v2509
        %v2511 = vmul.f32 %v2484, 1.442695
        %v2512 = vpow.pop %v2511
        %v2513 = vmul.f32 %v2485, 1.442695
        %v2514 = vpow.pop %v2513
        %v2515 = vmul.f32 %v2486, 1.442695
        %v2516 = vpow.pop %v2515
        %v2517 = vmul.f32 %v2487, 1.442695
        %v2518 = vpow.pop %v2517
        %v2519 = vmul.f32 %v2488, 1.442695
        %v2520 = vpow.pop %v2519
        %2522 = vset.pattern.permute.xlu0 2
        %2523 = vperm.xlu0 %2522, %v2457
        %v2524 = vpop.permute.xlu0 %2523
        %2527 = vset.pattern.permute.xlu0 2
        %2528 = vperm.xlu0 %2527, %v2458
        %v2529 = vpop.permute.xlu0 %2528
        %2532 = vset.pattern.permute.xlu0 2
        %2533 = vperm.xlu0 %2532, %v2459
        %v2534 = vpop.permute.xlu0 %2533
        %2537 = vset.pattern.permute.xlu0 2
        %2538 = vperm.xlu0 %2537, %v2460
        %v2539 = vpop.permute.xlu0 %2538
        %2542 = vset.pattern.permute.xlu0 2
        %2543 = vperm.xlu0 %2542, %v2461
        %v2544 = vpop.permute.xlu0 %2543
        %2547 = vset.pattern.permute.xlu0 2
        %2548 = vperm.xlu0 %2547, %v2462
        %v2549 = vpop.permute.xlu0 %2548
        %2552 = vset.pattern.permute.xlu0 2
        %2553 = vperm.xlu0 %2552, %v2463
        %v2554 = vpop.permute.xlu0 %2553
        %2557 = vset.pattern.permute.xlu0 2
        %2558 = vperm.xlu0 %2557, %v2464
        %v2559 = vpop.permute.xlu0 %2558
        %2562 = vset.pattern.permute.xlu0 2
        %2563 = vperm.xlu0 %2562, %v2465
        %v2564 = vpop.permute.xlu0 %2563
        %2567 = vset.pattern.permute.xlu0 2
        %2568 = vperm.xlu0 %2567, %v2466
        %v2569 = vpop.permute.xlu0 %2568
        %2572 = vset.pattern.permute.xlu0 2
        %2573 = vperm.xlu0 %2572, %v2467
        %v2574 = vpop.permute.xlu0 %2573
        %2577 = vset.pattern.permute.xlu0 2
        %2578 = vperm.xlu0 %2577, %v2468
        %v2579 = vpop.permute.xlu0 %2578
        %2582 = vset.pattern.permute.xlu0 2
        %2583 = vperm.xlu0 %2582, %v2469
        %v2584 = vpop.permute.xlu0 %2583
        %2587 = vset.pattern.permute.xlu0 2
        %2588 = vperm.xlu0 %2587, %v2470
        %v2589 = vpop.permute.xlu0 %2588
        %2592 = vset.pattern.permute.xlu0 2
        %2593 = vperm.xlu0 %2592, %v2471
        %v2594 = vpop.permute.xlu0 %2593
        %2597 = vset.pattern.permute.xlu0 2
        %2598 = vperm.xlu0 %2597, %v2472
        %v2599 = vpop.permute.xlu0 %2598
        %v2601 = vsub.f32 %v2393, %v2524
        %v2602 = vsub.f32 %v2394, %v2529
        %v2603 = vsub.f32 %v2395, %v2534
        %v2604 = vsub.f32 %v2396, %v2539
        %v2605 = vsub.f32 %v2397, %v2544
        %v2606 = vsub.f32 %v2398, %v2549
        %v2607 = vsub.f32 %v2399, %v2554
        %v2608 = vsub.f32 %v2400, %v2559
        %v2609 = vsub.f32 %v2401, %v2564
        %v2610 = vsub.f32 %v2402, %v2569
        %v2611 = vsub.f32 %v2403, %v2574
        %v2612 = vsub.f32 %v2404, %v2579
        %v2613 = vsub.f32 %v2405, %v2584
        %v2614 = vsub.f32 %v2406, %v2589
        %v2615 = vsub.f32 %v2407, %v2594
        %v2616 = vsub.f32 %v2408, %v2599
        %v2617 = vmul.f32 %v2601, 1.442695
        %v2618 = vpow.pop %v2617
        %v2619 = vmul.f32 %v2602, 1.442695
        %v2620 = vpow.pop %v2619
        %v2621 = vmul.f32 %v2603, 1.442695
        %v2622 = vpow.pop %v2621
        %v2623 = vmul.f32 %v2604, 1.442695
        %v2624 = vpow.pop %v2623
        %v2625 = vmul.f32 %v2605, 1.442695
        %v2626 = vpow.pop %v2625
        %v2627 = vmul.f32 %v2606, 1.442695
        %v2628 = vpow.pop %v2627
        %v2629 = vmul.f32 %v2607, 1.442695
        %v2630 = vpow.pop %v2629
        %v2631 = vmul.f32 %v2608, 1.442695
        %v2632 = vpow.pop %v2631
        %v2633 = vmul.f32 %v2609, 1.442695
        %v2634 = vpow.pop %v2633
        %v2635 = vmul.f32 %v2610, 1.442695
        %v2636 = vpow.pop %v2635
        %v2637 = vmul.f32 %v2611, 1.442695
        %v2638 = vpow.pop %v2637
        %v2639 = vmul.f32 %v2612, 1.442695
        %v2640 = vpow.pop %v2639
        %v2641 = vmul.f32 %v2613, 1.442695
        %v2642 = vpow.pop %v2641
        %v2643 = vmul.f32 %v2614, 1.442695
        %v2644 = vpow.pop %v2643
        %v2645 = vmul.f32 %v2615, 1.442695
        %v2646 = vpow.pop %v2645
        %v2647 = vmul.f32 %v2616, 1.442695
        %v2648 = vpow.pop %v2647
        %v2649 = vsel %vm707, %v2618, 0.0
        %v2650 = vsel %vm708, %v2620, 0.0
        %v2651 = vsel %vm709, %v2622, 0.0
        %v2652 = vsel %vm710, %v2624, 0.0
        %v2653 = vsel %vm711, %v2626, 0.0
        %v2654 = vsel %vm712, %v2628, 0.0
        %v2655 = vsel %vm713, %v2630, 0.0
        %v2656 = vsel %vm714, %v2632, 0.0
        %v2657 = vsel %vm715, %v2634, 0.0
        %v2658 = vsel %vm716, %v2636, 0.0
        %v2659 = vsel %vm717, %v2638, 0.0
        %v2660 = vsel %vm718, %v2640, 0.0
        %v2661 = vsel %vm719, %v2642, 0.0
        %v2662 = vsel %vm720, %v2644, 0.0
        %v2663 = vsel %vm721, %v2646, 0.0
        %v2664 = vsel %vm722, %v2648, 0.0
        %v2665 = vld [vmem:[#allocation3] sm:$0xff]
        %v2666 = vld [vmem:[#allocation3 + $0x8] sm:$0xff]
        %v2667 = vld [vmem:[#allocation3 + $0x10] sm:$0xff]
        %v2668 = vld [vmem:[#allocation3 + $0x18] sm:$0xff]
        %v2669 = vld [vmem:[#allocation3 + $0x20] sm:$0xff]
        %v2670 = vld [vmem:[#allocation3 + $0x28] sm:$0xff]
        %v2671 = vld [vmem:[#allocation3 + $0x30] sm:$0xff]
        %v2672 = vld [vmem:[#allocation3 + $0x38] sm:$0xff]
        %v2673 = vld [vmem:[#allocation3 + $0x40] sm:$0xff]
        %v2674 = vld [vmem:[#allocation3 + $0x48] sm:$0xff]
        %v2675 = vld [vmem:[#allocation3 + $0x50] sm:$0xff]
        %v2676 = vld [vmem:[#allocation3 + $0x58] sm:$0xff]
        %v2677 = vld [vmem:[#allocation3 + $0x60] sm:$0xff]
        %v2678 = vld [vmem:[#allocation3 + $0x68] sm:$0xff]
        %v2679 = vld [vmem:[#allocation3 + $0x70] sm:$0xff]
        %v2680 = vld [vmem:[#allocation3 + $0x78] sm:$0xff]
        %v2681 = vmul.f32 %v2490, %v2665
        %v2682 = vmul.f32 %v2492, %v2666
        %v2683 = vmul.f32 %v2494, %v2667
        %v2684 = vmul.f32 %v2496, %v2668
        %v2685 = vmul.f32 %v2498, %v2669
        %v2686 = vmul.f32 %v2500, %v2670
        %v2687 = vmul.f32 %v2502, %v2671
        %v2688 = vmul.f32 %v2504, %v2672
        %v2689 = vmul.f32 %v2506, %v2673
        %v2690 = vmul.f32 %v2508, %v2674
        %v2691 = vmul.f32 %v2510, %v2675
        %v2692 = vmul.f32 %v2512, %v2676
        %v2693 = vmul.f32 %v2514, %v2677
        %v2694 = vmul.f32 %v2516, %v2678
        %v2695 = vmul.f32 %v2518, %v2679
        %v2696 = vmul.f32 %v2520, %v2680
        %2697 = vadd.xlane.f32.xlu0 %v2649
        %v2698 = vpop.xlane.xlu0 %2697
        %2699 = vadd.xlane.f32.xlu0 %v2650
        %v2700 = vpop.xlane.xlu0 %2699
        %2701 = vadd.xlane.f32.xlu0 %v2651
        %v2702 = vpop.xlane.xlu0 %2701
        %2703 = vadd.xlane.f32.xlu0 %v2652
        %v2704 = vpop.xlane.xlu0 %2703
        %2705 = vadd.xlane.f32.xlu0 %v2653
        %v2706 = vpop.xlane.xlu0 %2705
        %2707 = vadd.xlane.f32.xlu0 %v2654
        %v2708 = vpop.xlane.xlu0 %2707
        %2709 = vadd.xlane.f32.xlu0 %v2655
        %v2710 = vpop.xlane.xlu0 %2709
        %2711 = vadd.xlane.f32.xlu0 %v2656
        %v2712 = vpop.xlane.xlu0 %2711
        %2713 = vadd.xlane.f32.xlu0 %v2657
        %v2714 = vpop.xlane.xlu0 %2713
        %2715 = vadd.xlane.f32.xlu0 %v2658
        %v2716 = vpop.xlane.xlu0 %2715
        %2717 = vadd.xlane.f32.xlu0 %v2659
        %v2718 = vpop.xlane.xlu0 %2717
        %2719 = vadd.xlane.f32.xlu0 %v2660
        %v2720 = vpop.xlane.xlu0 %2719
        %2721 = vadd.xlane.f32.xlu0 %v2661
        %v2722 = vpop.xlane.xlu0 %2721
        %2723 = vadd.xlane.f32.xlu0 %v2662
        %v2724 = vpop.xlane.xlu0 %2723
        %2725 = vadd.xlane.f32.xlu0 %v2663
        %v2726 = vpop.xlane.xlu0 %2725
        %2727 = vadd.xlane.f32.xlu0 %v2664
        %v2728 = vpop.xlane.xlu0 %2727
        %v2729 = vadd.f32 %v2681, %v2698
        %v2730 = vadd.f32 %v2682, %v2700
        %v2731 = vadd.f32 %v2683, %v2702
        %v2732 = vadd.f32 %v2684, %v2704
        %v2733 = vadd.f32 %v2685, %v2706
        %v2734 = vadd.f32 %v2686, %v2708
        %v2735 = vadd.f32 %v2687, %v2710
        %v2736 = vadd.f32 %v2688, %v2712
        %v2737 = vadd.f32 %v2689, %v2714
        %v2738 = vadd.f32 %v2690, %v2716
        %v2739 = vadd.f32 %v2691, %v2718
        %v2740 = vadd.f32 %v2692, %v2720
        %v2741 = vadd.f32 %v2693, %v2722
        %v2742 = vadd.f32 %v2694, %v2724
        %v2743 = vadd.f32 %v2695, %v2726
        %v2744 = vadd.f32 %v2696, %v2728
        %vm2745 = vcmask 23568
        %2746 = vst.msk [vmem:[#allocation3] sm:$0xff] %vm2745, %v2729
        %2747 = vst.msk [vmem:[#allocation3 + $0x8] sm:$0xff] %vm2745, %v2730
        %2748 = vst.msk [vmem:[#allocation3 + $0x10] sm:$0xff] %vm2745, %v2731
        %2749 = vst.msk [vmem:[#allocation3 + $0x18] sm:$0xff] %vm2745, %v2732
        %2750 = vst.msk [vmem:[#allocation3 + $0x20] sm:$0xff] %vm2745, %v2733
        %2751 = vst.msk [vmem:[#allocation3 + $0x28] sm:$0xff] %vm2745, %v2734
        %2752 = vst.msk [vmem:[#allocation3 + $0x30] sm:$0xff] %vm2745, %v2735
        %2753 = vst.msk [vmem:[#allocation3 + $0x38] sm:$0xff] %vm2745, %v2736
        %2754 = vst.msk [vmem:[#allocation3 + $0x40] sm:$0xff] %vm2745, %v2737
        %2755 = vst.msk [vmem:[#allocation3 + $0x48] sm:$0xff] %vm2745, %v2738
        %2756 = vst.msk [vmem:[#allocation3 + $0x50] sm:$0xff] %vm2745, %v2739
        %2757 = vst.msk [vmem:[#allocation3 + $0x58] sm:$0xff] %vm2745, %v2740
        %2758 = vst.msk [vmem:[#allocation3 + $0x60] sm:$0xff] %vm2745, %v2741
        %2759 = vst.msk [vmem:[#allocation3 + $0x68] sm:$0xff] %vm2745, %v2742
        %2760 = vst.msk [vmem:[#allocation3 + $0x70] sm:$0xff] %vm2745, %v2743
        %2761 = vst.msk [vmem:[#allocation3 + $0x78] sm:$0xff] %vm2745, %v2744
        %v2762 = vld [vmem:[#allocation4] sm:$0xff]
        %v2763 = vld [vmem:[#allocation4 + $0x8] sm:$0xff]
        %v2764 = vld [vmem:[#allocation4 + $0x10] sm:$0xff]
        %v2765 = vld [vmem:[#allocation4 + $0x18] sm:$0xff]
        %v2766 = vld [vmem:[#allocation4 + $0x20] sm:$0xff]
        %v2767 = vld [vmem:[#allocation4 + $0x28] sm:$0xff]
        %v2768 = vld [vmem:[#allocation4 + $0x30] sm:$0xff]
        %v2769 = vld [vmem:[#allocation4 + $0x38] sm:$0xff]
        %v2770 = vld [vmem:[#allocation4 + $0x40] sm:$0xff]
        %v2771 = vld [vmem:[#allocation4 + $0x48] sm:$0xff]
        %v2772 = vld [vmem:[#allocation4 + $0x50] sm:$0xff]
        %v2773 = vld [vmem:[#allocation4 + $0x58] sm:$0xff]
        %v2774 = vld [vmem:[#allocation4 + $0x60] sm:$0xff]
        %v2775 = vld [vmem:[#allocation4 + $0x68] sm:$0xff]
        %v2776 = vld [vmem:[#allocation4 + $0x70] sm:$0xff]
        %v2777 = vld [vmem:[#allocation4 + $0x78] sm:$0xff]
        %2779 = vset.pattern.permute.xlu0 2
        %2780 = vperm.xlu0 %2779, %v2490
        %v2781 = vpop.permute.xlu0 %2780
        %2784 = vset.pattern.permute.xlu0 2
        %2785 = vperm.xlu0 %2784, %v2492
        %v2786 = vpop.permute.xlu0 %2785
        %2789 = vset.pattern.permute.xlu0 2
        %2790 = vperm.xlu0 %2789, %v2494
        %v2791 = vpop.permute.xlu0 %2790
        %2794 = vset.pattern.permute.xlu0 2
        %2795 = vperm.xlu0 %2794, %v2496
        %v2796 = vpop.permute.xlu0 %2795
        %2799 = vset.pattern.permute.xlu0 2
        %2800 = vperm.xlu0 %2799, %v2498
        %v2801 = vpop.permute.xlu0 %2800
        %2804 = vset.pattern.permute.xlu0 2
        %2805 = vperm.xlu0 %2804, %v2500
        %v2806 = vpop.permute.xlu0 %2805
        %2809 = vset.pattern.permute.xlu0 2
        %2810 = vperm.xlu0 %2809, %v2502
        %v2811 = vpop.permute.xlu0 %2810
        %2814 = vset.pattern.permute.xlu0 2
        %2815 = vperm.xlu0 %2814, %v2504
        %v2816 = vpop.permute.xlu0 %2815
        %2819 = vset.pattern.permute.xlu0 2
        %2820 = vperm.xlu0 %2819, %v2506
        %v2821 = vpop.permute.xlu0 %2820
        %2824 = vset.pattern.permute.xlu0 2
        %2825 = vperm.xlu0 %2824, %v2508
        %v2826 = vpop.permute.xlu0 %2825
        %2829 = vset.pattern.permute.xlu0 2
        %2830 = vperm.xlu0 %2829, %v2510
        %v2831 = vpop.permute.xlu0 %2830
        %2834 = vset.pattern.permute.xlu0 2
        %2835 = vperm.xlu0 %2834, %v2512
        %v2836 = vpop.permute.xlu0 %2835
        %2839 = vset.pattern.permute.xlu0 2
        %2840 = vperm.xlu0 %2839, %v2514
        %v2841 = vpop.permute.xlu0 %2840
        %2844 = vset.pattern.permute.xlu0 2
        %2845 = vperm.xlu0 %2844, %v2516
        %v2846 = vpop.permute.xlu0 %2845
        %2849 = vset.pattern.permute.xlu0 2
        %2850 = vperm.xlu0 %2849, %v2518
        %v2851 = vpop.permute.xlu0 %2850
        %2854 = vset.pattern.permute.xlu0 2
        %2855 = vperm.xlu0 %2854, %v2520
        %v2856 = vpop.permute.xlu0 %2855
        %v2858 = vmul.f32 %v2781, %v2762
        %v2859 = vmul.f32 %v2786, %v2763
        %v2860 = vmul.f32 %v2791, %v2764
        %v2861 = vmul.f32 %v2796, %v2765
        %v2862 = vmul.f32 %v2801, %v2766
        %v2863 = vmul.f32 %v2806, %v2767
        %v2864 = vmul.f32 %v2811, %v2768
        %v2865 = vmul.f32 %v2816, %v2769
        %v2866 = vmul.f32 %v2821, %v2770
        %v2867 = vmul.f32 %v2826, %v2771
        %v2868 = vmul.f32 %v2831, %v2772
        %v2869 = vmul.f32 %v2836, %v2773
        %v2870 = vmul.f32 %v2841, %v2774
        %v2871 = vmul.f32 %v2846, %v2775
        %v2872 = vmul.f32 %v2851, %v2776
        %v2873 = vmul.f32 %v2856, %v2777
        %v2874 = vpack.c.bf16 %v2650, %v2649
        %v2875 = vpack.c.bf16 %v2652, %v2651
        %v2876 = vpack.c.bf16 %v2654, %v2653
        %v2877 = vpack.c.bf16 %v2656, %v2655
        %v2878 = vpack.c.bf16 %v2658, %v2657
        %v2879 = vpack.c.bf16 %v2660, %v2659
        %v2880 = vpack.c.bf16 %v2662, %v2661
        %v2881 = vpack.c.bf16 %v2664, %v2663
        %2882 = vrot.lane.b32.xlu0 %v1244, 64
        %v2883 = vpop.permute.xlu0 %2882
        %2884 = vrot.lane.b32.xlu0 %v1245, 64
        %v2885 = vpop.permute.xlu0 %2884
        %2886 = vrot.lane.b32.xlu0 %v1246, 64
        %v2887 = vpop.permute.xlu0 %2886
        %2888 = vrot.lane.b32.xlu0 %v1247, 64
        %v2889 = vpop.permute.xlu0 %2888
        %2890 = vrot.lane.b32.xlu0 %v1248, 64
        %v2891 = vpop.permute.xlu0 %2890
        %2892 = vrot.lane.b32.xlu0 %v1249, 64
        %v2893 = vpop.permute.xlu0 %2892
        %2894 = vrot.lane.b32.xlu0 %v1250, 64
        %v2895 = vpop.permute.xlu0 %2894
        %2896 = vrot.lane.b32.xlu0 %v1251, 64
        %v2897 = vpop.permute.xlu0 %2896
        %2906 = vmatprep.subr.bf16.mxu0 0
        %2907 = vmatpush1.bf16.msra.mxu0 %v2883
        %2908 = vmatprep.subr.bf16.mxu0 0
        %2909 = vmatpush1.bf16.msra.mxu0 %v2885
        %2910 = vmatprep.subr.bf16.mxu0 0
        %2911 = vmatpush1.bf16.msra.mxu0 %v2887
        %2912 = vmatprep.subr.bf16.mxu0 0
        %2913 = vmatpush1.bf16.msra.mxu0 %v2889
        %2914 = vmatprep.subr.bf16.mxu0 0
        %2915 = vmatpush1.bf16.msra.mxu0 %v2891
        %2916 = vmatprep.subr.bf16.mxu0 0
        %2917 = vmatpush1.bf16.msra.mxu0 %v2893
        %2918 = vmatprep.subr.bf16.mxu0 0
        %2919 = vmatpush1.bf16.msra.mxu0 %v2895
        %2920 = vmatprep.subr.bf16.mxu0 0
        %2921 = vmatpush1.bf16.msra.mxu0 %v2897
        %2922 = vmatprep.subr.bf16.mxu0 0
        %2923 = vmatpush1.bf16.msra.mxu0 0
        %2924 = vmatprep.subr.bf16.mxu0 0
        %2925 = vmatpush1.bf16.msra.mxu0 0
        %2926 = vmatprep.subr.bf16.mxu0 0
        %2927 = vmatpush1.bf16.msra.mxu0 0
        %2928 = vmatprep.subr.bf16.mxu0 0
        %2929 = vmatpush1.bf16.msra.mxu0 0
        %2930 = vmatprep.subr.bf16.mxu0 0
        %2931 = vmatpush1.bf16.msra.mxu0 0
        %2932 = vmatprep.subr.bf16.mxu0 0
        %2933 = vmatpush1.bf16.msra.mxu0 0
        %2934 = vmatprep.subr.bf16.mxu0 0
        %2935 = vmatpush1.bf16.msra.mxu0 0
        %2936 = vmatprep.subr.bf16.mxu0 0
        %2937 = vmatpush1.bf16.msra.mxu0 0
        %2938 = vmatprep.mubr.bf16.mxu0 0
        %2939 = vmatmul.mubr.bf16.gmra.mrb[0].mxu0 %v2874
        %v2940 = vpop.f32.mrb[0].mxu0
        %v2941 = vadd.f32 0.0, %v2940
        %v2942 = vpop.f32.mrb[0].mxu0
        %v2943 = vpop.f32.mrb[0].mxu0
        %v2944 = vadd.f32 0.0, %v2943
        %v2945 = vpop.f32.mrb[0].mxu0
        %2946 = vmatprep.mubr.bf16.mxu0 0
        %2947 = vmatmul.mubr.bf16.gmra.mrb[0].mxu0 %v2875
        %v2948 = vpop.f32.mrb[0].mxu0
        %v2949 = vadd.f32 0.0, %v2948
        %v2950 = vpop.f32.mrb[0].mxu0
        %v2951 = vpop.f32.mrb[0].mxu0
        %v2952 = vadd.f32 0.0, %v2951
        %v2953 = vpop.f32.mrb[0].mxu0
        %2954 = vmatprep.mubr.bf16.mxu0 0
        %2955 = vmatmul.mubr.bf16.gmra.mrb[0].mxu0 %v2876
        %v2956 = vpop.f32.mrb[0].mxu0
        %v2957 = vadd.f32 0.0, %v2956
        %v2958 = vpop.f32.mrb[0].mxu0
        %v2959 = vpop.f32.mrb[0].mxu0
        %v2960 = vadd.f32 0.0, %v2959
        %v2961 = vpop.f32.mrb[0].mxu0
        %2962 = vmatprep.mubr.bf16.mxu0 0
        %2963 = vmatmul.mubr.bf16.gmra.mrb[0].mxu0 %v2877
        %v2964 = vpop.f32.mrb[0].mxu0
        %v2965 = vadd.f32 0.0, %v2964
        %v2966 = vpop.f32.mrb[0].mxu0
        %v2967 = vpop.f32.mrb[0].mxu0
        %v2968 = vadd.f32 0.0, %v2967
        %v2969 = vpop.f32.mrb[0].mxu0
        %2970 = vmatprep.mubr.bf16.mxu0 0
        %2971 = vmatmul.mubr.bf16.gmra.mrb[0].mxu0 %v2878
        %v2972 = vpop.f32.mrb[0].mxu0
        %v2973 = vadd.f32 0.0, %v2972
        %v2974 = vpop.f32.mrb[0].mxu0
        %v2975 = vpop.f32.mrb[0].mxu0
        %v2976 = vadd.f32 0.0, %v2975
        %v2977 = vpop.f32.mrb[0].mxu0
        %2978 = vmatprep.mubr.bf16.mxu0 0
        %2979 = vmatmul.mubr.bf16.gmra.mrb[0].mxu0 %v2879
        %v2980 = vpop.f32.mrb[0].mxu0
        %v2981 = vadd.f32 0.0, %v2980
        %v2982 = vpop.f32.mrb[0].mxu0
        %v2983 = vpop.f32.mrb[0].mxu0
        %v2984 = vadd.f32 0.0, %v2983
        %v2985 = vpop.f32.mrb[0].mxu0
        %2986 = vmatprep.mubr.bf16.mxu0 0
        %2987 = vmatmul.mubr.bf16.gmra.mrb[0].mxu0 %v2880
        %v2988 = vpop.f32.mrb[0].mxu0
        %v2989 = vadd.f32 0.0, %v2988
        %v2990 = vpop.f32.mrb[0].mxu0
        %v2991 = vpop.f32.mrb[0].mxu0
        %v2992 = vadd.f32 0.0, %v2991
        %v2993 = vpop.f32.mrb[0].mxu0
        %2994 = vmatprep.mubr.bf16.mxu0 0
        %2995 = vmatmul.mubr.bf16.gmra.mrb[0].mxu0 %v2881
        %v2996 = vpop.f32.mrb[0].mxu0
        %v2997 = vadd.f32 0.0, %v2996
        %v2998 = vpop.f32.mrb[0].mxu0
        %v2999 = vpop.f32.mrb[0].mxu0
        %v3000 = vadd.f32 0.0, %v2999
        %v3001 = vpop.f32.mrb[0].mxu0
        %3002 = vdwg.mxu0
        %3019 = vrot.lane.b32.xlu0 %v2941, 64
        %v3020 = vpop.permute.xlu0 %3019
        %3021 = vrot.lane.b32.xlu0 %v2944, 64
        %v3022 = vpop.permute.xlu0 %3021
        %3023 = vrot.lane.b32.xlu0 %v2949, 64
        %v3024 = vpop.permute.xlu0 %3023
        %3025 = vrot.lane.b32.xlu0 %v2952, 64
        %v3026 = vpop.permute.xlu0 %3025
        %3027 = vrot.lane.b32.xlu0 %v2957, 64
        %v3028 = vpop.permute.xlu0 %3027
        %3029 = vrot.lane.b32.xlu0 %v2960, 64
        %v3030 = vpop.permute.xlu0 %3029
        %3031 = vrot.lane.b32.xlu0 %v2965, 64
        %v3032 = vpop.permute.xlu0 %3031
        %3033 = vrot.lane.b32.xlu0 %v2968, 64
        %v3034 = vpop.permute.xlu0 %3033
        %3035 = vrot.lane.b32.xlu0 %v2973, 64
        %v3036 = vpop.permute.xlu0 %3035
        %3037 = vrot.lane.b32.xlu0 %v2976, 64
        %v3038 = vpop.permute.xlu0 %3037
        %3039 = vrot.lane.b32.xlu0 %v2981, 64
        %v3040 = vpop.permute.xlu0 %3039
        %3041 = vrot.lane.b32.xlu0 %v2984, 64
        %v3042 = vpop.permute.xlu0 %3041
        %3043 = vrot.lane.b32.xlu0 %v2989, 64
        %v3044 = vpop.permute.xlu0 %3043
        %3045 = vrot.lane.b32.xlu0 %v2992, 64
        %v3046 = vpop.permute.xlu0 %3045
        %3047 = vrot.lane.b32.xlu0 %v2997, 64
        %v3048 = vpop.permute.xlu0 %3047
        %3049 = vrot.lane.b32.xlu0 %v3000, 64
        %v3050 = vpop.permute.xlu0 %3049
        %v3067 = vadd.f32 %v2858, %v3020
        %v3068 = vadd.f32 %v2859, %v3022
        %v3069 = vadd.f32 %v2860, %v3024
        %v3070 = vadd.f32 %v2861, %v3026
        %v3071 = vadd.f32 %v2862, %v3028
        %v3072 = vadd.f32 %v2863, %v3030
        %v3073 = vadd.f32 %v2864, %v3032
        %v3074 = vadd.f32 %v2865, %v3034
        %v3075 = vadd.f32 %v2866, %v3036
        %v3076 = vadd.f32 %v2867, %v3038
        %v3077 = vadd.f32 %v2868, %v3040
        %v3078 = vadd.f32 %v2869, %v3042
        %v3079 = vadd.f32 %v2870, %v3044
        %v3080 = vadd.f32 %v2871, %v3046
        %v3081 = vadd.f32 %v2872, %v3048
        %v3082 = vadd.f32 %v2873, %v3050
        %vm3083 = vcmask 785920
        %3084 = vst.msk [vmem:[#allocation4] sm:$0xff] %vm3083, %v3067
        %3085 = vst.msk [vmem:[#allocation4 + $0x8] sm:$0xff] %vm3083, %v3068
        %3086 = vst.msk [vmem:[#allocation4 + $0x10] sm:$0xff] %vm3083, %v3069
        %3087 = vst.msk [vmem:[#allocation4 + $0x18] sm:$0xff] %vm3083, %v3070
        %3088 = vst.msk [vmem:[#allocation4 + $0x20] sm:$0xff] %vm3083, %v3071
        %3089 = vst.msk [vmem:[#allocation4 + $0x28] sm:$0xff] %vm3083, %v3072
        %3090 = vst.msk [vmem:[#allocation4 + $0x30] sm:$0xff] %vm3083, %v3073
        %3091 = vst.msk [vmem:[#allocation4 + $0x38] sm:$0xff] %vm3083, %v3074
        %3092 = vst.msk [vmem:[#allocation4 + $0x40] sm:$0xff] %vm3083, %v3075
        %3093 = vst.msk [vmem:[#allocation4 + $0x48] sm:$0xff] %vm3083, %v3076
        %3094 = vst.msk [vmem:[#allocation4 + $0x50] sm:$0xff] %vm3083, %v3077
        %3095 = vst.msk [vmem:[#allocation4 + $0x58] sm:$0xff] %vm3083, %v3078
        %3096 = vst.msk [vmem:[#allocation4 + $0x60] sm:$0xff] %vm3083, %v3079
        %3097 = vst.msk [vmem:[#allocation4 + $0x68] sm:$0xff] %vm3083, %v3080
        %3098 = vst.msk [vmem:[#allocation4 + $0x70] sm:$0xff] %vm3083, %v3081
        %3099 = vst.msk [vmem:[#allocation4 + $0x78] sm:$0xff] %vm3083, %v3082
        %3100 = vst.msk [vmem:[#allocation2] sm:$0xff] %vm2745, %v2457
        %3101 = vst.msk [vmem:[#allocation2 + $0x8] sm:$0xff] %vm2745, %v2458
        %3102 = vst.msk [vmem:[#allocation2 + $0x10] sm:$0xff] %vm2745, %v2459
        %3103 = vst.msk [vmem:[#allocation2 + $0x18] sm:$0xff] %vm2745, %v2460
        %3104 = vst.msk [vmem:[#allocation2 + $0x20] sm:$0xff] %vm2745, %v2461
        %3105 = vst.msk [vmem:[#allocation2 + $0x28] sm:$0xff] %vm2745, %v2462
        %3106 = vst.msk [vmem:[#allocation2 + $0x30] sm:$0xff] %vm2745, %v2463
        %3107 = vst.msk [vmem:[#allocation2 + $0x38] sm:$0xff] %vm2745, %v2464
        %3108 = vst.msk [vmem:[#allocation2 + $0x40] sm:$0xff] %vm2745, %v2465
        %3109 = vst.msk [vmem:[#allocation2 + $0x48] sm:$0xff] %vm2745, %v2466
        %3110 = vst.msk [vmem:[#allocation2 + $0x50] sm:$0xff] %vm2745, %v2467
        %3111 = vst.msk [vmem:[#allocation2 + $0x58] sm:$0xff] %vm2745, %v2468
        %3112 = vst.msk [vmem:[#allocation2 + $0x60] sm:$0xff] %vm2745, %v2469
        %3113 = vst.msk [vmem:[#allocation2 + $0x68] sm:$0xff] %vm2745, %v2470
        %3114 = vst.msk [vmem:[#allocation2 + $0x70] sm:$0xff] %vm2745, %v2471
        %3115 = vst.msk [vmem:[#allocation2 + $0x78] sm:$0xff] %vm2745, %v2472
        %3116 = vset.pattern.permute.xlu0 3
        %3117 = vperm.xlu0 %3116, %v494
        %v3118 = vpop.permute.xlu0 %3117
        %3120 = vset.pattern.permute.xlu0 3
        %3121 = vperm.xlu0 %3120, %v495
        %v3122 = vpop.permute.xlu0 %3121
        %3124 = vset.pattern.permute.xlu0 3
        %3125 = vperm.xlu0 %3124, %v496
        %v3126 = vpop.permute.xlu0 %3125
        %3128 = vset.pattern.permute.xlu0 3
        %3129 = vperm.xlu0 %3128, %v497
        %v3130 = vpop.permute.xlu0 %3129
        %3132 = vset.pattern.permute.xlu0 3
        %3133 = vperm.xlu0 %3132, %v498
        %v3134 = vpop.permute.xlu0 %3133
        %3136 = vset.pattern.permute.xlu0 3
        %3137 = vperm.xlu0 %3136, %v499
        %v3138 = vpop.permute.xlu0 %3137
        %3140 = vset.pattern.permute.xlu0 3
        %3141 = vperm.xlu0 %3140, %v500
        %v3142 = vpop.permute.xlu0 %3141
        %3144 = vset.pattern.permute.xlu0 3
        %3145 = vperm.xlu0 %3144, %v501
        %v3146 = vpop.permute.xlu0 %3145
        %3148 = vset.pattern.permute.xlu0 3
        %3149 = vperm.xlu0 %3148, %v502
        %v3150 = vpop.permute.xlu0 %3149
        %3152 = vset.pattern.permute.xlu0 3
        %3153 = vperm.xlu0 %3152, %v503
        %v3154 = vpop.permute.xlu0 %3153
        %3156 = vset.pattern.permute.xlu0 3
        %3157 = vperm.xlu0 %3156, %v504
        %v3158 = vpop.permute.xlu0 %3157
        %3160 = vset.pattern.permute.xlu0 3
        %3161 = vperm.xlu0 %3160, %v505
        %v3162 = vpop.permute.xlu0 %3161
        %3164 = vset.pattern.permute.xlu0 3
        %3165 = vperm.xlu0 %3164, %v506
        %v3166 = vpop.permute.xlu0 %3165
        %3168 = vset.pattern.permute.xlu0 3
        %3169 = vperm.xlu0 %3168, %v507
        %v3170 = vpop.permute.xlu0 %3169
        %3172 = vset.pattern.permute.xlu0 3
        %3173 = vperm.xlu0 %3172, %v508
        %v3174 = vpop.permute.xlu0 %3173
        %3176 = vset.pattern.permute.xlu0 3
        %3177 = vperm.xlu0 %3176, %v509
        %v3178 = vpop.permute.xlu0 %3177
        %v3180 = vlaneseq
        %v3181 = vshrl.u32 %v3180, 7
        %v3182 = vsub.s32 3, %v3181
        %v3183 = vrot.slane %v510, %v3182
        %v3184 = vadd.f32 %v3118, %v3183
        %v3185 = vadd.f32 %v3122, %v3183
        %v3186 = vadd.f32 %v3126, %v3183
        %v3187 = vadd.f32 %v3130, %v3183
        %v3188 = vadd.f32 %v3134, %v3183
        %v3189 = vadd.f32 %v3138, %v3183
        %v3190 = vadd.f32 %v3142, %v3183
        %v3191 = vadd.f32 %v3146, %v3183
        %v3192 = vadd.f32 %v3150, %v3183
        %v3193 = vadd.f32 %v3154, %v3183
        %v3194 = vadd.f32 %v3158, %v3183
        %v3195 = vadd.f32 %v3162, %v3183
        %v3196 = vadd.f32 %v3166, %v3183
        %v3197 = vadd.f32 %v3170, %v3183
        %v3198 = vadd.f32 %v3174, %v3183
        %v3199 = vadd.f32 %v3178, %v3183
        %vm3200 = vcmp.gt.f32.partialorder %v3184, 0.0
        %vm3201 = vcmp.gt.f32.partialorder %v3185, 0.0
        %vm3202 = vcmp.gt.f32.partialorder %v3186, 0.0
        %vm3203 = vcmp.gt.f32.partialorder %v3187, 0.0
        %vm3204 = vcmp.gt.f32.partialorder %v3188, 0.0
        %vm3205 = vcmp.gt.f32.partialorder %v3189, 0.0
        %vm3206 = vcmp.gt.f32.partialorder %v3190, 0.0
        %vm3207 = vcmp.gt.f32.partialorder %v3191, 0.0
        %vm3208 = vcmp.gt.f32.partialorder %v3192, 0.0
        %vm3209 = vcmp.gt.f32.partialorder %v3193, 0.0
        %vm3210 = vcmp.gt.f32.partialorder %v3194, 0.0
        %vm3211 = vcmp.gt.f32.partialorder %v3195, 0.0
        %vm3212 = vcmp.gt.f32.partialorder %v3196, 0.0
        %vm3213 = vcmp.gt.f32.partialorder %v3197, 0.0
        %vm3214 = vcmp.gt.f32.partialorder %v3198, 0.0
        %vm3215 = vcmp.gt.f32.partialorder %v3199, 0.0
        %v3216 = vmul.f32 %v3184, 0.2
        %v3217 = vmul.f32 %v3185, 0.2
        %v3218 = vmul.f32 %v3186, 0.2
        %v3219 = vmul.f32 %v3187, 0.2
        %v3220 = vmul.f32 %v3188, 0.2
        %v3221 = vmul.f32 %v3189, 0.2
        %v3222 = vmul.f32 %v3190, 0.2
        %v3223 = vmul.f32 %v3191, 0.2
        %v3224 = vmul.f32 %v3192, 0.2
        %v3225 = vmul.f32 %v3193, 0.2
        %v3226 = vmul.f32 %v3194, 0.2
        %v3227 = vmul.f32 %v3195, 0.2
        %v3228 = vmul.f32 %v3196, 0.2
        %v3229 = vmul.f32 %v3197, 0.2
        %v3230 = vmul.f32 %v3198, 0.2
        %v3231 = vmul.f32 %v3199, 0.2
        %v3232 = vsel %vm3200, %v3184, %v3216
        %v3233 = vsel %vm3201, %v3185, %v3217
        %v3234 = vsel %vm3202, %v3186, %v3218
        %v3235 = vsel %vm3203, %v3187, %v3219
        %v3236 = vsel %vm3204, %v3188, %v3220
        %v3237 = vsel %vm3205, %v3189, %v3221
        %v3238 = vsel %vm3206, %v3190, %v3222
        %v3239 = vsel %vm3207, %v3191, %v3223
        %v3240 = vsel %vm3208, %v3192, %v3224
        %v3241 = vsel %vm3209, %v3193, %v3225
        %v3242 = vsel %vm3210, %v3194, %v3226
        %v3243 = vsel %vm3211, %v3195, %v3227
        %v3244 = vsel %vm3212, %v3196, %v3228
        %v3245 = vsel %vm3213, %v3197, %v3229
        %v3246 = vsel %vm3214, %v3198, %v3230
        %v3247 = vsel %vm3215, %v3199, %v3231
        %v3248 = vsel %vm707, %v3232, -1e+30
        %v3249 = vsel %vm708, %v3233, -1e+30
        %v3250 = vsel %vm709, %v3234, -1e+30
        %v3251 = vsel %vm710, %v3235, -1e+30
        %v3252 = vsel %vm711, %v3236, -1e+30
        %v3253 = vsel %vm712, %v3237, -1e+30
        %v3254 = vsel %vm713, %v3238, -1e+30
        %v3255 = vsel %vm714, %v3239, -1e+30
        %v3256 = vsel %vm715, %v3240, -1e+30
        %v3257 = vsel %vm716, %v3241, -1e+30
        %v3258 = vsel %vm717, %v3242, -1e+30
        %v3259 = vsel %vm718, %v3243, -1e+30
        %v3260 = vsel %vm719, %v3244, -1e+30
        %v3261 = vsel %vm720, %v3245, -1e+30
        %v3262 = vsel %vm721, %v3246, -1e+30
        %v3263 = vsel %vm722, %v3247, -1e+30
        %v3264 = vld [vmem:[#allocation2] sm:$0xff]
        %v3265 = vld [vmem:[#allocation2 + $0x8] sm:$0xff]
        %v3266 = vld [vmem:[#allocation2 + $0x10] sm:$0xff]
        %v3267 = vld [vmem:[#allocation2 + $0x18] sm:$0xff]
        %v3268 = vld [vmem:[#allocation2 + $0x20] sm:$0xff]
        %v3269 = vld [vmem:[#allocation2 + $0x28] sm:$0xff]
        %v3270 = vld [vmem:[#allocation2 + $0x30] sm:$0xff]
        %v3271 = vld [vmem:[#allocation2 + $0x38] sm:$0xff]
        %v3272 = vld [vmem:[#allocation2 + $0x40] sm:$0xff]
        %v3273 = vld [vmem:[#allocation2 + $0x48] sm:$0xff]
        %v3274 = vld [vmem:[#allocation2 + $0x50] sm:$0xff]
        %v3275 = vld [vmem:[#allocation2 + $0x58] sm:$0xff]
        %v3276 = vld [vmem:[#allocation2 + $0x60] sm:$0xff]
        %v3277 = vld [vmem:[#allocation2 + $0x68] sm:$0xff]
        %v3278 = vld [vmem:[#allocation2 + $0x70] sm:$0xff]
        %v3279 = vld [vmem:[#allocation2 + $0x78] sm:$0xff]
        %3280 = vmax.xlane.f32.xlu0 %v3248
        %v3281 = vpop.xlane.xlu0 %3280
        %3282 = vmax.xlane.f32.xlu0 %v3249
        %v3283 = vpop.xlane.xlu0 %3282
        %3284 = vmax.xlane.f32.xlu0 %v3250
        %v3285 = vpop.xlane.xlu0 %3284
        %3286 = vmax.xlane.f32.xlu0 %v3251
        %v3287 = vpop.xlane.xlu0 %3286
        %3288 = vmax.xlane.f32.xlu0 %v3252
        %v3289 = vpop.xlane.xlu0 %3288
        %3290 = vmax.xlane.f32.xlu0 %v3253
        %v3291 = vpop.xlane.xlu0 %3290
        %3292 = vmax.xlane.f32.xlu0 %v3254
        %v3293 = vpop.xlane.xlu0 %3292
        %3294 = vmax.xlane.f32.xlu0 %v3255
        %v3295 = vpop.xlane.xlu0 %3294
        %3296 = vmax.xlane.f32.xlu0 %v3256
        %v3297 = vpop.xlane.xlu0 %3296
        %3298 = vmax.xlane.f32.xlu0 %v3257
        %v3299 = vpop.xlane.xlu0 %3298
        %3300 = vmax.xlane.f32.xlu0 %v3258
        %v3301 = vpop.xlane.xlu0 %3300
        %3302 = vmax.xlane.f32.xlu0 %v3259
        %v3303 = vpop.xlane.xlu0 %3302
        %3304 = vmax.xlane.f32.xlu0 %v3260
        %v3305 = vpop.xlane.xlu0 %3304
        %3306 = vmax.xlane.f32.xlu0 %v3261
        %v3307 = vpop.xlane.xlu0 %3306
        %3308 = vmax.xlane.f32.xlu0 %v3262
        %v3309 = vpop.xlane.xlu0 %3308
        %3310 = vmax.xlane.f32.xlu0 %v3263
        %v3311 = vpop.xlane.xlu0 %3310
        %v3312 = vmax.f32 %v3264, %v3281
        %v3313 = vmax.f32 %v3265, %v3283
        %v3314 = vmax.f32 %v3266, %v3285
        %v3315 = vmax.f32 %v3267, %v3287
        %v3316 = vmax.f32 %v3268, %v3289
        %v3317 = vmax.f32 %v3269, %v3291
        %v3318 = vmax.f32 %v3270, %v3293
        %v3319 = vmax.f32 %v3271, %v3295
        %v3320 = vmax.f32 %v3272, %v3297
        %v3321 = vmax.f32 %v3273, %v3299
        %v3322 = vmax.f32 %v3274, %v3301
        %v3323 = vmax.f32 %v3275, %v3303
        %v3324 = vmax.f32 %v3276, %v3305
        %v3325 = vmax.f32 %v3277, %v3307
        %v3326 = vmax.f32 %v3278, %v3309
        %v3327 = vmax.f32 %v3279, %v3311
        %v3328 = vsub.f32 %v3264, %v3312
        %v3329 = vsub.f32 %v3265, %v3313
        %v3330 = vsub.f32 %v3266, %v3314
        %v3331 = vsub.f32 %v3267, %v3315
        %v3332 = vsub.f32 %v3268, %v3316
        %v3333 = vsub.f32 %v3269, %v3317
        %v3334 = vsub.f32 %v3270, %v3318
        %v3335 = vsub.f32 %v3271, %v3319
        %v3336 = vsub.f32 %v3272, %v3320
        %v3337 = vsub.f32 %v3273, %v3321
        %v3338 = vsub.f32 %v3274, %v3322
        %v3339 = vsub.f32 %v3275, %v3323
        %v3340 = vsub.f32 %v3276, %v3324
        %v3341 = vsub.f32 %v3277, %v3325
        %v3342 = vsub.f32 %v3278, %v3326
        %v3343 = vsub.f32 %v3279, %v3327
        %v3344 = vmul.f32 %v3328, 1.442695
        %v3345 = vpow.pop %v3344
        %v3346 = vmul.f32 %v3329, 1.442695
        %v3347 = vpow.pop %v3346
        %v3348 = vmul.f32 %v3330, 1.442695
        %v3349 = vpow.pop %v3348
        %v3350 = vmul.f32 %v3331, 1.442695
        %v3351 = vpow.pop %v3350
        %v3352 = vmul.f32 %v3332, 1.442695
        %v3353 = vpow.pop %v3352
        %v3354 = vmul.f32 %v3333, 1.442695
        %v3355 = vpow.pop %v3354
        %v3356 = vmul.f32 %v3334, 1.442695
        %v3357 = vpow.pop %v3356
        %v3358 = vmul.f32 %v3335, 1.442695
        %v3359 = vpow.pop %v3358
        %v3360 = vmul.f32 %v3336, 1.442695
        %v3361 = vpow.pop %v3360
        %v3362 = vmul.f32 %v3337, 1.442695
        %v3363 = vpow.pop %v3362
        %v3364 = vmul.f32 %v3338, 1.442695
        %v3365 = vpow.pop %v3364
        %v3366 = vmul.f32 %v3339, 1.442695
        %v3367 = vpow.pop %v3366
        %v3368 = vmul.f32 %v3340, 1.442695
        %v3369 = vpow.pop %v3368
        %v3370 = vmul.f32 %v3341, 1.442695
        %v3371 = vpow.pop %v3370
        %v3372 = vmul.f32 %v3342, 1.442695
        %v3373 = vpow.pop %v3372
        %v3374 = vmul.f32 %v3343, 1.442695
        %v3375 = vpow.pop %v3374
        %3377 = vset.pattern.permute.xlu0 3
        %3378 = vperm.xlu0 %3377, %v3312
        %v3379 = vpop.permute.xlu0 %3378
        %3382 = vset.pattern.permute.xlu0 3
        %3383 = vperm.xlu0 %3382, %v3313
        %v3384 = vpop.permute.xlu0 %3383
        %3387 = vset.pattern.permute.xlu0 3
        %3388 = vperm.xlu0 %3387, %v3314
        %v3389 = vpop.permute.xlu0 %3388
        %3392 = vset.pattern.permute.xlu0 3
        %3393 = vperm.xlu0 %3392, %v3315
        %v3394 = vpop.permute.xlu0 %3393
        %3397 = vset.pattern.permute.xlu0 3
        %3398 = vperm.xlu0 %3397, %v3316
        %v3399 = vpop.permute.xlu0 %3398
        %3402 = vset.pattern.permute.xlu0 3
        %3403 = vperm.xlu0 %3402, %v3317
        %v3404 = vpop.permute.xlu0 %3403
        %3407 = vset.pattern.permute.xlu0 3
        %3408 = vperm.xlu0 %3407, %v3318
        %v3409 = vpop.permute.xlu0 %3408
        %3412 = vset.pattern.permute.xlu0 3
        %3413 = vperm.xlu0 %3412, %v3319
        %v3414 = vpop.permute.xlu0 %3413
        %3417 = vset.pattern.permute.xlu0 3
        %3418 = vperm.xlu0 %3417, %v3320
        %v3419 = vpop.permute.xlu0 %3418
        %3422 = vset.pattern.permute.xlu0 3
        %3423 = vperm.xlu0 %3422, %v3321
        %v3424 = vpop.permute.xlu0 %3423
        %3427 = vset.pattern.permute.xlu0 3
        %3428 = vperm.xlu0 %3427, %v3322
        %v3429 = vpop.permute.xlu0 %3428
        %3432 = vset.pattern.permute.xlu0 3
        %3433 = vperm.xlu0 %3432, %v3323
        %v3434 = vpop.permute.xlu0 %3433
        %3437 = vset.pattern.permute.xlu0 3
        %3438 = vperm.xlu0 %3437, %v3324
        %v3439 = vpop.permute.xlu0 %3438
        %3442 = vset.pattern.permute.xlu0 3
        %3443 = vperm.xlu0 %3442, %v3325
        %v3444 = vpop.permute.xlu0 %3443
        %3447 = vset.pattern.permute.xlu0 3
        %3448 = vperm.xlu0 %3447, %v3326
        %v3449 = vpop.permute.xlu0 %3448
        %3452 = vset.pattern.permute.xlu0 3
        %3453 = vperm.xlu0 %3452, %v3327
        %v3454 = vpop.permute.xlu0 %3453
        %v3456 = vsub.f32 %v3248, %v3379
        %v3457 = vsub.f32 %v3249, %v3384
        %v3458 = vsub.f32 %v3250, %v3389
        %v3459 = vsub.f32 %v3251, %v3394
        %v3460 = vsub.f32 %v3252, %v3399
        %v3461 = vsub.f32 %v3253, %v3404
        %v3462 = vsub.f32 %v3254, %v3409
        %v3463 = vsub.f32 %v3255, %v3414
        %v3464 = vsub.f32 %v3256, %v3419
        %v3465 = vsub.f32 %v3257, %v3424
        %v3466 = vsub.f32 %v3258, %v3429
        %v3467 = vsub.f32 %v3259, %v3434
        %v3468 = vsub.f32 %v3260, %v3439
        %v3469 = vsub.f32 %v3261, %v3444
        %v3470 = vsub.f32 %v3262, %v3449
        %v3471 = vsub.f32 %v3263, %v3454
        %v3472 = vmul.f32 %v3456, 1.442695
        %v3473 = vpow.pop %v3472
        %v3474 = vmul.f32 %v3457, 1.442695
        %v3475 = vpow.pop %v3474
        %v3476 = vmul.f32 %v3458, 1.442695
        %v3477 = vpow.pop %v3476
        %v3478 = vmul.f32 %v3459, 1.442695
        %v3479 = vpow.pop %v3478
        %v3480 = vmul.f32 %v3460, 1.442695
        %v3481 = vpow.pop %v3480
        %v3482 = vmul.f32 %v3461, 1.442695
        %v3483 = vpow.pop %v3482
        %v3484 = vmul.f32 %v3462, 1.442695
        %v3485 = vpow.pop %v3484
        %v3486 = vmul.f32 %v3463, 1.442695
        %v3487 = vpow.pop %v3486
        %v3488 = vmul.f32 %v3464, 1.442695
        %v3489 = vpow.pop %v3488
        %v3490 = vmul.f32 %v3465, 1.442695
        %v3491 = vpow.pop %v3490
        %v3492 = vmul.f32 %v3466, 1.442695
        %v3493 = vpow.pop %v3492
        %v3494 = vmul.f32 %v3467, 1.442695
        %v3495 = vpow.pop %v3494
        %v3496 = vmul.f32 %v3468, 1.442695
        %v3497 = vpow.pop %v3496
        %v3498 = vmul.f32 %v3469, 1.442695
        %v3499 = vpow.pop %v3498
        %v3500 = vmul.f32 %v3470, 1.442695
        %v3501 = vpow.pop %v3500
        %v3502 = vmul.f32 %v3471, 1.442695
        %v3503 = vpow.pop %v3502
        %v3504 = vsel %vm707, %v3473, 0.0
        %v3505 = vsel %vm708, %v3475, 0.0
        %v3506 = vsel %vm709, %v3477, 0.0
        %v3507 = vsel %vm710, %v3479, 0.0
        %v3508 = vsel %vm711, %v3481, 0.0
        %v3509 = vsel %vm712, %v3483, 0.0
        %v3510 = vsel %vm713, %v3485, 0.0
        %v3511 = vsel %vm714, %v3487, 0.0
        %v3512 = vsel %vm715, %v3489, 0.0
        %v3513 = vsel %vm716, %v3491, 0.0
        %v3514 = vsel %vm717, %v3493, 0.0
        %v3515 = vsel %vm718, %v3495, 0.0
        %v3516 = vsel %vm719, %v3497, 0.0
        %v3517 = vsel %vm720, %v3499, 0.0
        %v3518 = vsel %vm721, %v3501, 0.0
        %v3519 = vsel %vm722, %v3503, 0.0
        %v3520 = vld [vmem:[#allocation3] sm:$0xff]
        %v3521 = vld [vmem:[#allocation3 + $0x8] sm:$0xff]
        %v3522 = vld [vmem:[#allocation3 + $0x10] sm:$0xff]
        %v3523 = vld [vmem:[#allocation3 + $0x18] sm:$0xff]
        %v3524 = vld [vmem:[#allocation3 + $0x20] sm:$0xff]
        %v3525 = vld [vmem:[#allocation3 + $0x28] sm:$0xff]
        %v3526 = vld [vmem:[#allocation3 + $0x30] sm:$0xff]
        %v3527 = vld [vmem:[#allocation3 + $0x38] sm:$0xff]
        %v3528 = vld [vmem:[#allocation3 + $0x40] sm:$0xff]
        %v3529 = vld [vmem:[#allocation3 + $0x48] sm:$0xff]
        %v3530 = vld [vmem:[#allocation3 + $0x50] sm:$0xff]
        %v3531 = vld [vmem:[#allocation3 + $0x58] sm:$0xff]
        %v3532 = vld [vmem:[#allocation3 + $0x60] sm:$0xff]
        %v3533 = vld [vmem:[#allocation3 + $0x68] sm:$0xff]
        %v3534 = vld [vmem:[#allocation3 + $0x70] sm:$0xff]
        %v3535 = vld [vmem:[#allocation3 + $0x78] sm:$0xff]
        %v3536 = vmul.f32 %v3345, %v3520
        %v3537 = vmul.f32 %v3347, %v3521
        %v3538 = vmul.f32 %v3349, %v3522
        %v3539 = vmul.f32 %v3351, %v3523
        %v3540 = vmul.f32 %v3353, %v3524
        %v3541 = vmul.f32 %v3355, %v3525
        %v3542 = vmul.f32 %v3357, %v3526
        %v3543 = vmul.f32 %v3359, %v3527
        %v3544 = vmul.f32 %v3361, %v3528
        %v3545 = vmul.f32 %v3363, %v3529
        %v3546 = vmul.f32 %v3365, %v3530
        %v3547 = vmul.f32 %v3367, %v3531
        %v3548 = vmul.f32 %v3369, %v3532
        %v3549 = vmul.f32 %v3371, %v3533
        %v3550 = vmul.f32 %v3373, %v3534
        %v3551 = vmul.f32 %v3375, %v3535
        %3552 = vadd.xlane.f32.xlu0 %v3504
        %v3553 = vpop.xlane.xlu0 %3552
        %3554 = vadd.xlane.f32.xlu0 %v3505
        %v3555 = vpop.xlane.xlu0 %3554
        %3556 = vadd.xlane.f32.xlu0 %v3506
        %v3557 = vpop.xlane.xlu0 %3556
        %3558 = vadd.xlane.f32.xlu0 %v3507
        %v3559 = vpop.xlane.xlu0 %3558
        %3560 = vadd.xlane.f32.xlu0 %v3508
        %v3561 = vpop.xlane.xlu0 %3560
        %3562 = vadd.xlane.f32.xlu0 %v3509
        %v3563 = vpop.xlane.xlu0 %3562
        %3564 = vadd.xlane.f32.xlu0 %v3510
        %v3565 = vpop.xlane.xlu0 %3564
        %3566 = vadd.xlane.f32.xlu0 %v3511
        %v3567 = vpop.xlane.xlu0 %3566
        %3568 = vadd.xlane.f32.xlu0 %v3512
        %v3569 = vpop.xlane.xlu0 %3568
        %3570 = vadd.xlane.f32.xlu0 %v3513
        %v3571 = vpop.xlane.xlu0 %3570
        %3572 = vadd.xlane.f32.xlu0 %v3514
        %v3573 = vpop.xlane.xlu0 %3572
        %3574 = vadd.xlane.f32.xlu0 %v3515
        %v3575 = vpop.xlane.xlu0 %3574
        %3576 = vadd.xlane.f32.xlu0 %v3516
        %v3577 = vpop.xlane.xlu0 %3576
        %3578 = vadd.xlane.f32.xlu0 %v3517
        %v3579 = vpop.xlane.xlu0 %3578
        %3580 = vadd.xlane.f32.xlu0 %v3518
        %v3581 = vpop.xlane.xlu0 %3580
        %3582 = vadd.xlane.f32.xlu0 %v3519
        %v3583 = vpop.xlane.xlu0 %3582
        %v3584 = vadd.f32 %v3536, %v3553
        %v3585 = vadd.f32 %v3537, %v3555
        %v3586 = vadd.f32 %v3538, %v3557
        %v3587 = vadd.f32 %v3539, %v3559
        %v3588 = vadd.f32 %v3540, %v3561
        %v3589 = vadd.f32 %v3541, %v3563
        %v3590 = vadd.f32 %v3542, %v3565
        %v3591 = vadd.f32 %v3543, %v3567
        %v3592 = vadd.f32 %v3544, %v3569
        %v3593 = vadd.f32 %v3545, %v3571
        %v3594 = vadd.f32 %v3546, %v3573
        %v3595 = vadd.f32 %v3547, %v3575
        %v3596 = vadd.f32 %v3548, %v3577
        %v3597 = vadd.f32 %v3549, %v3579
        %v3598 = vadd.f32 %v3550, %v3581
        %v3599 = vadd.f32 %v3551, %v3583
        %vm3600 = vcmask 31768
        %3601 = vst.msk [vmem:[#allocation3] sm:$0xff] %vm3600, %v3584
        %3602 = vst.msk [vmem:[#allocation3 + $0x8] sm:$0xff] %vm3600, %v3585
        %3603 = vst.msk [vmem:[#allocation3 + $0x10] sm:$0xff] %vm3600, %v3586
        %3604 = vst.msk [vmem:[#allocation3 + $0x18] sm:$0xff] %vm3600, %v3587
        %3605 = vst.msk [vmem:[#allocation3 + $0x20] sm:$0xff] %vm3600, %v3588
        %3606 = vst.msk [vmem:[#allocation3 + $0x28] sm:$0xff] %vm3600, %v3589
        %3607 = vst.msk [vmem:[#allocation3 + $0x30] sm:$0xff] %vm3600, %v3590
        %3608 = vst.msk [vmem:[#allocation3 + $0x38] sm:$0xff] %vm3600, %v3591
        %3609 = vst.msk [vmem:[#allocation3 + $0x40] sm:$0xff] %vm3600, %v3592
        %3610 = vst.msk [vmem:[#allocation3 + $0x48] sm:$0xff] %vm3600, %v3593
        %3611 = vst.msk [vmem:[#allocation3 + $0x50] sm:$0xff] %vm3600, %v3594
        %3612 = vst.msk [vmem:[#allocation3 + $0x58] sm:$0xff] %vm3600, %v3595
        %3613 = vst.msk [vmem:[#allocation3 + $0x60] sm:$0xff] %vm3600, %v3596
        %3614 = vst.msk [vmem:[#allocation3 + $0x68] sm:$0xff] %vm3600, %v3597
        %3615 = vst.msk [vmem:[#allocation3 + $0x70] sm:$0xff] %vm3600, %v3598
        %3616 = vst.msk [vmem:[#allocation3 + $0x78] sm:$0xff] %vm3600, %v3599
        %v3617 = vld [vmem:[#allocation4] sm:$0xff]
        %v3618 = vld [vmem:[#allocation4 + $0x8] sm:$0xff]
        %v3619 = vld [vmem:[#allocation4 + $0x10] sm:$0xff]
        %v3620 = vld [vmem:[#allocation4 + $0x18] sm:$0xff]
        %v3621 = vld [vmem:[#allocation4 + $0x20] sm:$0xff]
        %v3622 = vld [vmem:[#allocation4 + $0x28] sm:$0xff]
        %v3623 = vld [vmem:[#allocation4 + $0x30] sm:$0xff]
        %v3624 = vld [vmem:[#allocation4 + $0x38] sm:$0xff]
        %v3625 = vld [vmem:[#allocation4 + $0x40] sm:$0xff]
        %v3626 = vld [vmem:[#allocation4 + $0x48] sm:$0xff]
        %v3627 = vld [vmem:[#allocation4 + $0x50] sm:$0xff]
        %v3628 = vld [vmem:[#allocation4 + $0x58] sm:$0xff]
        %v3629 = vld [vmem:[#allocation4 + $0x60] sm:$0xff]
        %v3630 = vld [vmem:[#allocation4 + $0x68] sm:$0xff]
        %v3631 = vld [vmem:[#allocation4 + $0x70] sm:$0xff]
        %v3632 = vld [vmem:[#allocation4 + $0x78] sm:$0xff]
        %3634 = vset.pattern.permute.xlu0 3
        %3635 = vperm.xlu0 %3634, %v3345
        %v3636 = vpop.permute.xlu0 %3635
        %3639 = vset.pattern.permute.xlu0 3
        %3640 = vperm.xlu0 %3639, %v3347
        %v3641 = vpop.permute.xlu0 %3640
        %3644 = vset.pattern.permute.xlu0 3
        %3645 = vperm.xlu0 %3644, %v3349
        %v3646 = vpop.permute.xlu0 %3645
        %3649 = vset.pattern.permute.xlu0 3
        %3650 = vperm.xlu0 %3649, %v3351
        %v3651 = vpop.permute.xlu0 %3650
        %3654 = vset.pattern.permute.xlu0 3
        %3655 = vperm.xlu0 %3654, %v3353
        %v3656 = vpop.permute.xlu0 %3655
        %3659 = vset.pattern.permute.xlu0 3
        %3660 = vperm.xlu0 %3659, %v3355
        %v3661 = vpop.permute.xlu0 %3660
        %3664 = vset.pattern.permute.xlu0 3
        %3665 = vperm.xlu0 %3664, %v3357
        %v3666 = vpop.permute.xlu0 %3665
        %3669 = vset.pattern.permute.xlu0 3
        %3670 = vperm.xlu0 %3669, %v3359
        %v3671 = vpop.permute.xlu0 %3670
        %3674 = vset.pattern.permute.xlu0 3
        %3675 = vperm.xlu0 %3674, %v3361
        %v3676 = vpop.permute.xlu0 %3675
        %3679 = vset.pattern.permute.xlu0 3
        %3680 = vperm.xlu0 %3679, %v3363
        %v3681 = vpop.permute.xlu0 %3680
        %3684 = vset.pattern.permute.xlu0 3
        %3685 = vperm.xlu0 %3684, %v3365
        %v3686 = vpop.permute.xlu0 %3685
        %3689 = vset.pattern.permute.xlu0 3
        %3690 = vperm.xlu0 %3689, %v3367
        %v3691 = vpop.permute.xlu0 %3690
        %3694 = vset.pattern.permute.xlu0 3
        %3695 = vperm.xlu0 %3694, %v3369
        %v3696 = vpop.permute.xlu0 %3695
        %3699 = vset.pattern.permute.xlu0 3
        %3700 = vperm.xlu0 %3699, %v3371
        %v3701 = vpop.permute.xlu0 %3700
        %3704 = vset.pattern.permute.xlu0 3
        %3705 = vperm.xlu0 %3704, %v3373
        %v3706 = vpop.permute.xlu0 %3705
        %3709 = vset.pattern.permute.xlu0 3
        %3710 = vperm.xlu0 %3709, %v3375
        %v3711 = vpop.permute.xlu0 %3710
        %v3713 = vmul.f32 %v3636, %v3617
        %v3714 = vmul.f32 %v3641, %v3618
        %v3715 = vmul.f32 %v3646, %v3619
        %v3716 = vmul.f32 %v3651, %v3620
        %v3717 = vmul.f32 %v3656, %v3621
        %v3718 = vmul.f32 %v3661, %v3622
        %v3719 = vmul.f32 %v3666, %v3623
        %v3720 = vmul.f32 %v3671, %v3624
        %v3721 = vmul.f32 %v3676, %v3625
        %v3722 = vmul.f32 %v3681, %v3626
        %v3723 = vmul.f32 %v3686, %v3627
        %v3724 = vmul.f32 %v3691, %v3628
        %v3725 = vmul.f32 %v3696, %v3629
        %v3726 = vmul.f32 %v3701, %v3630
        %v3727 = vmul.f32 %v3706, %v3631
        %v3728 = vmul.f32 %v3711, %v3632
        %v3729 = vpack.c.bf16 %v3505, %v3504
        %v3730 = vpack.c.bf16 %v3507, %v3506
        %v3731 = vpack.c.bf16 %v3509, %v3508
        %v3732 = vpack.c.bf16 %v3511, %v3510
        %v3733 = vpack.c.bf16 %v3513, %v3512
        %v3734 = vpack.c.bf16 %v3515, %v3514
        %v3735 = vpack.c.bf16 %v3517, %v3516
        %v3736 = vpack.c.bf16 %v3519, %v3518
        %3737 = vrot.lane.b32.xlu0 %v1244, 32
        %v3738 = vpop.permute.xlu0 %3737
        %3739 = vrot.lane.b32.xlu0 %v1245, 32
        %v3740 = vpop.permute.xlu0 %3739
        %3741 = vrot.lane.b32.xlu0 %v1246, 32
        %v3742 = vpop.permute.xlu0 %3741
        %3743 = vrot.lane.b32.xlu0 %v1247, 32
        %v3744 = vpop.permute.xlu0 %3743
        %3745 = vrot.lane.b32.xlu0 %v1248, 32
        %v3746 = vpop.permute.xlu0 %3745
        %3747 = vrot.lane.b32.xlu0 %v1249, 32
        %v3748 = vpop.permute.xlu0 %3747
        %3749 = vrot.lane.b32.xlu0 %v1250, 32
        %v3750 = vpop.permute.xlu0 %3749
        %3751 = vrot.lane.b32.xlu0 %v1251, 32
        %v3752 = vpop.permute.xlu0 %3751
        %3761 = vmatprep.subr.bf16.mxu0 0
        %3762 = vmatpush1.bf16.msra.mxu0 %v3738
        %3763 = vmatprep.subr.bf16.mxu0 0
        %3764 = vmatpush1.bf16.msra.mxu0 %v3740
        %3765 = vmatprep.subr.bf16.mxu0 0
        %3766 = vmatpush1.bf16.msra.mxu0 %v3742
        %3767 = vmatprep.subr.bf16.mxu0 0
        %3768 = vmatpush1.bf16.msra.mxu0 %v3744
        %3769 = vmatprep.subr.bf16.mxu0 0
        %3770 = vmatpush1.bf16.msra.mxu0 %v3746
        %3771 = vmatprep.subr.bf16.mxu0 0
        %3772 = vmatpush1.bf16.msra.mxu0 %v3748
        %3773 = vmatprep.subr.bf16.mxu0 0
        %3774 = vmatpush1.bf16.msra.mxu0 %v3750
        %3775 = vmatprep.subr.bf16.mxu0 0
        %3776 = vmatpush1.bf16.msra.mxu0 %v3752
        %3777 = vmatprep.subr.bf16.mxu0 0
        %3778 = vmatpush1.bf16.msra.mxu0 0
        %3779 = vmatprep.subr.bf16.mxu0 0
        %3780 = vmatpush1.bf16.msra.mxu0 0
        %3781 = vmatprep.subr.bf16.mxu0 0
        %3782 = vmatpush1.bf16.msra.mxu0 0
        %3783 = vmatprep.subr.bf16.mxu0 0
        %3784 = vmatpush1.bf16.msra.mxu0 0
        %3785 = vmatprep.subr.bf16.mxu0 0
        %3786 = vmatpush1.bf16.msra.mxu0 0
        %3787 = vmatprep.subr.bf16.mxu0 0
        %3788 = vmatpush1.bf16.msra.mxu0 0
        %3789 = vmatprep.subr.bf16.mxu0 0
        %3790 = vmatpush1.bf16.msra.mxu0 0
        %3791 = vmatprep.subr.bf16.mxu0 0
        %3792 = vmatpush1.bf16.msra.mxu0 0
        %3793 = vmatprep.mubr.bf16.mxu0 0
        %3794 = vmatmul.mubr.bf16.gmra.mrb[0].mxu0 %v3729
        %v3795 = vpop.f32.mrb[0].mxu0
        %v3796 = vadd.f32 0.0, %v3795
        %v3797 = vpop.f32.mrb[0].mxu0
        %v3798 = vpop.f32.mrb[0].mxu0
        %v3799 = vadd.f32 0.0, %v3798
        %v3800 = vpop.f32.mrb[0].mxu0
        %3801 = vmatprep.mubr.bf16.mxu0 0
        %3802 = vmatmul.mubr.bf16.gmra.mrb[0].mxu0 %v3730
        %v3803 = vpop.f32.mrb[0].mxu0
        %v3804 = vadd.f32 0.0, %v3803
        %v3805 = vpop.f32.mrb[0].mxu0
        %v3806 = vpop.f32.mrb[0].mxu0
        %v3807 = vadd.f32 0.0, %v3806
        %v3808 = vpop.f32.mrb[0].mxu0
        %3809 = vmatprep.mubr.bf16.mxu0 0
        %3810 = vmatmul.mubr.bf16.gmra.mrb[0].mxu0 %v3731
        %v3811 = vpop.f32.mrb[0].mxu0
        %v3812 = vadd.f32 0.0, %v3811
        %v3813 = vpop.f32.mrb[0].mxu0
        %v3814 = vpop.f32.mrb[0].mxu0
        %v3815 = vadd.f32 0.0, %v3814
        %v3816 = vpop.f32.mrb[0].mxu0
        %3817 = vmatprep.mubr.bf16.mxu0 0
        %3818 = vmatmul.mubr.bf16.gmra.mrb[0].mxu0 %v3732
        %v3819 = vpop.f32.mrb[0].mxu0
        %v3820 = vadd.f32 0.0, %v3819
        %v3821 = vpop.f32.mrb[0].mxu0
        %v3822 = vpop.f32.mrb[0].mxu0
        %v3823 = vadd.f32 0.0, %v3822
        %v3824 = vpop.f32.mrb[0].mxu0
        %3825 = vmatprep.mubr.bf16.mxu0 0
        %3826 = vmatmul.mubr.bf16.gmra.mrb[0].mxu0 %v3733
        %v3827 = vpop.f32.mrb[0].mxu0
        %v3828 = vadd.f32 0.0, %v3827
        %v3829 = vpop.f32.mrb[0].mxu0
        %v3830 = vpop.f32.mrb[0].mxu0
        %v3831 = vadd.f32 0.0, %v3830
        %v3832 = vpop.f32.mrb[0].mxu0
        %3833 = vmatprep.mubr.bf16.mxu0 0
        %3834 = vmatmul.mubr.bf16.gmra.mrb[0].mxu0 %v3734
        %v3835 = vpop.f32.mrb[0].mxu0
        %v3836 = vadd.f32 0.0, %v3835
        %v3837 = vpop.f32.mrb[0].mxu0
        %v3838 = vpop.f32.mrb[0].mxu0
        %v3839 = vadd.f32 0.0, %v3838
        %v3840 = vpop.f32.mrb[0].mxu0
        %3841 = vmatprep.mubr.bf16.mxu0 0
        %3842 = vmatmul.mubr.bf16.gmra.mrb[0].mxu0 %v3735
        %v3843 = vpop.f32.mrb[0].mxu0
        %v3844 = vadd.f32 0.0, %v3843
        %v3845 = vpop.f32.mrb[0].mxu0
        %v3846 = vpop.f32.mrb[0].mxu0
        %v3847 = vadd.f32 0.0, %v3846
        %v3848 = vpop.f32.mrb[0].mxu0
        %3849 = vmatprep.mubr.bf16.mxu0 0
        %3850 = vmatmul.mubr.bf16.gmra.mrb[0].mxu0 %v3736
        %v3851 = vpop.f32.mrb[0].mxu0
        %v3852 = vadd.f32 0.0, %v3851
        %v3853 = vpop.f32.mrb[0].mxu0
        %v3854 = vpop.f32.mrb[0].mxu0
        %v3855 = vadd.f32 0.0, %v3854
        %v3856 = vpop.f32.mrb[0].mxu0
        %3857 = vdwg.mxu0
        %3874 = vrot.lane.b32.xlu0 %v3796, 96
        %v3875 = vpop.permute.xlu0 %3874
        %3876 = vrot.lane.b32.xlu0 %v3799, 96
        %v3877 = vpop.permute.xlu0 %3876
        %3878 = vrot.lane.b32.xlu0 %v3804, 96
        %v3879 = vpop.permute.xlu0 %3878
        %3880 = vrot.lane.b32.xlu0 %v3807, 96
        %v3881 = vpop.permute.xlu0 %3880
        %3882 = vrot.lane.b32.xlu0 %v3812, 96
        %v3883 = vpop.permute.xlu0 %3882
        %3884 = vrot.lane.b32.xlu0 %v3815, 96
        %v3885 = vpop.permute.xlu0 %3884
        %3886 = vrot.lane.b32.xlu0 %v3820, 96
        %v3887 = vpop.permute.xlu0 %3886
        %3888 = vrot.lane.b32.xlu0 %v3823, 96
        %v3889 = vpop.permute.xlu0 %3888
        %3890 = vrot.lane.b32.xlu0 %v3828, 96
        %v3891 = vpop.permute.xlu0 %3890
        %3892 = vrot.lane.b32.xlu0 %v3831, 96
        %v3893 = vpop.permute.xlu0 %3892
        %3894 = vrot.lane.b32.xlu0 %v3836, 96
        %v3895 = vpop.permute.xlu0 %3894
        %3896 = vrot.lane.b32.xlu0 %v3839, 96
        %v3897 = vpop.permute.xlu0 %3896
        %3898 = vrot.lane.b32.xlu0 %v3844, 96
        %v3899 = vpop.permute.xlu0 %3898
        %3900 = vrot.lane.b32.xlu0 %v3847, 96
        %v3901 = vpop.permute.xlu0 %3900
        %3902 = vrot.lane.b32.xlu0 %v3852, 96
        %v3903 = vpop.permute.xlu0 %3902
        %3904 = vrot.lane.b32.xlu0 %v3855, 96
        %v3905 = vpop.permute.xlu0 %3904
        %v3922 = vadd.f32 %v3713, %v3875
        %v3923 = vadd.f32 %v3714, %v3877
        %v3924 = vadd.f32 %v3715, %v3879
        %v3925 = vadd.f32 %v3716, %v3881
        %v3926 = vadd.f32 %v3717, %v3883
        %v3927 = vadd.f32 %v3718, %v3885
        %v3928 = vadd.f32 %v3719, %v3887
        %v3929 = vadd.f32 %v3720, %v3889
        %v3930 = vadd.f32 %v3721, %v3891
        %v3931 = vadd.f32 %v3722, %v3893
        %v3932 = vadd.f32 %v3723, %v3895
        %v3933 = vadd.f32 %v3724, %v3897
        %v3934 = vadd.f32 %v3725, %v3899
        %v3935 = vadd.f32 %v3726, %v3901
        %v3936 = vadd.f32 %v3727, %v3903
        %v3937 = vadd.f32 %v3728, %v3905
        %vm3938 = vcmask 1048320
        %3939 = vst.msk [vmem:[#allocation4] sm:$0xff] %vm3938, %v3922
        %3940 = vst.msk [vmem:[#allocation4 + $0x8] sm:$0xff] %vm3938, %v3923
        %3941 = vst.msk [vmem:[#allocation4 + $0x10] sm:$0xff] %vm3938, %v3924
        %3942 = vst.msk [vmem:[#allocation4 + $0x18] sm:$0xff] %vm3938, %v3925
        %3943 = vst.msk [vmem:[#allocation4 + $0x20] sm:$0xff] %vm3938, %v3926
        %3944 = vst.msk [vmem:[#allocation4 + $0x28] sm:$0xff] %vm3938, %v3927
        %3945 = vst.msk [vmem:[#allocation4 + $0x30] sm:$0xff] %vm3938, %v3928
        %3946 = vst.msk [vmem:[#allocation4 + $0x38] sm:$0xff] %vm3938, %v3929
        %3947 = vst.msk [vmem:[#allocation4 + $0x40] sm:$0xff] %vm3938, %v3930
        %3948 = vst.msk [vmem:[#allocation4 + $0x48] sm:$0xff] %vm3938, %v3931
        %3949 = vst.msk [vmem:[#allocation4 + $0x50] sm:$0xff] %vm3938, %v3932
        %3950 = vst.msk [vmem:[#allocation4 + $0x58] sm:$0xff] %vm3938, %v3933
        %3951 = vst.msk [vmem:[#allocation4 + $0x60] sm:$0xff] %vm3938, %v3934
        %3952 = vst.msk [vmem:[#allocation4 + $0x68] sm:$0xff] %vm3938, %v3935
        %3953 = vst.msk [vmem:[#allocation4 + $0x70] sm:$0xff] %vm3938, %v3936
        %3954 = vst.msk [vmem:[#allocation4 + $0x78] sm:$0xff] %vm3938, %v3937
        %3955 = vst.msk [vmem:[#allocation2] sm:$0xff] %vm3600, %v3312
        %3956 = vst.msk [vmem:[#allocation2 + $0x8] sm:$0xff] %vm3600, %v3313
        %3957 = vst.msk [vmem:[#allocation2 + $0x10] sm:$0xff] %vm3600, %v3314
        %3958 = vst.msk [vmem:[#allocation2 + $0x18] sm:$0xff] %vm3600, %v3315
        %3959 = vst.msk [vmem:[#allocation2 + $0x20] sm:$0xff] %vm3600, %v3316
        %3960 = vst.msk [vmem:[#allocation2 + $0x28] sm:$0xff] %vm3600, %v3317
        %3961 = vst.msk [vmem:[#allocation2 + $0x30] sm:$0xff] %vm3600, %v3318
        %3962 = vst.msk [vmem:[#allocation2 + $0x38] sm:$0xff] %vm3600, %v3319
        %3963 = vst.msk [vmem:[#allocation2 + $0x40] sm:$0xff] %vm3600, %v3320
        %3964 = vst.msk [vmem:[#allocation2 + $0x48] sm:$0xff] %vm3600, %v3321
        %3965 = vst.msk [vmem:[#allocation2 + $0x50] sm:$0xff] %vm3600, %v3322
        %3966 = vst.msk [vmem:[#allocation2 + $0x58] sm:$0xff] %vm3600, %v3323
        %3967 = vst.msk [vmem:[#allocation2 + $0x60] sm:$0xff] %vm3600, %v3324
        %3968 = vst.msk [vmem:[#allocation2 + $0x68] sm:$0xff] %vm3600, %v3325
        %3969 = vst.msk [vmem:[#allocation2 + $0x70] sm:$0xff] %vm3600, %v3326
        %3970 = vst.msk [vmem:[#allocation2 + $0x78] sm:$0xff] %vm3600, %v3327
        %p3971 = scmp.eq.s32.totalorder %s21, 1
        // Predicated region
        $region86: #{gat_forward.7} parent=76 // pred_check
          %p3972 = pneg %p3971
        $region87: #{gat_forward.7} parent=76 // pred_check_branch
          %3974 = sbr.rel (%p3972) target = $region89
        $region88: #{gat_forward.7} parent=76 // pred_region
          %v3975 = vld [vmem:[#allocation3] sm:$0xff]
          %v3976 = vld [vmem:[#allocation3 + $0x8] sm:$0xff]
          %v3977 = vld [vmem:[#allocation3 + $0x10] sm:$0xff]
          %v3978 = vld [vmem:[#allocation3 + $0x18] sm:$0xff]
          %v3979 = vld [vmem:[#allocation3 + $0x20] sm:$0xff]
          %v3980 = vld [vmem:[#allocation3 + $0x28] sm:$0xff]
          %v3981 = vld [vmem:[#allocation3 + $0x30] sm:$0xff]
          %v3982 = vld [vmem:[#allocation3 + $0x38] sm:$0xff]
          %v3983 = vld [vmem:[#allocation3 + $0x40] sm:$0xff]
          %v3984 = vld [vmem:[#allocation3 + $0x48] sm:$0xff]
          %v3985 = vld [vmem:[#allocation3 + $0x50] sm:$0xff]
          %v3986 = vld [vmem:[#allocation3 + $0x58] sm:$0xff]
          %v3987 = vld [vmem:[#allocation3 + $0x60] sm:$0xff]
          %v3988 = vld [vmem:[#allocation3 + $0x68] sm:$0xff]
          %v3989 = vld [vmem:[#allocation3 + $0x70] sm:$0xff]
          %v3990 = vld [vmem:[#allocation3 + $0x78] sm:$0xff]
          %v3991 = vmax.f32 %v3975, 1e-20
          %v3992 = vmax.f32 %v3976, 1e-20
          %v3993 = vmax.f32 %v3977, 1e-20
          %v3994 = vmax.f32 %v3978, 1e-20
          %v3995 = vmax.f32 %v3979, 1e-20
          %v3996 = vmax.f32 %v3980, 1e-20
          %v3997 = vmax.f32 %v3981, 1e-20
          %v3998 = vmax.f32 %v3982, 1e-20
          %v3999 = vmax.f32 %v3983, 1e-20
          %v4000 = vmax.f32 %v3984, 1e-20
          %v4001 = vmax.f32 %v3985, 1e-20
          %v4002 = vmax.f32 %v3986, 1e-20
          %v4003 = vmax.f32 %v3987, 1e-20
          %v4004 = vmax.f32 %v3988, 1e-20
          %v4005 = vmax.f32 %v3989, 1e-20
          %v4006 = vmax.f32 %v3990, 1e-20
          %v4007 = vrcp.pop %v3991
          %v4008 = vrcp.pop %v3992
          %v4009 = vrcp.pop %v3993
          %v4010 = vrcp.pop %v3994
          %v4011 = vrcp.pop %v3995
          %v4012 = vrcp.pop %v3996
          %v4013 = vrcp.pop %v3997
          %v4014 = vrcp.pop %v3998
          %v4015 = vrcp.pop %v3999
          %v4016 = vrcp.pop %v4000
          %v4017 = vrcp.pop %v4001
          %v4018 = vrcp.pop %v4002
          %v4019 = vrcp.pop %v4003
          %v4020 = vrcp.pop %v4004
          %v4021 = vrcp.pop %v4005
          %v4022 = vrcp.pop %v4006
          %v4023 = vld [vmem:[%s4] sm:$0x1]
          %v4024 = vld [vmem:[#allocation4] sm:$0xff]
          %v4025 = vld [vmem:[#allocation4 + $0x8] sm:$0xff]
          %v4026 = vld [vmem:[#allocation4 + $0x10] sm:$0xff]
          %v4027 = vld [vmem:[#allocation4 + $0x18] sm:$0xff]
          %v4028 = vld [vmem:[#allocation4 + $0x20] sm:$0xff]
          %v4029 = vld [vmem:[#allocation4 + $0x28] sm:$0xff]
          %v4030 = vld [vmem:[#allocation4 + $0x30] sm:$0xff]
          %v4031 = vld [vmem:[#allocation4 + $0x38] sm:$0xff]
          %v4032 = vld [vmem:[#allocation4 + $0x40] sm:$0xff]
          %v4033 = vld [vmem:[#allocation4 + $0x48] sm:$0xff]
          %v4034 = vld [vmem:[#allocation4 + $0x50] sm:$0xff]
          %v4035 = vld [vmem:[#allocation4 + $0x58] sm:$0xff]
          %v4036 = vld [vmem:[#allocation4 + $0x60] sm:$0xff]
          %v4037 = vld [vmem:[#allocation4 + $0x68] sm:$0xff]
          %v4038 = vld [vmem:[#allocation4 + $0x70] sm:$0xff]
          %v4039 = vld [vmem:[#allocation4 + $0x78] sm:$0xff]
          %4041 = vset.pattern.permute.xlu0 0
          %4042 = vperm.xlu0 %4041, %v4007
          %v4043 = vpop.permute.xlu0 %4042
          %4046 = vset.pattern.permute.xlu0 0
          %4047 = vperm.xlu0 %4046, %v4008
          %v4048 = vpop.permute.xlu0 %4047
          %4051 = vset.pattern.permute.xlu0 0
          %4052 = vperm.xlu0 %4051, %v4009
          %v4053 = vpop.permute.xlu0 %4052
          %4056 = vset.pattern.permute.xlu0 0
          %4057 = vperm.xlu0 %4056, %v4010
          %v4058 = vpop.permute.xlu0 %4057
          %4061 = vset.pattern.permute.xlu0 0
          %4062 = vperm.xlu0 %4061, %v4011
          %v4063 = vpop.permute.xlu0 %4062
          %4066 = vset.pattern.permute.xlu0 0
          %4067 = vperm.xlu0 %4066, %v4012
          %v4068 = vpop.permute.xlu0 %4067
          %4071 = vset.pattern.permute.xlu0 0
          %4072 = vperm.xlu0 %4071, %v4013
          %v4073 = vpop.permute.xlu0 %4072
          %4076 = vset.pattern.permute.xlu0 0
          %4077 = vperm.xlu0 %4076, %v4014
          %v4078 = vpop.permute.xlu0 %4077
          %4081 = vset.pattern.permute.xlu0 0
          %4082 = vperm.xlu0 %4081, %v4015
          %v4083 = vpop.permute.xlu0 %4082
          %4086 = vset.pattern.permute.xlu0 0
          %4087 = vperm.xlu0 %4086, %v4016
          %v4088 = vpop.permute.xlu0 %4087
          %4091 = vset.pattern.permute.xlu0 0
          %4092 = vperm.xlu0 %4091, %v4017
          %v4093 = vpop.permute.xlu0 %4092
          %4096 = vset.pattern.permute.xlu0 0
          %4097 = vperm.xlu0 %4096, %v4018
          %v4098 = vpop.permute.xlu0 %4097
          %4101 = vset.pattern.permute.xlu0 0
          %4102 = vperm.xlu0 %4101, %v4019
          %v4103 = vpop.permute.xlu0 %4102
          %4106 = vset.pattern.permute.xlu0 0
          %4107 = vperm.xlu0 %4106, %v4020
          %v4108 = vpop.permute.xlu0 %4107
          %4111 = vset.pattern.permute.xlu0 0
          %4112 = vperm.xlu0 %4111, %v4021
          %v4113 = vpop.permute.xlu0 %4112
          %4116 = vset.pattern.permute.xlu0 0
          %4117 = vperm.xlu0 %4116, %v4022
          %v4118 = vpop.permute.xlu0 %4117
          %v4120 = vmul.f32 %v4024, %v4043
          %v4121 = vmul.f32 %v4025, %v4048
          %v4122 = vmul.f32 %v4026, %v4053
          %v4123 = vmul.f32 %v4027, %v4058
          %v4124 = vmul.f32 %v4028, %v4063
          %v4125 = vmul.f32 %v4029, %v4068
          %v4126 = vmul.f32 %v4030, %v4073
          %v4127 = vmul.f32 %v4031, %v4078
          %v4128 = vmul.f32 %v4032, %v4083
          %v4129 = vmul.f32 %v4033, %v4088
          %v4130 = vmul.f32 %v4034, %v4093
          %v4131 = vmul.f32 %v4035, %v4098
          %v4132 = vmul.f32 %v4036, %v4103
          %v4133 = vmul.f32 %v4037, %v4108
          %v4134 = vmul.f32 %v4038, %v4113
          %v4135 = vmul.f32 %v4039, %v4118
          %v4137 = vlaneseq
          %v4138 = vshrl.u32 %v4137, 7
          %v4139 = vsub.s32 0, %v4138
          %v4140 = vrot.slane %v4023, %v4139
          %v4142 = vadd.f32 %v4120, %v4140
          %v4143 = vadd.f32 %v4121, %v4140
          %v4144 = vadd.f32 %v4122, %v4140
          %v4145 = vadd.f32 %v4123, %v4140
          %v4146 = vadd.f32 %v4124, %v4140
          %v4147 = vadd.f32 %v4125, %v4140
          %v4148 = vadd.f32 %v4126, %v4140
          %v4149 = vadd.f32 %v4127, %v4140
          %v4150 = vadd.f32 %v4128, %v4140
          %v4151 = vadd.f32 %v4129, %v4140
          %v4152 = vadd.f32 %v4130, %v4140
          %v4153 = vadd.f32 %v4131, %v4140
          %v4154 = vadd.f32 %v4132, %v4140
          %v4155 = vadd.f32 %v4133, %v4140
          %v4156 = vadd.f32 %v4134, %v4140
          %v4157 = vadd.f32 %v4135, %v4140
          %vm4158 = vcmp.gt.f32.partialorder %v4142, 0.0
          %vm4159 = vcmp.gt.f32.partialorder %v4143, 0.0
          %vm4160 = vcmp.gt.f32.partialorder %v4144, 0.0
          %vm4161 = vcmp.gt.f32.partialorder %v4145, 0.0
          %vm4162 = vcmp.gt.f32.partialorder %v4146, 0.0
          %vm4163 = vcmp.gt.f32.partialorder %v4147, 0.0
          %vm4164 = vcmp.gt.f32.partialorder %v4148, 0.0
          %vm4165 = vcmp.gt.f32.partialorder %v4149, 0.0
          %vm4166 = vcmp.gt.f32.partialorder %v4150, 0.0
          %vm4167 = vcmp.gt.f32.partialorder %v4151, 0.0
          %vm4168 = vcmp.gt.f32.partialorder %v4152, 0.0
          %vm4169 = vcmp.gt.f32.partialorder %v4153, 0.0
          %vm4170 = vcmp.gt.f32.partialorder %v4154, 0.0
          %vm4171 = vcmp.gt.f32.partialorder %v4155, 0.0
          %vm4172 = vcmp.gt.f32.partialorder %v4156, 0.0
          %vm4173 = vcmp.gt.f32.partialorder %v4157, 0.0
          %v4174 = vmul.f32 %v4142, 1.442695
          %v4175 = vpow.pop %v4174
          %v4176 = vmul.f32 %v4143, 1.442695
          %v4177 = vpow.pop %v4176
          %v4178 = vmul.f32 %v4144, 1.442695
          %v4179 = vpow.pop %v4178
          %v4180 = vmul.f32 %v4145, 1.442695
          %v4181 = vpow.pop %v4180
          %v4182 = vmul.f32 %v4146, 1.442695
          %v4183 = vpow.pop %v4182
          %v4184 = vmul.f32 %v4147, 1.442695
          %v4185 = vpow.pop %v4184
          %v4186 = vmul.f32 %v4148, 1.442695
          %v4187 = vpow.pop %v4186
          %v4188 = vmul.f32 %v4149, 1.442695
          %v4189 = vpow.pop %v4188
          %v4190 = vmul.f32 %v4150, 1.442695
          %v4191 = vpow.pop %v4190
          %v4192 = vmul.f32 %v4151, 1.442695
          %v4193 = vpow.pop %v4192
          %v4194 = vmul.f32 %v4152, 1.442695
          %v4195 = vpow.pop %v4194
          %v4196 = vmul.f32 %v4153, 1.442695
          %v4197 = vpow.pop %v4196
          %v4198 = vmul.f32 %v4154, 1.442695
          %v4199 = vpow.pop %v4198
          %v4200 = vmul.f32 %v4155, 1.442695
          %v4201 = vpow.pop %v4200
          %v4202 = vmul.f32 %v4156, 1.442695
          %v4203 = vpow.pop %v4202
          %v4204 = vmul.f32 %v4157, 1.442695
          %v4205 = vpow.pop %v4204
          %v4206 = vsub.f32 %v4175, 1.0
          %v4207 = vsub.f32 %v4177, 1.0
          %v4208 = vsub.f32 %v4179, 1.0
          %v4209 = vsub.f32 %v4181, 1.0
          %v4210 = vsub.f32 %v4183, 1.0
          %v4211 = vsub.f32 %v4185, 1.0
          %v4212 = vsub.f32 %v4187, 1.0
          %v4213 = vsub.f32 %v4189, 1.0
          %v4214 = vsub.f32 %v4191, 1.0
          %v4215 = vsub.f32 %v4193, 1.0
          %v4216 = vsub.f32 %v4195, 1.0
          %v4217 = vsub.f32 %v4197, 1.0
          %v4218 = vsub.f32 %v4199, 1.0
          %v4219 = vsub.f32 %v4201, 1.0
          %v4220 = vsub.f32 %v4203, 1.0
          %v4221 = vsub.f32 %v4205, 1.0
          %v4222 = vsel %vm4158, %v4142, %v4206
          %v4223 = vsel %vm4159, %v4143, %v4207
          %v4224 = vsel %vm4160, %v4144, %v4208
          %v4225 = vsel %vm4161, %v4145, %v4209
          %v4226 = vsel %vm4162, %v4146, %v4210
          %v4227 = vsel %vm4163, %v4147, %v4211
          %v4228 = vsel %vm4164, %v4148, %v4212
          %v4229 = vsel %vm4165, %v4149, %v4213
          %v4230 = vsel %vm4166, %v4150, %v4214
          %v4231 = vsel %vm4167, %v4151, %v4215
          %v4232 = vsel %vm4168, %v4152, %v4216
          %v4233 = vsel %vm4169, %v4153, %v4217
          %v4234 = vsel %vm4170, %v4154, %v4218
          %v4235 = vsel %vm4171, %v4155, %v4219
          %v4236 = vsel %vm4172, %v4156, %v4220
          %v4237 = vsel %vm4173, %v4157, %v4221
          %v4238 = vpack.c.bf16 %v4223, %v4222
          %v4239 = vpack.c.bf16 %v4225, %v4224
          %v4240 = vpack.c.bf16 %v4227, %v4226
          %v4241 = vpack.c.bf16 %v4229, %v4228
          %v4242 = vpack.c.bf16 %v4231, %v4230
          %v4243 = vpack.c.bf16 %v4233, %v4232
          %v4244 = vpack.c.bf16 %v4235, %v4234
          %v4245 = vpack.c.bf16 %v4237, %v4236
          %v4254 = vunpack.c.l.b16 %v4238
          %v4255 = vunpack.c.h.b16 %v4238
          %v4256 = vunpack.c.l.b16 %v4239
          %v4257 = vunpack.c.h.b16 %v4239
          %v4258 = vunpack.c.l.b16 %v4240
          %v4259 = vunpack.c.h.b16 %v4240
          %v4260 = vunpack.c.l.b16 %v4241
          %v4261 = vunpack.c.h.b16 %v4241
          %v4262 = vunpack.c.l.b16 %v4242
          %v4263 = vunpack.c.h.b16 %v4242
          %v4264 = vunpack.c.l.b16 %v4243
          %v4265 = vunpack.c.h.b16 %v4243
          %v4266 = vunpack.c.l.b16 %v4244
          %v4267 = vunpack.c.h.b16 %v4244
          %v4268 = vunpack.c.l.b16 %v4245
          %v4269 = vunpack.c.h.b16 %v4245
          %v4270 = vpack.c.b16 %v4254, %v4254
          %v4271 = vpack.c.b16 %v4255, %v4255
          %v4272 = vpack.c.b16 %v4256, %v4256
          %v4273 = vpack.c.b16 %v4257, %v4257
          %v4274 = vpack.c.b16 %v4258, %v4258
          %v4275 = vpack.c.b16 %v4259, %v4259
          %v4276 = vpack.c.b16 %v4260, %v4260
          %v4277 = vpack.c.b16 %v4261, %v4261
          %v4278 = vpack.c.b16 %v4262, %v4262
          %v4279 = vpack.c.b16 %v4263, %v4263
          %v4280 = vpack.c.b16 %v4264, %v4264
          %v4281 = vpack.c.b16 %v4265, %v4265
          %v4282 = vpack.c.b16 %v4266, %v4266
          %v4283 = vpack.c.b16 %v4267, %v4267
          %v4284 = vpack.c.b16 %v4268, %v4268
          %v4285 = vpack.c.b16 %v4269, %v4269
          %vm4302 = vcmask 257024
          %4303 = vst.msk [vmem:[%s404] sm:$0xf] %vm4302, %v4270
          %4304 = vst.msk [vmem:[%s404 + $0x4] sm:$0xf] %vm4302, %v4271
          %4305 = vst.msk [vmem:[%s404 + $0x8] sm:$0xf] %vm4302, %v4272
          %4306 = vst.msk [vmem:[%s404 + $0xc] sm:$0xf] %vm4302, %v4273
          %4307 = vst.msk [vmem:[%s404 + $0x10] sm:$0xf] %vm4302, %v4274
          %4308 = vst.msk [vmem:[%s404 + $0x14] sm:$0xf] %vm4302, %v4275
          %4309 = vst.msk [vmem:[%s404 + $0x18] sm:$0xf] %vm4302, %v4276
          %4310 = vst.msk [vmem:[%s404 + $0x1c] sm:$0xf] %vm4302, %v4277
          %4311 = vst.msk [vmem:[%s404 + $0x20] sm:$0xf] %vm4302, %v4278
          %4312 = vst.msk [vmem:[%s404 + $0x24] sm:$0xf] %vm4302, %v4279
          %4313 = vst.msk [vmem:[%s404 + $0x28] sm:$0xf] %vm4302, %v4280
          %4314 = vst.msk [vmem:[%s404 + $0x2c] sm:$0xf] %vm4302, %v4281
          %4315 = vst.msk [vmem:[%s404 + $0x30] sm:$0xf] %vm4302, %v4282
          %4316 = vst.msk [vmem:[%s404 + $0x34] sm:$0xf] %vm4302, %v4283
          %4317 = vst.msk [vmem:[%s404 + $0x38] sm:$0xf] %vm4302, %v4284
          %4318 = vst.msk [vmem:[%s404 + $0x3c] sm:$0xf] %vm4302, %v4285
          %v4319 = vld [vmem:[#allocation4] sm:$0xff]
          %v4320 = vld [vmem:[#allocation4 + $0x8] sm:$0xff]
          %v4321 = vld [vmem:[#allocation4 + $0x10] sm:$0xff]
          %v4322 = vld [vmem:[#allocation4 + $0x18] sm:$0xff]
          %v4323 = vld [vmem:[#allocation4 + $0x20] sm:$0xff]
          %v4324 = vld [vmem:[#allocation4 + $0x28] sm:$0xff]
          %v4325 = vld [vmem:[#allocation4 + $0x30] sm:$0xff]
          %v4326 = vld [vmem:[#allocation4 + $0x38] sm:$0xff]
          %v4327 = vld [vmem:[#allocation4 + $0x40] sm:$0xff]
          %v4328 = vld [vmem:[#allocation4 + $0x48] sm:$0xff]
          %v4329 = vld [vmem:[#allocation4 + $0x50] sm:$0xff]
          %v4330 = vld [vmem:[#allocation4 + $0x58] sm:$0xff]
          %v4331 = vld [vmem:[#allocation4 + $0x60] sm:$0xff]
          %v4332 = vld [vmem:[#allocation4 + $0x68] sm:$0xff]
          %v4333 = vld [vmem:[#allocation4 + $0x70] sm:$0xff]
          %v4334 = vld [vmem:[#allocation4 + $0x78] sm:$0xff]
          %4335 = vset.pattern.permute.xlu0 1
          %4336 = vperm.xlu0 %4335, %v4007
          %v4337 = vpop.permute.xlu0 %4336
          %4339 = vset.pattern.permute.xlu0 1
          %4340 = vperm.xlu0 %4339, %v4008
          %v4341 = vpop.permute.xlu0 %4340
          %4343 = vset.pattern.permute.xlu0 1
          %4344 = vperm.xlu0 %4343, %v4009
          %v4345 = vpop.permute.xlu0 %4344
          %4347 = vset.pattern.permute.xlu0 1
          %4348 = vperm.xlu0 %4347, %v4010
          %v4349 = vpop.permute.xlu0 %4348
          %4351 = vset.pattern.permute.xlu0 1
          %4352 = vperm.xlu0 %4351, %v4011
          %v4353 = vpop.permute.xlu0 %4352
          %4355 = vset.pattern.permute.xlu0 1
          %4356 = vperm.xlu0 %4355, %v4012
          %v4357 = vpop.permute.xlu0 %4356
          %4359 = vset.pattern.permute.xlu0 1
          %4360 = vperm.xlu0 %4359, %v4013
          %v4361 = vpop.permute.xlu0 %4360
          %4363 = vset.pattern.permute.xlu0 1
          %4364 = vperm.xlu0 %4363, %v4014
          %v4365 = vpop.permute.xlu0 %4364
          %4367 = vset.pattern.permute.xlu0 1
          %4368 = vperm.xlu0 %4367, %v4015
          %v4369 = vpop.permute.xlu0 %4368
          %4371 = vset.pattern.permute.xlu0 1
          %4372 = vperm.xlu0 %4371, %v4016
          %v4373 = vpop.permute.xlu0 %4372
          %4375 = vset.pattern.permute.xlu0 1
          %4376 = vperm.xlu0 %4375, %v4017
          %v4377 = vpop.permute.xlu0 %4376
          %4379 = vset.pattern.permute.xlu0 1
          %4380 = vperm.xlu0 %4379, %v4018
          %v4381 = vpop.permute.xlu0 %4380
          %4383 = vset.pattern.permute.xlu0 1
          %4384 = vperm.xlu0 %4383, %v4019
          %v4385 = vpop.permute.xlu0 %4384
          %4387 = vset.pattern.permute.xlu0 1
          %4388 = vperm.xlu0 %4387, %v4020
          %v4389 = vpop.permute.xlu0 %4388
          %4391 = vset.pattern.permute.xlu0 1
          %4392 = vperm.xlu0 %4391, %v4021
          %v4393 = vpop.permute.xlu0 %4392
          %4395 = vset.pattern.permute.xlu0 1
          %4396 = vperm.xlu0 %4395, %v4022
          %v4397 = vpop.permute.xlu0 %4396
          %v4399 = vmul.f32 %v4319, %v4337
          %v4400 = vmul.f32 %v4320, %v4341
          %v4401 = vmul.f32 %v4321, %v4345
          %v4402 = vmul.f32 %v4322, %v4349
          %v4403 = vmul.f32 %v4323, %v4353
          %v4404 = vmul.f32 %v4324, %v4357
          %v4405 = vmul.f32 %v4325, %v4361
          %v4406 = vmul.f32 %v4326, %v4365
          %v4407 = vmul.f32 %v4327, %v4369
          %v4408 = vmul.f32 %v4328, %v4373
          %v4409 = vmul.f32 %v4329, %v4377
          %v4410 = vmul.f32 %v4330, %v4381
          %v4411 = vmul.f32 %v4331, %v4385
          %v4412 = vmul.f32 %v4332, %v4389
          %v4413 = vmul.f32 %v4333, %v4393
          %v4414 = vmul.f32 %v4334, %v4397
          %v4415 = vadd.f32 %v4399, %v4140
          %v4416 = vadd.f32 %v4400, %v4140
          %v4417 = vadd.f32 %v4401, %v4140
          %v4418 = vadd.f32 %v4402, %v4140
          %v4419 = vadd.f32 %v4403, %v4140
          %v4420 = vadd.f32 %v4404, %v4140
          %v4421 = vadd.f32 %v4405, %v4140
          %v4422 = vadd.f32 %v4406, %v4140
          %v4423 = vadd.f32 %v4407, %v4140
          %v4424 = vadd.f32 %v4408, %v4140
          %v4425 = vadd.f32 %v4409, %v4140
          %v4426 = vadd.f32 %v4410, %v4140
          %v4427 = vadd.f32 %v4411, %v4140
          %v4428 = vadd.f32 %v4412, %v4140
          %v4429 = vadd.f32 %v4413, %v4140
          %v4430 = vadd.f32 %v4414, %v4140
          %vm4431 = vcmp.gt.f32.partialorder %v4415, 0.0
          %vm4432 = vcmp.gt.f32.partialorder %v4416, 0.0
          %vm4433 = vcmp.gt.f32.partialorder %v4417, 0.0
          %vm4434 = vcmp.gt.f32.partialorder %v4418, 0.0
          %vm4435 = vcmp.gt.f32.partialorder %v4419, 0.0
          %vm4436 = vcmp.gt.f32.partialorder %v4420, 0.0
          %vm4437 = vcmp.gt.f32.partialorder %v4421, 0.0
          %vm4438 = vcmp.gt.f32.partialorder %v4422, 0.0
          %vm4439 = vcmp.gt.f32.partialorder %v4423, 0.0
          %vm4440 = vcmp.gt.f32.partialorder %v4424, 0.0
          %vm4441 = vcmp.gt.f32.partialorder %v4425, 0.0
          %vm4442 = vcmp.gt.f32.partialorder %v4426, 0.0
          %vm4443 = vcmp.gt.f32.partialorder %v4427, 0.0
          %vm4444 = vcmp.gt.f32.partialorder %v4428, 0.0
          %vm4445 = vcmp.gt.f32.partialorder %v4429, 0.0
          %vm4446 = vcmp.gt.f32.partialorder %v4430, 0.0
          %v4447 = vmul.f32 %v4415, 1.442695
          %v4448 = vpow.pop %v4447
          %v4449 = vmul.f32 %v4416, 1.442695
          %v4450 = vpow.pop %v4449
          %v4451 = vmul.f32 %v4417, 1.442695
          %v4452 = vpow.pop %v4451
          %v4453 = vmul.f32 %v4418, 1.442695
          %v4454 = vpow.pop %v4453
          %v4455 = vmul.f32 %v4419, 1.442695
          %v4456 = vpow.pop %v4455
          %v4457 = vmul.f32 %v4420, 1.442695
          %v4458 = vpow.pop %v4457
          %v4459 = vmul.f32 %v4421, 1.442695
          %v4460 = vpow.pop %v4459
          %v4461 = vmul.f32 %v4422, 1.442695
          %v4462 = vpow.pop %v4461
          %v4463 = vmul.f32 %v4423, 1.442695
          %v4464 = vpow.pop %v4463
          %v4465 = vmul.f32 %v4424, 1.442695
          %v4466 = vpow.pop %v4465
          %v4467 = vmul.f32 %v4425, 1.442695
          %v4468 = vpow.pop %v4467
          %v4469 = vmul.f32 %v4426, 1.442695
          %v4470 = vpow.pop %v4469
          %v4471 = vmul.f32 %v4427, 1.442695
          %v4472 = vpow.pop %v4471
          %v4473 = vmul.f32 %v4428, 1.442695
          %v4474 = vpow.pop %v4473
          %v4475 = vmul.f32 %v4429, 1.442695
          %v4476 = vpow.pop %v4475
          %v4477 = vmul.f32 %v4430, 1.442695
          %v4478 = vpow.pop %v4477
          %v4479 = vsub.f32 %v4448, 1.0
          %v4480 = vsub.f32 %v4450, 1.0
          %v4481 = vsub.f32 %v4452, 1.0
          %v4482 = vsub.f32 %v4454, 1.0
          %v4483 = vsub.f32 %v4456, 1.0
          %v4484 = vsub.f32 %v4458, 1.0
          %v4485 = vsub.f32 %v4460, 1.0
          %v4486 = vsub.f32 %v4462, 1.0
          %v4487 = vsub.f32 %v4464, 1.0
          %v4488 = vsub.f32 %v4466, 1.0
          %v4489 = vsub.f32 %v4468, 1.0
          %v4490 = vsub.f32 %v4470, 1.0
          %v4491 = vsub.f32 %v4472, 1.0
          %v4492 = vsub.f32 %v4474, 1.0
          %v4493 = vsub.f32 %v4476, 1.0
          %v4494 = vsub.f32 %v4478, 1.0
          %v4495 = vsel %vm4431, %v4415, %v4479
          %v4496 = vsel %vm4432, %v4416, %v4480
          %v4497 = vsel %vm4433, %v4417, %v4481
          %v4498 = vsel %vm4434, %v4418, %v4482
          %v4499 = vsel %vm4435, %v4419, %v4483
          %v4500 = vsel %vm4436, %v4420, %v4484
          %v4501 = vsel %vm4437, %v4421, %v4485
          %v4502 = vsel %vm4438, %v4422, %v4486
          %v4503 = vsel %vm4439, %v4423, %v4487
          %v4504 = vsel %vm4440, %v4424, %v4488
          %v4505 = vsel %vm4441, %v4425, %v4489
          %v4506 = vsel %vm4442, %v4426, %v4490
          %v4507 = vsel %vm4443, %v4427, %v4491
          %v4508 = vsel %vm4444, %v4428, %v4492
          %v4509 = vsel %vm4445, %v4429, %v4493
          %v4510 = vsel %vm4446, %v4430, %v4494
          %v4511 = vpack.c.bf16 %v4496, %v4495
          %v4512 = vpack.c.bf16 %v4498, %v4497
          %v4513 = vpack.c.bf16 %v4500, %v4499
          %v4514 = vpack.c.bf16 %v4502, %v4501
          %v4515 = vpack.c.bf16 %v4504, %v4503
          %v4516 = vpack.c.bf16 %v4506, %v4505
          %v4517 = vpack.c.bf16 %v4508, %v4507
          %v4518 = vpack.c.bf16 %v4510, %v4509
          %v4527 = vunpack.c.l.b16 %v4511
          %v4528 = vunpack.c.h.b16 %v4511
          %v4529 = vunpack.c.l.b16 %v4512
          %v4530 = vunpack.c.h.b16 %v4512
          %v4531 = vunpack.c.l.b16 %v4513
          %v4532 = vunpack.c.h.b16 %v4513
          %v4533 = vunpack.c.l.b16 %v4514
          %v4534 = vunpack.c.h.b16 %v4514
          %v4535 = vunpack.c.l.b16 %v4515
          %v4536 = vunpack.c.h.b16 %v4515
          %v4537 = vunpack.c.l.b16 %v4516
          %v4538 = vunpack.c.h.b16 %v4516
          %v4539 = vunpack.c.l.b16 %v4517
          %v4540 = vunpack.c.h.b16 %v4517
          %v4541 = vunpack.c.l.b16 %v4518
          %v4542 = vunpack.c.h.b16 %v4518
          %v4543 = vpack.c.b16 %v4527, %v4527
          %v4544 = vpack.c.b16 %v4528, %v4528
          %v4545 = vpack.c.b16 %v4529, %v4529
          %v4546 = vpack.c.b16 %v4530, %v4530
          %v4547 = vpack.c.b16 %v4531, %v4531
          %v4548 = vpack.c.b16 %v4532, %v4532
          %v4549 = vpack.c.b16 %v4533, %v4533
          %v4550 = vpack.c.b16 %v4534, %v4534
          %v4551 = vpack.c.b16 %v4535, %v4535
          %v4552 = vpack.c.b16 %v4536, %v4536
          %v4553 = vpack.c.b16 %v4537, %v4537
          %v4554 = vpack.c.b16 %v4538, %v4538
          %v4555 = vpack.c.b16 %v4539, %v4539
          %v4556 = vpack.c.b16 %v4540, %v4540
          %v4557 = vpack.c.b16 %v4541, %v4541
          %v4558 = vpack.c.b16 %v4542, %v4542
          %vm4575 = vcmask 519424
          %4576 = vst.msk [vmem:[%s404] sm:$0xf] %vm4575, %v4543
          %4577 = vst.msk [vmem:[%s404 + $0x4] sm:$0xf] %vm4575, %v4544
          %4578 = vst.msk [vmem:[%s404 + $0x8] sm:$0xf] %vm4575, %v4545
          %4579 = vst.msk [vmem:[%s404 + $0xc] sm:$0xf] %vm4575, %v4546
          %4580 = vst.msk [vmem:[%s404 + $0x10] sm:$0xf] %vm4575, %v4547
          %4581 = vst.msk [vmem:[%s404 + $0x14] sm:$0xf] %vm4575, %v4548
          %4582 = vst.msk [vmem:[%s404 + $0x18] sm:$0xf] %vm4575, %v4549
          %4583 = vst.msk [vmem:[%s404 + $0x1c] sm:$0xf] %vm4575, %v4550
          %4584 = vst.msk [vmem:[%s404 + $0x20] sm:$0xf] %vm4575, %v4551
          %4585 = vst.msk [vmem:[%s404 + $0x24] sm:$0xf] %vm4575, %v4552
          %4586 = vst.msk [vmem:[%s404 + $0x28] sm:$0xf] %vm4575, %v4553
          %4587 = vst.msk [vmem:[%s404 + $0x2c] sm:$0xf] %vm4575, %v4554
          %4588 = vst.msk [vmem:[%s404 + $0x30] sm:$0xf] %vm4575, %v4555
          %4589 = vst.msk [vmem:[%s404 + $0x34] sm:$0xf] %vm4575, %v4556
          %4590 = vst.msk [vmem:[%s404 + $0x38] sm:$0xf] %vm4575, %v4557
          %4591 = vst.msk [vmem:[%s404 + $0x3c] sm:$0xf] %vm4575, %v4558
          %v4592 = vld [vmem:[#allocation4] sm:$0xff]
          %v4593 = vld [vmem:[#allocation4 + $0x8] sm:$0xff]
          %v4594 = vld [vmem:[#allocation4 + $0x10] sm:$0xff]
          %v4595 = vld [vmem:[#allocation4 + $0x18] sm:$0xff]
          %v4596 = vld [vmem:[#allocation4 + $0x20] sm:$0xff]
          %v4597 = vld [vmem:[#allocation4 + $0x28] sm:$0xff]
          %v4598 = vld [vmem:[#allocation4 + $0x30] sm:$0xff]
          %v4599 = vld [vmem:[#allocation4 + $0x38] sm:$0xff]
          %v4600 = vld [vmem:[#allocation4 + $0x40] sm:$0xff]
          %v4601 = vld [vmem:[#allocation4 + $0x48] sm:$0xff]
          %v4602 = vld [vmem:[#allocation4 + $0x50] sm:$0xff]
          %v4603 = vld [vmem:[#allocation4 + $0x58] sm:$0xff]
          %v4604 = vld [vmem:[#allocation4 + $0x60] sm:$0xff]
          %v4605 = vld [vmem:[#allocation4 + $0x68] sm:$0xff]
          %v4606 = vld [vmem:[#allocation4 + $0x70] sm:$0xff]
          %v4607 = vld [vmem:[#allocation4 + $0x78] sm:$0xff]
          %4608 = vset.pattern.permute.xlu0 2
          %4609 = vperm.xlu0 %4608, %v4007
          %v4610 = vpop.permute.xlu0 %4609
          %4612 = vset.pattern.permute.xlu0 2
          %4613 = vperm.xlu0 %4612, %v4008
          %v4614 = vpop.permute.xlu0 %4613
          %4616 = vset.pattern.permute.xlu0 2
          %4617 = vperm.xlu0 %4616, %v4009
          %v4618 = vpop.permute.xlu0 %4617
          %4620 = vset.pattern.permute.xlu0 2
          %4621 = vperm.xlu0 %4620, %v4010
          %v4622 = vpop.permute.xlu0 %4621
          %4624 = vset.pattern.permute.xlu0 2
          %4625 = vperm.xlu0 %4624, %v4011
          %v4626 = vpop.permute.xlu0 %4625
          %4628 = vset.pattern.permute.xlu0 2
          %4629 = vperm.xlu0 %4628, %v4012
          %v4630 = vpop.permute.xlu0 %4629
          %4632 = vset.pattern.permute.xlu0 2
          %4633 = vperm.xlu0 %4632, %v4013
          %v4634 = vpop.permute.xlu0 %4633
          %4636 = vset.pattern.permute.xlu0 2
          %4637 = vperm.xlu0 %4636, %v4014
          %v4638 = vpop.permute.xlu0 %4637
          %4640 = vset.pattern.permute.xlu0 2
          %4641 = vperm.xlu0 %4640, %v4015
          %v4642 = vpop.permute.xlu0 %4641
          %4644 = vset.pattern.permute.xlu0 2
          %4645 = vperm.xlu0 %4644, %v4016
          %v4646 = vpop.permute.xlu0 %4645
          %4648 = vset.pattern.permute.xlu0 2
          %4649 = vperm.xlu0 %4648, %v4017
          %v4650 = vpop.permute.xlu0 %4649
          %4652 = vset.pattern.permute.xlu0 2
          %4653 = vperm.xlu0 %4652, %v4018
          %v4654 = vpop.permute.xlu0 %4653
          %4656 = vset.pattern.permute.xlu0 2
          %4657 = vperm.xlu0 %4656, %v4019
          %v4658 = vpop.permute.xlu0 %4657
          %4660 = vset.pattern.permute.xlu0 2
          %4661 = vperm.xlu0 %4660, %v4020
          %v4662 = vpop.permute.xlu0 %4661
          %4664 = vset.pattern.permute.xlu0 2
          %4665 = vperm.xlu0 %4664, %v4021
          %v4666 = vpop.permute.xlu0 %4665
          %4668 = vset.pattern.permute.xlu0 2
          %4669 = vperm.xlu0 %4668, %v4022
          %v4670 = vpop.permute.xlu0 %4669
          %v4672 = vmul.f32 %v4592, %v4610
          %v4673 = vmul.f32 %v4593, %v4614
          %v4674 = vmul.f32 %v4594, %v4618
          %v4675 = vmul.f32 %v4595, %v4622
          %v4676 = vmul.f32 %v4596, %v4626
          %v4677 = vmul.f32 %v4597, %v4630
          %v4678 = vmul.f32 %v4598, %v4634
          %v4679 = vmul.f32 %v4599, %v4638
          %v4680 = vmul.f32 %v4600, %v4642
          %v4681 = vmul.f32 %v4601, %v4646
          %v4682 = vmul.f32 %v4602, %v4650
          %v4683 = vmul.f32 %v4603, %v4654
          %v4684 = vmul.f32 %v4604, %v4658
          %v4685 = vmul.f32 %v4605, %v4662
          %v4686 = vmul.f32 %v4606, %v4666
          %v4687 = vmul.f32 %v4607, %v4670
          %v4688 = vadd.f32 %v4672, %v4140
          %v4689 = vadd.f32 %v4673, %v4140
          %v4690 = vadd.f32 %v4674, %v4140
          %v4691 = vadd.f32 %v4675, %v4140
          %v4692 = vadd.f32 %v4676, %v4140
          %v4693 = vadd.f32 %v4677, %v4140
          %v4694 = vadd.f32 %v4678, %v4140
          %v4695 = vadd.f32 %v4679, %v4140
          %v4696 = vadd.f32 %v4680, %v4140
          %v4697 = vadd.f32 %v4681, %v4140
          %v4698 = vadd.f32 %v4682, %v4140
          %v4699 = vadd.f32 %v4683, %v4140
          %v4700 = vadd.f32 %v4684, %v4140
          %v4701 = vadd.f32 %v4685, %v4140
          %v4702 = vadd.f32 %v4686, %v4140
          %v4703 = vadd.f32 %v4687, %v4140
          %vm4704 = vcmp.gt.f32.partialorder %v4688, 0.0
          %vm4705 = vcmp.gt.f32.partialorder %v4689, 0.0
          %vm4706 = vcmp.gt.f32.partialorder %v4690, 0.0
          %vm4707 = vcmp.gt.f32.partialorder %v4691, 0.0
          %vm4708 = vcmp.gt.f32.partialorder %v4692, 0.0
          %vm4709 = vcmp.gt.f32.partialorder %v4693, 0.0
          %vm4710 = vcmp.gt.f32.partialorder %v4694, 0.0
          %vm4711 = vcmp.gt.f32.partialorder %v4695, 0.0
          %vm4712 = vcmp.gt.f32.partialorder %v4696, 0.0
          %vm4713 = vcmp.gt.f32.partialorder %v4697, 0.0
          %vm4714 = vcmp.gt.f32.partialorder %v4698, 0.0
          %vm4715 = vcmp.gt.f32.partialorder %v4699, 0.0
          %vm4716 = vcmp.gt.f32.partialorder %v4700, 0.0
          %vm4717 = vcmp.gt.f32.partialorder %v4701, 0.0
          %vm4718 = vcmp.gt.f32.partialorder %v4702, 0.0
          %vm4719 = vcmp.gt.f32.partialorder %v4703, 0.0
          %v4720 = vmul.f32 %v4688, 1.442695
          %v4721 = vpow.pop %v4720
          %v4722 = vmul.f32 %v4689, 1.442695
          %v4723 = vpow.pop %v4722
          %v4724 = vmul.f32 %v4690, 1.442695
          %v4725 = vpow.pop %v4724
          %v4726 = vmul.f32 %v4691, 1.442695
          %v4727 = vpow.pop %v4726
          %v4728 = vmul.f32 %v4692, 1.442695
          %v4729 = vpow.pop %v4728
          %v4730 = vmul.f32 %v4693, 1.442695
          %v4731 = vpow.pop %v4730
          %v4732 = vmul.f32 %v4694, 1.442695
          %v4733 = vpow.pop %v4732
          %v4734 = vmul.f32 %v4695, 1.442695
          %v4735 = vpow.pop %v4734
          %v4736 = vmul.f32 %v4696, 1.442695
          %v4737 = vpow.pop %v4736
          %v4738 = vmul.f32 %v4697, 1.442695
          %v4739 = vpow.pop %v4738
          %v4740 = vmul.f32 %v4698, 1.442695
          %v4741 = vpow.pop %v4740
          %v4742 = vmul.f32 %v4699, 1.442695
          %v4743 = vpow.pop %v4742
          %v4744 = vmul.f32 %v4700, 1.442695
          %v4745 = vpow.pop %v4744
          %v4746 = vmul.f32 %v4701, 1.442695
          %v4747 = vpow.pop %v4746
          %v4748 = vmul.f32 %v4702, 1.442695
          %v4749 = vpow.pop %v4748
          %v4750 = vmul.f32 %v4703, 1.442695
          %v4751 = vpow.pop %v4750
          %v4752 = vsub.f32 %v4721, 1.0
          %v4753 = vsub.f32 %v4723, 1.0
          %v4754 = vsub.f32 %v4725, 1.0
          %v4755 = vsub.f32 %v4727, 1.0
          %v4756 = vsub.f32 %v4729, 1.0
          %v4757 = vsub.f32 %v4731, 1.0
          %v4758 = vsub.f32 %v4733, 1.0
          %v4759 = vsub.f32 %v4735, 1.0
          %v4760 = vsub.f32 %v4737, 1.0
          %v4761 = vsub.f32 %v4739, 1.0
          %v4762 = vsub.f32 %v4741, 1.0
          %v4763 = vsub.f32 %v4743, 1.0
          %v4764 = vsub.f32 %v4745, 1.0
          %v4765 = vsub.f32 %v4747, 1.0
          %v4766 = vsub.f32 %v4749, 1.0
          %v4767 = vsub.f32 %v4751, 1.0
          %v4768 = vsel %vm4704, %v4688, %v4752
          %v4769 = vsel %vm4705, %v4689, %v4753
          %v4770 = vsel %vm4706, %v4690, %v4754
          %v4771 = vsel %vm4707, %v4691, %v4755
          %v4772 = vsel %vm4708, %v4692, %v4756
          %v4773 = vsel %vm4709, %v4693, %v4757
          %v4774 = vsel %vm4710, %v4694, %v4758
          %v4775 = vsel %vm4711, %v4695, %v4759
          %v4776 = vsel %vm4712, %v4696, %v4760
          %v4777 = vsel %vm4713, %v4697, %v4761
          %v4778 = vsel %vm4714, %v4698, %v4762
          %v4779 = vsel %vm4715, %v4699, %v4763
          %v4780 = vsel %vm4716, %v4700, %v4764
          %v4781 = vsel %vm4717, %v4701, %v4765
          %v4782 = vsel %vm4718, %v4702, %v4766
          %v4783 = vsel %vm4719, %v4703, %v4767
          %v4784 = vpack.c.bf16 %v4769, %v4768
          %v4785 = vpack.c.bf16 %v4771, %v4770
          %v4786 = vpack.c.bf16 %v4773, %v4772
          %v4787 = vpack.c.bf16 %v4775, %v4774
          %v4788 = vpack.c.bf16 %v4777, %v4776
          %v4789 = vpack.c.bf16 %v4779, %v4778
          %v4790 = vpack.c.bf16 %v4781, %v4780
          %v4791 = vpack.c.bf16 %v4783, %v4782
          %v4800 = vunpack.c.l.b16 %v4784
          %v4801 = vunpack.c.h.b16 %v4784
          %v4802 = vunpack.c.l.b16 %v4785
          %v4803 = vunpack.c.h.b16 %v4785
          %v4804 = vunpack.c.l.b16 %v4786
          %v4805 = vunpack.c.h.b16 %v4786
          %v4806 = vunpack.c.l.b16 %v4787
          %v4807 = vunpack.c.h.b16 %v4787
          %v4808 = vunpack.c.l.b16 %v4788
          %v4809 = vunpack.c.h.b16 %v4788
          %v4810 = vunpack.c.l.b16 %v4789
          %v4811 = vunpack.c.h.b16 %v4789
          %v4812 = vunpack.c.l.b16 %v4790
          %v4813 = vunpack.c.h.b16 %v4790
          %v4814 = vunpack.c.l.b16 %v4791
          %v4815 = vunpack.c.h.b16 %v4791
          %v4816 = vpack.c.b16 %v4800, %v4800
          %v4817 = vpack.c.b16 %v4801, %v4801
          %v4818 = vpack.c.b16 %v4802, %v4802
          %v4819 = vpack.c.b16 %v4803, %v4803
          %v4820 = vpack.c.b16 %v4804, %v4804
          %v4821 = vpack.c.b16 %v4805, %v4805
          %v4822 = vpack.c.b16 %v4806, %v4806
          %v4823 = vpack.c.b16 %v4807, %v4807
          %v4824 = vpack.c.b16 %v4808, %v4808
          %v4825 = vpack.c.b16 %v4809, %v4809
          %v4826 = vpack.c.b16 %v4810, %v4810
          %v4827 = vpack.c.b16 %v4811, %v4811
          %v4828 = vpack.c.b16 %v4812, %v4812
          %v4829 = vpack.c.b16 %v4813, %v4813
          %v4830 = vpack.c.b16 %v4814, %v4814
          %v4831 = vpack.c.b16 %v4815, %v4815
          %vm4848 = vcmask 781824
          %4849 = vst.msk [vmem:[%s404] sm:$0xf] %vm4848, %v4816
          %4850 = vst.msk [vmem:[%s404 + $0x4] sm:$0xf] %vm4848, %v4817
          %4851 = vst.msk [vmem:[%s404 + $0x8] sm:$0xf] %vm4848, %v4818
          %4852 = vst.msk [vmem:[%s404 + $0xc] sm:$0xf] %vm4848, %v4819
          %4853 = vst.msk [vmem:[%s404 + $0x10] sm:$0xf] %vm4848, %v4820
          %4854 = vst.msk [vmem:[%s404 + $0x14] sm:$0xf] %vm4848, %v4821
          %4855 = vst.msk [vmem:[%s404 + $0x18] sm:$0xf] %vm4848, %v4822
          %4856 = vst.msk [vmem:[%s404 + $0x1c] sm:$0xf] %vm4848, %v4823
          %4857 = vst.msk [vmem:[%s404 + $0x20] sm:$0xf] %vm4848, %v4824
          %4858 = vst.msk [vmem:[%s404 + $0x24] sm:$0xf] %vm4848, %v4825
          %4859 = vst.msk [vmem:[%s404 + $0x28] sm:$0xf] %vm4848, %v4826
          %4860 = vst.msk [vmem:[%s404 + $0x2c] sm:$0xf] %vm4848, %v4827
          %4861 = vst.msk [vmem:[%s404 + $0x30] sm:$0xf] %vm4848, %v4828
          %4862 = vst.msk [vmem:[%s404 + $0x34] sm:$0xf] %vm4848, %v4829
          %4863 = vst.msk [vmem:[%s404 + $0x38] sm:$0xf] %vm4848, %v4830
          %4864 = vst.msk [vmem:[%s404 + $0x3c] sm:$0xf] %vm4848, %v4831
          %v4865 = vld [vmem:[#allocation4] sm:$0xff]
          %v4866 = vld [vmem:[#allocation4 + $0x8] sm:$0xff]
          %v4867 = vld [vmem:[#allocation4 + $0x10] sm:$0xff]
          %v4868 = vld [vmem:[#allocation4 + $0x18] sm:$0xff]
          %v4869 = vld [vmem:[#allocation4 + $0x20] sm:$0xff]
          %v4870 = vld [vmem:[#allocation4 + $0x28] sm:$0xff]
          %v4871 = vld [vmem:[#allocation4 + $0x30] sm:$0xff]
          %v4872 = vld [vmem:[#allocation4 + $0x38] sm:$0xff]
          %v4873 = vld [vmem:[#allocation4 + $0x40] sm:$0xff]
          %v4874 = vld [vmem:[#allocation4 + $0x48] sm:$0xff]
          %v4875 = vld [vmem:[#allocation4 + $0x50] sm:$0xff]
          %v4876 = vld [vmem:[#allocation4 + $0x58] sm:$0xff]
          %v4877 = vld [vmem:[#allocation4 + $0x60] sm:$0xff]
          %v4878 = vld [vmem:[#allocation4 + $0x68] sm:$0xff]
          %v4879 = vld [vmem:[#allocation4 + $0x70] sm:$0xff]
          %v4880 = vld [vmem:[#allocation4 + $0x78] sm:$0xff]
          %4881 = vset.pattern.permute.xlu0 3
          %4882 = vperm.xlu0 %4881, %v4007
          %v4883 = vpop.permute.xlu0 %4882
          %4885 = vset.pattern.permute.xlu0 3
          %4886 = vperm.xlu0 %4885, %v4008
          %v4887 = vpop.permute.xlu0 %4886
          %4889 = vset.pattern.permute.xlu0 3
          %4890 = vperm.xlu0 %4889, %v4009
          %v4891 = vpop.permute.xlu0 %4890
          %4893 = vset.pattern.permute.xlu0 3
          %4894 = vperm.xlu0 %4893, %v4010
          %v4895 = vpop.permute.xlu0 %4894
          %4897 = vset.pattern.permute.xlu0 3
          %4898 = vperm.xlu0 %4897, %v4011
          %v4899 = vpop.permute.xlu0 %4898
          %4901 = vset.pattern.permute.xlu0 3
          %4902 = vperm.xlu0 %4901, %v4012
          %v4903 = vpop.permute.xlu0 %4902
          %4905 = vset.pattern.permute.xlu0 3
          %4906 = vperm.xlu0 %4905, %v4013
          %v4907 = vpop.permute.xlu0 %4906
          %4909 = vset.pattern.permute.xlu0 3
          %4910 = vperm.xlu0 %4909, %v4014
          %v4911 = vpop.permute.xlu0 %4910
          %4913 = vset.pattern.permute.xlu0 3
          %4914 = vperm.xlu0 %4913, %v4015
          %v4915 = vpop.permute.xlu0 %4914
          %4917 = vset.pattern.permute.xlu0 3
          %4918 = vperm.xlu0 %4917, %v4016
          %v4919 = vpop.permute.xlu0 %4918
          %4921 = vset.pattern.permute.xlu0 3
          %4922 = vperm.xlu0 %4921, %v4017
          %v4923 = vpop.permute.xlu0 %4922
          %4925 = vset.pattern.permute.xlu0 3
          %4926 = vperm.xlu0 %4925, %v4018
          %v4927 = vpop.permute.xlu0 %4926
          %4929 = vset.pattern.permute.xlu0 3
          %4930 = vperm.xlu0 %4929, %v4019
          %v4931 = vpop.permute.xlu0 %4930
          %4933 = vset.pattern.permute.xlu0 3
          %4934 = vperm.xlu0 %4933, %v4020
          %v4935 = vpop.permute.xlu0 %4934
          %4937 = vset.pattern.permute.xlu0 3
          %4938 = vperm.xlu0 %4937, %v4021
          %v4939 = vpop.permute.xlu0 %4938
          %4941 = vset.pattern.permute.xlu0 3
          %4942 = vperm.xlu0 %4941, %v4022
          %v4943 = vpop.permute.xlu0 %4942
          %v4945 = vmul.f32 %v4865, %v4883
          %v4946 = vmul.f32 %v4866, %v4887
          %v4947 = vmul.f32 %v4867, %v4891
          %v4948 = vmul.f32 %v4868, %v4895
          %v4949 = vmul.f32 %v4869, %v4899
          %v4950 = vmul.f32 %v4870, %v4903
          %v4951 = vmul.f32 %v4871, %v4907
          %v4952 = vmul.f32 %v4872, %v4911
          %v4953 = vmul.f32 %v4873, %v4915
          %v4954 = vmul.f32 %v4874, %v4919
          %v4955 = vmul.f32 %v4875, %v4923
          %v4956 = vmul.f32 %v4876, %v4927
          %v4957 = vmul.f32 %v4877, %v4931
          %v4958 = vmul.f32 %v4878, %v4935
          %v4959 = vmul.f32 %v4879, %v4939
          %v4960 = vmul.f32 %v4880, %v4943
          %v4961 = vadd.f32 %v4945, %v4140
          %v4962 = vadd.f32 %v4946, %v4140
          %v4963 = vadd.f32 %v4947, %v4140
          %v4964 = vadd.f32 %v4948, %v4140
          %v4965 = vadd.f32 %v4949, %v4140
          %v4966 = vadd.f32 %v4950, %v4140
          %v4967 = vadd.f32 %v4951, %v4140
          %v4968 = vadd.f32 %v4952, %v4140
          %v4969 = vadd.f32 %v4953, %v4140
          %v4970 = vadd.f32 %v4954, %v4140
          %v4971 = vadd.f32 %v4955, %v4140
          %v4972 = vadd.f32 %v4956, %v4140
          %v4973 = vadd.f32 %v4957, %v4140
          %v4974 = vadd.f32 %v4958, %v4140
          %v4975 = vadd.f32 %v4959, %v4140
          %v4976 = vadd.f32 %v4960, %v4140
          %vm4977 = vcmp.gt.f32.partialorder %v4961, 0.0
          %vm4978 = vcmp.gt.f32.partialorder %v4962, 0.0
          %vm4979 = vcmp.gt.f32.partialorder %v4963, 0.0
          %vm4980 = vcmp.gt.f32.partialorder %v4964, 0.0
          %vm4981 = vcmp.gt.f32.partialorder %v4965, 0.0
          %vm4982 = vcmp.gt.f32.partialorder %v4966, 0.0
          %vm4983 = vcmp.gt.f32.partialorder %v4967, 0.0
          %vm4984 = vcmp.gt.f32.partialorder %v4968, 0.0
          %vm4985 = vcmp.gt.f32.partialorder %v4969, 0.0
          %vm4986 = vcmp.gt.f32.partialorder %v4970, 0.0
          %vm4987 = vcmp.gt.f32.partialorder %v4971, 0.0
          %vm4988 = vcmp.gt.f32.partialorder %v4972, 0.0
          %vm4989 = vcmp.gt.f32.partialorder %v4973, 0.0
          %vm4990 = vcmp.gt.f32.partialorder %v4974, 0.0
          %vm4991 = vcmp.gt.f32.partialorder %v4975, 0.0
          %vm4992 = vcmp.gt.f32.partialorder %v4976, 0.0
          %v4993 = vmul.f32 %v4961, 1.442695
          %v4994 = vpow.pop %v4993
          %v4995 = vmul.f32 %v4962, 1.442695
          %v4996 = vpow.pop %v4995
          %v4997 = vmul.f32 %v4963, 1.442695
          %v4998 = vpow.pop %v4997
          %v4999 = vmul.f32 %v4964, 1.442695
          %v5000 = vpow.pop %v4999
          %v5001 = vmul.f32 %v4965, 1.442695
          %v5002 = vpow.pop %v5001
          %v5003 = vmul.f32 %v4966, 1.442695
          %v5004 = vpow.pop %v5003
          %v5005 = vmul.f32 %v4967, 1.442695
          %v5006 = vpow.pop %v5005
          %v5007 = vmul.f32 %v4968, 1.442695
          %v5008 = vpow.pop %v5007
          %v5009 = vmul.f32 %v4969, 1.442695
          %v5010 = vpow.pop %v5009
          %v5011 = vmul.f32 %v4970, 1.442695
          %v5012 = vpow.pop %v5011
          %v5013 = vmul.f32 %v4971, 1.442695
          %v5014 = vpow.pop %v5013
          %v5015 = vmul.f32 %v4972, 1.442695
          %v5016 = vpow.pop %v5015
          %v5017 = vmul.f32 %v4973, 1.442695
          %v5018 = vpow.pop %v5017
          %v5019 = vmul.f32 %v4974, 1.442695
          %v5020 = vpow.pop %v5019
          %v5021 = vmul.f32 %v4975, 1.442695
          %v5022 = vpow.pop %v5021
          %v5023 = vmul.f32 %v4976, 1.442695
          %v5024 = vpow.pop %v5023
          %v5025 = vsub.f32 %v4994, 1.0
          %v5026 = vsub.f32 %v4996, 1.0
          %v5027 = vsub.f32 %v4998, 1.0
          %v5028 = vsub.f32 %v5000, 1.0
          %v5029 = vsub.f32 %v5002, 1.0
          %v5030 = vsub.f32 %v5004, 1.0
          %v5031 = vsub.f32 %v5006, 1.0
          %v5032 = vsub.f32 %v5008, 1.0
          %v5033 = vsub.f32 %v5010, 1.0
          %v5034 = vsub.f32 %v5012, 1.0
          %v5035 = vsub.f32 %v5014, 1.0
          %v5036 = vsub.f32 %v5016, 1.0
          %v5037 = vsub.f32 %v5018, 1.0
          %v5038 = vsub.f32 %v5020, 1.0
          %v5039 = vsub.f32 %v5022, 1.0
          %v5040 = vsub.f32 %v5024, 1.0
          %v5041 = vsel %vm4977, %v4961, %v5025
          %v5042 = vsel %vm4978, %v4962, %v5026
          %v5043 = vsel %vm4979, %v4963, %v5027
          %v5044 = vsel %vm4980, %v4964, %v5028
          %v5045 = vsel %vm4981, %v4965, %v5029
          %v5046 = vsel %vm4982, %v4966, %v5030
          %v5047 = vsel %vm4983, %v4967, %v5031
          %v5048 = vsel %vm4984, %v4968, %v5032
          %v5049 = vsel %vm4985, %v4969, %v5033
          %v5050 = vsel %vm4986, %v4970, %v5034
          %v5051 = vsel %vm4987, %v4971, %v5035
          %v5052 = vsel %vm4988, %v4972, %v5036
          %v5053 = vsel %vm4989, %v4973, %v5037
          %v5054 = vsel %vm4990, %v4974, %v5038
          %v5055 = vsel %vm4991, %v4975, %v5039
          %v5056 = vsel %vm4992, %v4976, %v5040
          %v5057 = vpack.c.bf16 %v5042, %v5041
          %v5058 = vpack.c.bf16 %v5044, %v5043
          %v5059 = vpack.c.bf16 %v5046, %v5045
          %v5060 = vpack.c.bf16 %v5048, %v5047
          %v5061 = vpack.c.bf16 %v5050, %v5049
          %v5062 = vpack.c.bf16 %v5052, %v5051
          %v5063 = vpack.c.bf16 %v5054, %v5053
          %v5064 = vpack.c.bf16 %v5056, %v5055
          %v5073 = vunpack.c.l.b16 %v5057
          %v5074 = vunpack.c.h.b16 %v5057
          %v5075 = vunpack.c.l.b16 %v5058
          %v5076 = vunpack.c.h.b16 %v5058
          %v5077 = vunpack.c.l.b16 %v5059
          %v5078 = vunpack.c.h.b16 %v5059
          %v5079 = vunpack.c.l.b16 %v5060
          %v5080 = vunpack.c.h.b16 %v5060
          %v5081 = vunpack.c.l.b16 %v5061
          %v5082 = vunpack.c.h.b16 %v5061
          %v5083 = vunpack.c.l.b16 %v5062
          %v5084 = vunpack.c.h.b16 %v5062
          %v5085 = vunpack.c.l.b16 %v5063
          %v5086 = vunpack.c.h.b16 %v5063
          %v5087 = vunpack.c.l.b16 %v5064
          %v5088 = vunpack.c.h.b16 %v5064
          %v5089 = vpack.c.b16 %v5073, %v5073
          %v5090 = vpack.c.b16 %v5074, %v5074
          %v5091 = vpack.c.b16 %v5075, %v5075
          %v5092 = vpack.c.b16 %v5076, %v5076
          %v5093 = vpack.c.b16 %v5077, %v5077
          %v5094 = vpack.c.b16 %v5078, %v5078
          %v5095 = vpack.c.b16 %v5079, %v5079
          %v5096 = vpack.c.b16 %v5080, %v5080
          %v5097 = vpack.c.b16 %v5081, %v5081
          %v5098 = vpack.c.b16 %v5082, %v5082
          %v5099 = vpack.c.b16 %v5083, %v5083
          %v5100 = vpack.c.b16 %v5084, %v5084
          %v5101 = vpack.c.b16 %v5085, %v5085
          %v5102 = vpack.c.b16 %v5086, %v5086
          %v5103 = vpack.c.b16 %v5087, %v5087
          %v5104 = vpack.c.b16 %v5088, %v5088
          %vm5121 = vcmask 1044224
          %5122 = vst.msk [vmem:[%s404] sm:$0xf] %vm5121, %v5089
          %5123 = vst.msk [vmem:[%s404 + $0x4] sm:$0xf] %vm5121, %v5090
          %5124 = vst.msk [vmem:[%s404 + $0x8] sm:$0xf] %vm5121, %v5091
          %5125 = vst.msk [vmem:[%s404 + $0xc] sm:$0xf] %vm5121, %v5092
          %5126 = vst.msk [vmem:[%s404 + $0x10] sm:$0xf] %vm5121, %v5093
          %5127 = vst.msk [vmem:[%s404 + $0x14] sm:$0xf] %vm5121, %v5094
          %5128 = vst.msk [vmem:[%s404 + $0x18] sm:$0xf] %vm5121, %v5095
          %5129 = vst.msk [vmem:[%s404 + $0x1c] sm:$0xf] %vm5121, %v5096
          %5130 = vst.msk [vmem:[%s404 + $0x20] sm:$0xf] %vm5121, %v5097
          %5131 = vst.msk [vmem:[%s404 + $0x24] sm:$0xf] %vm5121, %v5098
          %5132 = vst.msk [vmem:[%s404 + $0x28] sm:$0xf] %vm5121, %v5099
          %5133 = vst.msk [vmem:[%s404 + $0x2c] sm:$0xf] %vm5121, %v5100
          %5134 = vst.msk [vmem:[%s404 + $0x30] sm:$0xf] %vm5121, %v5101
          %5135 = vst.msk [vmem:[%s404 + $0x34] sm:$0xf] %vm5121, %v5102
          %5136 = vst.msk [vmem:[%s404 + $0x38] sm:$0xf] %vm5121, %v5103
          %5137 = vst.msk [vmem:[%s404 + $0x3c] sm:$0xf] %vm5121, %v5104
        $region89: #{gat_forward.7} parent=76 // pred_fallthru
          _
        %s5138 = smul.u32 16, %s20
        %p5139 = scmp.lt.s32.totalorder %s5138, 31
        %s5140 = scalar_select %p5139, %s5138, 31
        %s5141 = smul.addr %s5140, 4
        %s5142 = scalar_lea.vmem %s5, %s5141
        // Predicated region
        $region90: #{gat_forward.7} parent=76 // pred_check
          %p5143 = pneg %p173
        $region91: #{gat_forward.7} parent=76 // pred_check_branch
          %5145 = sbr.rel (%p5143) target = $region93
        $region92: #{gat_forward.7} parent=76 // pred_region
          %s5146 = smul.u32 16, %s20
        $region93: #{gat_forward.7} parent=76 // pred_fallthru
          _
      $region77: #{gat_forward.7} parent=5 // pred_fallthru
        _
      %p5147 = scmp.le.s32.totalorder 2, %s11
      // Predicated region
      $region94: #{gat_forward.7} parent=5 // pred_check
        %p5148 = pneg %p5147
      $region95: #{gat_forward.7} parent=5 // pred_check_branch
        %5150 = sbr.rel (%p5148) target = $region97
      $region96: #{gat_forward.7} parent=5 // pred_region
        %s5151 = ssub.s32 %s11, 2
        // Predicated region
        $region98: #{gat_forward.7} parent=96 // pred_check
          %p5152 = pneg %p179
        $region99: #{gat_forward.7} parent=96 // pred_check_branch
          %5154 = sbr.rel (%p5152) target = $region101
        $region100: #{gat_forward.7} parent=96 // pred_region
          %s5155 = smul.u32 16, %s22
          %p5156 = scmp.lt.s32.totalorder %s5155, 31
          %s5157 = scalar_select %p5156, %s5155, 31
          %s5158 = smul.addr %s5157, 4
          %s5159 = scalar_lea.vmem %s5, %s5158
        $region101: #{gat_forward.7} parent=96 // pred_fallthru
          _
      $region97: #{gat_forward.7} parent=5 // pred_fallthru
        _
    $region6: #{gat_forward.7} parent=1 // loop_footer
      %s15 = sadd.s32 1, %s11
    $region7: #{gat_forward.7} parent=1 // loop_footer_branch
      %10 = sbr.rel target = $region3
    $region8: #{gat_forward.7} parent=1 // loop_exit
      _

</llo_original>
